<compile_context>
chip_gen: v6e
topology: v6e:2x2x1
jax: 0.10.0
libtpu: 0.0.40
codegen_flags: <defaults>
</compile_context>

<pallas_src>
import functools

import jax
import jax.numpy as jnp
from jax.experimental import pallas as pl
from jax.experimental.pallas import tpu as pltpu

_VMEM_LIMIT = 48 * 1024 * 1024  # conservative across v5e/v6e (128 MiB) and v7x (64 MiB)


# ----------------------------------------------------------------------------
# Fused multi-layer LSTM stack kernel (single pallas_call, grid=(1,)).
# ----------------------------------------------------------------------------
def _lstm_stack_kernel(emb_ref, h0_ref, c0_ref, *rest, nlayers, T, B, H):
    # rest = [wih_0, whh_0, b_0, ..., wih_{L-1}, whh_{L-1}, b_{L-1},
    #         y_ref, hT_ref, cT_ref, gx0, gx1, gx2, gx3]
    layer_refs = rest[:3 * nlayers]
    y_ref, hT_ref, cT_ref = rest[3 * nlayers:3 * nlayers + 3]
    gx_refs = rest[3 * nlayers + 3:]          # 4 scratch buffers, (T, B, H) f32

    for layer in range(nlayers):
        wih_ref, whh_ref, b_ref = layer_refs[3 * layer:3 * layer + 3]

        # ---- 1) Input projection hoisted out of the time loop:
        #         one (T*B, F_in) x (F_in, H) matmul per gate (cuDNN-style).
        #         Layer > 0 reads the previous layer's output directly from
        #         the (VMEM-resident) y output ref — no HBM bounce.
        if layer == 0:
            x2d = emb_ref[...].reshape(T * B, emb_ref.shape[-1])      # bf16
        else:
            x2d = y_ref[...].astype(jnp.bfloat16).reshape(T * B, H)
        for k in range(4):
            gx_refs[k][...] = (
                jnp.dot(x2d, wih_ref[k], preferred_element_type=jnp.float32)
                + b_ref[k]).reshape(T, B, H)

        # Recurrent weights, per gate, loaded once per layer (bf16, resident).
        whh = [whh_ref[k] for k in range(4)]

        # ---- 2) Serial recurrence: only h @ W_hh + f32 gate math per step.
        def step(t, carry):
            h, c = carry                                   # f32 carries
            hb = h.astype(jnp.bfloat16)
            i_pre = gx_refs[0][t] + jnp.dot(hb, whh[0], preferred_element_type=jnp.float32)
            f_pre = gx_refs[1][t] + jnp.dot(hb, whh[1], preferred_element_type=jnp.float32)
            g_pre = gx_refs[2][t] + jnp.dot(hb, whh[2], preferred_element_type=jnp.float32)
            o_pre = gx_refs[3][t] + jnp.dot(hb, whh[3], preferred_element_type=jnp.float32)
            i_g = jax.nn.sigmoid(i_pre)
            f_g = jax.nn.sigmoid(f_pre)
            g_g = jnp.tanh(g_pre)
            o_g = jax.nn.sigmoid(o_pre)
            c_new = f_g * c + i_g * g_g
            h_new = o_g * jnp.tanh(c_new)
            # Store into the (VMEM-resident) output slab; the single HBM
            # writeback of y happens once for the whole (T, B, H) block.
            y_ref[t] = h_new.astype(y_ref.dtype)
            return h_new, c_new

        h_fin, c_fin = jax.lax.fori_loop(
            0, T, step, (h0_ref[layer], c0_ref[layer]), unroll=(T <= 32))

        # ---- 3) Final states written once per layer (not per timestep).
        hT_ref[layer] = h_fin
        cT_ref[layer] = c_fin


def lstm_stack(emb, h0, c0, layer_params):
    """Fused multi-layer LSTM.

    emb          : (T, B, ninp) bf16
    h0, c0       : (nlayers, B, H) f32
    layer_params : list of (wih (4, F_in, H) bf16, whh (4, H, H) bf16,
                            bias (4, 1, H) f32) in PyTorch gate order i,f,g,o.
    returns      : y (T, B, H) f32, hT (nlayers, B, H), cT (nlayers, B, H)
    """
    T, B, ninp = emb.shape
    nlayers, _, H = h0.shape

    flat_weights = []
    in_specs = [
        pl.BlockSpec((T, B, ninp), lambda i: (0, 0, 0)),
        pl.BlockSpec((nlayers, B, H), lambda i: (0, 0, 0)),
        pl.BlockSpec((nlayers, B, H), lambda i: (0, 0, 0)),
    ]
    for (wih, whh, b) in layer_params:
        flat_weights += [wih, whh, b]
        in_specs += [
            pl.BlockSpec(wih.shape, lambda i: (0, 0, 0)),
            pl.BlockSpec(whh.shape, lambda i: (0, 0, 0)),
            pl.BlockSpec(b.shape, lambda i: (0, 0, 0)),
        ]

    kernel = functools.partial(_lstm_stack_kernel, nlayers=nlayers, T=T, B=B, H=H)
    y, hT, cT = pl.pallas_call(
        kernel,
        out_shape=(
            jax.ShapeDtypeStruct((T, B, H), jnp.float32),
            jax.ShapeDtypeStruct((nlayers, B, H), jnp.float32),
            jax.ShapeDtypeStruct((nlayers, B, H), jnp.float32),
        ),
        grid_spec=pltpu.PrefetchScalarGridSpec(
            num_scalar_prefetch=0,
            grid=(1,),
            in_specs=in_specs,
            out_specs=[
                pl.BlockSpec((T, B, H), lambda i: (0, 0, 0)),
                pl.BlockSpec((nlayers, B, H), lambda i: (0, 0, 0)),
                pl.BlockSpec((nlayers, B, H), lambda i: (0, 0, 0)),
            ],
            scratch_shapes=[pltpu.VMEM((T, B, H), jnp.float32) for _ in range(4)],
        ),
        compiler_params=pltpu.CompilerParams(
            dimension_semantics=("arbitrary",),
            vmem_limit_bytes=_VMEM_LIMIT),
    )(emb, h0, c0, *flat_weights)
    return y, hT, cT


# ----------------------------------------------------------------------------
# Decoder (Linear) kernel, tiled over (rows, vocab), parallel grid.
# ----------------------------------------------------------------------------
def _decoder_kernel(x_ref, w_ref, b_ref, o_ref):
    o_ref[...] = (jnp.dot(x_ref[...], w_ref[...],
                          preferred_element_type=jnp.float32)
                  + b_ref[...]).astype(o_ref.dtype)


def _pick_tile(dim, target, unit):
    """Largest multiple of `unit` that divides `dim` and is <= target, else dim."""
    t = (target // unit) * unit
    while t >= unit:
        if dim % t == 0:
            return t
        t -= unit
    return dim


def decoder(x, w_t, bias):
    """x: (N, H) bf16, w_t: (H, V) bf16, bias: (1, V) f32 -> (N, V) f32."""
    N, H = x.shape
    V = w_t.shape[-1]
    tn = _pick_tile(N, 256, 8)       # row tile (multiple of 8 sublanes)
    tv = _pick_tile(V, 2048, 128)    # vocab tile (multiple of 128/256-friendly)
    grid = (N // tn, V // tv)
    return pl.pallas_call(
        _decoder_kernel,
        out_shape=jax.ShapeDtypeStruct((N, V), jnp.float32),
        grid_spec=pltpu.PrefetchScalarGridSpec(
            num_scalar_prefetch=0,
            grid=grid,
            in_specs=[
                pl.BlockSpec((tn, H), lambda i, j: (i, 0)),
                pl.BlockSpec((H, tv), lambda i, j: (0, j)),
                pl.BlockSpec((1, tv), lambda i, j: (0, j)),
            ],
            out_specs=pl.BlockSpec((tn, tv), lambda i, j: (i, j)),
        ),
        compiler_params=pltpu.CompilerParams(
            dimension_semantics=("parallel", "parallel"),
            vmem_limit_bytes=_VMEM_LIMIT),
    )(x, w_t, bias)


# ----------------------------------------------------------------------------
# Parameters (mirrors RNNModel.__init__ / init_weights for the LSTM variant).
# ----------------------------------------------------------------------------
class RNNModelParams:
    def __init__(self, key, ntoken, ninp, nhid, nlayers):
        self.ntoken, self.ninp, self.nhid, self.nlayers = ntoken, ninp, nhid, nlayers
        keys = jax.random.split(key, 2 + 4 * nlayers)
        initrange = 0.1
        # Encoder / decoder init mirrors RNNModel.init_weights().
        self.encoder_w = jax.random.uniform(
            keys[0], (ntoken, ninp), jnp.float32, -initrange, initrange)
        dec_w = jax.random.uniform(
            keys[1], (ntoken, nhid), jnp.float32, -initrange, initrange)
        self.decoder_w_t = dec_w.T.astype(jnp.bfloat16)        # (nhid, ntoken)
        self.decoder_b = jnp.zeros((1, ntoken), jnp.float32)
        # LSTM weights, PyTorch default init U(-1/sqrt(nhid), 1/sqrt(nhid)).
        stdv = 1.0 / (nhid ** 0.5)
        self.lstm = []
        for layer in range(nlayers):
            f_in = ninp if layer == 0 else nhid
            k = keys[2 + 4 * layer: 2 + 4 * (layer + 1)]
            w_ih = jax.random.uniform(k[0], (4 * nhid, f_in), jnp.float32, -stdv, stdv)
            w_hh = jax.random.uniform(k[1], (4 * nhid, nhid), jnp.float32, -stdv, stdv)
            b_ih = jax.random.uniform(k[2], (4 * nhid,), jnp.float32, -stdv, stdv)
            b_hh = jax.random.uniform(k[3], (4 * nhid,), jnp.float32, -stdv, stdv)
            # Gate-major layout (i, f, g, o): per-gate (F_in, H) operands so the
            # kernel never lane-slices a combined 4H gate result.
            wih_g = w_ih.reshape(4, nhid, f_in).transpose(0, 2, 1).astype(jnp.bfloat16)
            whh_g = w_hh.reshape(4, nhid, nhid).transpose(0, 2, 1).astype(jnp.bfloat16)
            b_g = (b_ih + b_hh).reshape(4, 1, nhid)            # f32 (gate math stays f32)
            self.lstm.append((wih_g, whh_g, b_g))


# ----------------------------------------------------------------------------
# RNNModel forward (LSTM variant).
# ----------------------------------------------------------------------------
def rnn_model_forward(params, tokens, hidden):
    """tokens: (T, B) int32; hidden: (h0, c0) each (nlayers, B, nhid)."""
    h0_all, c0_all = hidden
    T, B = tokens.shape
    H, V = params.nhid, params.ntoken

    # Embedding lookup (glue; gather is not the hot path).
    # TODO(synk): nn.Dropout in train mode omitted; eval-mode identity used.
    emb = jnp.take(params.encoder_w, tokens.reshape(-1), axis=0)
    emb = emb.reshape(T, B, params.ninp)

    # Pad batch to a multiple of 8 sublanes; padded rows are dead and sliced off.
    B_pad = max(8, -(-B // 8) * 8)
    pad = B_pad - B
    if pad:
        emb = jnp.pad(emb, ((0, 0), (0, pad), (0, 0)))
        h0 = jnp.pad(h0_all, ((0, 0), (0, pad), (0, 0)))
        c0 = jnp.pad(c0_all, ((0, 0), (0, pad), (0, 0)))
    else:
        h0, c0 = h0_all, c0_all

    # Fused multi-layer LSTM in a single pallas_call.
    y, hT, cT = lstm_stack(emb.astype(jnp.bfloat16), h0, c0, params.lstm)

    # Decoder: tiled (rows x vocab) parallel matmul.
    flat = y.reshape(T * B_pad, H).astype(jnp.bfloat16)
    decoded = decoder(flat, params.decoder_w_t, params.decoder_b)
    decoded = decoded.reshape(T, B_pad, V)[:, :B, :]

    return decoded, (hT[:, :B, :], cT[:, :B, :])


if __name__ == "__main__":
    # Small shapes: ntoken=128, ninp=32, nhid=32, nlayers=2, seq=8, batch=2.
    ntoken, ninp, nhid, nlayers = 128, 32, 32, 2
    T, B = 8, 2

    key = jax.random.PRNGKey(0)
    pkey, tkey = jax.random.split(key)
    params = RNNModelParams(pkey, ntoken, ninp, nhid, nlayers)

    tokens = jax.random.randint(tkey, (T, B), 0, ntoken, dtype=jnp.int32)
    hidden = (jnp.zeros((nlayers, B, nhid), jnp.float32),
              jnp.zeros((nlayers, B, nhid), jnp.float32))

    fwd = jax.jit(lambda t, h: rnn_model_forward(params, t, h))
    decoded, (hT, cT) = fwd(tokens, hidden)
    jax.block_until_ready((decoded, hT, cT))

    assert decoded.shape == (T, B, ntoken)
    assert hT.shape == (nlayers, B, nhid) and cT.shape == (nlayers, B, nhid)
    assert bool(jnp.all(jnp.isfinite(decoded)))
    assert bool(jnp.all(jnp.isfinite(hT))) and bool(jnp.all(jnp.isfinite(cT)))
    print("KERNEL_OK")
</pallas_src>

<mosaic_0001>
module attributes {stable_mosaic.version = 11 : i64} {
  func.func @_decoder_kernel(%arg0: i32, %arg1: i32, %arg2: memref<64x32xbf16, #tpu.memory_space<vmem>>, %arg3: memref<32x128xbf16, #tpu.memory_space<vmem>>, %arg4: memref<1x128xf32, #tpu.memory_space<vmem>>, %arg5: memref<64x128xf32, #tpu.memory_space<vmem>>) attributes {dimension_semantics = [#tpu.dimension_semantics<parallel>, #tpu.dimension_semantics<parallel>], iteration_bounds = array<i64: 1, 1>, scalar_prefetch = 0 : i64, scratch_operands = 0 : i64, tpu.core_type = #tpu.core_type<tc>, window_params = [{transform_indices = @transform_0, window_bounds = array<i64: 64, 32>}, {transform_indices = @transform_1, window_bounds = array<i64: 32, 128>}, {transform_indices = @transform_2, window_bounds = array<i64: 1, 128>}, {transform_indices = @transform_3, window_bounds = array<i64: 64, 128>}]} {
    %c0 = arith.constant 0 : index
    %c0_0 = arith.constant 0 : index
    %0 = vector.load %arg2[%c0, %c0_0] : memref<64x32xbf16, #tpu.memory_space<vmem>>, vector<64x32xbf16>
    %c0_1 = arith.constant 0 : index
    %c0_2 = arith.constant 0 : index
    %1 = vector.load %arg3[%c0_1, %c0_2] : memref<32x128xbf16, #tpu.memory_space<vmem>>, vector<32x128xbf16>
    %cst = arith.constant dense<0.000000e+00> : vector<64x128xf32>
    %2 = tpu.matmul %0, %1, %cst {dimension_numbers = #tpu.dot_dimension_numbers<[1], [0], [0], [1], [0, 0, 1, 1], [], []>} : vector<64x32xbf16>, vector<32x128xbf16>, vector<64x128xf32> -> vector<64x128xf32>
    %c0_3 = arith.constant 0 : index
    %c0_4 = arith.constant 0 : index
    %3 = vector.load %arg4[%c0_3, %c0_4] : memref<1x128xf32, #tpu.memory_space<vmem>>, vector<1x128xf32>
    %4 = vector.broadcast %3 : vector<1x128xf32> to vector<64x128xf32>
    %5 = arith.addf %2, %4 : vector<64x128xf32>
    %c0_5 = arith.constant 0 : index
    %c0_6 = arith.constant 0 : index
    %6 = vector.load %arg5[%c0_5, %c0_6] : memref<64x128xf32, #tpu.memory_space<vmem>>, vector<64x128xf32>
    tpu.vector_store %arg5[%c0_5, %c0_6], %5 {strides = array<i32>} : memref<64x128xf32, #tpu.memory_space<vmem>>, vector<64x128xf32>,
    return
  }
  func.func @transform_0(%arg0: i32, %arg1: i32) -> (i32, i32) {
    %c0_i32 = arith.constant 0 : i32
    %c0_i32_0 = arith.constant 0 : i32
    return %arg0, %c0_i32 : i32, i32
  }
  func.func @transform_1(%arg0: i32, %arg1: i32) -> (i32, i32) {
    %c0_i32 = arith.constant 0 : i32
    %c0_i32_0 = arith.constant 0 : i32
    return %c0_i32, %arg1 : i32, i32
  }
  func.func @transform_2(%arg0: i32, %arg1: i32) -> (i32, i32) {
    %c0_i32 = arith.constant 0 : i32
    %c0_i32_0 = arith.constant 0 : i32
    return %c0_i32, %arg1 : i32, i32
  }
  func.func @transform_3(%arg0: i32, %arg1: i32) -> (i32, i32) {
    %c0_i32 = arith.constant 0 : i32
    return %arg0, %arg1 : i32, i32
  }
}

module attributes {stable_mosaic.version = 11 : i64} {
  func.func @_lstm_stack_kernel(%arg0: i32, %arg1: memref<8x8x32xbf16, #tpu.memory_space<vmem>>, %arg2: memref<2x8x32xf32, #tpu.memory_space<vmem>>, %arg3: memref<2x8x32xf32, #tpu.memory_space<vmem>>, %arg4: memref<4x32x32xbf16, #tpu.memory_space<vmem>>, %arg5: memref<4x32x32xbf16, #tpu.memory_space<vmem>>, %arg6: memref<4x1x32xf32, #tpu.memory_space<vmem>>, %arg7: memref<4x32x32xbf16, #tpu.memory_space<vmem>>, %arg8: memref<4x32x32xbf16, #tpu.memory_space<vmem>>, %arg9: memref<4x1x32xf32, #tpu.memory_space<vmem>>, %arg10: memref<8x8x32xf32, #tpu.memory_space<vmem>>, %arg11: memref<2x8x32xf32, #tpu.memory_space<vmem>>, %arg12: memref<2x8x32xf32, #tpu.memory_space<vmem>>, %arg13: memref<8x8x32xf32, #tpu.memory_space<vmem>>, %arg14: memref<8x8x32xf32, #tpu.memory_space<vmem>>, %arg15: memref<8x8x32xf32, #tpu.memory_space<vmem>>, %arg16: memref<8x8x32xf32, #tpu.memory_space<vmem>>) attributes {dimension_semantics = [#tpu.dimension_semantics<arbitrary>], iteration_bounds = array<i64: 1>, scalar_prefetch = 0 : i64, scratch_operands = 4 : i64, tpu.core_type = #tpu.core_type<tc>, window_params = [{pipeline_mode = #tpu.pipeline_mode<synchronous>, transform_indices = @transform_0, window_bounds = array<i64: 8, 8, 32>}, {pipeline_mode = #tpu.pipeline_mode<synchronous>, transform_indices = @transform_1, window_bounds = array<i64: 2, 8, 32>}, {pipeline_mode = #tpu.pipeline_mode<synchronous>, transform_indices = @transform_2, window_bounds = array<i64: 2, 8, 32>}, {pipeline_mode = #tpu.pipeline_mode<synchronous>, transform_indices = @transform_3, window_bounds = array<i64: 4, 32, 32>}, {pipeline_mode = #tpu.pipeline_mode<synchronous>, transform_indices = @transform_4, window_bounds = array<i64: 4, 32, 32>}, {pipeline_mode = #tpu.pipeline_mode<synchronous>, transform_indices = @transform_5, window_bounds = array<i64: 4, 1, 32>}, {pipeline_mode = #tpu.pipeline_mode<synchronous>, transform_indices = @transform_6, window_bounds = array<i64: 4, 32, 32>}, {pipeline_mode = #tpu.pipeline_mode<synchronous>, transform_indices = @transform_7, window_bounds = array<i64: 4, 32, 32>}, {pipeline_mode = #tpu.pipeline_mode<synchronous>, transform_indices = @transform_8, window_bounds = array<i64: 4, 1, 32>}, {pipeline_mode = #tpu.pipeline_mode<synchronous>, transform_indices = @transform_9, window_bounds = array<i64: 8, 8, 32>}, {pipeline_mode = #tpu.pipeline_mode<synchronous>, transform_indices = @transform_10, window_bounds = array<i64: 2, 8, 32>}, {pipeline_mode = #tpu.pipeline_mode<synchronous>, transform_indices = @transform_11, window_bounds = array<i64: 2, 8, 32>}]} {
    %c0 = arith.constant 0 : index
    %c0_0 = arith.constant 0 : index
    %c0_1 = arith.constant 0 : index
    %0 = vector.load %arg1[%c0, %c0_0, %c0_1] : memref<8x8x32xbf16, #tpu.memory_space<vmem>>, vector<8x8x32xbf16>
    %1 = vector.shape_cast %0 : vector<8x8x32xbf16> to vector<64x32xbf16>
    %c0_2 = arith.constant 0 : index
    %c0_3 = arith.constant 0 : index
    %c0_4 = arith.constant 0 : index
    %2 = vector.load %arg4[%c0_2, %c0_3, %c0_4] : memref<4x32x32xbf16, #tpu.memory_space<vmem>>, vector<1x32x32xbf16>
    %3 = vector.shape_cast %2 : vector<1x32x32xbf16> to vector<32x32xbf16>
    %cst = arith.constant dense<0.000000e+00> : vector<64x32xf32>
    %4 = tpu.matmul %1, %3, %cst {dimension_numbers = #tpu.dot_dimension_numbers<[1], [0], [0], [1], [0, 0, 1, 1], [], []>} : vector<64x32xbf16>, vector<32x32xbf16>, vector<64x32xf32> -> vector<64x32xf32>
    %c0_5 = arith.constant 0 : index
    %c0_6 = arith.constant 0 : index
    %c0_7 = arith.constant 0 : index
    %5 = vector.load %arg6[%c0_5, %c0_6, %c0_7] : memref<4x1x32xf32, #tpu.memory_space<vmem>>, vector<1x1x32xf32>
    %6 = vector.shape_cast %5 : vector<1x1x32xf32> to vector<1x32xf32>
    %7 = vector.broadcast %6 : vector<1x32xf32> to vector<64x32xf32>
    %8 = arith.addf %4, %7 : vector<64x32xf32>
    %9 = vector.shape_cast %8 : vector<64x32xf32> to vector<8x8x32xf32>
    %c0_8 = arith.constant 0 : index
    %c0_9 = arith.constant 0 : index
    %c0_10 = arith.constant 0 : index
    %10 = vector.load %arg13[%c0_8, %c0_9, %c0_10] : memref<8x8x32xf32, #tpu.memory_space<vmem>>, vector<8x8x32xf32>
    tpu.vector_store %arg13[%c0_8, %c0_9, %c0_10], %9 {strides = array<i32>} : memref<8x8x32xf32, #tpu.memory_space<vmem>>, vector<8x8x32xf32>,
    %c1 = arith.constant 1 : index
    %c0_11 = arith.constant 0 : index
    %c0_12 = arith.constant 0 : index
    %11 = vector.load %arg4[%c1, %c0_11, %c0_12] : memref<4x32x32xbf16, #tpu.memory_space<vmem>>, vector<1x32x32xbf16>
    %12 = vector.shape_cast %11 : vector<1x32x32xbf16> to vector<32x32xbf16>
    %cst_13 = arith.constant dense<0.000000e+00> : vector<64x32xf32>
    %13 = tpu.matmul %1, %12, %cst_13 {dimension_numbers = #tpu.dot_dimension_numbers<[1], [0], [0], [1], [0, 0, 1, 1], [], []>} : vector<64x32xbf16>, vector<32x32xbf16>, vector<64x32xf32> -> vector<64x32xf32>
    %c1_14 = arith.constant 1 : index
    %c0_15 = arith.constant 0 : index
    %c0_16 = arith.constant 0 : index
    %14 = vector.load %arg6[%c1_14, %c0_15, %c0_16] : memref<4x1x32xf32, #tpu.memory_space<vmem>>, vector<1x1x32xf32>
    %15 = vector.shape_cast %14 : vector<1x1x32xf32> to vector<1x32xf32>
    %16 = vector.broadcast %15 : vector<1x32xf32> to vector<64x32xf32>
    %17 = arith.addf %13, %16 : vector<64x32xf32>
    %18 = vector.shape_cast %17 : vector<64x32xf32> to vector<8x8x32xf32>
    %c0_17 = arith.constant 0 : index
    %c0_18 = arith.constant 0 : index
    %c0_19 = arith.constant 0 : index
    %19 = vector.load %arg14[%c0_17, %c0_18, %c0_19] : memref<8x8x32xf32, #tpu.memory_space<vmem>>, vector<8x8x32xf32>
    tpu.vector_store %arg14[%c0_17, %c0_18, %c0_19], %18 {strides = array<i32>} : memref<8x8x32xf32, #tpu.memory_space<vmem>>, vector<8x8x32xf32>,
    %c2 = arith.constant 2 : index
    %c0_20 = arith.constant 0 : index
    %c0_21 = arith.constant 0 : index
    %20 = vector.load %arg4[%c2, %c0_20, %c0_21] : memref<4x32x32xbf16, #tpu.memory_space<vmem>>, vector<1x32x32xbf16>
    %21 = vector.shape_cast %20 : vector<1x32x32xbf16> to vector<32x32xbf16>
    %cst_22 = arith.constant dense<0.000000e+00> : vector<64x32xf32>
    %22 = tpu.matmul %1, %21, %cst_22 {dimension_numbers = #tpu.dot_dimension_numbers<[1], [0], [0], [1], [0, 0, 1, 1], [], []>} : vector<64x32xbf16>, vector<32x32xbf16>, vector<64x32xf32> -> vector<64x32xf32>
    %c2_23 = arith.constant 2 : index
    %c0_24 = arith.constant 0 : index
    %c0_25 = arith.constant 0 : index
    %23 = vector.load %arg6[%c2_23, %c0_24, %c0_25] : memref<4x1x32xf32, #tpu.memory_space<vmem>>, vector<1x1x32xf32>
    %24 = vector.shape_cast %23 : vector<1x1x32xf32> to vector<1x32xf32>
    %25 = vector.broadcast %24 : vector<1x32xf32> to vector<64x32xf32>
    %26 = arith.addf %22, %25 : vector<64x32xf32>
    %27 = vector.shape_cast %26 : vector<64x32xf32> to vector<8x8x32xf32>
    %c0_26 = arith.constant 0 : index
    %c0_27 = arith.constant 0 : index
    %c0_28 = arith.constant 0 : index
    %28 = vector.load %arg15[%c0_26, %c0_27, %c0_28] : memref<8x8x32xf32, #tpu.memory_space<vmem>>, vector<8x8x32xf32>
    tpu.vector_store %arg15[%c0_26, %c0_27, %c0_28], %27 {strides = array<i32>} : memref<8x8x32xf32, #tpu.memory_space<vmem>>, vector<8x8x32xf32>,
    %c3 = arith.constant 3 : index
    %c0_29 = arith.constant 0 : index
    %c0_30 = arith.constant 0 : index
    %29 = vector.load %arg4[%c3, %c0_29, %c0_30] : memref<4x32x32xbf16, #tpu.memory_space<vmem>>, vector<1x32x32xbf16>
    %30 = vector.shape_cast %29 : vector<1x32x32xbf16> to vector<32x32xbf16>
    %cst_31 = arith.constant dense<0.000000e+00> : vector<64x32xf32>
    %31 = tpu.matmul %1, %30, %cst_31 {dimension_numbers = #tpu.dot_dimension_numbers<[1], [0], [0], [1], [0, 0, 1, 1], [], []>} : vector<64x32xbf16>, vector<32x32xbf16>, vector<64x32xf32> -> vector<64x32xf32>
    %c3_32 = arith.constant 3 : index
    %c0_33 = arith.constant 0 : index
    %c0_34 = arith.constant 0 : index
    %32 = vector.load %arg6[%c3_32, %c0_33, %c0_34] : memref<4x1x32xf32, #tpu.memory_space<vmem>>, vector<1x1x32xf32>
    %33 = vector.shape_cast %32 : vector<1x1x32xf32> to vector<1x32xf32>
    %34 = vector.broadcast %33 : vector<1x32xf32> to vector<64x32xf32>
    %35 = arith.addf %31, %34 : vector<64x32xf32>
    %36 = vector.shape_cast %35 : vector<64x32xf32> to vector<8x8x32xf32>
    %c0_35 = arith.constant 0 : index
    %c0_36 = arith.constant 0 : index
    %c0_37 = arith.constant 0 : index
    %37 = vector.load %arg16[%c0_35, %c0_36, %c0_37] : memref<8x8x32xf32, #tpu.memory_space<vmem>>, vector<8x8x32xf32>
    tpu.vector_store %arg16[%c0_35, %c0_36, %c0_37], %36 {strides = array<i32>} : memref<8x8x32xf32, #tpu.memory_space<vmem>>, vector<8x8x32xf32>,
    %c0_38 = arith.constant 0 : index
    %c0_39 = arith.constant 0 : index
    %c0_40 = arith.constant 0 : index
    %38 = vector.load %arg5[%c0_38, %c0_39, %c0_40] : memref<4x32x32xbf16, #tpu.memory_space<vmem>>, vector<1x32x32xbf16>
    %39 = vector.shape_cast %38 : vector<1x32x32xbf16> to vector<32x32xbf16>
    %c1_41 = arith.constant 1 : index
    %c0_42 = arith.constant 0 : index
    %c0_43 = arith.constant 0 : index
    %40 = vector.load %arg5[%c1_41, %c0_42, %c0_43] : memref<4x32x32xbf16, #tpu.memory_space<vmem>>, vector<1x32x32xbf16>
    %41 = vector.shape_cast %40 : vector<1x32x32xbf16> to vector<32x32xbf16>
    %c2_44 = arith.constant 2 : index
    %c0_45 = arith.constant 0 : index
    %c0_46 = arith.constant 0 : index
    %42 = vector.load %arg5[%c2_44, %c0_45, %c0_46] : memref<4x32x32xbf16, #tpu.memory_space<vmem>>, vector<1x32x32xbf16>
    %43 = vector.shape_cast %42 : vector<1x32x32xbf16> to vector<32x32xbf16>
    %c3_47 = arith.constant 3 : index
    %c0_48 = arith.constant 0 : index
    %c0_49 = arith.constant 0 : index
    %44 = vector.load %arg5[%c3_47, %c0_48, %c0_49] : memref<4x32x32xbf16, #tpu.memory_space<vmem>>, vector<1x32x32xbf16>
    %45 = vector.shape_cast %44 : vector<1x32x32xbf16> to vector<32x32xbf16>
    %c0_50 = arith.constant 0 : index
    %c0_51 = arith.constant 0 : index
    %c0_52 = arith.constant 0 : index
    %46 = vector.load %arg2[%c0_50, %c0_51, %c0_52] : memref<2x8x32xf32, #tpu.memory_space<vmem>>, vector<1x8x32xf32>
    %47 = vector.shape_cast %46 : vector<1x8x32xf32> to vector<8x32xf32>
    %c0_53 = arith.constant 0 : index
    %c0_54 = arith.constant 0 : index
    %c0_55 = arith.constant 0 : index
    %48 = vector.load %arg3[%c0_53, %c0_54, %c0_55] : memref<2x8x32xf32, #tpu.memory_space<vmem>>, vector<1x8x32xf32>
    %49 = vector.shape_cast %48 : vector<1x8x32xf32> to vector<8x32xf32>
    %c0_i32 = arith.constant 0 : i32
    %50 = arith.truncf %47 : vector<8x32xf32> to vector<8x32xbf16>
    %51 = arith.index_cast %c0_i32 : i32 to index
    %c0_56 = arith.constant 0 : index
    %c0_57 = arith.constant 0 : index
    %52 = vector.load %arg13[%51, %c0_56, %c0_57] : memref<8x8x32xf32, #tpu.memory_space<vmem>>, vector<1x8x32xf32>
    %53 = vector.shape_cast %52 : vector<1x8x32xf32> to vector<8x32xf32>
    %cst_58 = arith.constant dense<0.000000e+00> : vector<8x32xf32>
    %54 = tpu.matmul %50, %39, %cst_58 {dimension_numbers = #tpu.dot_dimension_numbers<[1], [0], [0], [1], [0, 0, 1, 1], [], []>} : vector<8x32xbf16>, vector<32x32xbf16>, vector<8x32xf32> -> vector<8x32xf32>
    %55 = arith.addf %53, %54 : vector<8x32xf32>
    %56 = arith.index_cast %c0_i32 : i32 to index
    %c0_59 = arith.constant 0 : index
    %c0_60 = arith.constant 0 : index
    %57 = vector.load %arg14[%56, %c0_59, %c0_60] : memref<8x8x32xf32, #tpu.memory_space<vmem>>, vector<1x8x32xf32>
    %58 = vector.shape_cast %57 : vector<1x8x32xf32> to vector<8x32xf32>
    %cst_61 = arith.constant dense<0.000000e+00> : vector<8x32xf32>
    %59 = tpu.matmul %50, %41, %cst_61 {dimension_numbers = #tpu.dot_dimension_numbers<[1], [0], [0], [1], [0, 0, 1, 1], [], []>} : vector<8x32xbf16>, vector<32x32xbf16>, vector<8x32xf32> -> vector<8x32xf32>
    %60 = arith.addf %58, %59 : vector<8x32xf32>
    %61 = arith.index_cast %c0_i32 : i32 to index
    %c0_62 = arith.constant 0 : index
    %c0_63 = arith.constant 0 : index
    %62 = vector.load %arg15[%61, %c0_62, %c0_63] : memref<8x8x32xf32, #tpu.memory_space<vmem>>, vector<1x8x32xf32>
    %63 = vector.shape_cast %62 : vector<1x8x32xf32> to vector<8x32xf32>
    %cst_64 = arith.constant dense<0.000000e+00> : vector<8x32xf32>
    %64 = tpu.matmul %50, %43, %cst_64 {dimension_numbers = #tpu.dot_dimension_numbers<[1], [0], [0], [1], [0, 0, 1, 1], [], []>} : vector<8x32xbf16>, vector<32x32xbf16>, vector<8x32xf32> -> vector<8x32xf32>
    %65 = arith.addf %63, %64 : vector<8x32xf32>
    %66 = arith.index_cast %c0_i32 : i32 to index
    %c0_65 = arith.constant 0 : index
    %c0_66 = arith.constant 0 : index
    %67 = vector.load %arg16[%66, %c0_65, %c0_66] : memref<8x8x32xf32, #tpu.memory_space<vmem>>, vector<1x8x32xf32>
    %68 = vector.shape_cast %67 : vector<1x8x32xf32> to vector<8x32xf32>
    %cst_67 = arith.constant dense<0.000000e+00> : vector<8x32xf32>
    %69 = tpu.matmul %50, %45, %cst_67 {dimension_numbers = #tpu.dot_dimension_numbers<[1], [0], [0], [1], [0, 0, 1, 1], [], []>} : vector<8x32xbf16>, vector<32x32xbf16>, vector<8x32xf32> -> vector<8x32xf32>
    %70 = arith.addf %68, %69 : vector<8x32xf32>
    %71 = arith.negf %55 : vector<8x32xf32>
    %72 = math.exp %71 : vector<8x32xf32>
    %cst_68 = arith.constant 1.000000e+00 : f32
    %73 = vector.broadcast %cst_68 : f32 to vector<8x32xf32>
    %74 = arith.addf %73, %72 : vector<8x32xf32>
    %75 = arith.divf %73, %74 : vector<8x32xf32>
    %76 = arith.negf %60 : vector<8x32xf32>
    %77 = math.exp %76 : vector<8x32xf32>
    %cst_69 = arith.constant 1.000000e+00 : f32
    %78 = vector.broadcast %cst_69 : f32 to vector<8x32xf32>
    %79 = arith.addf %78, %77 : vector<8x32xf32>
    %80 = arith.divf %78, %79 : vector<8x32xf32>
    %81 = math.tanh %65 : vector<8x32xf32>
    %82 = arith.negf %70 : vector<8x32xf32>
    %83 = math.exp %82 : vector<8x32xf32>
    %cst_70 = arith.constant 1.000000e+00 : f32
    %84 = vector.broadcast %cst_70 : f32 to vector<8x32xf32>
    %85 = arith.addf %84, %83 : vector<8x32xf32>
    %86 = arith.divf %84, %85 : vector<8x32xf32>
    %87 = arith.mulf %80, %49 : vector<8x32xf32>
    %88 = arith.mulf %75, %81 : vector<8x32xf32>
    %89 = arith.addf %87, %88 : vector<8x32xf32>
    %90 = math.tanh %89 : vector<8x32xf32>
    %91 = arith.mulf %86, %90 : vector<8x32xf32>
    %92 = arith.index_cast %c0_i32 : i32 to index
    %c0_71 = arith.constant 0 : index
    %c0_72 = arith.constant 0 : index
    %93 = vector.load %arg10[%92, %c0_71, %c0_72] : memref<8x8x32xf32, #tpu.memory_space<vmem>>, vector<1x8x32xf32>
    %94 = vector.shape_cast %93 : vector<1x8x32xf32> to vector<8x32xf32>
    %95 = vector.shape_cast %91 : vector<8x32xf32> to vector<1x8x32xf32>
    tpu.vector_store %arg10[%92, %c0_71, %c0_72], %95 {strides = array<i32>} : memref<8x8x32xf32, #tpu.memory_space<vmem>>, vector<1x8x32xf32>,
    %c1_i32 = arith.constant 1 : i32
    %96 = arith.truncf %91 : vector<8x32xf32> to vector<8x32xbf16>
    %97 = arith.index_cast %c1_i32 : i32 to index
    %c0_73 = arith.constant 0 : index
    %c0_74 = arith.constant 0 : index
    %98 = vector.load %arg13[%97, %c0_73, %c0_74] : memref<8x8x32xf32, #tpu.memory_space<vmem>>, vector<1x8x32xf32>
    %99 = vector.shape_cast %98 : vector<1x8x32xf32> to vector<8x32xf32>
    %cst_75 = arith.constant dense<0.000000e+00> : vector<8x32xf32>
    %100 = tpu.matmul %96, %39, %cst_75 {dimension_numbers = #tpu.dot_dimension_numbers<[1], [0], [0], [1], [0, 0, 1, 1], [], []>} : vector<8x32xbf16>, vector<32x32xbf16>, vector<8x32xf32> -> vector<8x32xf32>
    %101 = arith.addf %99, %100 : vector<8x32xf32>
    %102 = arith.index_cast %c1_i32 : i32 to index
    %c0_76 = arith.constant 0 : index
    %c0_77 = arith.constant 0 : index
    %103 = vector.load %arg14[%102, %c0_76, %c0_77] : memref<8x8x32xf32, #tpu.memory_space<vmem>>, vector<1x8x32xf32>
    %104 = vector.shape_cast %103 : vector<1x8x32xf32> to vector<8x32xf32>
    %cst_78 = arith.constant dense<0.000000e+00> : vector<8x32xf32>
    %105 = tpu.matmul %96, %41, %cst_78 {dimension_numbers = #tpu.dot_dimension_numbers<[1], [0], [0], [1], [0, 0, 1, 1], [], []>} : vector<8x32xbf16>, vector<32x32xbf16>, vector<8x32xf32> -> vector<8x32xf32>
    %106 = arith.addf %104, %105 : vector<8x32xf32>
    %107 = arith.index_cast %c1_i32 : i32 to index
    %c0_79 = arith.constant 0 : index
    %c0_80 = arith.constant 0 : index
    %108 = vector.load %arg15[%107, %c0_79, %c0_80] : memref<8x8x32xf32, #tpu.memory_space<vmem>>, vector<1x8x32xf32>
    %109 = vector.shape_cast %108 : vector<1x8x32xf32> to vector<8x32xf32>
    %cst_81 = arith.constant dense<0.000000e+00> : vector<8x32xf32>
    %110 = tpu.matmul %96, %43, %cst_81 {dimension_numbers = #tpu.dot_dimension_numbers<[1], [0], [0], [1], [0, 0, 1, 1], [], []>} : vector<8x32xbf16>, vector<32x32xbf16>, vector<8x32xf32> -> vector<8x32xf32>
    %111 = arith.addf %109, %110 : vector<8x32xf32>
    %112 = arith.index_cast %c1_i32 : i32 to index
    %c0_82 = arith.constant 0 : index
    %c0_83 = arith.constant 0 : index
    %113 = vector.load %arg16[%112, %c0_82, %c0_83] : memref<8x8x32xf32, #tpu.memory_space<vmem>>, vector<1x8x32xf32>
    %114 = vector.shape_cast %113 : vector<1x8x32xf32> to vector<8x32xf32>
    %cst_84 = arith.constant dense<0.000000e+00> : vector<8x32xf32>
    %115 = tpu.matmul %96, %45, %cst_84 {dimension_numbers = #tpu.dot_dimension_numbers<[1], [0], [0], [1], [0, 0, 1, 1], [], []>} : vector<8x32xbf16>, vector<32x32xbf16>, vector<8x32xf32> -> vector<8x32xf32>
    %116 = arith.addf %114, %115 : vector<8x32xf32>
    %117 = arith.negf %101 : vector<8x32xf32>
    %118 = math.exp %117 : vector<8x32xf32>
    %cst_85 = arith.constant 1.000000e+00 : f32
    %119 = vector.broadcast %cst_85 : f32 to vector<8x32xf32>
    %120 = arith.addf %119, %118 : vector<8x32xf32>
    %121 = arith.divf %119, %120 : vector<8x32xf32>
    %122 = arith.negf %106 : vector<8x32xf32>
    %123 = math.exp %122 : vector<8x32xf32>
    %cst_86 = arith.constant 1.000000e+00 : f32
    %124 = vector.broadcast %cst_86 : f32 to vector<8x32xf32>
    %125 = arith.addf %124, %123 : vector<8x32xf32>
    %126 = arith.divf %124, %125 : vector<8x32xf32>
    %127 = math.tanh %111 : vector<8x32xf32>
    %128 = arith.negf %116 : vector<8x32xf32>
    %129 = math.exp %128 : vector<8x32xf32>
    %cst_87 = arith.constant 1.000000e+00 : f32
    %130 = vector.broadcast %cst_87 : f32 to vector<8x32xf32>
    %131 = arith.addf %130, %129 : vector<8x32xf32>
    %132 = arith.divf %130, %131 : vector<8x32xf32>
    %133 = arith.mulf %126, %89 : vector<8x32xf32>
    %134 = arith.mulf %121, %127 : vector<8x32xf32>
    %135 = arith.addf %133, %134 : vector<8x32xf32>
    %136 = math.tanh %135 : vector<8x32xf32>
    %137 = arith.mulf %132, %136 : vector<8x32xf32>
    %138 = arith.index_cast %c1_i32 : i32 to index
    %c0_88 = arith.constant 0 : index
    %c0_89 = arith.constant 0 : index
    %139 = vector.load %arg10[%138, %c0_88, %c0_89] : memref<8x8x32xf32, #tpu.memory_space<vmem>>, vector<1x8x32xf32>
    %140 = vector.shape_cast %139 : vector<1x8x32xf32> to vector<8x32xf32>
    %141 = vector.shape_cast %137 : vector<8x32xf32> to vector<1x8x32xf32>
    tpu.vector_store %arg10[%138, %c0_88, %c0_89], %141 {strides = array<i32>} : memref<8x8x32xf32, #tpu.memory_space<vmem>>, vector<1x8x32xf32>,
    %c2_i32 = arith.constant 2 : i32
    %142 = arith.truncf %137 : vector<8x32xf32> to vector<8x32xbf16>
    %143 = arith.index_cast %c2_i32 : i32 to index
    %c0_90 = arith.constant 0 : index
    %c0_91 = arith.constant 0 : index
    %144 = vector.load %arg13[%143, %c0_90, %c0_91] : memref<8x8x32xf32, #tpu.memory_space<vmem>>, vector<1x8x32xf32>
    %145 = vector.shape_cast %144 : vector<1x8x32xf32> to vector<8x32xf32>
    %cst_92 = arith.constant dense<0.000000e+00> : vector<8x32xf32>
    %146 = tpu.matmul %142, %39, %cst_92 {dimension_numbers = #tpu.dot_dimension_numbers<[1], [0], [0], [1], [0, 0, 1, 1], [], []>} : vector<8x32xbf16>, vector<32x32xbf16>, vector<8x32xf32> -> vector<8x32xf32>
    %147 = arith.addf %145, %146 : vector<8x32xf32>
    %148 = arith.index_cast %c2_i32 : i32 to index
    %c0_93 = arith.constant 0 : index
    %c0_94 = arith.constant 0 : index
    %149 = vector.load %arg14[%148, %c0_93, %c0_94] : memref<8x8x32xf32, #tpu.memory_space<vmem>>, vector<1x8x32xf32>
    %150 = vector.shape_cast %149 : vector<1x8x32xf32> to vector<8x32xf32>
    %cst_95 = arith.constant dense<0.000000e+00> : vector<8x32xf32>
    %151 = tpu.matmul %142, %41, %cst_95 {dimension_numbers = #tpu.dot_dimension_numbers<[1], [0], [0], [1], [0, 0, 1, 1], [], []>} : vector<8x32xbf16>, vector<32x32xbf16>, vector<8x32xf32> -> vector<8x32xf32>
    %152 = arith.addf %150, %151 : vector<8x32xf32>
    %153 = arith.index_cast %c2_i32 : i32 to index
    %c0_96 = arith.constant 0 : index
    %c0_97 = arith.constant 0 : index
    %154 = vector.load %arg15[%153, %c0_96, %c0_97] : memref<8x8x32xf32, #tpu.memory_space<vmem>>, vector<1x8x32xf32>
    %155 = vector.shape_cast %154 : vector<1x8x32xf32> to vector<8x32xf32>
    %cst_98 = arith.constant dense<0.000000e+00> : vector<8x32xf32>
    %156 = tpu.matmul %142, %43, %cst_98 {dimension_numbers = #tpu.dot_dimension_numbers<[1], [0], [0], [1], [0, 0, 1, 1], [], []>} : vector<8x32xbf16>, vector<32x32xbf16>, vector<8x32xf32> -> vector<8x32xf32>
    %157 = arith.addf %155, %156 : vector<8x32xf32>
    %158 = arith.index_cast %c2_i32 : i32 to index
    %c0_99 = arith.constant 0 : index
    %c0_100 = arith.constant 0 : index
    %159 = vector.load %arg16[%158, %c0_99, %c0_100] : memref<8x8x32xf32, #tpu.memory_space<vmem>>, vector<1x8x32xf32>
    %160 = vector.shape_cast %159 : vector<1x8x32xf32> to vector<8x32xf32>
    %cst_101 = arith.constant dense<0.000000e+00> : vector<8x32xf32>
    %161 = tpu.matmul %142, %45, %cst_101 {dimension_numbers = #tpu.dot_dimension_numbers<[1], [0], [0], [1], [0, 0, 1, 1], [], []>} : vector<8x32xbf16>, vector<32x32xbf16>, vector<8x32xf32> -> vector<8x32xf32>
    %162 = arith.addf %160, %161 : vector<8x32xf32>
    %163 = arith.negf %147 : vector<8x32xf32>
    %164 = math.exp %163 : vector<8x32xf32>
    %cst_102 = arith.constant 1.000000e+00 : f32
    %165 = vector.broadcast %cst_102 : f32 to vector<8x32xf32>
    %166 = arith.addf %165, %164 : vector<8x32xf32>
    %167 = arith.divf %165, %166 : vector<8x32xf32>
    %168 = arith.negf %152 : vector<8x32xf32>
    %169 = math.exp %168 : vector<8x32xf32>
    %cst_103 = arith.constant 1.000000e+00 : f32
    %170 = vector.broadcast %cst_103 : f32 to vector<8x32xf32>
    %171 = arith.addf %170, %169 : vector<8x32xf32>
    %172 = arith.divf %170, %171 : vector<8x32xf32>
    %173 = math.tanh %157 : vector<8x32xf32>
    %174 = arith.negf %162 : vector<8x32xf32>
    %175 = math.exp %174 : vector<8x32xf32>
    %cst_104 = arith.constant 1.000000e+00 : f32
    %176 = vector.broadcast %cst_104 : f32 to vector<8x32xf32>
    %177 = arith.addf %176, %175 : vector<8x32xf32>
    %178 = arith.divf %176, %177 : vector<8x32xf32>
    %179 = arith.mulf %172, %135 : vector<8x32xf32>
    %180 = arith.mulf %167, %173 : vector<8x32xf32>
    %181 = arith.addf %179, %180 : vector<8x32xf32>
    %182 = math.tanh %181 : vector<8x32xf32>
    %183 = arith.mulf %178, %182 : vector<8x32xf32>
    %184 = arith.index_cast %c2_i32 : i32 to index
    %c0_105 = arith.constant 0 : index
    %c0_106 = arith.constant 0 : index
    %185 = vector.load %arg10[%184, %c0_105, %c0_106] : memref<8x8x32xf32, #tpu.memory_space<vmem>>, vector<1x8x32xf32>
    %186 = vector.shape_cast %185 : vector<1x8x32xf32> to vector<8x32xf32>
    %187 = vector.shape_cast %183 : vector<8x32xf32> to vector<1x8x32xf32>
    tpu.vector_store %arg10[%184, %c0_105, %c0_106], %187 {strides = array<i32>} : memref<8x8x32xf32, #tpu.memory_space<vmem>>, vector<1x8x32xf32>,
    %c3_i32 = arith.constant 3 : i32
    %188 = arith.truncf %183 : vector<8x32xf32> to vector<8x32xbf16>
    %189 = arith.index_cast %c3_i32 : i32 to index
    %c0_107 = arith.constant 0 : index
    %c0_108 = arith.constant 0 : index
    %190 = vector.load %arg13[%189, %c0_107, %c0_108] : memref<8x8x32xf32, #tpu.memory_space<vmem>>, vector<1x8x32xf32>
    %191 = vector.shape_cast %190 : vector<1x8x32xf32> to vector<8x32xf32>
    %cst_109 = arith.constant dense<0.000000e+00> : vector<8x32xf32>
    %192 = tpu.matmul %188, %39, %cst_109 {dimension_numbers = #tpu.dot_dimension_numbers<[1], [0], [0], [1], [0, 0, 1, 1], [], []>} : vector<8x32xbf16>, vector<32x32xbf16>, vector<8x32xf32> -> vector<8x32xf32>
    %193 = arith.addf %191, %192 : vector<8x32xf32>
    %194 = arith.index_cast %c3_i32 : i32 to index
    %c0_110 = arith.constant 0 : index
    %c0_111 = arith.constant 0 : index
    %195 = vector.load %arg14[%194, %c0_110, %c0_111] : memref<8x8x32xf32, #tpu.memory_space<vmem>>, vector<1x8x32xf32>
    %196 = vector.shape_cast %195 : vector<1x8x32xf32> to vector<8x32xf32>
    %cst_112 = arith.constant dense<0.000000e+00> : vector<8x32xf32>
    %197 = tpu.matmul %188, %41, %cst_112 {dimension_numbers = #tpu.dot_dimension_numbers<[1], [0], [0], [1], [0, 0, 1, 1], [], []>} : vector<8x32xbf16>, vector<32x32xbf16>, vector<8x32xf32> -> vector<8x32xf32>
    %198 = arith.addf %196, %197 : vector<8x32xf32>
    %199 = arith.index_cast %c3_i32 : i32 to index
    %c0_113 = arith.constant 0 : index
    %c0_114 = arith.constant 0 : index
    %200 = vector.load %arg15[%199, %c0_113, %c0_114] : memref<8x8x32xf32, #tpu.memory_space<vmem>>, vector<1x8x32xf32>
    %201 = vector.shape_cast %200 : vector<1x8x32xf32> to vector<8x32xf32>
    %cst_115 = arith.constant dense<0.000000e+00> : vector<8x32xf32>
    %202 = tpu.matmul %188, %43, %cst_115 {dimension_numbers = #tpu.dot_dimension_numbers<[1], [0], [0], [1], [0, 0, 1, 1], [], []>} : vector<8x32xbf16>, vector<32x32xbf16>, vector<8x32xf32> -> vector<8x32xf32>
    %203 = arith.addf %201, %202 : vector<8x32xf32>
    %204 = arith.index_cast %c3_i32 : i32 to index
    %c0_116 = arith.constant 0 : index
    %c0_117 = arith.constant 0 : index
    %205 = vector.load %arg16[%204, %c0_116, %c0_117] : memref<8x8x32xf32, #tpu.memory_space<vmem>>, vector<1x8x32xf32>
    %206 = vector.shape_cast %205 : vector<1x8x32xf32> to vector<8x32xf32>
    %cst_118 = arith.constant dense<0.000000e+00> : vector<8x32xf32>
    %207 = tpu.matmul %188, %45, %cst_118 {dimension_numbers = #tpu.dot_dimension_numbers<[1], [0], [0], [1], [0, 0, 1, 1], [], []>} : vector<8x32xbf16>, vector<32x32xbf16>, vector<8x32xf32> -> vector<8x32xf32>
    %208 = arith.addf %206, %207 : vector<8x32xf32>
    %209 = arith.negf %193 : vector<8x32xf32>
    %210 = math.exp %209 : vector<8x32xf32>
    %cst_119 = arith.constant 1.000000e+00 : f32
    %211 = vector.broadcast %cst_119 : f32 to vector<8x32xf32>
    %212 = arith.addf %211, %210 : vector<8x32xf32>
    %213 = arith.divf %211, %212 : vector<8x32xf32>
    %214 = arith.negf %198 : vector<8x32xf32>
    %215 = math.exp %214 : vector<8x32xf32>
    %cst_120 = arith.constant 1.000000e+00 : f32
    %216 = vector.broadcast %cst_120 : f32 to vector<8x32xf32>
    %217 = arith.addf %216, %215 : vector<8x32xf32>
    %218 = arith.divf %216, %217 : vector<8x32xf32>
    %219 = math.tanh %203 : vector<8x32xf32>
    %220 = arith.negf %208 : vector<8x32xf32>
    %221 = math.exp %220 : vector<8x32xf32>
    %cst_121 = arith.constant 1.000000e+00 : f32
    %222 = vector.broadcast %cst_121 : f32 to vector<8x32xf32>
    %223 = arith.addf %222, %221 : vector<8x32xf32>
    %224 = arith.divf %222, %223 : vector<8x32xf32>
    %225 = arith.mulf %218, %181 : vector<8x32xf32>
    %226 = arith.mulf %213, %219 : vector<8x32xf32>
    %227 = arith.addf %225, %226 : vector<8x32xf32>
    %228 = math.tanh %227 : vector<8x32xf32>
    %229 = arith.mulf %224, %228 : vector<8x32xf32>
    %230 = arith.index_cast %c3_i32 : i32 to index
    %c0_122 = arith.constant 0 : index
    %c0_123 = arith.constant 0 : index
    %231 = vector.load %arg10[%230, %c0_122, %c0_123] : memref<8x8x32xf32, #tpu.memory_space<vmem>>, vector<1x8x32xf32>
    %232 = vector.shape_cast %231 : vector<1x8x32xf32> to vector<8x32xf32>
    %233 = vector.shape_cast %229 : vector<8x32xf32> to vector<1x8x32xf32>
    tpu.vector_store %arg10[%230, %c0_122, %c0_123], %233 {strides = array<i32>} : memref<8x8x32xf32, #tpu.memory_space<vmem>>, vector<1x8x32xf32>,
    %c4_i32 = arith.constant 4 : i32
    %234 = arith.truncf %229 : vector<8x32xf32> to vector<8x32xbf16>
    %235 = arith.index_cast %c4_i32 : i32 to index
    %c0_124 = arith.constant 0 : index
    %c0_125 = arith.constant 0 : index
    %236 = vector.load %arg13[%235, %c0_124, %c0_125] : memref<8x8x32xf32, #tpu.memory_space<vmem>>, vector<1x8x32xf32>
    %237 = vector.shape_cast %236 : vector<1x8x32xf32> to vector<8x32xf32>
    %cst_126 = arith.constant dense<0.000000e+00> : vector<8x32xf32>
    %238 = tpu.matmul %234, %39, %cst_126 {dimension_numbers = #tpu.dot_dimension_numbers<[1], [0], [0], [1], [0, 0, 1, 1], [], []>} : vector<8x32xbf16>, vector<32x32xbf16>, vector<8x32xf32> -> vector<8x32xf32>
    %239 = arith.addf %237, %238 : vector<8x32xf32>
    %240 = arith.index_cast %c4_i32 : i32 to index
    %c0_127 = arith.constant 0 : index
    %c0_128 = arith.constant 0 : index
    %241 = vector.load %arg14[%240, %c0_127, %c0_128] : memref<8x8x32xf32, #tpu.memory_space<vmem>>, vector<1x8x32xf32>
    %242 = vector.shape_cast %241 : vector<1x8x32xf32> to vector<8x32xf32>
    %cst_129 = arith.constant dense<0.000000e+00> : vector<8x32xf32>
    %243 = tpu.matmul %234, %41, %cst_129 {dimension_numbers = #tpu.dot_dimension_numbers<[1], [0], [0], [1], [0, 0, 1, 1], [], []>} : vector<8x32xbf16>, vector<32x32xbf16>, vector<8x32xf32> -> vector<8x32xf32>
    %244 = arith.addf %242, %243 : vector<8x32xf32>
    %245 = arith.index_cast %c4_i32 : i32 to index
    %c0_130 = arith.constant 0 : index
    %c0_131 = arith.constant 0 : index
    %246 = vector.load %arg15[%245, %c0_130, %c0_131] : memref<8x8x32xf32, #tpu.memory_space<vmem>>, vector<1x8x32xf32>
    %247 = vector.shape_cast %246 : vector<1x8x32xf32> to vector<8x32xf32>
    %cst_132 = arith.constant dense<0.000000e+00> : vector<8x32xf32>
    %248 = tpu.matmul %234, %43, %cst_132 {dimension_numbers = #tpu.dot_dimension_numbers<[1], [0], [0], [1], [0, 0, 1, 1], [], []>} : vector<8x32xbf16>, vector<32x32xbf16>, vector<8x32xf32> -> vector<8x32xf32>
    %249 = arith.addf %247, %248 : vector<8x32xf32>
    %250 = arith.index_cast %c4_i32 : i32 to index
    %c0_133 = arith.constant 0 : index
    %c0_134 = arith.constant 0 : index
    %251 = vector.load %arg16[%250, %c0_133, %c0_134] : memref<8x8x32xf32, #tpu.memory_space<vmem>>, vector<1x8x32xf32>
    %252 = vector.shape_cast %251 : vector<1x8x32xf32> to vector<8x32xf32>
    %cst_135 = arith.constant dense<0.000000e+00> : vector<8x32xf32>
    %253 = tpu.matmul %234, %45, %cst_135 {dimension_numbers = #tpu.dot_dimension_numbers<[1], [0], [0], [1], [0, 0, 1, 1], [], []>} : vector<8x32xbf16>, vector<32x32xbf16>, vector<8x32xf32> -> vector<8x32xf32>
    %254 = arith.addf %252, %253 : vector<8x32xf32>
    %255 = arith.negf %239 : vector<8x32xf32>
    %256 = math.exp %255 : vector<8x32xf32>
    %cst_136 = arith.constant 1.000000e+00 : f32
    %257 = vector.broadcast %cst_136 : f32 to vector<8x32xf32>
    %258 = arith.addf %257, %256 : vector<8x32xf32>
    %259 = arith.divf %257, %258 : vector<8x32xf32>
    %260 = arith.negf %244 : vector<8x32xf32>
    %261 = math.exp %260 : vector<8x32xf32>
    %cst_137 = arith.constant 1.000000e+00 : f32
    %262 = vector.broadcast %cst_137 : f32 to vector<8x32xf32>
    %263 = arith.addf %262, %261 : vector<8x32xf32>
    %264 = arith.divf %262, %263 : vector<8x32xf32>
    %265 = math.tanh %249 : vector<8x32xf32>
    %266 = arith.negf %254 : vector<8x32xf32>
    %267 = math.exp %266 : vector<8x32xf32>
    %cst_138 = arith.constant 1.000000e+00 : f32
    %268 = vector.broadcast %cst_138 : f32 to vector<8x32xf32>
    %269 = arith.addf %268, %267 : vector<8x32xf32>
    %270 = arith.divf %268, %269 : vector<8x32xf32>
    %271 = arith.mulf %264, %227 : vector<8x32xf32>
    %272 = arith.mulf %259, %265 : vector<8x32xf32>
    %273 = arith.addf %271, %272 : vector<8x32xf32>
    %274 = math.tanh %273 : vector<8x32xf32>
    %275 = arith.mulf %270, %274 : vector<8x32xf32>
    %276 = arith.index_cast %c4_i32 : i32 to index
    %c0_139 = arith.constant 0 : index
    %c0_140 = arith.constant 0 : index
    %277 = vector.load %arg10[%276, %c0_139, %c0_140] : memref<8x8x32xf32, #tpu.memory_space<vmem>>, vector<1x8x32xf32>
    %278 = vector.shape_cast %277 : vector<1x8x32xf32> to vector<8x32xf32>
    %279 = vector.shape_cast %275 : vector<8x32xf32> to vector<1x8x32xf32>
    tpu.vector_store %arg10[%276, %c0_139, %c0_140], %279 {strides = array<i32>} : memref<8x8x32xf32, #tpu.memory_space<vmem>>, vector<1x8x32xf32>,
    %c5_i32 = arith.constant 5 : i32
    %280 = arith.truncf %275 : vector<8x32xf32> to vector<8x32xbf16>
    %281 = arith.index_cast %c5_i32 : i32 to index
    %c0_141 = arith.constant 0 : index
    %c0_142 = arith.constant 0 : index
    %282 = vector.load %arg13[%281, %c0_141, %c0_142] : memref<8x8x32xf32, #tpu.memory_space<vmem>>, vector<1x8x32xf32>
    %283 = vector.shape_cast %282 : vector<1x8x32xf32> to vector<8x32xf32>
    %cst_143 = arith.constant dense<0.000000e+00> : vector<8x32xf32>
    %284 = tpu.matmul %280, %39, %cst_143 {dimension_numbers = #tpu.dot_dimension_numbers<[1], [0], [0], [1], [0, 0, 1, 1], [], []>} : vector<8x32xbf16>, vector<32x32xbf16>, vector<8x32xf32> -> vector<8x32xf32>
    %285 = arith.addf %283, %284 : vector<8x32xf32>
    %286 = arith.index_cast %c5_i32 : i32 to index
    %c0_144 = arith.constant 0 : index
    %c0_145 = arith.constant 0 : index
    %287 = vector.load %arg14[%286, %c0_144, %c0_145] : memref<8x8x32xf32, #tpu.memory_space<vmem>>, vector<1x8x32xf32>
    %288 = vector.shape_cast %287 : vector<1x8x32xf32> to vector<8x32xf32>
    %cst_146 = arith.constant dense<0.000000e+00> : vector<8x32xf32>
    %289 = tpu.matmul %280, %41, %cst_146 {dimension_numbers = #tpu.dot_dimension_numbers<[1], [0], [0], [1], [0, 0, 1, 1], [], []>} : vector<8x32xbf16>, vector<32x32xbf16>, vector<8x32xf32> -> vector<8x32xf32>
    %290 = arith.addf %288, %289 : vector<8x32xf32>
    %291 = arith.index_cast %c5_i32 : i32 to index
    %c0_147 = arith.constant 0 : index
    %c0_148 = arith.constant 0 : index
    %292 = vector.load %arg15[%291, %c0_147, %c0_148] : memref<8x8x32xf32, #tpu.memory_space<vmem>>, vector<1x8x32xf32>
    %293 = vector.shape_cast %292 : vector<1x8x32xf32> to vector<8x32xf32>
    %cst_149 = arith.constant dense<0.000000e+00> : vector<8x32xf32>
    %294 = tpu.matmul %280, %43, %cst_149 {dimension_numbers = #tpu.dot_dimension_numbers<[1], [0], [0], [1], [0, 0, 1, 1], [], []>} : vector<8x32xbf16>, vector<32x32xbf16>, vector<8x32xf32> -> vector<8x32xf32>
    %295 = arith.addf %293, %294 : vector<8x32xf32>
    %296 = arith.index_cast %c5_i32 : i32 to index
    %c0_150 = arith.constant 0 : index
    %c0_151 = arith.constant 0 : index
    %297 = vector.load %arg16[%296, %c0_150, %c0_151] : memref<8x8x32xf32, #tpu.memory_space<vmem>>, vector<1x8x32xf32>
    %298 = vector.shape_cast %297 : vector<1x8x32xf32> to vector<8x32xf32>
    %cst_152 = arith.constant dense<0.000000e+00> : vector<8x32xf32>
    %299 = tpu.matmul %280, %45, %cst_152 {dimension_numbers = #tpu.dot_dimension_numbers<[1], [0], [0], [1], [0, 0, 1, 1], [], []>} : vector<8x32xbf16>, vector<32x32xbf16>, vector<8x32xf32> -> vector<8x32xf32>
    %300 = arith.addf %298, %299 : vector<8x32xf32>
    %301 = arith.negf %285 : vector<8x32xf32>
    %302 = math.exp %301 : vector<8x32xf32>
    %cst_153 = arith.constant 1.000000e+00 : f32
    %303 = vector.broadcast %cst_153 : f32 to vector<8x32xf32>
    %304 = arith.addf %303, %302 : vector<8x32xf32>
    %305 = arith.divf %303, %304 : vector<8x32xf32>
    %306 = arith.negf %290 : vector<8x32xf32>
    %307 = math.exp %306 : vector<8x32xf32>
    %cst_154 = arith.constant 1.000000e+00 : f32
    %308 = vector.broadcast %cst_154 : f32 to vector<8x32xf32>
    %309 = arith.addf %308, %307 : vector<8x32xf32>
    %310 = arith.divf %308, %309 : vector<8x32xf32>
    %311 = math.tanh %295 : vector<8x32xf32>
    %312 = arith.negf %300 : vector<8x32xf32>
    %313 = math.exp %312 : vector<8x32xf32>
    %cst_155 = arith.constant 1.000000e+00 : f32
    %314 = vector.broadcast %cst_155 : f32 to vector<8x32xf32>
    %315 = arith.addf %314, %313 : vector<8x32xf32>
    %316 = arith.divf %314, %315 : vector<8x32xf32>
    %317 = arith.mulf %310, %273 : vector<8x32xf32>
    %318 = arith.mulf %305, %311 : vector<8x32xf32>
    %319 = arith.addf %317, %318 : vector<8x32xf32>
    %320 = math.tanh %319 : vector<8x32xf32>
    %321 = arith.mulf %316, %320 : vector<8x32xf32>
    %322 = arith.index_cast %c5_i32 : i32 to index
    %c0_156 = arith.constant 0 : index
    %c0_157 = arith.constant 0 : index
    %323 = vector.load %arg10[%322, %c0_156, %c0_157] : memref<8x8x32xf32, #tpu.memory_space<vmem>>, vector<1x8x32xf32>
    %324 = vector.shape_cast %323 : vector<1x8x32xf32> to vector<8x32xf32>
    %325 = vector.shape_cast %321 : vector<8x32xf32> to vector<1x8x32xf32>
    tpu.vector_store %arg10[%322, %c0_156, %c0_157], %325 {strides = array<i32>} : memref<8x8x32xf32, #tpu.memory_space<vmem>>, vector<1x8x32xf32>,
    %c6_i32 = arith.constant 6 : i32
    %326 = arith.truncf %321 : vector<8x32xf32> to vector<8x32xbf16>
    %327 = arith.index_cast %c6_i32 : i32 to index
    %c0_158 = arith.constant 0 : index
    %c0_159 = arith.constant 0 : index
    %328 = vector.load %arg13[%327, %c0_158, %c0_159] : memref<8x8x32xf32, #tpu.memory_space<vmem>>, vector<1x8x32xf32>
    %329 = vector.shape_cast %328 : vector<1x8x32xf32> to vector<8x32xf32>
    %cst_160 = arith.constant dense<0.000000e+00> : vector<8x32xf32>
    %330 = tpu.matmul %326, %39, %cst_160 {dimension_numbers = #tpu.dot_dimension_numbers<[1], [0], [0], [1], [0, 0, 1, 1], [], []>} : vector<8x32xbf16>, vector<32x32xbf16>, vector<8x32xf32> -> vector<8x32xf32>
    %331 = arith.addf %329, %330 : vector<8x32xf32>
    %332 = arith.index_cast %c6_i32 : i32 to index
    %c0_161 = arith.constant 0 : index
    %c0_162 = arith.constant 0 : index
    %333 = vector.load %arg14[%332, %c0_161, %c0_162] : memref<8x8x32xf32, #tpu.memory_space<vmem>>, vector<1x8x32xf32>
    %334 = vector.shape_cast %333 : vector<1x8x32xf32> to vector<8x32xf32>
    %cst_163 = arith.constant dense<0.000000e+00> : vector<8x32xf32>
    %335 = tpu.matmul %326, %41, %cst_163 {dimension_numbers = #tpu.dot_dimension_numbers<[1], [0], [0], [1], [0, 0, 1, 1], [], []>} : vector<8x32xbf16>, vector<32x32xbf16>, vector<8x32xf32> -> vector<8x32xf32>
    %336 = arith.addf %334, %335 : vector<8x32xf32>
    %337 = arith.index_cast %c6_i32 : i32 to index
    %c0_164 = arith.constant 0 : index
    %c0_165 = arith.constant 0 : index
    %338 = vector.load %arg15[%337, %c0_164, %c0_165] : memref<8x8x32xf32, #tpu.memory_space<vmem>>, vector<1x8x32xf32>
    %339 = vector.shape_cast %338 : vector<1x8x32xf32> to vector<8x32xf32>
    %cst_166 = arith.constant dense<0.000000e+00> : vector<8x32xf32>
    %340 = tpu.matmul %326, %43, %cst_166 {dimension_numbers = #tpu.dot_dimension_numbers<[1], [0], [0], [1], [0, 0, 1, 1], [], []>} : vector<8x32xbf16>, vector<32x32xbf16>, vector<8x32xf32> -> vector<8x32xf32>
    %341 = arith.addf %339, %340 : vector<8x32xf32>
    %342 = arith.index_cast %c6_i32 : i32 to index
    %c0_167 = arith.constant 0 : index
    %c0_168 = arith.constant 0 : index
    %343 = vector.load %arg16[%342, %c0_167, %c0_168] : memref<8x8x32xf32, #tpu.memory_space<vmem>>, vector<1x8x32xf32>
    %344 = vector.shape_cast %343 : vector<1x8x32xf32> to vector<8x32xf32>
    %cst_169 = arith.constant dense<0.000000e+00> : vector<8x32xf32>
    %345 = tpu.matmul %326, %45, %cst_169 {dimension_numbers = #tpu.dot_dimension_numbers<[1], [0], [0], [1], [0, 0, 1, 1], [], []>} : vector<8x32xbf16>, vector<32x32xbf16>, vector<8x32xf32> -> vector<8x32xf32>
    %346 = arith.addf %344, %345 : vector<8x32xf32>
    %347 = arith.negf %331 : vector<8x32xf32>
    %348 = math.exp %347 : vector<8x32xf32>
    %cst_170 = arith.constant 1.000000e+00 : f32
    %349 = vector.broadcast %cst_170 : f32 to vector<8x32xf32>
    %350 = arith.addf %349, %348 : vector<8x32xf32>
    %351 = arith.divf %349, %350 : vector<8x32xf32>
    %352 = arith.negf %336 : vector<8x32xf32>
    %353 = math.exp %352 : vector<8x32xf32>
    %cst_171 = arith.constant 1.000000e+00 : f32
    %354 = vector.broadcast %cst_171 : f32 to vector<8x32xf32>
    %355 = arith.addf %354, %353 : vector<8x32xf32>
    %356 = arith.divf %354, %355 : vector<8x32xf32>
    %357 = math.tanh %341 : vector<8x32xf32>
    %358 = arith.negf %346 : vector<8x32xf32>
    %359 = math.exp %358 : vector<8x32xf32>
    %cst_172 = arith.constant 1.000000e+00 : f32
    %360 = vector.broadcast %cst_172 : f32 to vector<8x32xf32>
    %361 = arith.addf %360, %359 : vector<8x32xf32>
    %362 = arith.divf %360, %361 : vector<8x32xf32>
    %363 = arith.mulf %356, %319 : vector<8x32xf32>
    %364 = arith.mulf %351, %357 : vector<8x32xf32>
    %365 = arith.addf %363, %364 : vector<8x32xf32>
    %366 = math.tanh %365 : vector<8x32xf32>
    %367 = arith.mulf %362, %366 : vector<8x32xf32>
    %368 = arith.index_cast %c6_i32 : i32 to index
    %c0_173 = arith.constant 0 : index
    %c0_174 = arith.constant 0 : index
    %369 = vector.load %arg10[%368, %c0_173, %c0_174] : memref<8x8x32xf32, #tpu.memory_space<vmem>>, vector<1x8x32xf32>
    %370 = vector.shape_cast %369 : vector<1x8x32xf32> to vector<8x32xf32>
    %371 = vector.shape_cast %367 : vector<8x32xf32> to vector<1x8x32xf32>
    tpu.vector_store %arg10[%368, %c0_173, %c0_174], %371 {strides = array<i32>} : memref<8x8x32xf32, #tpu.memory_space<vmem>>, vector<1x8x32xf32>,
    %c7_i32 = arith.constant 7 : i32
    %372 = arith.truncf %367 : vector<8x32xf32> to vector<8x32xbf16>
    %373 = arith.index_cast %c7_i32 : i32 to index
    %c0_175 = arith.constant 0 : index
    %c0_176 = arith.constant 0 : index
    %374 = vector.load %arg13[%373, %c0_175, %c0_176] : memref<8x8x32xf32, #tpu.memory_space<vmem>>, vector<1x8x32xf32>
    %375 = vector.shape_cast %374 : vector<1x8x32xf32> to vector<8x32xf32>
    %cst_177 = arith.constant dense<0.000000e+00> : vector<8x32xf32>
    %376 = tpu.matmul %372, %39, %cst_177 {dimension_numbers = #tpu.dot_dimension_numbers<[1], [0], [0], [1], [0, 0, 1, 1], [], []>} : vector<8x32xbf16>, vector<32x32xbf16>, vector<8x32xf32> -> vector<8x32xf32>
    %377 = arith.addf %375, %376 : vector<8x32xf32>
    %378 = arith.index_cast %c7_i32 : i32 to index
    %c0_178 = arith.constant 0 : index
    %c0_179 = arith.constant 0 : index
    %379 = vector.load %arg14[%378, %c0_178, %c0_179] : memref<8x8x32xf32, #tpu.memory_space<vmem>>, vector<1x8x32xf32>
    %380 = vector.shape_cast %379 : vector<1x8x32xf32> to vector<8x32xf32>
    %cst_180 = arith.constant dense<0.000000e+00> : vector<8x32xf32>
    %381 = tpu.matmul %372, %41, %cst_180 {dimension_numbers = #tpu.dot_dimension_numbers<[1], [0], [0], [1], [0, 0, 1, 1], [], []>} : vector<8x32xbf16>, vector<32x32xbf16>, vector<8x32xf32> -> vector<8x32xf32>
    %382 = arith.addf %380, %381 : vector<8x32xf32>
    %383 = arith.index_cast %c7_i32 : i32 to index
    %c0_181 = arith.constant 0 : index
    %c0_182 = arith.constant 0 : index
    %384 = vector.load %arg15[%383, %c0_181, %c0_182] : memref<8x8x32xf32, #tpu.memory_space<vmem>>, vector<1x8x32xf32>
    %385 = vector.shape_cast %384 : vector<1x8x32xf32> to vector<8x32xf32>
    %cst_183 = arith.constant dense<0.000000e+00> : vector<8x32xf32>
    %386 = tpu.matmul %372, %43, %cst_183 {dimension_numbers = #tpu.dot_dimension_numbers<[1], [0], [0], [1], [0, 0, 1, 1], [], []>} : vector<8x32xbf16>, vector<32x32xbf16>, vector<8x32xf32> -> vector<8x32xf32>
    %387 = arith.addf %385, %386 : vector<8x32xf32>
    %388 = arith.index_cast %c7_i32 : i32 to index
    %c0_184 = arith.constant 0 : index
    %c0_185 = arith.constant 0 : index
    %389 = vector.load %arg16[%388, %c0_184, %c0_185] : memref<8x8x32xf32, #tpu.memory_space<vmem>>, vector<1x8x32xf32>
    %390 = vector.shape_cast %389 : vector<1x8x32xf32> to vector<8x32xf32>
    %cst_186 = arith.constant dense<0.000000e+00> : vector<8x32xf32>
    %391 = tpu.matmul %372, %45, %cst_186 {dimension_numbers = #tpu.dot_dimension_numbers<[1], [0], [0], [1], [0, 0, 1, 1], [], []>} : vector<8x32xbf16>, vector<32x32xbf16>, vector<8x32xf32> -> vector<8x32xf32>
    %392 = arith.addf %390, %391 : vector<8x32xf32>
    %393 = arith.negf %377 : vector<8x32xf32>
    %394 = math.exp %393 : vector<8x32xf32>
    %cst_187 = arith.constant 1.000000e+00 : f32
    %395 = vector.broadcast %cst_187 : f32 to vector<8x32xf32>
    %396 = arith.addf %395, %394 : vector<8x32xf32>
    %397 = arith.divf %395, %396 : vector<8x32xf32>
    %398 = arith.negf %382 : vector<8x32xf32>
    %399 = math.exp %398 : vector<8x32xf32>
    %cst_188 = arith.constant 1.000000e+00 : f32
    %400 = vector.broadcast %cst_188 : f32 to vector<8x32xf32>
    %401 = arith.addf %400, %399 : vector<8x32xf32>
    %402 = arith.divf %400, %401 : vector<8x32xf32>
    %403 = math.tanh %387 : vector<8x32xf32>
    %404 = arith.negf %392 : vector<8x32xf32>
    %405 = math.exp %404 : vector<8x32xf32>
    %cst_189 = arith.constant 1.000000e+00 : f32
    %406 = vector.broadcast %cst_189 : f32 to vector<8x32xf32>
    %407 = arith.addf %406, %405 : vector<8x32xf32>
    %408 = arith.divf %406, %407 : vector<8x32xf32>
    %409 = arith.mulf %402, %365 : vector<8x32xf32>
    %410 = arith.mulf %397, %403 : vector<8x32xf32>
    %411 = arith.addf %409, %410 : vector<8x32xf32>
    %412 = math.tanh %411 : vector<8x32xf32>
    %413 = arith.mulf %408, %412 : vector<8x32xf32>
    %414 = arith.index_cast %c7_i32 : i32 to index
    %c0_190 = arith.constant 0 : index
    %c0_191 = arith.constant 0 : index
    %415 = vector.load %arg10[%414, %c0_190, %c0_191] : memref<8x8x32xf32, #tpu.memory_space<vmem>>, vector<1x8x32xf32>
    %416 = vector.shape_cast %415 : vector<1x8x32xf32> to vector<8x32xf32>
    %417 = vector.shape_cast %413 : vector<8x32xf32> to vector<1x8x32xf32>
    tpu.vector_store %arg10[%414, %c0_190, %c0_191], %417 {strides = array<i32>} : memref<8x8x32xf32, #tpu.memory_space<vmem>>, vector<1x8x32xf32>,
    %c8_i32 = arith.constant 8 : i32
    %c0_192 = arith.constant 0 : index
    %c0_193 = arith.constant 0 : index
    %c0_194 = arith.constant 0 : index
    %418 = vector.load %arg11[%c0_192, %c0_193, %c0_194] : memref<2x8x32xf32, #tpu.memory_space<vmem>>, vector<1x8x32xf32>
    %419 = vector.shape_cast %418 : vector<1x8x32xf32> to vector<8x32xf32>
    %420 = vector.shape_cast %413 : vector<8x32xf32> to vector<1x8x32xf32>
    tpu.vector_store %arg11[%c0_192, %c0_193, %c0_194], %420 {strides = array<i32>} : memref<2x8x32xf32, #tpu.memory_space<vmem>>, vector<1x8x32xf32>,
    %c0_195 = arith.constant 0 : index
    %c0_196 = arith.constant 0 : index
    %c0_197 = arith.constant 0 : index
    %421 = vector.load %arg12[%c0_195, %c0_196, %c0_197] : memref<2x8x32xf32, #tpu.memory_space<vmem>>, vector<1x8x32xf32>
    %422 = vector.shape_cast %421 : vector<1x8x32xf32> to vector<8x32xf32>
    %423 = vector.shape_cast %411 : vector<8x32xf32> to vector<1x8x32xf32>
    tpu.vector_store %arg12[%c0_195, %c0_196, %c0_197], %423 {strides = array<i32>} : memref<2x8x32xf32, #tpu.memory_space<vmem>>, vector<1x8x32xf32>,
    %c0_198 = arith.constant 0 : index
    %c0_199 = arith.constant 0 : index
    %c0_200 = arith.constant 0 : index
    %424 = vector.load %arg10[%c0_198, %c0_199, %c0_200] : memref<8x8x32xf32, #tpu.memory_space<vmem>>, vector<8x8x32xf32>
    %425 = arith.truncf %424 : vector<8x8x32xf32> to vector<8x8x32xbf16>
    %426 = vector.shape_cast %425 : vector<8x8x32xbf16> to vector<64x32xbf16>
    %c0_201 = arith.constant 0 : index
    %c0_202 = arith.constant 0 : index
    %c0_203 = arith.constant 0 : index
    %427 = vector.load %arg7[%c0_201, %c0_202, %c0_203] : memref<4x32x32xbf16, #tpu.memory_space<vmem>>, vector<1x32x32xbf16>
    %428 = vector.shape_cast %427 : vector<1x32x32xbf16> to vector<32x32xbf16>
    %cst_204 = arith.constant dense<0.000000e+00> : vector<64x32xf32>
    %429 = tpu.matmul %426, %428, %cst_204 {dimension_numbers = #tpu.dot_dimension_numbers<[1], [0], [0], [1], [0, 0, 1, 1], [], []>} : vector<64x32xbf16>, vector<32x32xbf16>, vector<64x32xf32> -> vector<64x32xf32>
    %c0_205 = arith.constant 0 : index
    %c0_206 = arith.constant 0 : index
    %c0_207 = arith.constant 0 : index
    %430 = vector.load %arg9[%c0_205, %c0_206, %c0_207] : memref<4x1x32xf32, #tpu.memory_space<vmem>>, vector<1x1x32xf32>
    %431 = vector.shape_cast %430 : vector<1x1x32xf32> to vector<1x32xf32>
    %432 = vector.broadcast %431 : vector<1x32xf32> to vector<64x32xf32>
    %433 = arith.addf %429, %432 : vector<64x32xf32>
    %434 = vector.shape_cast %433 : vector<64x32xf32> to vector<8x8x32xf32>
    %c0_208 = arith.constant 0 : index
    %c0_209 = arith.constant 0 : index
    %c0_210 = arith.constant 0 : index
    %435 = vector.load %arg13[%c0_208, %c0_209, %c0_210] : memref<8x8x32xf32, #tpu.memory_space<vmem>>, vector<8x8x32xf32>
    tpu.vector_store %arg13[%c0_208, %c0_209, %c0_210], %434 {strides = array<i32>} : memref<8x8x32xf32, #tpu.memory_space<vmem>>, vector<8x8x32xf32>,
    %c1_211 = arith.constant 1 : index
    %c0_212 = arith.constant 0 : index
    %c0_213 = arith.constant 0 : index
    %436 = vector.load %arg7[%c1_211, %c0_212, %c0_213] : memref<4x32x32xbf16, #tpu.memory_space<vmem>>, vector<1x32x32xbf16>
    %437 = vector.shape_cast %436 : vector<1x32x32xbf16> to vector<32x32xbf16>
    %cst_214 = arith.constant dense<0.000000e+00> : vector<64x32xf32>
    %438 = tpu.matmul %426, %437, %cst_214 {dimension_numbers = #tpu.dot_dimension_numbers<[1], [0], [0], [1], [0, 0, 1, 1], [], []>} : vector<64x32xbf16>, vector<32x32xbf16>, vector<64x32xf32> -> vector<64x32xf32>
    %c1_215 = arith.constant 1 : index
    %c0_216 = arith.constant 0 : index
    %c0_217 = arith.constant 0 : index
    %439 = vector.load %arg9[%c1_215, %c0_216, %c0_217] : memref<4x1x32xf32, #tpu.memory_space<vmem>>, vector<1x1x32xf32>
    %440 = vector.shape_cast %439 : vector<1x1x32xf32> to vector<1x32xf32>
    %441 = vector.broadcast %440 : vector<1x32xf32> to vector<64x32xf32>
    %442 = arith.addf %438, %441 : vector<64x32xf32>
    %443 = vector.shape_cast %442 : vector<64x32xf32> to vector<8x8x32xf32>
    %c0_218 = arith.constant 0 : index
    %c0_219 = arith.constant 0 : index
    %c0_220 = arith.constant 0 : index
    %444 = vector.load %arg14[%c0_218, %c0_219, %c0_220] : memref<8x8x32xf32, #tpu.memory_space<vmem>>, vector<8x8x32xf32>
    tpu.vector_store %arg14[%c0_218, %c0_219, %c0_220], %443 {strides = array<i32>} : memref<8x8x32xf32, #tpu.memory_space<vmem>>, vector<8x8x32xf32>,
    %c2_221 = arith.constant 2 : index
    %c0_222 = arith.constant 0 : index
    %c0_223 = arith.constant 0 : index
    %445 = vector.load %arg7[%c2_221, %c0_222, %c0_223] : memref<4x32x32xbf16, #tpu.memory_space<vmem>>, vector<1x32x32xbf16>
    %446 = vector.shape_cast %445 : vector<1x32x32xbf16> to vector<32x32xbf16>
    %cst_224 = arith.constant dense<0.000000e+00> : vector<64x32xf32>
    %447 = tpu.matmul %426, %446, %cst_224 {dimension_numbers = #tpu.dot_dimension_numbers<[1], [0], [0], [1], [0, 0, 1, 1], [], []>} : vector<64x32xbf16>, vector<32x32xbf16>, vector<64x32xf32> -> vector<64x32xf32>
    %c2_225 = arith.constant 2 : index
    %c0_226 = arith.constant 0 : index
    %c0_227 = arith.constant 0 : index
    %448 = vector.load %arg9[%c2_225, %c0_226, %c0_227] : memref<4x1x32xf32, #tpu.memory_space<vmem>>, vector<1x1x32xf32>
    %449 = vector.shape_cast %448 : vector<1x1x32xf32> to vector<1x32xf32>
    %450 = vector.broadcast %449 : vector<1x32xf32> to vector<64x32xf32>
    %451 = arith.addf %447, %450 : vector<64x32xf32>
    %452 = vector.shape_cast %451 : vector<64x32xf32> to vector<8x8x32xf32>
    %c0_228 = arith.constant 0 : index
    %c0_229 = arith.constant 0 : index
    %c0_230 = arith.constant 0 : index
    %453 = vector.load %arg15[%c0_228, %c0_229, %c0_230] : memref<8x8x32xf32, #tpu.memory_space<vmem>>, vector<8x8x32xf32>
    tpu.vector_store %arg15[%c0_228, %c0_229, %c0_230], %452 {strides = array<i32>} : memref<8x8x32xf32, #tpu.memory_space<vmem>>, vector<8x8x32xf32>,
    %c3_231 = arith.constant 3 : index
    %c0_232 = arith.constant 0 : index
    %c0_233 = arith.constant 0 : index
    %454 = vector.load %arg7[%c3_231, %c0_232, %c0_233] : memref<4x32x32xbf16, #tpu.memory_space<vmem>>, vector<1x32x32xbf16>
    %455 = vector.shape_cast %454 : vector<1x32x32xbf16> to vector<32x32xbf16>
    %cst_234 = arith.constant dense<0.000000e+00> : vector<64x32xf32>
    %456 = tpu.matmul %426, %455, %cst_234 {dimension_numbers = #tpu.dot_dimension_numbers<[1], [0], [0], [1], [0, 0, 1, 1], [], []>} : vector<64x32xbf16>, vector<32x32xbf16>, vector<64x32xf32> -> vector<64x32xf32>
    %c3_235 = arith.constant 3 : index
    %c0_236 = arith.constant 0 : index
    %c0_237 = arith.constant 0 : index
    %457 = vector.load %arg9[%c3_235, %c0_236, %c0_237] : memref<4x1x32xf32, #tpu.memory_space<vmem>>, vector<1x1x32xf32>
    %458 = vector.shape_cast %457 : vector<1x1x32xf32> to vector<1x32xf32>
    %459 = vector.broadcast %458 : vector<1x32xf32> to vector<64x32xf32>
    %460 = arith.addf %456, %459 : vector<64x32xf32>
    %461 = vector.shape_cast %460 : vector<64x32xf32> to vector<8x8x32xf32>
    %c0_238 = arith.constant 0 : index
    %c0_239 = arith.constant 0 : index
    %c0_240 = arith.constant 0 : index
    %462 = vector.load %arg16[%c0_238, %c0_239, %c0_240] : memref<8x8x32xf32, #tpu.memory_space<vmem>>, vector<8x8x32xf32>
    tpu.vector_store %arg16[%c0_238, %c0_239, %c0_240], %461 {strides = array<i32>} : memref<8x8x32xf32, #tpu.memory_space<vmem>>, vector<8x8x32xf32>,
    %c0_241 = arith.constant 0 : index
    %c0_242 = arith.constant 0 : index
    %c0_243 = arith.constant 0 : index
    %463 = vector.load %arg8[%c0_241, %c0_242, %c0_243] : memref<4x32x32xbf16, #tpu.memory_space<vmem>>, vector<1x32x32xbf16>
    %464 = vector.shape_cast %463 : vector<1x32x32xbf16> to vector<32x32xbf16>
    %c1_244 = arith.constant 1 : index
    %c0_245 = arith.constant 0 : index
    %c0_246 = arith.constant 0 : index
    %465 = vector.load %arg8[%c1_244, %c0_245, %c0_246] : memref<4x32x32xbf16, #tpu.memory_space<vmem>>, vector<1x32x32xbf16>
    %466 = vector.shape_cast %465 : vector<1x32x32xbf16> to vector<32x32xbf16>
    %c2_247 = arith.constant 2 : index
    %c0_248 = arith.constant 0 : index
    %c0_249 = arith.constant 0 : index
    %467 = vector.load %arg8[%c2_247, %c0_248, %c0_249] : memref<4x32x32xbf16, #tpu.memory_space<vmem>>, vector<1x32x32xbf16>
    %468 = vector.shape_cast %467 : vector<1x32x32xbf16> to vector<32x32xbf16>
    %c3_250 = arith.constant 3 : index
    %c0_251 = arith.constant 0 : index
    %c0_252 = arith.constant 0 : index
    %469 = vector.load %arg8[%c3_250, %c0_251, %c0_252] : memref<4x32x32xbf16, #tpu.memory_space<vmem>>, vector<1x32x32xbf16>
    %470 = vector.shape_cast %469 : vector<1x32x32xbf16> to vector<32x32xbf16>
    %c1_253 = arith.constant 1 : index
    %c0_254 = arith.constant 0 : index
    %c0_255 = arith.constant 0 : index
    %471 = vector.load %arg2[%c1_253, %c0_254, %c0_255] : memref<2x8x32xf32, #tpu.memory_space<vmem>>, vector<1x8x32xf32>
    %472 = vector.shape_cast %471 : vector<1x8x32xf32> to vector<8x32xf32>
    %c1_256 = arith.constant 1 : index
    %c0_257 = arith.constant 0 : index
    %c0_258 = arith.constant 0 : index
    %473 = vector.load %arg3[%c1_256, %c0_257, %c0_258] : memref<2x8x32xf32, #tpu.memory_space<vmem>>, vector<1x8x32xf32>
    %474 = vector.shape_cast %473 : vector<1x8x32xf32> to vector<8x32xf32>
    %c0_i32_259 = arith.constant 0 : i32
    %475 = arith.truncf %472 : vector<8x32xf32> to vector<8x32xbf16>
    %476 = arith.index_cast %c0_i32_259 : i32 to index
    %c0_260 = arith.constant 0 : index
    %c0_261 = arith.constant 0 : index
    %477 = vector.load %arg13[%476, %c0_260, %c0_261] : memref<8x8x32xf32, #tpu.memory_space<vmem>>, vector<1x8x32xf32>
    %478 = vector.shape_cast %477 : vector<1x8x32xf32> to vector<8x32xf32>
    %cst_262 = arith.constant dense<0.000000e+00> : vector<8x32xf32>
    %479 = tpu.matmul %475, %464, %cst_262 {dimension_numbers = #tpu.dot_dimension_numbers<[1], [0], [0], [1], [0, 0, 1, 1], [], []>} : vector<8x32xbf16>, vector<32x32xbf16>, vector<8x32xf32> -> vector<8x32xf32>
    %480 = arith.addf %478, %479 : vector<8x32xf32>
    %481 = arith.index_cast %c0_i32_259 : i32 to index
    %c0_263 = arith.constant 0 : index
    %c0_264 = arith.constant 0 : index
    %482 = vector.load %arg14[%481, %c0_263, %c0_264] : memref<8x8x32xf32, #tpu.memory_space<vmem>>, vector<1x8x32xf32>
    %483 = vector.shape_cast %482 : vector<1x8x32xf32> to vector<8x32xf32>
    %cst_265 = arith.constant dense<0.000000e+00> : vector<8x32xf32>
    %484 = tpu.matmul %475, %466, %cst_265 {dimension_numbers = #tpu.dot_dimension_numbers<[1], [0], [0], [1], [0, 0, 1, 1], [], []>} : vector<8x32xbf16>, vector<32x32xbf16>, vector<8x32xf32> -> vector<8x32xf32>
    %485 = arith.addf %483, %484 : vector<8x32xf32>
    %486 = arith.index_cast %c0_i32_259 : i32 to index
    %c0_266 = arith.constant 0 : index
    %c0_267 = arith.constant 0 : index
    %487 = vector.load %arg15[%486, %c0_266, %c0_267] : memref<8x8x32xf32, #tpu.memory_space<vmem>>, vector<1x8x32xf32>
    %488 = vector.shape_cast %487 : vector<1x8x32xf32> to vector<8x32xf32>
    %cst_268 = arith.constant dense<0.000000e+00> : vector<8x32xf32>
    %489 = tpu.matmul %475, %468, %cst_268 {dimension_numbers = #tpu.dot_dimension_numbers<[1], [0], [0], [1], [0, 0, 1, 1], [], []>} : vector<8x32xbf16>, vector<32x32xbf16>, vector<8x32xf32> -> vector<8x32xf32>
    %490 = arith.addf %488, %489 : vector<8x32xf32>
    %491 = arith.index_cast %c0_i32_259 : i32 to index
    %c0_269 = arith.constant 0 : index
    %c0_270 = arith.constant 0 : index
    %492 = vector.load %arg16[%491, %c0_269, %c0_270] : memref<8x8x32xf32, #tpu.memory_space<vmem>>, vector<1x8x32xf32>
    %493 = vector.shape_cast %492 : vector<1x8x32xf32> to vector<8x32xf32>
    %cst_271 = arith.constant dense<0.000000e+00> : vector<8x32xf32>
    %494 = tpu.matmul %475, %470, %cst_271 {dimension_numbers = #tpu.dot_dimension_numbers<[1], [0], [0], [1], [0, 0, 1, 1], [], []>} : vector<8x32xbf16>, vector<32x32xbf16>, vector<8x32xf32> -> vector<8x32xf32>
    %495 = arith.addf %493, %494 : vector<8x32xf32>
    %496 = arith.negf %480 : vector<8x32xf32>
    %497 = math.exp %496 : vector<8x32xf32>
    %cst_272 = arith.constant 1.000000e+00 : f32
    %498 = vector.broadcast %cst_272 : f32 to vector<8x32xf32>
    %499 = arith.addf %498, %497 : vector<8x32xf32>
    %500 = arith.divf %498, %499 : vector<8x32xf32>
    %501 = arith.negf %485 : vector<8x32xf32>
    %502 = math.exp %501 : vector<8x32xf32>
    %cst_273 = arith.constant 1.000000e+00 : f32
    %503 = vector.broadcast %cst_273 : f32 to vector<8x32xf32>
    %504 = arith.addf %503, %502 : vector<8x32xf32>
    %505 = arith.divf %503, %504 : vector<8x32xf32>
    %506 = math.tanh %490 : vector<8x32xf32>
    %507 = arith.negf %495 : vector<8x32xf32>
    %508 = math.exp %507 : vector<8x32xf32>
    %cst_274 = arith.constant 1.000000e+00 : f32
    %509 = vector.broadcast %cst_274 : f32 to vector<8x32xf32>
    %510 = arith.addf %509, %508 : vector<8x32xf32>
    %511 = arith.divf %509, %510 : vector<8x32xf32>
    %512 = arith.mulf %505, %474 : vector<8x32xf32>
    %513 = arith.mulf %500, %506 : vector<8x32xf32>
    %514 = arith.addf %512, %513 : vector<8x32xf32>
    %515 = math.tanh %514 : vector<8x32xf32>
    %516 = arith.mulf %511, %515 : vector<8x32xf32>
    %517 = arith.index_cast %c0_i32_259 : i32 to index
    %c0_275 = arith.constant 0 : index
    %c0_276 = arith.constant 0 : index
    %518 = vector.load %arg10[%517, %c0_275, %c0_276] : memref<8x8x32xf32, #tpu.memory_space<vmem>>, vector<1x8x32xf32>
    %519 = vector.shape_cast %518 : vector<1x8x32xf32> to vector<8x32xf32>
    %520 = vector.shape_cast %516 : vector<8x32xf32> to vector<1x8x32xf32>
    tpu.vector_store %arg10[%517, %c0_275, %c0_276], %520 {strides = array<i32>} : memref<8x8x32xf32, #tpu.memory_space<vmem>>, vector<1x8x32xf32>,
    %c1_i32_277 = arith.constant 1 : i32
    %521 = arith.truncf %516 : vector<8x32xf32> to vector<8x32xbf16>
    %522 = arith.index_cast %c1_i32_277 : i32 to index
    %c0_278 = arith.constant 0 : index
    %c0_279 = arith.constant 0 : index
    %523 = vector.load %arg13[%522, %c0_278, %c0_279] : memref<8x8x32xf32, #tpu.memory_space<vmem>>, vector<1x8x32xf32>
    %524 = vector.shape_cast %523 : vector<1x8x32xf32> to vector<8x32xf32>
    %cst_280 = arith.constant dense<0.000000e+00> : vector<8x32xf32>
    %525 = tpu.matmul %521, %464, %cst_280 {dimension_numbers = #tpu.dot_dimension_numbers<[1], [0], [0], [1], [0, 0, 1, 1], [], []>} : vector<8x32xbf16>, vector<32x32xbf16>, vector<8x32xf32> -> vector<8x32xf32>
    %526 = arith.addf %524, %525 : vector<8x32xf32>
    %527 = arith.index_cast %c1_i32_277 : i32 to index
    %c0_281 = arith.constant 0 : index
    %c0_282 = arith.constant 0 : index
    %528 = vector.load %arg14[%527, %c0_281, %c0_282] : memref<8x8x32xf32, #tpu.memory_space<vmem>>, vector<1x8x32xf32>
    %529 = vector.shape_cast %528 : vector<1x8x32xf32> to vector<8x32xf32>
    %cst_283 = arith.constant dense<0.000000e+00> : vector<8x32xf32>
    %530 = tpu.matmul %521, %466, %cst_283 {dimension_numbers = #tpu.dot_dimension_numbers<[1], [0], [0], [1], [0, 0, 1, 1], [], []>} : vector<8x32xbf16>, vector<32x32xbf16>, vector<8x32xf32> -> vector<8x32xf32>
    %531 = arith.addf %529, %530 : vector<8x32xf32>
    %532 = arith.index_cast %c1_i32_277 : i32 to index
    %c0_284 = arith.constant 0 : index
    %c0_285 = arith.constant 0 : index
    %533 = vector.load %arg15[%532, %c0_284, %c0_285] : memref<8x8x32xf32, #tpu.memory_space<vmem>>, vector<1x8x32xf32>
    %534 = vector.shape_cast %533 : vector<1x8x32xf32> to vector<8x32xf32>
    %cst_286 = arith.constant dense<0.000000e+00> : vector<8x32xf32>
    %535 = tpu.matmul %521, %468, %cst_286 {dimension_numbers = #tpu.dot_dimension_numbers<[1], [0], [0], [1], [0, 0, 1, 1], [], []>} : vector<8x32xbf16>, vector<32x32xbf16>, vector<8x32xf32> -> vector<8x32xf32>
    %536 = arith.addf %534, %535 : vector<8x32xf32>
    %537 = arith.index_cast %c1_i32_277 : i32 to index
    %c0_287 = arith.constant 0 : index
    %c0_288 = arith.constant 0 : index
    %538 = vector.load %arg16[%537, %c0_287, %c0_288] : memref<8x8x32xf32, #tpu.memory_space<vmem>>, vector<1x8x32xf32>
    %539 = vector.shape_cast %538 : vector<1x8x32xf32> to vector<8x32xf32>
    %cst_289 = arith.constant dense<0.000000e+00> : vector<8x32xf32>
    %540 = tpu.matmul %521, %470, %cst_289 {dimension_numbers = #tpu.dot_dimension_numbers<[1], [0], [0], [1], [0, 0, 1, 1], [], []>} : vector<8x32xbf16>, vector<32x32xbf16>, vector<8x32xf32> -> vector<8x32xf32>
    %541 = arith.addf %539, %540 : vector<8x32xf32>
    %542 = arith.negf %526 : vector<8x32xf32>
    %543 = math.exp %542 : vector<8x32xf32>
    %cst_290 = arith.constant 1.000000e+00 : f32
    %544 = vector.broadcast %cst_290 : f32 to vector<8x32xf32>
    %545 = arith.addf %544, %543 : vector<8x32xf32>
    %546 = arith.divf %544, %545 : vector<8x32xf32>
    %547 = arith.negf %531 : vector<8x32xf32>
    %548 = math.exp %547 : vector<8x32xf32>
    %cst_291 = arith.constant 1.000000e+00 : f32
    %549 = vector.broadcast %cst_291 : f32 to vector<8x32xf32>
    %550 = arith.addf %549, %548 : vector<8x32xf32>
    %551 = arith.divf %549, %550 : vector<8x32xf32>
    %552 = math.tanh %536 : vector<8x32xf32>
    %553 = arith.negf %541 : vector<8x32xf32>
    %554 = math.exp %553 : vector<8x32xf32>
    %cst_292 = arith.constant 1.000000e+00 : f32
    %555 = vector.broadcast %cst_292 : f32 to vector<8x32xf32>
    %556 = arith.addf %555, %554 : vector<8x32xf32>
    %557 = arith.divf %555, %556 : vector<8x32xf32>
    %558 = arith.mulf %551, %514 : vector<8x32xf32>
    %559 = arith.mulf %546, %552 : vector<8x32xf32>
    %560 = arith.addf %558, %559 : vector<8x32xf32>
    %561 = math.tanh %560 : vector<8x32xf32>
    %562 = arith.mulf %557, %561 : vector<8x32xf32>
    %563 = arith.index_cast %c1_i32_277 : i32 to index
    %c0_293 = arith.constant 0 : index
    %c0_294 = arith.constant 0 : index
    %564 = vector.load %arg10[%563, %c0_293, %c0_294] : memref<8x8x32xf32, #tpu.memory_space<vmem>>, vector<1x8x32xf32>
    %565 = vector.shape_cast %564 : vector<1x8x32xf32> to vector<8x32xf32>
    %566 = vector.shape_cast %562 : vector<8x32xf32> to vector<1x8x32xf32>
    tpu.vector_store %arg10[%563, %c0_293, %c0_294], %566 {strides = array<i32>} : memref<8x8x32xf32, #tpu.memory_space<vmem>>, vector<1x8x32xf32>,
    %c2_i32_295 = arith.constant 2 : i32
    %567 = arith.truncf %562 : vector<8x32xf32> to vector<8x32xbf16>
    %568 = arith.index_cast %c2_i32_295 : i32 to index
    %c0_296 = arith.constant 0 : index
    %c0_297 = arith.constant 0 : index
    %569 = vector.load %arg13[%568, %c0_296, %c0_297] : memref<8x8x32xf32, #tpu.memory_space<vmem>>, vector<1x8x32xf32>
    %570 = vector.shape_cast %569 : vector<1x8x32xf32> to vector<8x32xf32>
    %cst_298 = arith.constant dense<0.000000e+00> : vector<8x32xf32>
    %571 = tpu.matmul %567, %464, %cst_298 {dimension_numbers = #tpu.dot_dimension_numbers<[1], [0], [0], [1], [0, 0, 1, 1], [], []>} : vector<8x32xbf16>, vector<32x32xbf16>, vector<8x32xf32> -> vector<8x32xf32>
    %572 = arith.addf %570, %571 : vector<8x32xf32>
    %573 = arith.index_cast %c2_i32_295 : i32 to index
    %c0_299 = arith.constant 0 : index
    %c0_300 = arith.constant 0 : index
    %574 = vector.load %arg14[%573, %c0_299, %c0_300] : memref<8x8x32xf32, #tpu.memory_space<vmem>>, vector<1x8x32xf32>
    %575 = vector.shape_cast %574 : vector<1x8x32xf32> to vector<8x32xf32>
    %cst_301 = arith.constant dense<0.000000e+00> : vector<8x32xf32>
    %576 = tpu.matmul %567, %466, %cst_301 {dimension_numbers = #tpu.dot_dimension_numbers<[1], [0], [0], [1], [0, 0, 1, 1], [], []>} : vector<8x32xbf16>, vector<32x32xbf16>, vector<8x32xf32> -> vector<8x32xf32>
    %577 = arith.addf %575, %576 : vector<8x32xf32>
    %578 = arith.index_cast %c2_i32_295 : i32 to index
    %c0_302 = arith.constant 0 : index
    %c0_303 = arith.constant 0 : index
    %579 = vector.load %arg15[%578, %c0_302, %c0_303] : memref<8x8x32xf32, #tpu.memory_space<vmem>>, vector<1x8x32xf32>
    %580 = vector.shape_cast %579 : vector<1x8x32xf32> to vector<8x32xf32>
    %cst_304 = arith.constant dense<0.000000e+00> : vector<8x32xf32>
    %581 = tpu.matmul %567, %468, %cst_304 {dimension_numbers = #tpu.dot_dimension_numbers<[1], [0], [0], [1], [0, 0, 1, 1], [], []>} : vector<8x32xbf16>, vector<32x32xbf16>, vector<8x32xf32> -> vector<8x32xf32>
    %582 = arith.addf %580, %581 : vector<8x32xf32>
    %583 = arith.index_cast %c2_i32_295 : i32 to index
    %c0_305 = arith.constant 0 : index
    %c0_306 = arith.constant 0 : index
    %584 = vector.load %arg16[%583, %c0_305, %c0_306] : memref<8x8x32xf32, #tpu.memory_space<vmem>>, vector<1x8x32xf32>
    %585 = vector.shape_cast %584 : vector<1x8x32xf32> to vector<8x32xf32>
    %cst_307 = arith.constant dense<0.000000e+00> : vector<8x32xf32>
    %586 = tpu.matmul %567, %470, %cst_307 {dimension_numbers = #tpu.dot_dimension_numbers<[1], [0], [0], [1], [0, 0, 1, 1], [], []>} : vector<8x32xbf16>, vector<32x32xbf16>, vector<8x32xf32> -> vector<8x32xf32>
    %587 = arith.addf %585, %586 : vector<8x32xf32>
    %588 = arith.negf %572 : vector<8x32xf32>
    %589 = math.exp %588 : vector<8x32xf32>
    %cst_308 = arith.constant 1.000000e+00 : f32
    %590 = vector.broadcast %cst_308 : f32 to vector<8x32xf32>
    %591 = arith.addf %590, %589 : vector<8x32xf32>
    %592 = arith.divf %590, %591 : vector<8x32xf32>
    %593 = arith.negf %577 : vector<8x32xf32>
    %594 = math.exp %593 : vector<8x32xf32>
    %cst_309 = arith.constant 1.000000e+00 : f32
    %595 = vector.broadcast %cst_309 : f32 to vector<8x32xf32>
    %596 = arith.addf %595, %594 : vector<8x32xf32>
    %597 = arith.divf %595, %596 : vector<8x32xf32>
    %598 = math.tanh %582 : vector<8x32xf32>
    %599 = arith.negf %587 : vector<8x32xf32>
    %600 = math.exp %599 : vector<8x32xf32>
    %cst_310 = arith.constant 1.000000e+00 : f32
    %601 = vector.broadcast %cst_310 : f32 to vector<8x32xf32>
    %602 = arith.addf %601, %600 : vector<8x32xf32>
    %603 = arith.divf %601, %602 : vector<8x32xf32>
    %604 = arith.mulf %597, %560 : vector<8x32xf32>
    %605 = arith.mulf %592, %598 : vector<8x32xf32>
    %606 = arith.addf %604, %605 : vector<8x32xf32>
    %607 = math.tanh %606 : vector<8x32xf32>
    %608 = arith.mulf %603, %607 : vector<8x32xf32>
    %609 = arith.index_cast %c2_i32_295 : i32 to index
    %c0_311 = arith.constant 0 : index
    %c0_312 = arith.constant 0 : index
    %610 = vector.load %arg10[%609, %c0_311, %c0_312] : memref<8x8x32xf32, #tpu.memory_space<vmem>>, vector<1x8x32xf32>
    %611 = vector.shape_cast %610 : vector<1x8x32xf32> to vector<8x32xf32>
    %612 = vector.shape_cast %608 : vector<8x32xf32> to vector<1x8x32xf32>
    tpu.vector_store %arg10[%609, %c0_311, %c0_312], %612 {strides = array<i32>} : memref<8x8x32xf32, #tpu.memory_space<vmem>>, vector<1x8x32xf32>,
    %c3_i32_313 = arith.constant 3 : i32
    %613 = arith.truncf %608 : vector<8x32xf32> to vector<8x32xbf16>
    %614 = arith.index_cast %c3_i32_313 : i32 to index
    %c0_314 = arith.constant 0 : index
    %c0_315 = arith.constant 0 : index
    %615 = vector.load %arg13[%614, %c0_314, %c0_315] : memref<8x8x32xf32, #tpu.memory_space<vmem>>, vector<1x8x32xf32>
    %616 = vector.shape_cast %615 : vector<1x8x32xf32> to vector<8x32xf32>
    %cst_316 = arith.constant dense<0.000000e+00> : vector<8x32xf32>
    %617 = tpu.matmul %613, %464, %cst_316 {dimension_numbers = #tpu.dot_dimension_numbers<[1], [0], [0], [1], [0, 0, 1, 1], [], []>} : vector<8x32xbf16>, vector<32x32xbf16>, vector<8x32xf32> -> vector<8x32xf32>
    %618 = arith.addf %616, %617 : vector<8x32xf32>
    %619 = arith.index_cast %c3_i32_313 : i32 to index
    %c0_317 = arith.constant 0 : index
    %c0_318 = arith.constant 0 : index
    %620 = vector.load %arg14[%619, %c0_317, %c0_318] : memref<8x8x32xf32, #tpu.memory_space<vmem>>, vector<1x8x32xf32>
    %621 = vector.shape_cast %620 : vector<1x8x32xf32> to vector<8x32xf32>
    %cst_319 = arith.constant dense<0.000000e+00> : vector<8x32xf32>
    %622 = tpu.matmul %613, %466, %cst_319 {dimension_numbers = #tpu.dot_dimension_numbers<[1], [0], [0], [1], [0, 0, 1, 1], [], []>} : vector<8x32xbf16>, vector<32x32xbf16>, vector<8x32xf32> -> vector<8x32xf32>
    %623 = arith.addf %621, %622 : vector<8x32xf32>
    %624 = arith.index_cast %c3_i32_313 : i32 to index
    %c0_320 = arith.constant 0 : index
    %c0_321 = arith.constant 0 : index
    %625 = vector.load %arg15[%624, %c0_320, %c0_321] : memref<8x8x32xf32, #tpu.memory_space<vmem>>, vector<1x8x32xf32>
    %626 = vector.shape_cast %625 : vector<1x8x32xf32> to vector<8x32xf32>
    %cst_322 = arith.constant dense<0.000000e+00> : vector<8x32xf32>
    %627 = tpu.matmul %613, %468, %cst_322 {dimension_numbers = #tpu.dot_dimension_numbers<[1], [0], [0], [1], [0, 0, 1, 1], [], []>} : vector<8x32xbf16>, vector<32x32xbf16>, vector<8x32xf32> -> vector<8x32xf32>
    %628 = arith.addf %626, %627 : vector<8x32xf32>
    %629 = arith.index_cast %c3_i32_313 : i32 to index
    %c0_323 = arith.constant 0 : index
    %c0_324 = arith.constant 0 : index
    %630 = vector.load %arg16[%629, %c0_323, %c0_324] : memref<8x8x32xf32, #tpu.memory_space<vmem>>, vector<1x8x32xf32>
    %631 = vector.shape_cast %630 : vector<1x8x32xf32> to vector<8x32xf32>
    %cst_325 = arith.constant dense<0.000000e+00> : vector<8x32xf32>
    %632 = tpu.matmul %613, %470, %cst_325 {dimension_numbers = #tpu.dot_dimension_numbers<[1], [0], [0], [1], [0, 0, 1, 1], [], []>} : vector<8x32xbf16>, vector<32x32xbf16>, vector<8x32xf32> -> vector<8x32xf32>
    %633 = arith.addf %631, %632 : vector<8x32xf32>
    %634 = arith.negf %618 : vector<8x32xf32>
    %635 = math.exp %634 : vector<8x32xf32>
    %cst_326 = arith.constant 1.000000e+00 : f32
    %636 = vector.broadcast %cst_326 : f32 to vector<8x32xf32>
    %637 = arith.addf %636, %635 : vector<8x32xf32>
    %638 = arith.divf %636, %637 : vector<8x32xf32>
    %639 = arith.negf %623 : vector<8x32xf32>
    %640 = math.exp %639 : vector<8x32xf32>
    %cst_327 = arith.constant 1.000000e+00 : f32
    %641 = vector.broadcast %cst_327 : f32 to vector<8x32xf32>
    %642 = arith.addf %641, %640 : vector<8x32xf32>
    %643 = arith.divf %641, %642 : vector<8x32xf32>
    %644 = math.tanh %628 : vector<8x32xf32>
    %645 = arith.negf %633 : vector<8x32xf32>
    %646 = math.exp %645 : vector<8x32xf32>
    %cst_328 = arith.constant 1.000000e+00 : f32
    %647 = vector.broadcast %cst_328 : f32 to vector<8x32xf32>
    %648 = arith.addf %647, %646 : vector<8x32xf32>
    %649 = arith.divf %647, %648 : vector<8x32xf32>
    %650 = arith.mulf %643, %606 : vector<8x32xf32>
    %651 = arith.mulf %638, %644 : vector<8x32xf32>
    %652 = arith.addf %650, %651 : vector<8x32xf32>
    %653 = math.tanh %652 : vector<8x32xf32>
    %654 = arith.mulf %649, %653 : vector<8x32xf32>
    %655 = arith.index_cast %c3_i32_313 : i32 to index
    %c0_329 = arith.constant 0 : index
    %c0_330 = arith.constant 0 : index
    %656 = vector.load %arg10[%655, %c0_329, %c0_330] : memref<8x8x32xf32, #tpu.memory_space<vmem>>, vector<1x8x32xf32>
    %657 = vector.shape_cast %656 : vector<1x8x32xf32> to vector<8x32xf32>
    %658 = vector.shape_cast %654 : vector<8x32xf32> to vector<1x8x32xf32>
    tpu.vector_store %arg10[%655, %c0_329, %c0_330], %658 {strides = array<i32>} : memref<8x8x32xf32, #tpu.memory_space<vmem>>, vector<1x8x32xf32>,
    %c4_i32_331 = arith.constant 4 : i32
    %659 = arith.truncf %654 : vector<8x32xf32> to vector<8x32xbf16>
    %660 = arith.index_cast %c4_i32_331 : i32 to index
    %c0_332 = arith.constant 0 : index
    %c0_333 = arith.constant 0 : index
    %661 = vector.load %arg13[%660, %c0_332, %c0_333] : memref<8x8x32xf32, #tpu.memory_space<vmem>>, vector<1x8x32xf32>
    %662 = vector.shape_cast %661 : vector<1x8x32xf32> to vector<8x32xf32>
    %cst_334 = arith.constant dense<0.000000e+00> : vector<8x32xf32>
    %663 = tpu.matmul %659, %464, %cst_334 {dimension_numbers = #tpu.dot_dimension_numbers<[1], [0], [0], [1], [0, 0, 1, 1], [], []>} : vector<8x32xbf16>, vector<32x32xbf16>, vector<8x32xf32> -> vector<8x32xf32>
    %664 = arith.addf %662, %663 : vector<8x32xf32>
    %665 = arith.index_cast %c4_i32_331 : i32 to index
    %c0_335 = arith.constant 0 : index
    %c0_336 = arith.constant 0 : index
    %666 = vector.load %arg14[%665, %c0_335, %c0_336] : memref<8x8x32xf32, #tpu.memory_space<vmem>>, vector<1x8x32xf32>
    %667 = vector.shape_cast %666 : vector<1x8x32xf32> to vector<8x32xf32>
    %cst_337 = arith.constant dense<0.000000e+00> : vector<8x32xf32>
    %668 = tpu.matmul %659, %466, %cst_337 {dimension_numbers = #tpu.dot_dimension_numbers<[1], [0], [0], [1], [0, 0, 1, 1], [], []>} : vector<8x32xbf16>, vector<32x32xbf16>, vector<8x32xf32> -> vector<8x32xf32>
    %669 = arith.addf %667, %668 : vector<8x32xf32>
    %670 = arith.index_cast %c4_i32_331 : i32 to index
    %c0_338 = arith.constant 0 : index
    %c0_339 = arith.constant 0 : index
    %671 = vector.load %arg15[%670, %c0_338, %c0_339] : memref<8x8x32xf32, #tpu.memory_space<vmem>>, vector<1x8x32xf32>
    %672 = vector.shape_cast %671 : vector<1x8x32xf32> to vector<8x32xf32>
    %cst_340 = arith.constant dense<0.000000e+00> : vector<8x32xf32>
    %673 = tpu.matmul %659, %468, %cst_340 {dimension_numbers = #tpu.dot_dimension_numbers<[1], [0], [0], [1], [0, 0, 1, 1], [], []>} : vector<8x32xbf16>, vector<32x32xbf16>, vector<8x32xf32> -> vector<8x32xf32>
    %674 = arith.addf %672, %673 : vector<8x32xf32>
    %675 = arith.index_cast %c4_i32_331 : i32 to index
    %c0_341 = arith.constant 0 : index
    %c0_342 = arith.constant 0 : index
    %676 = vector.load %arg16[%675, %c0_341, %c0_342] : memref<8x8x32xf32, #tpu.memory_space<vmem>>, vector<1x8x32xf32>
    %677 = vector.shape_cast %676 : vector<1x8x32xf32> to vector<8x32xf32>
    %cst_343 = arith.constant dense<0.000000e+00> : vector<8x32xf32>
    %678 = tpu.matmul %659, %470, %cst_343 {dimension_numbers = #tpu.dot_dimension_numbers<[1], [0], [0], [1], [0, 0, 1, 1], [], []>} : vector<8x32xbf16>, vector<32x32xbf16>, vector<8x32xf32> -> vector<8x32xf32>
    %679 = arith.addf %677, %678 : vector<8x32xf32>
    %680 = arith.negf %664 : vector<8x32xf32>
    %681 = math.exp %680 : vector<8x32xf32>
    %cst_344 = arith.constant 1.000000e+00 : f32
    %682 = vector.broadcast %cst_344 : f32 to vector<8x32xf32>
    %683 = arith.addf %682, %681 : vector<8x32xf32>
    %684 = arith.divf %682, %683 : vector<8x32xf32>
    %685 = arith.negf %669 : vector<8x32xf32>
    %686 = math.exp %685 : vector<8x32xf32>
    %cst_345 = arith.constant 1.000000e+00 : f32
    %687 = vector.broadcast %cst_345 : f32 to vector<8x32xf32>
    %688 = arith.addf %687, %686 : vector<8x32xf32>
    %689 = arith.divf %687, %688 : vector<8x32xf32>
    %690 = math.tanh %674 : vector<8x32xf32>
    %691 = arith.negf %679 : vector<8x32xf32>
    %692 = math.exp %691 : vector<8x32xf32>
    %cst_346 = arith.constant 1.000000e+00 : f32
    %693 = vector.broadcast %cst_346 : f32 to vector<8x32xf32>
    %694 = arith.addf %693, %692 : vector<8x32xf32>
    %695 = arith.divf %693, %694 : vector<8x32xf32>
    %696 = arith.mulf %689, %652 : vector<8x32xf32>
    %697 = arith.mulf %684, %690 : vector<8x32xf32>
    %698 = arith.addf %696, %697 : vector<8x32xf32>
    %699 = math.tanh %698 : vector<8x32xf32>
    %700 = arith.mulf %695, %699 : vector<8x32xf32>
    %701 = arith.index_cast %c4_i32_331 : i32 to index
    %c0_347 = arith.constant 0 : index
    %c0_348 = arith.constant 0 : index
    %702 = vector.load %arg10[%701, %c0_347, %c0_348] : memref<8x8x32xf32, #tpu.memory_space<vmem>>, vector<1x8x32xf32>
    %703 = vector.shape_cast %702 : vector<1x8x32xf32> to vector<8x32xf32>
    %704 = vector.shape_cast %700 : vector<8x32xf32> to vector<1x8x32xf32>
    tpu.vector_store %arg10[%701, %c0_347, %c0_348], %704 {strides = array<i32>} : memref<8x8x32xf32, #tpu.memory_space<vmem>>, vector<1x8x32xf32>,
    %c5_i32_349 = arith.constant 5 : i32
    %705 = arith.truncf %700 : vector<8x32xf32> to vector<8x32xbf16>
    %706 = arith.index_cast %c5_i32_349 : i32 to index
    %c0_350 = arith.constant 0 : index
    %c0_351 = arith.constant 0 : index
    %707 = vector.load %arg13[%706, %c0_350, %c0_351] : memref<8x8x32xf32, #tpu.memory_space<vmem>>, vector<1x8x32xf32>
    %708 = vector.shape_cast %707 : vector<1x8x32xf32> to vector<8x32xf32>
    %cst_352 = arith.constant dense<0.000000e+00> : vector<8x32xf32>
    %709 = tpu.matmul %705, %464, %cst_352 {dimension_numbers = #tpu.dot_dimension_numbers<[1], [0], [0], [1], [0, 0, 1, 1], [], []>} : vector<8x32xbf16>, vector<32x32xbf16>, vector<8x32xf32> -> vector<8x32xf32>
    %710 = arith.addf %708, %709 : vector<8x32xf32>
    %711 = arith.index_cast %c5_i32_349 : i32 to index
    %c0_353 = arith.constant 0 : index
    %c0_354 = arith.constant 0 : index
    %712 = vector.load %arg14[%711, %c0_353, %c0_354] : memref<8x8x32xf32, #tpu.memory_space<vmem>>, vector<1x8x32xf32>
    %713 = vector.shape_cast %712 : vector<1x8x32xf32> to vector<8x32xf32>
    %cst_355 = arith.constant dense<0.000000e+00> : vector<8x32xf32>
    %714 = tpu.matmul %705, %466, %cst_355 {dimension_numbers = #tpu.dot_dimension_numbers<[1], [0], [0], [1], [0, 0, 1, 1], [], []>} : vector<8x32xbf16>, vector<32x32xbf16>, vector<8x32xf32> -> vector<8x32xf32>
    %715 = arith.addf %713, %714 : vector<8x32xf32>
    %716 = arith.index_cast %c5_i32_349 : i32 to index
    %c0_356 = arith.constant 0 : index
    %c0_357 = arith.constant 0 : index
    %717 = vector.load %arg15[%716, %c0_356, %c0_357] : memref<8x8x32xf32, #tpu.memory_space<vmem>>, vector<1x8x32xf32>
    %718 = vector.shape_cast %717 : vector<1x8x32xf32> to vector<8x32xf32>
    %cst_358 = arith.constant dense<0.000000e+00> : vector<8x32xf32>
    %719 = tpu.matmul %705, %468, %cst_358 {dimension_numbers = #tpu.dot_dimension_numbers<[1], [0], [0], [1], [0, 0, 1, 1], [], []>} : vector<8x32xbf16>, vector<32x32xbf16>, vector<8x32xf32> -> vector<8x32xf32>
    %720 = arith.addf %718, %719 : vector<8x32xf32>
    %721 = arith.index_cast %c5_i32_349 : i32 to index
    %c0_359 = arith.constant 0 : index
    %c0_360 = arith.constant 0 : index
    %722 = vector.load %arg16[%721, %c0_359, %c0_360] : memref<8x8x32xf32, #tpu.memory_space<vmem>>, vector<1x8x32xf32>
    %723 = vector.shape_cast %722 : vector<1x8x32xf32> to vector<8x32xf32>
    %cst_361 = arith.constant dense<0.000000e+00> : vector<8x32xf32>
    %724 = tpu.matmul %705, %470, %cst_361 {dimension_numbers = #tpu.dot_dimension_numbers<[1], [0], [0], [1], [0, 0, 1, 1], [], []>} : vector<8x32xbf16>, vector<32x32xbf16>, vector<8x32xf32> -> vector<8x32xf32>
    %725 = arith.addf %723, %724 : vector<8x32xf32>
    %726 = arith.negf %710 : vector<8x32xf32>
    %727 = math.exp %726 : vector<8x32xf32>
    %cst_362 = arith.constant 1.000000e+00 : f32
    %728 = vector.broadcast %cst_362 : f32 to vector<8x32xf32>
    %729 = arith.addf %728, %727 : vector<8x32xf32>
    %730 = arith.divf %728, %729 : vector<8x32xf32>
    %731 = arith.negf %715 : vector<8x32xf32>
    %732 = math.exp %731 : vector<8x32xf32>
    %cst_363 = arith.constant 1.000000e+00 : f32
    %733 = vector.broadcast %cst_363 : f32 to vector<8x32xf32>
    %734 = arith.addf %733, %732 : vector<8x32xf32>
    %735 = arith.divf %733, %734 : vector<8x32xf32>
    %736 = math.tanh %720 : vector<8x32xf32>
    %737 = arith.negf %725 : vector<8x32xf32>
    %738 = math.exp %737 : vector<8x32xf32>
    %cst_364 = arith.constant 1.000000e+00 : f32
    %739 = vector.broadcast %cst_364 : f32 to vector<8x32xf32>
    %740 = arith.addf %739, %738 : vector<8x32xf32>
    %741 = arith.divf %739, %740 : vector<8x32xf32>
    %742 = arith.mulf %735, %698 : vector<8x32xf32>
    %743 = arith.mulf %730, %736 : vector<8x32xf32>
    %744 = arith.addf %742, %743 : vector<8x32xf32>
    %745 = math.tanh %744 : vector<8x32xf32>
    %746 = arith.mulf %741, %745 : vector<8x32xf32>
    %747 = arith.index_cast %c5_i32_349 : i32 to index
    %c0_365 = arith.constant 0 : index
    %c0_366 = arith.constant 0 : index
    %748 = vector.load %arg10[%747, %c0_365, %c0_366] : memref<8x8x32xf32, #tpu.memory_space<vmem>>, vector<1x8x32xf32>
    %749 = vector.shape_cast %748 : vector<1x8x32xf32> to vector<8x32xf32>
    %750 = vector.shape_cast %746 : vector<8x32xf32> to vector<1x8x32xf32>
    tpu.vector_store %arg10[%747, %c0_365, %c0_366], %750 {strides = array<i32>} : memref<8x8x32xf32, #tpu.memory_space<vmem>>, vector<1x8x32xf32>,
    %c6_i32_367 = arith.constant 6 : i32
    %751 = arith.truncf %746 : vector<8x32xf32> to vector<8x32xbf16>
    %752 = arith.index_cast %c6_i32_367 : i32 to index
    %c0_368 = arith.constant 0 : index
    %c0_369 = arith.constant 0 : index
    %753 = vector.load %arg13[%752, %c0_368, %c0_369] : memref<8x8x32xf32, #tpu.memory_space<vmem>>, vector<1x8x32xf32>
    %754 = vector.shape_cast %753 : vector<1x8x32xf32> to vector<8x32xf32>
    %cst_370 = arith.constant dense<0.000000e+00> : vector<8x32xf32>
    %755 = tpu.matmul %751, %464, %cst_370 {dimension_numbers = #tpu.dot_dimension_numbers<[1], [0], [0], [1], [0, 0, 1, 1], [], []>} : vector<8x32xbf16>, vector<32x32xbf16>, vector<8x32xf32> -> vector<8x32xf32>
    %756 = arith.addf %754, %755 : vector<8x32xf32>
    %757 = arith.index_cast %c6_i32_367 : i32 to index
    %c0_371 = arith.constant 0 : index
    %c0_372 = arith.constant 0 : index
    %758 = vector.load %arg14[%757, %c0_371, %c0_372] : memref<8x8x32xf32, #tpu.memory_space<vmem>>, vector<1x8x32xf32>
    %759 = vector.shape_cast %758 : vector<1x8x32xf32> to vector<8x32xf32>
    %cst_373 = arith.constant dense<0.000000e+00> : vector<8x32xf32>
    %760 = tpu.matmul %751, %466, %cst_373 {dimension_numbers = #tpu.dot_dimension_numbers<[1], [0], [0], [1], [0, 0, 1, 1], [], []>} : vector<8x32xbf16>, vector<32x32xbf16>, vector<8x32xf32> -> vector<8x32xf32>
    %761 = arith.addf %759, %760 : vector<8x32xf32>
    %762 = arith.index_cast %c6_i32_367 : i32 to index
    %c0_374 = arith.constant 0 : index
    %c0_375 = arith.constant 0 : index
    %763 = vector.load %arg15[%762, %c0_374, %c0_375] : memref<8x8x32xf32, #tpu.memory_space<vmem>>, vector<1x8x32xf32>
    %764 = vector.shape_cast %763 : vector<1x8x32xf32> to vector<8x32xf32>
    %cst_376 = arith.constant dense<0.000000e+00> : vector<8x32xf32>
    %765 = tpu.matmul %751, %468, %cst_376 {dimension_numbers = #tpu.dot_dimension_numbers<[1], [0], [0], [1], [0, 0, 1, 1], [], []>} : vector<8x32xbf16>, vector<32x32xbf16>, vector<8x32xf32> -> vector<8x32xf32>
    %766 = arith.addf %764, %765 : vector<8x32xf32>
    %767 = arith.index_cast %c6_i32_367 : i32 to index
    %c0_377 = arith.constant 0 : index
    %c0_378 = arith.constant 0 : index
    %768 = vector.load %arg16[%767, %c0_377, %c0_378] : memref<8x8x32xf32, #tpu.memory_space<vmem>>, vector<1x8x32xf32>
    %769 = vector.shape_cast %768 : vector<1x8x32xf32> to vector<8x32xf32>
    %cst_379 = arith.constant dense<0.000000e+00> : vector<8x32xf32>
    %770 = tpu.matmul %751, %470, %cst_379 {dimension_numbers = #tpu.dot_dimension_numbers<[1], [0], [0], [1], [0, 0, 1, 1], [], []>} : vector<8x32xbf16>, vector<32x32xbf16>, vector<8x32xf32> -> vector<8x32xf32>
    %771 = arith.addf %769, %770 : vector<8x32xf32>
    %772 = arith.negf %756 : vector<8x32xf32>
    %773 = math.exp %772 : vector<8x32xf32>
    %cst_380 = arith.constant 1.000000e+00 : f32
    %774 = vector.broadcast %cst_380 : f32 to vector<8x32xf32>
    %775 = arith.addf %774, %773 : vector<8x32xf32>
    %776 = arith.divf %774, %775 : vector<8x32xf32>
    %777 = arith.negf %761 : vector<8x32xf32>
    %778 = math.exp %777 : vector<8x32xf32>
    %cst_381 = arith.constant 1.000000e+00 : f32
    %779 = vector.broadcast %cst_381 : f32 to vector<8x32xf32>
    %780 = arith.addf %779, %778 : vector<8x32xf32>
    %781 = arith.divf %779, %780 : vector<8x32xf32>
    %782 = math.tanh %766 : vector<8x32xf32>
    %783 = arith.negf %771 : vector<8x32xf32>
    %784 = math.exp %783 : vector<8x32xf32>
    %cst_382 = arith.constant 1.000000e+00 : f32
    %785 = vector.broadcast %cst_382 : f32 to vector<8x32xf32>
    %786 = arith.addf %785, %784 : vector<8x32xf32>
    %787 = arith.divf %785, %786 : vector<8x32xf32>
    %788 = arith.mulf %781, %744 : vector<8x32xf32>
    %789 = arith.mulf %776, %782 : vector<8x32xf32>
    %790 = arith.addf %788, %789 : vector<8x32xf32>
    %791 = math.tanh %790 : vector<8x32xf32>
    %792 = arith.mulf %787, %791 : vector<8x32xf32>
    %793 = arith.index_cast %c6_i32_367 : i32 to index
    %c0_383 = arith.constant 0 : index
    %c0_384 = arith.constant 0 : index
    %794 = vector.load %arg10[%793, %c0_383, %c0_384] : memref<8x8x32xf32, #tpu.memory_space<vmem>>, vector<1x8x32xf32>
    %795 = vector.shape_cast %794 : vector<1x8x32xf32> to vector<8x32xf32>
    %796 = vector.shape_cast %792 : vector<8x32xf32> to vector<1x8x32xf32>
    tpu.vector_store %arg10[%793, %c0_383, %c0_384], %796 {strides = array<i32>} : memref<8x8x32xf32, #tpu.memory_space<vmem>>, vector<1x8x32xf32>,
    %c7_i32_385 = arith.constant 7 : i32
    %797 = arith.truncf %792 : vector<8x32xf32> to vector<8x32xbf16>
    %798 = arith.index_cast %c7_i32_385 : i32 to index
    %c0_386 = arith.constant 0 : index
    %c0_387 = arith.constant 0 : index
    %799 = vector.load %arg13[%798, %c0_386, %c0_387] : memref<8x8x32xf32, #tpu.memory_space<vmem>>, vector<1x8x32xf32>
    %800 = vector.shape_cast %799 : vector<1x8x32xf32> to vector<8x32xf32>
    %cst_388 = arith.constant dense<0.000000e+00> : vector<8x32xf32>
    %801 = tpu.matmul %797, %464, %cst_388 {dimension_numbers = #tpu.dot_dimension_numbers<[1], [0], [0], [1], [0, 0, 1, 1], [], []>} : vector<8x32xbf16>, vector<32x32xbf16>, vector<8x32xf32> -> vector<8x32xf32>
    %802 = arith.addf %800, %801 : vector<8x32xf32>
    %803 = arith.index_cast %c7_i32_385 : i32 to index
    %c0_389 = arith.constant 0 : index
    %c0_390 = arith.constant 0 : index
    %804 = vector.load %arg14[%803, %c0_389, %c0_390] : memref<8x8x32xf32, #tpu.memory_space<vmem>>, vector<1x8x32xf32>
    %805 = vector.shape_cast %804 : vector<1x8x32xf32> to vector<8x32xf32>
    %cst_391 = arith.constant dense<0.000000e+00> : vector<8x32xf32>
    %806 = tpu.matmul %797, %466, %cst_391 {dimension_numbers = #tpu.dot_dimension_numbers<[1], [0], [0], [1], [0, 0, 1, 1], [], []>} : vector<8x32xbf16>, vector<32x32xbf16>, vector<8x32xf32> -> vector<8x32xf32>
    %807 = arith.addf %805, %806 : vector<8x32xf32>
    %808 = arith.index_cast %c7_i32_385 : i32 to index
    %c0_392 = arith.constant 0 : index
    %c0_393 = arith.constant 0 : index
    %809 = vector.load %arg15[%808, %c0_392, %c0_393] : memref<8x8x32xf32, #tpu.memory_space<vmem>>, vector<1x8x32xf32>
    %810 = vector.shape_cast %809 : vector<1x8x32xf32> to vector<8x32xf32>
    %cst_394 = arith.constant dense<0.000000e+00> : vector<8x32xf32>
    %811 = tpu.matmul %797, %468, %cst_394 {dimension_numbers = #tpu.dot_dimension_numbers<[1], [0], [0], [1], [0, 0, 1, 1], [], []>} : vector<8x32xbf16>, vector<32x32xbf16>, vector<8x32xf32> -> vector<8x32xf32>
    %812 = arith.addf %810, %811 : vector<8x32xf32>
    %813 = arith.index_cast %c7_i32_385 : i32 to index
    %c0_395 = arith.constant 0 : index
    %c0_396 = arith.constant 0 : index
    %814 = vector.load %arg16[%813, %c0_395, %c0_396] : memref<8x8x32xf32, #tpu.memory_space<vmem>>, vector<1x8x32xf32>
    %815 = vector.shape_cast %814 : vector<1x8x32xf32> to vector<8x32xf32>
    %cst_397 = arith.constant dense<0.000000e+00> : vector<8x32xf32>
    %816 = tpu.matmul %797, %470, %cst_397 {dimension_numbers = #tpu.dot_dimension_numbers<[1], [0], [0], [1], [0, 0, 1, 1], [], []>} : vector<8x32xbf16>, vector<32x32xbf16>, vector<8x32xf32> -> vector<8x32xf32>
    %817 = arith.addf %815, %816 : vector<8x32xf32>
    %818 = arith.negf %802 : vector<8x32xf32>
    %819 = math.exp %818 : vector<8x32xf32>
    %cst_398 = arith.constant 1.000000e+00 : f32
    %820 = vector.broadcast %cst_398 : f32 to vector<8x32xf32>
    %821 = arith.addf %820, %819 : vector<8x32xf32>
    %822 = arith.divf %820, %821 : vector<8x32xf32>
    %823 = arith.negf %807 : vector<8x32xf32>
    %824 = math.exp %823 : vector<8x32xf32>
    %cst_399 = arith.constant 1.000000e+00 : f32
    %825 = vector.broadcast %cst_399 : f32 to vector<8x32xf32>
    %826 = arith.addf %825, %824 : vector<8x32xf32>
    %827 = arith.divf %825, %826 : vector<8x32xf32>
    %828 = math.tanh %812 : vector<8x32xf32>
    %829 = arith.negf %817 : vector<8x32xf32>
    %830 = math.exp %829 : vector<8x32xf32>
    %cst_400 = arith.constant 1.000000e+00 : f32
    %831 = vector.broadcast %cst_400 : f32 to vector<8x32xf32>
    %832 = arith.addf %831, %830 : vector<8x32xf32>
    %833 = arith.divf %831, %832 : vector<8x32xf32>
    %834 = arith.mulf %827, %790 : vector<8x32xf32>
    %835 = arith.mulf %822, %828 : vector<8x32xf32>
    %836 = arith.addf %834, %835 : vector<8x32xf32>
    %837 = math.tanh %836 : vector<8x32xf32>
    %838 = arith.mulf %833, %837 : vector<8x32xf32>
    %839 = arith.index_cast %c7_i32_385 : i32 to index
    %c0_401 = arith.constant 0 : index
    %c0_402 = arith.constant 0 : index
    %840 = vector.load %arg10[%839, %c0_401, %c0_402] : memref<8x8x32xf32, #tpu.memory_space<vmem>>, vector<1x8x32xf32>
    %841 = vector.shape_cast %840 : vector<1x8x32xf32> to vector<8x32xf32>
    %842 = vector.shape_cast %838 : vector<8x32xf32> to vector<1x8x32xf32>
    tpu.vector_store %arg10[%839, %c0_401, %c0_402], %842 {strides = array<i32>} : memref<8x8x32xf32, #tpu.memory_space<vmem>>, vector<1x8x32xf32>,
    %c8_i32_403 = arith.constant 8 : i32
    %c1_404 = arith.constant 1 : index
    %c0_405 = arith.constant 0 : index
    %c0_406 = arith.constant 0 : index
    %843 = vector.load %arg11[%c1_404, %c0_405, %c0_406] : memref<2x8x32xf32, #tpu.memory_space<vmem>>, vector<1x8x32xf32>
    %844 = vector.shape_cast %843 : vector<1x8x32xf32> to vector<8x32xf32>
    %845 = vector.shape_cast %838 : vector<8x32xf32> to vector<1x8x32xf32>
    tpu.vector_store %arg11[%c1_404, %c0_405, %c0_406], %845 {strides = array<i32>} : memref<2x8x32xf32, #tpu.memory_space<vmem>>, vector<1x8x32xf32>,
    %c1_407 = arith.constant 1 : index
    %c0_408 = arith.constant 0 : index
    %c0_409 = arith.constant 0 : index
    %846 = vector.load %arg12[%c1_407, %c0_408, %c0_409] : memref<2x8x32xf32, #tpu.memory_space<vmem>>, vector<1x8x32xf32>
    %847 = vector.shape_cast %846 : vector<1x8x32xf32> to vector<8x32xf32>
    %848 = vector.shape_cast %836 : vector<8x32xf32> to vector<1x8x32xf32>
    tpu.vector_store %arg12[%c1_407, %c0_408, %c0_409], %848 {strides = array<i32>} : memref<2x8x32xf32, #tpu.memory_space<vmem>>, vector<1x8x32xf32>,
    return
  }
  func.func @transform_0(%arg0: i32) -> (i32, i32, i32) {
    %c0_i32 = arith.constant 0 : i32
    %c0_i32_0 = arith.constant 0 : i32
    %c0_i32_1 = arith.constant 0 : i32
    %c0_i32_2 = arith.constant 0 : i32
    return %c0_i32, %c0_i32_0, %c0_i32_1 : i32, i32, i32
  }
  func.func @transform_1(%arg0: i32) -> (i32, i32, i32) {
    %c0_i32 = arith.constant 0 : i32
    %c0_i32_0 = arith.constant 0 : i32
    %c0_i32_1 = arith.constant 0 : i32
    %c0_i32_2 = arith.constant 0 : i32
    return %c0_i32, %c0_i32_0, %c0_i32_1 : i32, i32, i32
  }
  func.func @transform_2(%arg0: i32) -> (i32, i32, i32) {
    %c0_i32 = arith.constant 0 : i32
    %c0_i32_0 = arith.constant 0 : i32
    %c0_i32_1 = arith.constant 0 : i32
    %c0_i32_2 = arith.constant 0 : i32
    return %c0_i32, %c0_i32_0, %c0_i32_1 : i32, i32, i32
  }
  func.func @transform_3(%arg0: i32) -> (i32, i32, i32) {
    %c0_i32 = arith.constant 0 : i32
    %c0_i32_0 = arith.constant 0 : i32
    %c0_i32_1 = arith.constant 0 : i32
    %c0_i32_2 = arith.constant 0 : i32
    return %c0_i32, %c0_i32_0, %c0_i32_1 : i32, i32, i32
  }
  func.func @transform_4(%arg0: i32) -> (i32, i32, i32) {
    %c0_i32 = arith.constant 0 : i32
    %c0_i32_0 = arith.constant 0 : i32
    %c0_i32_1 = arith.constant 0 : i32
    %c0_i32_2 = arith.constant 0 : i32
    return %c0_i32, %c0_i32_0, %c0_i32_1 : i32, i32, i32
  }
  func.func @transform_5(%arg0: i32) -> (i32, i32, i32) {
    %c0_i32 = arith.constant 0 : i32
    %c0_i32_0 = arith.constant 0 : i32
    %c0_i32_1 = arith.constant 0 : i32
    %c0_i32_2 = arith.constant 0 : i32
    return %c0_i32, %c0_i32_0, %c0_i32_1 : i32, i32, i32
  }
  func.func @transform_6(%arg0: i32) -> (i32, i32, i32) {
    %c0_i32 = arith.constant 0 : i32
    %c0_i32_0 = arith.constant 0 : i32
    %c0_i32_1 = arith.constant 0 : i32
    %c0_i32_2 = arith.constant 0 : i32
    return %c0_i32, %c0_i32_0, %c0_i32_1 : i32, i32, i32
  }
  func.func @transform_7(%arg0: i32) -> (i32, i32, i32) {
    %c0_i32 = arith.constant 0 : i32
    %c0_i32_0 = arith.constant 0 : i32
    %c0_i32_1 = arith.constant 0 : i32
    %c0_i32_2 = arith.constant 0 : i32
    return %c0_i32, %c0_i32_0, %c0_i32_1 : i32, i32, i32
  }
  func.func @transform_8(%arg0: i32) -> (i32, i32, i32) {
    %c0_i32 = arith.constant 0 : i32
    %c0_i32_0 = arith.constant 0 : i32
    %c0_i32_1 = arith.constant 0 : i32
    %c0_i32_2 = arith.constant 0 : i32
    return %c0_i32, %c0_i32_0, %c0_i32_1 : i32, i32, i32
  }
  func.func @transform_9(%arg0: i32) -> (i32, i32, i32) {
    %c0_i32 = arith.constant 0 : i32
    %c0_i32_0 = arith.constant 0 : i32
    %c0_i32_1 = arith.constant 0 : i32
    %c0_i32_2 = arith.constant 0 : i32
    return %c0_i32, %c0_i32_0, %c0_i32_1 : i32, i32, i32
  }
  func.func @transform_10(%arg0: i32) -> (i32, i32, i32) {
    %c0_i32 = arith.constant 0 : i32
    %c0_i32_0 = arith.constant 0 : i32
    %c0_i32_1 = arith.constant 0 : i32
    %c0_i32_2 = arith.constant 0 : i32
    return %c0_i32, %c0_i32_0, %c0_i32_1 : i32, i32, i32
  }
  func.func @transform_11(%arg0: i32) -> (i32, i32, i32) {
    %c0_i32 = arith.constant 0 : i32
    %c0_i32_0 = arith.constant 0 : i32
    %c0_i32_1 = arith.constant 0 : i32
    %c0_i32_2 = arith.constant 0 : i32
    return %c0_i32, %c0_i32_0, %c0_i32_1 : i32, i32, i32
  }
}

</mosaic_0001>

<llo_original>
// kernel: _lambda_.3
$region0: #{_lambda_.3}
  #allocation0 [shape = 'u32[]', space=smem, size = 0x4, offset = 0x4, fixed_abs, tag = 'smem constant byte address 0x4 - core index']
  #allocation1 [shape = 'u32[144,128]{1,0:T(1,128)}', space=vmem, size = 0x12000, scoped, tag = 'internal scratch']
  %s0 = inlined_call_operand.vmem [shape: bf16[64,32], index: 0, kind: input, shape index: {}]
  %s1 = inlined_call_operand.vmem [shape: bf16[32,128], index: 1, kind: input, shape index: {}]
  %s2 = inlined_call_operand.vmem [shape: f32[1,128], index: 2, kind: input, shape index: {}]
  %s3 = inlined_call_operand.vmem [shape: f32[64,128], index: 3, kind: output, shape index: {}]
  %s4 = sld [smem:[#allocation0]]
  $region22: #{_lambda_.3} parent=0
    _
  %s6 = ssub.s32 1, %s4
  %s7 = scalar_select 0, %s6, %s4
  // Predicated region
  $region2: #{_lambda_.3} parent=0 // pred_check
    _
  $region3: #{_lambda_.3} parent=0 // pred_check_branch
    %9 = sbr.rel (0) target = $region5
  $region4: #{_lambda_.3} parent=0 // pred_region
    _
  $region5: #{_lambda_.3} parent=0 // pred_fallthru
    _
  // Predicated region
  $region6: #{_lambda_.3} parent=0 // pred_check
    _
  $region7: #{_lambda_.3} parent=0 // pred_check_branch
    %11 = sbr.rel (0) target = $region9
  $region8: #{_lambda_.3} parent=0 // pred_region
    _
  $region9: #{_lambda_.3} parent=0 // pred_fallthru
    _
  // Predicated region
  $region10: #{_lambda_.3} parent=0 // pred_check
    _
  $region11: #{_lambda_.3} parent=0 // pred_check_branch
    %13 = sbr.rel (0) target = $region13
  $region12: #{_lambda_.3} parent=0 // pred_region
    _
  $region13: #{_lambda_.3} parent=0 // pred_fallthru
    _
  %v15 = vld [vmem:[%s0] sm:$0xf]
  %v16 = vld [vmem:[%s0 + $0x4] sm:$0xf]
  %v17 = vld [vmem:[%s0 + $0x8] sm:$0xf]
  %v18 = vld [vmem:[%s0 + $0xc] sm:$0xf]
  %v19 = vld [vmem:[%s0 + $0x10] sm:$0xf]
  %v20 = vld [vmem:[%s0 + $0x14] sm:$0xf]
  %v21 = vld [vmem:[%s0 + $0x18] sm:$0xf]
  %v22 = vld [vmem:[%s0 + $0x1c] sm:$0xf]
  %v23 = vld [vmem:[%s1] sm:$0xf]
  %v24 = vld [vmem:[%s1 + $0x4] sm:$0xf]
  %v25 = vld [vmem:[%s1 + $0x8] sm:$0xf]
  %v26 = vld [vmem:[%s1 + $0xc] sm:$0xf]
  %v27 = vld [vmem:[%s2] sm:$0x1]
  %v29 = vlaneseq
  %v30 = vshrl.u32 %v29, 7
  %v31 = vsub.s32 0, %v30
  %v32 = vrot.slane %v27, %v31
  %v42 = vunpack.c.l.b16 %v15
  %v43 = vunpack.c.l.b16 %v16
  %v44 = vunpack.c.l.b16 %v17
  %v45 = vunpack.c.l.b16 %v18
  %v46 = vunpack.c.l.b16 %v19
  %v47 = vunpack.c.l.b16 %v20
  %v48 = vunpack.c.l.b16 %v21
  %v49 = vunpack.c.l.b16 %v22
  %v50 = vpack.c.b16 %v43, %v42
  %v51 = vpack.c.b16 %v45, %v44
  %v52 = vpack.c.b16 %v47, %v46
  %v53 = vpack.c.b16 %v49, %v48
  %v58 = vunpack.c.l.b16 %v23
  %v59 = vunpack.c.l.b16 %v24
  %v60 = vunpack.c.l.b16 %v25
  %v61 = vunpack.c.l.b16 %v26
  %v62 = vpack.c.b16 %v59, %v58
  %v63 = vpack.c.b16 %v61, %v60
  %vm66 = vcmask 261120
  %v68 = vsel %vm66, %v50, 0
  %v71 = vsel %vm66, %v51, 0
  %v74 = vsel %vm66, %v52, 0
  %v77 = vsel %vm66, %v53, 0
  %79 = vmatprep.subr.bf16.mxu0 0
  %80 = vmatpush1.bf16.msra.mxu0 0
  %81 = vmatprep.subr.bf16.mxu0 0
  %82 = vmatpush1.bf16.msra.mxu0 0
  %83 = vmatprep.subr.bf16.mxu0 0
  %84 = vmatpush1.bf16.msra.mxu0 0
  %85 = vmatprep.subr.bf16.mxu0 0
  %86 = vmatpush1.bf16.msra.mxu0 0
  %87 = vmatprep.subr.bf16.mxu0 0
  %88 = vmatpush1.bf16.msra.mxu0 0
  %89 = vmatprep.subr.bf16.mxu0 0
  %90 = vmatpush1.bf16.msra.mxu0 0
  %91 = vmatprep.subr.bf16.mxu0 0
  %92 = vmatpush1.bf16.msra.mxu0 %v63
  %93 = vmatprep.subr.bf16.mxu0 0
  %94 = vmatpush1.bf16.msra.mxu0 %v62
  %95 = vmatprep.subr.bf16.mxu0 0
  %96 = vmatpush2.bf16.msra.mxu0 0
  %97 = vmatprep.subr.bf16.mxu0 0
  %98 = vmatpush2.bf16.msra.mxu0 0
  %99 = vmatprep.subr.bf16.mxu0 0
  %100 = vmatpush2.bf16.msra.mxu0 0
  %101 = vmatprep.subr.bf16.mxu0 0
  %102 = vmatpush2.bf16.msra.mxu0 0
  %103 = vmatprep.subr.bf16.mxu0 0
  %104 = vmatpush2.bf16.msra.mxu0 0
  %105 = vmatprep.subr.bf16.mxu0 0
  %106 = vmatpush2.bf16.msra.mxu0 0
  %107 = vmatprep.subr.bf16.mxu0 0
  %108 = vmatpush2.bf16.msra.mxu0 0
  %109 = vmatprep.subr.bf16.mxu0 0
  %110 = vmatpush2.bf16.msra.mxu0 0
  %111 = vmatprep.mubr.bf16.mxu0 0
  %112 = vmatmul.mubr.bf16.gmra.mxu0 %v68
  %v113 = vpop.f32.mrf.mxu0
  %v114 = vadd.f32 %v32, %v113
  %v115 = vpop.f32.mrf.mxu0
  %v116 = vpop.f32.mrf.mxu0
  %v117 = vadd.f32 %v32, %v116
  %v118 = vpop.f32.mrf.mxu0
  %119 = vmatprep.mubr.bf16.mxu0 0
  %120 = vmatmul.mubr.bf16.gmra.mxu0 %v71
  %v121 = vpop.f32.mrf.mxu0
  %v122 = vadd.f32 %v32, %v121
  %v123 = vpop.f32.mrf.mxu0
  %v124 = vpop.f32.mrf.mxu0
  %v125 = vadd.f32 %v32, %v124
  %v126 = vpop.f32.mrf.mxu0
  %127 = vmatprep.mubr.bf16.mxu0 0
  %128 = vmatmul.mubr.bf16.gmra.mxu0 %v74
  %v129 = vpop.f32.mrf.mxu0
  %v130 = vadd.f32 %v32, %v129
  %v131 = vpop.f32.mrf.mxu0
  %v132 = vpop.f32.mrf.mxu0
  %v133 = vadd.f32 %v32, %v132
  %v134 = vpop.f32.mrf.mxu0
  %135 = vmatprep.mubr.bf16.mxu0 0
  %136 = vmatmul.mubr.bf16.gmra.mxu0 %v77
  %v137 = vpop.f32.mrf.mxu0
  %v138 = vadd.f32 %v32, %v137
  %v139 = vpop.f32.mrf.mxu0
  %v140 = vpop.f32.mrf.mxu0
  %v141 = vadd.f32 %v32, %v140
  %v142 = vpop.f32.mrf.mxu0
  %143 = vdwg.mxu0
  %144 = vst [vmem:[%s3] sm:$0xff] %v114
  %145 = vst [vmem:[%s3 + $0x8] sm:$0xff] %v117
  %146 = vst [vmem:[%s3 + $0x10] sm:$0xff] %v122
  %147 = vst [vmem:[%s3 + $0x18] sm:$0xff] %v125
  %148 = vst [vmem:[%s3 + $0x20] sm:$0xff] %v130
  %149 = vst [vmem:[%s3 + $0x28] sm:$0xff] %v133
  %150 = vst [vmem:[%s3 + $0x30] sm:$0xff] %v138
  %151 = vst [vmem:[%s3 + $0x38] sm:$0xff] %v141
  // Predicated region
  $region14: #{_lambda_.3} parent=0 // pred_check
    _
  $region15: #{_lambda_.3} parent=0 // pred_check_branch
    %153 = sbr.rel (0) target = $region17
  $region16: #{_lambda_.3} parent=0 // pred_region
    _
  $region17: #{_lambda_.3} parent=0 // pred_fallthru
    _
  // Predicated region
  $region18: #{_lambda_.3} parent=0 // pred_check
    _
  $region19: #{_lambda_.3} parent=0 // pred_check_branch
    %155 = sbr.rel (0) target = $region21
  $region20: #{_lambda_.3} parent=0 // pred_region
    _
  $region21: #{_lambda_.3} parent=0 // pred_fallthru
    _

// kernel: _lambda_.2
$region0: #{_lambda_.2}
  #allocation0 [shape = 'u32[]', space=smem, size = 0x4, offset = 0x4, fixed_abs, tag = 'smem constant byte address 0x4 - core index']
  #allocation1 [shape = 'u32[144,128]{1,0:T(1,128)}', space=vmem, size = 0x12000, scoped, tag = 'internal scratch']
  #allocation2 [shape = 'f32[8,8,32]{2,1,0:T(8,128)}', space=vmem, size = 0x8000, scoped, tag = 'scratch operand']
  #allocation3 [shape = 'f32[8,8,32]{2,1,0:T(8,128)}', space=vmem, size = 0x8000, scoped, tag = 'scratch operand']
  #allocation4 [shape = 'f32[8,8,32]{2,1,0:T(8,128)}', space=vmem, size = 0x8000, scoped, tag = 'scratch operand']
  #allocation5 [shape = 'f32[8,8,32]{2,1,0:T(8,128)}', space=vmem, size = 0x8000, scoped, tag = 'scratch operand']
  %s0 = inlined_call_operand.vmem [shape: bf16[8,8,32], index: 0, kind: input, shape index: {}]
  %s1 = inlined_call_operand.vmem [shape: f32[2,8,32], index: 1, kind: input, shape index: {}]
  %s2 = inlined_call_operand.vmem [shape: f32[2,8,32], index: 2, kind: input, shape index: {}]
  %s3 = inlined_call_operand.vmem [shape: bf16[4,32,32], index: 3, kind: input, shape index: {}]
  %s4 = inlined_call_operand.vmem [shape: bf16[4,32,32], index: 4, kind: input, shape index: {}]
  %s5 = inlined_call_operand.vmem [shape: f32[4,1,32], index: 5, kind: input, shape index: {}]
  %s6 = inlined_call_operand.vmem [shape: bf16[4,32,32], index: 6, kind: input, shape index: {}]
  %s7 = inlined_call_operand.hbm [shape: bf16[4,32,32], index: 7, kind: input, shape index: {}]
  %s8 = inlined_call_operand.vmem [shape: f32[4,1,32], index: 8, kind: input, shape index: {}]
  %s9 = inlined_call_operand.vmem [shape: f32[8,8,32], index: 9, kind: output, shape index: {0}]
  %s10 = inlined_call_operand.vmem [shape: f32[2,8,32], index: 10, kind: output, shape index: {1}]
  %s11 = inlined_call_operand.vmem [shape: f32[2,8,32], index: 11, kind: output, shape index: {2}]
  %12 = xla_tuple %s9, %s10, %s11
  %s13 = sld [smem:[#allocation0]]
  $region66: #{_lambda_.2} parent=0
    _
  %s15 = ssub.s32 1, %s13
  %s16 = scalar_select 0, %s15, %s13
  $region1: #{_lambda_.2} parent=0
    #allocation6 [shape = 'u8[32768]{0}', space=vmem, size = 0x8000, scoped, tag = 'input window, operand 7, single buffered']
    #allocation7 [shape = 's32[1]{0}', space=sflag, size = 0x4, scoped, tag = 'scoped memory for _lambda_.2']
    %17 = vsyncpa [#allocation7], 0
    // Predicated region
    $region2: #{_lambda_.2} parent=1 // pred_check
      _
    $region3: #{_lambda_.2} parent=1 // pred_check_branch
      %19 = sbr.rel (0) target = $region5
    $region4: #{_lambda_.2} parent=1 // pred_region
      _
    $region5: #{_lambda_.2} parent=1 // pred_fallthru
      _
    // Predicated region
    $region6: #{_lambda_.2} parent=1 // pred_check
      _
    $region7: #{_lambda_.2} parent=1 // pred_check_branch
      %21 = sbr.rel (0) target = $region9
    $region8: #{_lambda_.2} parent=1 // pred_region
      _
    $region9: #{_lambda_.2} parent=1 // pred_fallthru
      _
    // Predicated region
    $region10: #{_lambda_.2} parent=1 // pred_check
      _
    $region11: #{_lambda_.2} parent=1 // pred_check_branch
      %23 = sbr.rel (0) target = $region13
    $region12: #{_lambda_.2} parent=1 // pred_region
      _
    $region13: #{_lambda_.2} parent=1 // pred_fallthru
      _
    // Predicated region
    $region14: #{_lambda_.2} parent=1 // pred_check
      _
    $region15: #{_lambda_.2} parent=1 // pred_check_branch
      %25 = sbr.rel (0) target = $region17
    $region16: #{_lambda_.2} parent=1 // pred_region
      _
    $region17: #{_lambda_.2} parent=1 // pred_fallthru
      _
    // Predicated region
    $region18: #{_lambda_.2} parent=1 // pred_check
      _
    $region19: #{_lambda_.2} parent=1 // pred_check_branch
      %27 = sbr.rel (0) target = $region21
    $region20: #{_lambda_.2} parent=1 // pred_region
      _
    $region21: #{_lambda_.2} parent=1 // pred_fallthru
      _
    // Predicated region
    $region22: #{_lambda_.2} parent=1 // pred_check
      _
    $region23: #{_lambda_.2} parent=1 // pred_check_branch
      %29 = sbr.rel (0) target = $region25
    $region24: #{_lambda_.2} parent=1 // pred_region
      _
    $region25: #{_lambda_.2} parent=1 // pred_fallthru
      _
    // Predicated region
    $region26: #{_lambda_.2} parent=1 // pred_check
      _
    $region27: #{_lambda_.2} parent=1 // pred_check_branch
      %31 = sbr.rel (0) target = $region29
    $region28: #{_lambda_.2} parent=1 // pred_region
      _
    $region29: #{_lambda_.2} parent=1 // pred_fallthru
      _
    // Predicated region
    $region30: #{_lambda_.2} parent=1 // pred_check
      _
    $region31: #{_lambda_.2} parent=1 // pred_check_branch
      %33 = sbr.rel (0) target = $region33
    $region32: #{_lambda_.2} parent=1 // pred_region
      %s35 = ssub.s32 1024, 1024
      %36 = vsyncadd [#allocation7], %s35
      %s37 = sshll.u32 [#allocation6], 4
      %s38 = int_to_ptr.vmem [resolvable:$true] %s37
      %43 = dma.hbm_to_vmem [thread:$0]  %s7, 1024, %s38, [#allocation7], 64, 64, 4
    $region33: #{_lambda_.2} parent=1 // pred_fallthru
      _
    // Predicated region
    $region34: #{_lambda_.2} parent=1 // pred_check
      _
    $region35: #{_lambda_.2} parent=1 // pred_check_branch
      %45 = sbr.rel (0) target = $region37
    $region36: #{_lambda_.2} parent=1 // pred_region
      _
    $region37: #{_lambda_.2} parent=1 // pred_fallthru
      _
    // Predicated region
    $region38: #{_lambda_.2} parent=1 // pred_check
      _
    $region39: #{_lambda_.2} parent=1 // pred_check_branch
      %47 = sbr.rel (0) target = $region41
    $region40: #{_lambda_.2} parent=1 // pred_region
      %48 = dma.done [#allocation7], 1024
    $region41: #{_lambda_.2} parent=1 // pred_fallthru
      _
    %v50 = vld [vmem:[%s0] sm:$0xf]
    %v51 = vld [vmem:[%s0 + $0x4] sm:$0xf]
    %v52 = vld [vmem:[%s0 + $0x8] sm:$0xf]
    %v53 = vld [vmem:[%s0 + $0xc] sm:$0xf]
    %v54 = vld [vmem:[%s0 + $0x10] sm:$0xf]
    %v55 = vld [vmem:[%s0 + $0x14] sm:$0xf]
    %v56 = vld [vmem:[%s0 + $0x18] sm:$0xf]
    %v57 = vld [vmem:[%s0 + $0x1c] sm:$0xf]
    %v58 = vld [vmem:[%s3] sm:$0xf]
    %v59 = vld [vmem:[%s3 + $0x4] sm:$0xf]
    %v60 = vld [vmem:[%s3 + $0x8] sm:$0xf]
    %v61 = vld [vmem:[%s3 + $0xc] sm:$0xf]
    %v62 = vld [vmem:[%s5] sm:$0x1]
    %v64 = vlaneseq
    %v65 = vshrl.u32 %v64, 7
    %v66 = vsub.s32 0, %v65
    %v67 = vrot.slane %v62, %v66
    %v77 = vunpack.c.l.b16 %v50
    %v78 = vunpack.c.l.b16 %v51
    %v79 = vunpack.c.l.b16 %v52
    %v80 = vunpack.c.l.b16 %v53
    %v81 = vunpack.c.l.b16 %v54
    %v82 = vunpack.c.l.b16 %v55
    %v83 = vunpack.c.l.b16 %v56
    %v84 = vunpack.c.l.b16 %v57
    %v85 = vpack.c.b16 %v78, %v77
    %v86 = vpack.c.b16 %v80, %v79
    %v87 = vpack.c.b16 %v82, %v81
    %v88 = vpack.c.b16 %v84, %v83
    %v93 = vunpack.c.l.b16 %v58
    %v94 = vunpack.c.l.b16 %v59
    %v95 = vunpack.c.l.b16 %v60
    %v96 = vunpack.c.l.b16 %v61
    %v97 = vpack.c.b16 %v94, %v93
    %v98 = vpack.c.b16 %v96, %v95
    %vm101 = vcmask 261120
    %v103 = vsel %vm101, %v85, 0
    %v106 = vsel %vm101, %v86, 0
    %v109 = vsel %vm101, %v87, 0
    %v112 = vsel %vm101, %v88, 0
    %114 = vmatprep.subr.bf16.mxu0 0
    %115 = vmatpush1.bf16.msra.mxu0 0
    %116 = vmatprep.subr.bf16.mxu0 0
    %117 = vmatpush1.bf16.msra.mxu0 0
    %118 = vmatprep.subr.bf16.mxu0 0
    %119 = vmatpush1.bf16.msra.mxu0 0
    %120 = vmatprep.subr.bf16.mxu0 0
    %121 = vmatpush1.bf16.msra.mxu0 0
    %122 = vmatprep.subr.bf16.mxu0 0
    %123 = vmatpush1.bf16.msra.mxu0 0
    %124 = vmatprep.subr.bf16.mxu0 0
    %125 = vmatpush1.bf16.msra.mxu0 0
    %126 = vmatprep.subr.bf16.mxu0 0
    %127 = vmatpush1.bf16.msra.mxu0 %v98
    %128 = vmatprep.subr.bf16.mxu0 0
    %129 = vmatpush1.bf16.msra.mxu0 %v97
    %130 = vmatprep.subr.bf16.mxu0 0
    %131 = vmatpush2.bf16.msra.mxu0 0
    %132 = vmatprep.subr.bf16.mxu0 0
    %133 = vmatpush2.bf16.msra.mxu0 0
    %134 = vmatprep.subr.bf16.mxu0 0
    %135 = vmatpush2.bf16.msra.mxu0 0
    %136 = vmatprep.subr.bf16.mxu0 0
    %137 = vmatpush2.bf16.msra.mxu0 0
    %138 = vmatprep.subr.bf16.mxu0 0
    %139 = vmatpush2.bf16.msra.mxu0 0
    %140 = vmatprep.subr.bf16.mxu0 0
    %141 = vmatpush2.bf16.msra.mxu0 0
    %142 = vmatprep.subr.bf16.mxu0 0
    %143 = vmatpush2.bf16.msra.mxu0 0
    %144 = vmatprep.subr.bf16.mxu0 0
    %145 = vmatpush2.bf16.msra.mxu0 0
    %146 = vmatprep.mubr.bf16.mxu0 0
    %147 = vmatmul.mubr.bf16.gmra.mxu0 %v103
    %v148 = vpop.f32.mrf.mxu0
    %v149 = vadd.f32 %v67, %v148
    %v150 = vpop.f32.mrf.mxu0
    %v151 = vpop.f32.mrf.mxu0
    %v152 = vadd.f32 %v67, %v151
    %v153 = vpop.f32.mrf.mxu0
    %154 = vmatprep.mubr.bf16.mxu0 0
    %155 = vmatmul.mubr.bf16.gmra.mxu0 %v106
    %v156 = vpop.f32.mrf.mxu0
    %v157 = vadd.f32 %v67, %v156
    %v158 = vpop.f32.mrf.mxu0
    %v159 = vpop.f32.mrf.mxu0
    %v160 = vadd.f32 %v67, %v159
    %v161 = vpop.f32.mrf.mxu0
    %162 = vmatprep.mubr.bf16.mxu0 0
    %163 = vmatmul.mubr.bf16.gmra.mxu0 %v109
    %v164 = vpop.f32.mrf.mxu0
    %v165 = vadd.f32 %v67, %v164
    %v166 = vpop.f32.mrf.mxu0
    %v167 = vpop.f32.mrf.mxu0
    %v168 = vadd.f32 %v67, %v167
    %v169 = vpop.f32.mrf.mxu0
    %170 = vmatprep.mubr.bf16.mxu0 0
    %171 = vmatmul.mubr.bf16.gmra.mxu0 %v112
    %v172 = vpop.f32.mrf.mxu0
    %v173 = vadd.f32 %v67, %v172
    %v174 = vpop.f32.mrf.mxu0
    %v175 = vpop.f32.mrf.mxu0
    %v176 = vadd.f32 %v67, %v175
    %v177 = vpop.f32.mrf.mxu0
    %178 = vdwg.mxu0
    %179 = vst.msk [vmem:[#allocation2] sm:$0xff] %vm101, %v149
    %180 = vst.msk [vmem:[#allocation2 + $0x8] sm:$0xff] %vm101, %v152
    %181 = vst.msk [vmem:[#allocation2 + $0x10] sm:$0xff] %vm101, %v157
    %182 = vst.msk [vmem:[#allocation2 + $0x18] sm:$0xff] %vm101, %v160
    %183 = vst.msk [vmem:[#allocation2 + $0x20] sm:$0xff] %vm101, %v165
    %184 = vst.msk [vmem:[#allocation2 + $0x28] sm:$0xff] %vm101, %v168
    %185 = vst.msk [vmem:[#allocation2 + $0x30] sm:$0xff] %vm101, %v173
    %186 = vst.msk [vmem:[#allocation2 + $0x38] sm:$0xff] %vm101, %v176
    %s187 = scalar_lea.vmem %s3, 16
    %v188 = vld [vmem:[%s187] sm:$0xf]
    %v189 = vld [vmem:[%s187 + $0x4] sm:$0xf]
    %v190 = vld [vmem:[%s187 + $0x8] sm:$0xf]
    %v191 = vld [vmem:[%s187 + $0xc] sm:$0xf]
    %s192 = scalar_lea.vmem %s5, 1
    %v193 = vld [vmem:[%s192] sm:$0x1]
    %v195 = vlaneseq
    %v196 = vshrl.u32 %v195, 7
    %v197 = vsub.s32 0, %v196
    %v198 = vrot.slane %v193, %v197
    %v204 = vunpack.c.l.b16 %v188
    %v205 = vunpack.c.l.b16 %v189
    %v206 = vunpack.c.l.b16 %v190
    %v207 = vunpack.c.l.b16 %v191
    %v208 = vpack.c.b16 %v205, %v204
    %v209 = vpack.c.b16 %v207, %v206
    %212 = vmatprep.subr.bf16.mxu0 0
    %213 = vmatpush1.bf16.msra.mxu0 0
    %214 = vmatprep.subr.bf16.mxu0 0
    %215 = vmatpush1.bf16.msra.mxu0 0
    %216 = vmatprep.subr.bf16.mxu0 0
    %217 = vmatpush1.bf16.msra.mxu0 0
    %218 = vmatprep.subr.bf16.mxu0 0
    %219 = vmatpush1.bf16.msra.mxu0 0
    %220 = vmatprep.subr.bf16.mxu0 0
    %221 = vmatpush1.bf16.msra.mxu0 0
    %222 = vmatprep.subr.bf16.mxu0 0
    %223 = vmatpush1.bf16.msra.mxu0 0
    %224 = vmatprep.subr.bf16.mxu0 0
    %225 = vmatpush1.bf16.msra.mxu0 %v209
    %226 = vmatprep.subr.bf16.mxu0 0
    %227 = vmatpush1.bf16.msra.mxu0 %v208
    %228 = vmatprep.subr.bf16.mxu0 0
    %229 = vmatpush2.bf16.msra.mxu0 0
    %230 = vmatprep.subr.bf16.mxu0 0
    %231 = vmatpush2.bf16.msra.mxu0 0
    %232 = vmatprep.subr.bf16.mxu0 0
    %233 = vmatpush2.bf16.msra.mxu0 0
    %234 = vmatprep.subr.bf16.mxu0 0
    %235 = vmatpush2.bf16.msra.mxu0 0
    %236 = vmatprep.subr.bf16.mxu0 0
    %237 = vmatpush2.bf16.msra.mxu0 0
    %238 = vmatprep.subr.bf16.mxu0 0
    %239 = vmatpush2.bf16.msra.mxu0 0
    %240 = vmatprep.subr.bf16.mxu0 0
    %241 = vmatpush2.bf16.msra.mxu0 0
    %242 = vmatprep.subr.bf16.mxu0 0
    %243 = vmatpush2.bf16.msra.mxu0 0
    %244 = vmatprep.mubr.bf16.mxu0 0
    %245 = vmatmul.mubr.bf16.gmra.mxu0 %v103
    %v246 = vpop.f32.mrf.mxu0
    %v247 = vadd.f32 %v198, %v246
    %v248 = vpop.f32.mrf.mxu0
    %v249 = vpop.f32.mrf.mxu0
    %v250 = vadd.f32 %v198, %v249
    %v251 = vpop.f32.mrf.mxu0
    %252 = vmatprep.mubr.bf16.mxu0 0
    %253 = vmatmul.mubr.bf16.gmra.mxu0 %v106
    %v254 = vpop.f32.mrf.mxu0
    %v255 = vadd.f32 %v198, %v254
    %v256 = vpop.f32.mrf.mxu0
    %v257 = vpop.f32.mrf.mxu0
    %v258 = vadd.f32 %v198, %v257
    %v259 = vpop.f32.mrf.mxu0
    %260 = vmatprep.mubr.bf16.mxu0 0
    %261 = vmatmul.mubr.bf16.gmra.mxu0 %v109
    %v262 = vpop.f32.mrf.mxu0
    %v263 = vadd.f32 %v198, %v262
    %v264 = vpop.f32.mrf.mxu0
    %v265 = vpop.f32.mrf.mxu0
    %v266 = vadd.f32 %v198, %v265
    %v267 = vpop.f32.mrf.mxu0
    %268 = vmatprep.mubr.bf16.mxu0 0
    %269 = vmatmul.mubr.bf16.gmra.mxu0 %v112
    %v270 = vpop.f32.mrf.mxu0
    %v271 = vadd.f32 %v198, %v270
    %v272 = vpop.f32.mrf.mxu0
    %v273 = vpop.f32.mrf.mxu0
    %v274 = vadd.f32 %v198, %v273
    %v275 = vpop.f32.mrf.mxu0
    %276 = vdwg.mxu0
    %277 = vst.msk [vmem:[#allocation3] sm:$0xff] %vm101, %v247
    %278 = vst.msk [vmem:[#allocation3 + $0x8] sm:$0xff] %vm101, %v250
    %279 = vst.msk [vmem:[#allocation3 + $0x10] sm:$0xff] %vm101, %v255
    %280 = vst.msk [vmem:[#allocation3 + $0x18] sm:$0xff] %vm101, %v258
    %281 = vst.msk [vmem:[#allocation3 + $0x20] sm:$0xff] %vm101, %v263
    %282 = vst.msk [vmem:[#allocation3 + $0x28] sm:$0xff] %vm101, %v266
    %283 = vst.msk [vmem:[#allocation3 + $0x30] sm:$0xff] %vm101, %v271
    %284 = vst.msk [vmem:[#allocation3 + $0x38] sm:$0xff] %vm101, %v274
    %s285 = scalar_lea.vmem %s3, 32
    %v286 = vld [vmem:[%s285] sm:$0xf]
    %v287 = vld [vmem:[%s285 + $0x4] sm:$0xf]
    %v288 = vld [vmem:[%s285 + $0x8] sm:$0xf]
    %v289 = vld [vmem:[%s285 + $0xc] sm:$0xf]
    %s290 = scalar_lea.vmem %s5, 2
    %v291 = vld [vmem:[%s290] sm:$0x1]
    %v293 = vlaneseq
    %v294 = vshrl.u32 %v293, 7
    %v295 = vsub.s32 0, %v294
    %v296 = vrot.slane %v291, %v295
    %v302 = vunpack.c.l.b16 %v286
    %v303 = vunpack.c.l.b16 %v287
    %v304 = vunpack.c.l.b16 %v288
    %v305 = vunpack.c.l.b16 %v289
    %v306 = vpack.c.b16 %v303, %v302
    %v307 = vpack.c.b16 %v305, %v304
    %310 = vmatprep.subr.bf16.mxu0 0
    %311 = vmatpush1.bf16.msra.mxu0 0
    %312 = vmatprep.subr.bf16.mxu0 0
    %313 = vmatpush1.bf16.msra.mxu0 0
    %314 = vmatprep.subr.bf16.mxu0 0
    %315 = vmatpush1.bf16.msra.mxu0 0
    %316 = vmatprep.subr.bf16.mxu0 0
    %317 = vmatpush1.bf16.msra.mxu0 0
    %318 = vmatprep.subr.bf16.mxu0 0
    %319 = vmatpush1.bf16.msra.mxu0 0
    %320 = vmatprep.subr.bf16.mxu0 0
    %321 = vmatpush1.bf16.msra.mxu0 0
    %322 = vmatprep.subr.bf16.mxu0 0
    %323 = vmatpush1.bf16.msra.mxu0 %v307
    %324 = vmatprep.subr.bf16.mxu0 0
    %325 = vmatpush1.bf16.msra.mxu0 %v306
    %326 = vmatprep.subr.bf16.mxu0 0
    %327 = vmatpush2.bf16.msra.mxu0 0
    %328 = vmatprep.subr.bf16.mxu0 0
    %329 = vmatpush2.bf16.msra.mxu0 0
    %330 = vmatprep.subr.bf16.mxu0 0
    %331 = vmatpush2.bf16.msra.mxu0 0
    %332 = vmatprep.subr.bf16.mxu0 0
    %333 = vmatpush2.bf16.msra.mxu0 0
    %334 = vmatprep.subr.bf16.mxu0 0
    %335 = vmatpush2.bf16.msra.mxu0 0
    %336 = vmatprep.subr.bf16.mxu0 0
    %337 = vmatpush2.bf16.msra.mxu0 0
    %338 = vmatprep.subr.bf16.mxu0 0
    %339 = vmatpush2.bf16.msra.mxu0 0
    %340 = vmatprep.subr.bf16.mxu0 0
    %341 = vmatpush2.bf16.msra.mxu0 0
    %342 = vmatprep.mubr.bf16.mxu0 0
    %343 = vmatmul.mubr.bf16.gmra.mxu0 %v103
    %v344 = vpop.f32.mrf.mxu0
    %v345 = vadd.f32 %v296, %v344
    %v346 = vpop.f32.mrf.mxu0
    %v347 = vpop.f32.mrf.mxu0
    %v348 = vadd.f32 %v296, %v347
    %v349 = vpop.f32.mrf.mxu0
    %350 = vmatprep.mubr.bf16.mxu0 0
    %351 = vmatmul.mubr.bf16.gmra.mxu0 %v106
    %v352 = vpop.f32.mrf.mxu0
    %v353 = vadd.f32 %v296, %v352
    %v354 = vpop.f32.mrf.mxu0
    %v355 = vpop.f32.mrf.mxu0
    %v356 = vadd.f32 %v296, %v355
    %v357 = vpop.f32.mrf.mxu0
    %358 = vmatprep.mubr.bf16.mxu0 0
    %359 = vmatmul.mubr.bf16.gmra.mxu0 %v109
    %v360 = vpop.f32.mrf.mxu0
    %v361 = vadd.f32 %v296, %v360
    %v362 = vpop.f32.mrf.mxu0
    %v363 = vpop.f32.mrf.mxu0
    %v364 = vadd.f32 %v296, %v363
    %v365 = vpop.f32.mrf.mxu0
    %366 = vmatprep.mubr.bf16.mxu0 0
    %367 = vmatmul.mubr.bf16.gmra.mxu0 %v112
    %v368 = vpop.f32.mrf.mxu0
    %v369 = vadd.f32 %v296, %v368
    %v370 = vpop.f32.mrf.mxu0
    %v371 = vpop.f32.mrf.mxu0
    %v372 = vadd.f32 %v296, %v371
    %v373 = vpop.f32.mrf.mxu0
    %374 = vdwg.mxu0
    %375 = vst.msk [vmem:[#allocation4] sm:$0xff] %vm101, %v345
    %376 = vst.msk [vmem:[#allocation4 + $0x8] sm:$0xff] %vm101, %v348
    %377 = vst.msk [vmem:[#allocation4 + $0x10] sm:$0xff] %vm101, %v353
    %378 = vst.msk [vmem:[#allocation4 + $0x18] sm:$0xff] %vm101, %v356
    %379 = vst.msk [vmem:[#allocation4 + $0x20] sm:$0xff] %vm101, %v361
    %380 = vst.msk [vmem:[#allocation4 + $0x28] sm:$0xff] %vm101, %v364
    %381 = vst.msk [vmem:[#allocation4 + $0x30] sm:$0xff] %vm101, %v369
    %382 = vst.msk [vmem:[#allocation4 + $0x38] sm:$0xff] %vm101, %v372
    %s383 = scalar_lea.vmem %s3, 48
    %v384 = vld [vmem:[%s383] sm:$0xf]
    %v385 = vld [vmem:[%s383 + $0x4] sm:$0xf]
    %v386 = vld [vmem:[%s383 + $0x8] sm:$0xf]
    %v387 = vld [vmem:[%s383 + $0xc] sm:$0xf]
    %s388 = scalar_lea.vmem %s5, 3
    %v389 = vld [vmem:[%s388] sm:$0x1]
    %v391 = vlaneseq
    %v392 = vshrl.u32 %v391, 7
    %v393 = vsub.s32 0, %v392
    %v394 = vrot.slane %v389, %v393
    %v400 = vunpack.c.l.b16 %v384
    %v401 = vunpack.c.l.b16 %v385
    %v402 = vunpack.c.l.b16 %v386
    %v403 = vunpack.c.l.b16 %v387
    %v404 = vpack.c.b16 %v401, %v400
    %v405 = vpack.c.b16 %v403, %v402
    %408 = vmatprep.subr.bf16.mxu0 0
    %409 = vmatpush1.bf16.msra.mxu0 0
    %410 = vmatprep.subr.bf16.mxu0 0
    %411 = vmatpush1.bf16.msra.mxu0 0
    %412 = vmatprep.subr.bf16.mxu0 0
    %413 = vmatpush1.bf16.msra.mxu0 0
    %414 = vmatprep.subr.bf16.mxu0 0
    %415 = vmatpush1.bf16.msra.mxu0 0
    %416 = vmatprep.subr.bf16.mxu0 0
    %417 = vmatpush1.bf16.msra.mxu0 0
    %418 = vmatprep.subr.bf16.mxu0 0
    %419 = vmatpush1.bf16.msra.mxu0 0
    %420 = vmatprep.subr.bf16.mxu0 0
    %421 = vmatpush1.bf16.msra.mxu0 %v405
    %422 = vmatprep.subr.bf16.mxu0 0
    %423 = vmatpush1.bf16.msra.mxu0 %v404
    %424 = vmatprep.subr.bf16.mxu0 0
    %425 = vmatpush2.bf16.msra.mxu0 0
    %426 = vmatprep.subr.bf16.mxu0 0
    %427 = vmatpush2.bf16.msra.mxu0 0
    %428 = vmatprep.subr.bf16.mxu0 0
    %429 = vmatpush2.bf16.msra.mxu0 0
    %430 = vmatprep.subr.bf16.mxu0 0
    %431 = vmatpush2.bf16.msra.mxu0 0
    %432 = vmatprep.subr.bf16.mxu0 0
    %433 = vmatpush2.bf16.msra.mxu0 0
    %434 = vmatprep.subr.bf16.mxu0 0
    %435 = vmatpush2.bf16.msra.mxu0 0
    %436 = vmatprep.subr.bf16.mxu0 0
    %437 = vmatpush2.bf16.msra.mxu0 0
    %438 = vmatprep.subr.bf16.mxu0 0
    %439 = vmatpush2.bf16.msra.mxu0 0
    %440 = vmatprep.mubr.bf16.mxu0 0
    %441 = vmatmul.mubr.bf16.gmra.mxu0 %v103
    %v442 = vpop.f32.mrf.mxu0
    %v443 = vadd.f32 %v394, %v442
    %v444 = vpop.f32.mrf.mxu0
    %v445 = vpop.f32.mrf.mxu0
    %v446 = vadd.f32 %v394, %v445
    %v447 = vpop.f32.mrf.mxu0
    %448 = vmatprep.mubr.bf16.mxu0 0
    %449 = vmatmul.mubr.bf16.gmra.mxu0 %v106
    %v450 = vpop.f32.mrf.mxu0
    %v451 = vadd.f32 %v394, %v450
    %v452 = vpop.f32.mrf.mxu0
    %v453 = vpop.f32.mrf.mxu0
    %v454 = vadd.f32 %v394, %v453
    %v455 = vpop.f32.mrf.mxu0
    %456 = vmatprep.mubr.bf16.mxu0 0
    %457 = vmatmul.mubr.bf16.gmra.mxu0 %v109
    %v458 = vpop.f32.mrf.mxu0
    %v459 = vadd.f32 %v394, %v458
    %v460 = vpop.f32.mrf.mxu0
    %v461 = vpop.f32.mrf.mxu0
    %v462 = vadd.f32 %v394, %v461
    %v463 = vpop.f32.mrf.mxu0
    %464 = vmatprep.mubr.bf16.mxu0 0
    %465 = vmatmul.mubr.bf16.gmra.mxu0 %v112
    %v466 = vpop.f32.mrf.mxu0
    %v467 = vadd.f32 %v394, %v466
    %v468 = vpop.f32.mrf.mxu0
    %v469 = vpop.f32.mrf.mxu0
    %v470 = vadd.f32 %v394, %v469
    %v471 = vpop.f32.mrf.mxu0
    %472 = vdwg.mxu0
    %473 = vst.msk [vmem:[#allocation5] sm:$0xff] %vm101, %v443
    %474 = vst.msk [vmem:[#allocation5 + $0x8] sm:$0xff] %vm101, %v446
    %475 = vst.msk [vmem:[#allocation5 + $0x10] sm:$0xff] %vm101, %v451
    %476 = vst.msk [vmem:[#allocation5 + $0x18] sm:$0xff] %vm101, %v454
    %477 = vst.msk [vmem:[#allocation5 + $0x20] sm:$0xff] %vm101, %v459
    %478 = vst.msk [vmem:[#allocation5 + $0x28] sm:$0xff] %vm101, %v462
    %479 = vst.msk [vmem:[#allocation5 + $0x30] sm:$0xff] %vm101, %v467
    %480 = vst.msk [vmem:[#allocation5 + $0x38] sm:$0xff] %vm101, %v470
    %v481 = vld [vmem:[%s4] sm:$0xf]
    %v482 = vld [vmem:[%s4 + $0x4] sm:$0xf]
    %v483 = vld [vmem:[%s4 + $0x8] sm:$0xf]
    %v484 = vld [vmem:[%s4 + $0xc] sm:$0xf]
    %s485 = scalar_lea.vmem %s4, 16
    %v486 = vld [vmem:[%s485] sm:$0xf]
    %v487 = vld [vmem:[%s485 + $0x4] sm:$0xf]
    %v488 = vld [vmem:[%s485 + $0x8] sm:$0xf]
    %v489 = vld [vmem:[%s485 + $0xc] sm:$0xf]
    %s490 = scalar_lea.vmem %s4, 32
    %v491 = vld [vmem:[%s490] sm:$0xf]
    %v492 = vld [vmem:[%s490 + $0x4] sm:$0xf]
    %v493 = vld [vmem:[%s490 + $0x8] sm:$0xf]
    %v494 = vld [vmem:[%s490 + $0xc] sm:$0xf]
    %s495 = scalar_lea.vmem %s4, 48
    %v496 = vld [vmem:[%s495] sm:$0xf]
    %v497 = vld [vmem:[%s495 + $0x4] sm:$0xf]
    %v498 = vld [vmem:[%s495 + $0x8] sm:$0xf]
    %v499 = vld [vmem:[%s495 + $0xc] sm:$0xf]
    %v500 = vld [vmem:[%s1] sm:$0xff]
    %v501 = vld [vmem:[%s2] sm:$0xff]
    %v502 = vpack.c.bf16 %v500, %v500
    %v503 = vld [vmem:[#allocation2] sm:$0xff]
    %v508 = vunpack.c.l.b16 %v481
    %v509 = vunpack.c.l.b16 %v482
    %v510 = vunpack.c.l.b16 %v483
    %v511 = vunpack.c.l.b16 %v484
    %v512 = vpack.c.b16 %v509, %v508
    %v513 = vpack.c.b16 %v511, %v510
    %v517 = vsel %vm101, %v502, 0
    %519 = vmatprep.subr.bf16.mxu0 0
    %520 = vmatpush1.bf16.msra.mxu0 0
    %521 = vmatprep.subr.bf16.mxu0 0
    %522 = vmatpush1.bf16.msra.mxu0 0
    %523 = vmatprep.subr.bf16.mxu0 0
    %524 = vmatpush1.bf16.msra.mxu0 0
    %525 = vmatprep.subr.bf16.mxu0 0
    %526 = vmatpush1.bf16.msra.mxu0 0
    %527 = vmatprep.subr.bf16.mxu0 0
    %528 = vmatpush1.bf16.msra.mxu0 0
    %529 = vmatprep.subr.bf16.mxu0 0
    %530 = vmatpush1.bf16.msra.mxu0 0
    %531 = vmatprep.subr.bf16.mxu0 0
    %532 = vmatpush1.bf16.msra.mxu0 %v513
    %533 = vmatprep.subr.bf16.mxu0 0
    %534 = vmatpush1.bf16.msra.mxu0 %v512
    %535 = vmatprep.subr.bf16.mxu0 0
    %536 = vmatpush2.bf16.msra.mxu0 0
    %537 = vmatprep.subr.bf16.mxu0 0
    %538 = vmatpush2.bf16.msra.mxu0 0
    %539 = vmatprep.subr.bf16.mxu0 0
    %540 = vmatpush2.bf16.msra.mxu0 0
    %541 = vmatprep.subr.bf16.mxu0 0
    %542 = vmatpush2.bf16.msra.mxu0 0
    %543 = vmatprep.subr.bf16.mxu0 0
    %544 = vmatpush2.bf16.msra.mxu0 0
    %545 = vmatprep.subr.bf16.mxu0 0
    %546 = vmatpush2.bf16.msra.mxu0 0
    %547 = vmatprep.subr.bf16.mxu0 0
    %548 = vmatpush2.bf16.msra.mxu0 0
    %549 = vmatprep.subr.bf16.mxu0 0
    %550 = vmatpush2.bf16.msra.mxu0 0
    %551 = vmatprep.mubr.bf16.mxu0 0
    %552 = vmatmul.mubr.bf16.gmra.mxu0 %v517
    %v553 = vpop.f32.mrf.mxu0
    %v554 = vadd.f32 0.0, %v553
    %v555 = vpop.f32.mrf.mxu0
    %v556 = vpop.f32.mrf.mxu0
    %v557 = vpop.f32.mrf.mxu0
    %558 = vdwg.mxu0
    %v559 = vadd.f32 %v503, %v554
    %v560 = vld [vmem:[#allocation3] sm:$0xff]
    %v565 = vunpack.c.l.b16 %v486
    %v566 = vunpack.c.l.b16 %v487
    %v567 = vunpack.c.l.b16 %v488
    %v568 = vunpack.c.l.b16 %v489
    %v569 = vpack.c.b16 %v566, %v565
    %v570 = vpack.c.b16 %v568, %v567
    %573 = vmatprep.subr.bf16.mxu0 0
    %574 = vmatpush1.bf16.msra.mxu0 0
    %575 = vmatprep.subr.bf16.mxu0 0
    %576 = vmatpush1.bf16.msra.mxu0 0
    %577 = vmatprep.subr.bf16.mxu0 0
    %578 = vmatpush1.bf16.msra.mxu0 0
    %579 = vmatprep.subr.bf16.mxu0 0
    %580 = vmatpush1.bf16.msra.mxu0 0
    %581 = vmatprep.subr.bf16.mxu0 0
    %582 = vmatpush1.bf16.msra.mxu0 0
    %583 = vmatprep.subr.bf16.mxu0 0
    %584 = vmatpush1.bf16.msra.mxu0 0
    %585 = vmatprep.subr.bf16.mxu0 0
    %586 = vmatpush1.bf16.msra.mxu0 %v570
    %587 = vmatprep.subr.bf16.mxu0 0
    %588 = vmatpush1.bf16.msra.mxu0 %v569
    %589 = vmatprep.subr.bf16.mxu0 0
    %590 = vmatpush2.bf16.msra.mxu0 0
    %591 = vmatprep.subr.bf16.mxu0 0
    %592 = vmatpush2.bf16.msra.mxu0 0
    %593 = vmatprep.subr.bf16.mxu0 0
    %594 = vmatpush2.bf16.msra.mxu0 0
    %595 = vmatprep.subr.bf16.mxu0 0
    %596 = vmatpush2.bf16.msra.mxu0 0
    %597 = vmatprep.subr.bf16.mxu0 0
    %598 = vmatpush2.bf16.msra.mxu0 0
    %599 = vmatprep.subr.bf16.mxu0 0
    %600 = vmatpush2.bf16.msra.mxu0 0
    %601 = vmatprep.subr.bf16.mxu0 0
    %602 = vmatpush2.bf16.msra.mxu0 0
    %603 = vmatprep.subr.bf16.mxu0 0
    %604 = vmatpush2.bf16.msra.mxu0 0
    %605 = vmatprep.mubr.bf16.mxu0 0
    %606 = vmatmul.mubr.bf16.gmra.mxu0 %v517
    %v607 = vpop.f32.mrf.mxu0
    %v608 = vadd.f32 0.0, %v607
    %v609 = vpop.f32.mrf.mxu0
    %v610 = vpop.f32.mrf.mxu0
    %v611 = vpop.f32.mrf.mxu0
    %612 = vdwg.mxu0
    %v613 = vadd.f32 %v560, %v608
    %v614 = vld [vmem:[#allocation4] sm:$0xff]
    %v619 = vunpack.c.l.b16 %v491
    %v620 = vunpack.c.l.b16 %v492
    %v621 = vunpack.c.l.b16 %v493
    %v622 = vunpack.c.l.b16 %v494
    %v623 = vpack.c.b16 %v620, %v619
    %v624 = vpack.c.b16 %v622, %v621
    %627 = vmatprep.subr.bf16.mxu0 0
    %628 = vmatpush1.bf16.msra.mxu0 0
    %629 = vmatprep.subr.bf16.mxu0 0
    %630 = vmatpush1.bf16.msra.mxu0 0
    %631 = vmatprep.subr.bf16.mxu0 0
    %632 = vmatpush1.bf16.msra.mxu0 0
    %633 = vmatprep.subr.bf16.mxu0 0
    %634 = vmatpush1.bf16.msra.mxu0 0
    %635 = vmatprep.subr.bf16.mxu0 0
    %636 = vmatpush1.bf16.msra.mxu0 0
    %637 = vmatprep.subr.bf16.mxu0 0
    %638 = vmatpush1.bf16.msra.mxu0 0
    %639 = vmatprep.subr.bf16.mxu0 0
    %640 = vmatpush1.bf16.msra.mxu0 %v624
    %641 = vmatprep.subr.bf16.mxu0 0
    %642 = vmatpush1.bf16.msra.mxu0 %v623
    %643 = vmatprep.subr.bf16.mxu0 0
    %644 = vmatpush2.bf16.msra.mxu0 0
    %645 = vmatprep.subr.bf16.mxu0 0
    %646 = vmatpush2.bf16.msra.mxu0 0
    %647 = vmatprep.subr.bf16.mxu0 0
    %648 = vmatpush2.bf16.msra.mxu0 0
    %649 = vmatprep.subr.bf16.mxu0 0
    %650 = vmatpush2.bf16.msra.mxu0 0
    %651 = vmatprep.subr.bf16.mxu0 0
    %652 = vmatpush2.bf16.msra.mxu0 0
    %653 = vmatprep.subr.bf16.mxu0 0
    %654 = vmatpush2.bf16.msra.mxu0 0
    %655 = vmatprep.subr.bf16.mxu0 0
    %656 = vmatpush2.bf16.msra.mxu0 0
    %657 = vmatprep.subr.bf16.mxu0 0
    %658 = vmatpush2.bf16.msra.mxu0 0
    %659 = vmatprep.mubr.bf16.mxu0 0
    %660 = vmatmul.mubr.bf16.gmra.mxu0 %v517
    %v661 = vpop.f32.mrf.mxu0
    %v662 = vadd.f32 0.0, %v661
    %v663 = vpop.f32.mrf.mxu0
    %v664 = vpop.f32.mrf.mxu0
    %v665 = vpop.f32.mrf.mxu0
    %666 = vdwg.mxu0
    %v667 = vadd.f32 %v614, %v662
    %v668 = vld [vmem:[#allocation5] sm:$0xff]
    %v673 = vunpack.c.l.b16 %v496
    %v674 = vunpack.c.l.b16 %v497
    %v675 = vunpack.c.l.b16 %v498
    %v676 = vunpack.c.l.b16 %v499
    %v677 = vpack.c.b16 %v674, %v673
    %v678 = vpack.c.b16 %v676, %v675
    %681 = vmatprep.subr.bf16.mxu0 0
    %682 = vmatpush1.bf16.msra.mxu0 0
    %683 = vmatprep.subr.bf16.mxu0 0
    %684 = vmatpush1.bf16.msra.mxu0 0
    %685 = vmatprep.subr.bf16.mxu0 0
    %686 = vmatpush1.bf16.msra.mxu0 0
    %687 = vmatprep.subr.bf16.mxu0 0
    %688 = vmatpush1.bf16.msra.mxu0 0
    %689 = vmatprep.subr.bf16.mxu0 0
    %690 = vmatpush1.bf16.msra.mxu0 0
    %691 = vmatprep.subr.bf16.mxu0 0
    %692 = vmatpush1.bf16.msra.mxu0 0
    %693 = vmatprep.subr.bf16.mxu0 0
    %694 = vmatpush1.bf16.msra.mxu0 %v678
    %695 = vmatprep.subr.bf16.mxu0 0
    %696 = vmatpush1.bf16.msra.mxu0 %v677
    %697 = vmatprep.subr.bf16.mxu0 0
    %698 = vmatpush2.bf16.msra.mxu0 0
    %699 = vmatprep.subr.bf16.mxu0 0
    %700 = vmatpush2.bf16.msra.mxu0 0
    %701 = vmatprep.subr.bf16.mxu0 0
    %702 = vmatpush2.bf16.msra.mxu0 0
    %703 = vmatprep.subr.bf16.mxu0 0
    %704 = vmatpush2.bf16.msra.mxu0 0
    %705 = vmatprep.subr.bf16.mxu0 0
    %706 = vmatpush2.bf16.msra.mxu0 0
    %707 = vmatprep.subr.bf16.mxu0 0
    %708 = vmatpush2.bf16.msra.mxu0 0
    %709 = vmatprep.subr.bf16.mxu0 0
    %710 = vmatpush2.bf16.msra.mxu0 0
    %711 = vmatprep.subr.bf16.mxu0 0
    %712 = vmatpush2.bf16.msra.mxu0 0
    %713 = vmatprep.mubr.bf16.mxu0 0
    %714 = vmatmul.mubr.bf16.gmra.mxu0 %v517
    %v715 = vpop.f32.mrf.mxu0
    %v716 = vadd.f32 0.0, %v715
    %v717 = vpop.f32.mrf.mxu0
    %v718 = vpop.f32.mrf.mxu0
    %v719 = vpop.f32.mrf.mxu0
    %720 = vdwg.mxu0
    %v721 = vadd.f32 %v668, %v716
    %v722 = vxor.u32 %v559, 2147483648
    %v723 = vmul.f32 %v722, 1.442695
    %v724 = vpow.pop %v723
    %v725 = vadd.f32 %v724, 1.0
    %v726 = vrcp.pop %v725
    %v727 = vmul.f32 1.0, %v726
    %v728 = vxor.u32 %v613, 2147483648
    %v729 = vmul.f32 %v728, 1.442695
    %v730 = vpow.pop %v729
    %v731 = vadd.f32 %v730, 1.0
    %v732 = vrcp.pop %v731
    %v733 = vmul.f32 1.0, %v732
    %v734 = vtanh.pop %v667
    %v735 = vxor.u32 %v721, 2147483648
    %v736 = vmul.f32 %v735, 1.442695
    %v737 = vpow.pop %v736
    %v738 = vadd.f32 %v737, 1.0
    %v739 = vrcp.pop %v738
    %v740 = vmul.f32 1.0, %v739
    %v741 = vmul.f32 %v733, %v501
    %v742 = vmul.f32 %v727, %v734
    %v743 = vadd.f32 %v741, %v742
    %v744 = vtanh.pop %v743
    %v745 = vmul.f32 %v740, %v744
    %746 = vst.msk [vmem:[%s9] sm:$0xff] %vm101, %v745
    %v747 = vpack.c.bf16 %v745, %v745
    %s748 = scalar_lea.vmem [#allocation2], 8
    %v749 = vld [vmem:[%s748] sm:$0xff]
    %v751 = vsel %vm101, %v747, 0
    %753 = vmatprep.subr.bf16.mxu0 0
    %754 = vmatpush1.bf16.msra.mxu0 0
    %755 = vmatprep.subr.bf16.mxu0 0
    %756 = vmatpush1.bf16.msra.mxu0 0
    %757 = vmatprep.subr.bf16.mxu0 0
    %758 = vmatpush1.bf16.msra.mxu0 0
    %759 = vmatprep.subr.bf16.mxu0 0
    %760 = vmatpush1.bf16.msra.mxu0 0
    %761 = vmatprep.subr.bf16.mxu0 0
    %762 = vmatpush1.bf16.msra.mxu0 0
    %763 = vmatprep.subr.bf16.mxu0 0
    %764 = vmatpush1.bf16.msra.mxu0 0
    %765 = vmatprep.subr.bf16.mxu0 0
    %766 = vmatpush1.bf16.msra.mxu0 %v513
    %767 = vmatprep.subr.bf16.mxu0 0
    %768 = vmatpush1.bf16.msra.mxu0 %v512
    %769 = vmatprep.subr.bf16.mxu0 0
    %770 = vmatpush2.bf16.msra.mxu0 0
    %771 = vmatprep.subr.bf16.mxu0 0
    %772 = vmatpush2.bf16.msra.mxu0 0
    %773 = vmatprep.subr.bf16.mxu0 0
    %774 = vmatpush2.bf16.msra.mxu0 0
    %775 = vmatprep.subr.bf16.mxu0 0
    %776 = vmatpush2.bf16.msra.mxu0 0
    %777 = vmatprep.subr.bf16.mxu0 0
    %778 = vmatpush2.bf16.msra.mxu0 0
    %779 = vmatprep.subr.bf16.mxu0 0
    %780 = vmatpush2.bf16.msra.mxu0 0
    %781 = vmatprep.subr.bf16.mxu0 0
    %782 = vmatpush2.bf16.msra.mxu0 0
    %783 = vmatprep.subr.bf16.mxu0 0
    %784 = vmatpush2.bf16.msra.mxu0 0
    %785 = vmatprep.mubr.bf16.mxu0 0
    %786 = vmatmul.mubr.bf16.gmra.mxu0 %v751
    %v787 = vpop.f32.mrf.mxu0
    %v788 = vadd.f32 0.0, %v787
    %v789 = vpop.f32.mrf.mxu0
    %v790 = vpop.f32.mrf.mxu0
    %v791 = vpop.f32.mrf.mxu0
    %792 = vdwg.mxu0
    %v793 = vadd.f32 %v749, %v788
    %s794 = scalar_lea.vmem [#allocation3], 8
    %v795 = vld [vmem:[%s794] sm:$0xff]
    %796 = vmatprep.subr.bf16.mxu0 0
    %797 = vmatpush1.bf16.msra.mxu0 0
    %798 = vmatprep.subr.bf16.mxu0 0
    %799 = vmatpush1.bf16.msra.mxu0 0
    %800 = vmatprep.subr.bf16.mxu0 0
    %801 = vmatpush1.bf16.msra.mxu0 0
    %802 = vmatprep.subr.bf16.mxu0 0
    %803 = vmatpush1.bf16.msra.mxu0 0
    %804 = vmatprep.subr.bf16.mxu0 0
    %805 = vmatpush1.bf16.msra.mxu0 0
    %806 = vmatprep.subr.bf16.mxu0 0
    %807 = vmatpush1.bf16.msra.mxu0 0
    %808 = vmatprep.subr.bf16.mxu0 0
    %809 = vmatpush1.bf16.msra.mxu0 %v570
    %810 = vmatprep.subr.bf16.mxu0 0
    %811 = vmatpush1.bf16.msra.mxu0 %v569
    %812 = vmatprep.subr.bf16.mxu0 0
    %813 = vmatpush2.bf16.msra.mxu0 0
    %814 = vmatprep.subr.bf16.mxu0 0
    %815 = vmatpush2.bf16.msra.mxu0 0
    %816 = vmatprep.subr.bf16.mxu0 0
    %817 = vmatpush2.bf16.msra.mxu0 0
    %818 = vmatprep.subr.bf16.mxu0 0
    %819 = vmatpush2.bf16.msra.mxu0 0
    %820 = vmatprep.subr.bf16.mxu0 0
    %821 = vmatpush2.bf16.msra.mxu0 0
    %822 = vmatprep.subr.bf16.mxu0 0
    %823 = vmatpush2.bf16.msra.mxu0 0
    %824 = vmatprep.subr.bf16.mxu0 0
    %825 = vmatpush2.bf16.msra.mxu0 0
    %826 = vmatprep.subr.bf16.mxu0 0
    %827 = vmatpush2.bf16.msra.mxu0 0
    %828 = vmatprep.mubr.bf16.mxu0 0
    %829 = vmatmul.mubr.bf16.gmra.mxu0 %v751
    %v830 = vpop.f32.mrf.mxu0
    %v831 = vadd.f32 0.0, %v830
    %v832 = vpop.f32.mrf.mxu0
    %v833 = vpop.f32.mrf.mxu0
    %v834 = vpop.f32.mrf.mxu0
    %835 = vdwg.mxu0
    %v836 = vadd.f32 %v795, %v831
    %s837 = scalar_lea.vmem [#allocation4], 8
    %v838 = vld [vmem:[%s837] sm:$0xff]
    %839 = vmatprep.subr.bf16.mxu0 0
    %840 = vmatpush1.bf16.msra.mxu0 0
    %841 = vmatprep.subr.bf16.mxu0 0
    %842 = vmatpush1.bf16.msra.mxu0 0
    %843 = vmatprep.subr.bf16.mxu0 0
    %844 = vmatpush1.bf16.msra.mxu0 0
    %845 = vmatprep.subr.bf16.mxu0 0
    %846 = vmatpush1.bf16.msra.mxu0 0
    %847 = vmatprep.subr.bf16.mxu0 0
    %848 = vmatpush1.bf16.msra.mxu0 0
    %849 = vmatprep.subr.bf16.mxu0 0
    %850 = vmatpush1.bf16.msra.mxu0 0
    %851 = vmatprep.subr.bf16.mxu0 0
    %852 = vmatpush1.bf16.msra.mxu0 %v624
    %853 = vmatprep.subr.bf16.mxu0 0
    %854 = vmatpush1.bf16.msra.mxu0 %v623
    %855 = vmatprep.subr.bf16.mxu0 0
    %856 = vmatpush2.bf16.msra.mxu0 0
    %857 = vmatprep.subr.bf16.mxu0 0
    %858 = vmatpush2.bf16.msra.mxu0 0
    %859 = vmatprep.subr.bf16.mxu0 0
    %860 = vmatpush2.bf16.msra.mxu0 0
    %861 = vmatprep.subr.bf16.mxu0 0
    %862 = vmatpush2.bf16.msra.mxu0 0
    %863 = vmatprep.subr.bf16.mxu0 0
    %864 = vmatpush2.bf16.msra.mxu0 0
    %865 = vmatprep.subr.bf16.mxu0 0
    %866 = vmatpush2.bf16.msra.mxu0 0
    %867 = vmatprep.subr.bf16.mxu0 0
    %868 = vmatpush2.bf16.msra.mxu0 0
    %869 = vmatprep.subr.bf16.mxu0 0
    %870 = vmatpush2.bf16.msra.mxu0 0
    %871 = vmatprep.mubr.bf16.mxu0 0
    %872 = vmatmul.mubr.bf16.gmra.mxu0 %v751
    %v873 = vpop.f32.mrf.mxu0
    %v874 = vadd.f32 0.0, %v873
    %v875 = vpop.f32.mrf.mxu0
    %v876 = vpop.f32.mrf.mxu0
    %v877 = vpop.f32.mrf.mxu0
    %878 = vdwg.mxu0
    %v879 = vadd.f32 %v838, %v874
    %s880 = scalar_lea.vmem [#allocation5], 8
    %v881 = vld [vmem:[%s880] sm:$0xff]
    %882 = vmatprep.subr.bf16.mxu0 0
    %883 = vmatpush1.bf16.msra.mxu0 0
    %884 = vmatprep.subr.bf16.mxu0 0
    %885 = vmatpush1.bf16.msra.mxu0 0
    %886 = vmatprep.subr.bf16.mxu0 0
    %887 = vmatpush1.bf16.msra.mxu0 0
    %888 = vmatprep.subr.bf16.mxu0 0
    %889 = vmatpush1.bf16.msra.mxu0 0
    %890 = vmatprep.subr.bf16.mxu0 0
    %891 = vmatpush1.bf16.msra.mxu0 0
    %892 = vmatprep.subr.bf16.mxu0 0
    %893 = vmatpush1.bf16.msra.mxu0 0
    %894 = vmatprep.subr.bf16.mxu0 0
    %895 = vmatpush1.bf16.msra.mxu0 %v678
    %896 = vmatprep.subr.bf16.mxu0 0
    %897 = vmatpush1.bf16.msra.mxu0 %v677
    %898 = vmatprep.subr.bf16.mxu0 0
    %899 = vmatpush2.bf16.msra.mxu0 0
    %900 = vmatprep.subr.bf16.mxu0 0
    %901 = vmatpush2.bf16.msra.mxu0 0
    %902 = vmatprep.subr.bf16.mxu0 0
    %903 = vmatpush2.bf16.msra.mxu0 0
    %904 = vmatprep.subr.bf16.mxu0 0
    %905 = vmatpush2.bf16.msra.mxu0 0
    %906 = vmatprep.subr.bf16.mxu0 0
    %907 = vmatpush2.bf16.msra.mxu0 0
    %908 = vmatprep.subr.bf16.mxu0 0
    %909 = vmatpush2.bf16.msra.mxu0 0
    %910 = vmatprep.subr.bf16.mxu0 0
    %911 = vmatpush2.bf16.msra.mxu0 0
    %912 = vmatprep.subr.bf16.mxu0 0
    %913 = vmatpush2.bf16.msra.mxu0 0
    %914 = vmatprep.mubr.bf16.mxu0 0
    %915 = vmatmul.mubr.bf16.gmra.mxu0 %v751
    %v916 = vpop.f32.mrf.mxu0
    %v917 = vadd.f32 0.0, %v916
    %v918 = vpop.f32.mrf.mxu0
    %v919 = vpop.f32.mrf.mxu0
    %v920 = vpop.f32.mrf.mxu0
    %921 = vdwg.mxu0
    %v922 = vadd.f32 %v881, %v917
    %v923 = vxor.u32 %v793, 2147483648
    %v924 = vmul.f32 %v923, 1.442695
    %v925 = vpow.pop %v924
    %v926 = vadd.f32 %v925, 1.0
    %v927 = vrcp.pop %v926
    %v928 = vmul.f32 1.0, %v927
    %v929 = vxor.u32 %v836, 2147483648
    %v930 = vmul.f32 %v929, 1.442695
    %v931 = vpow.pop %v930
    %v932 = vadd.f32 %v931, 1.0
    %v933 = vrcp.pop %v932
    %v934 = vmul.f32 1.0, %v933
    %v935 = vtanh.pop %v879
    %v936 = vxor.u32 %v922, 2147483648
    %v937 = vmul.f32 %v936, 1.442695
    %v938 = vpow.pop %v937
    %v939 = vadd.f32 %v938, 1.0
    %v940 = vrcp.pop %v939
    %v941 = vmul.f32 1.0, %v940
    %v942 = vmul.f32 %v934, %v743
    %v943 = vmul.f32 %v928, %v935
    %v944 = vadd.f32 %v942, %v943
    %v945 = vtanh.pop %v944
    %v946 = vmul.f32 %v941, %v945
    %s947 = scalar_lea.vmem %s9, 8
    %948 = vst.msk [vmem:[%s947] sm:$0xff] %vm101, %v946
    %v949 = vpack.c.bf16 %v946, %v946
    %s950 = scalar_lea.vmem [#allocation2], 16
    %v951 = vld [vmem:[%s950] sm:$0xff]
    %v953 = vsel %vm101, %v949, 0
    %955 = vmatprep.subr.bf16.mxu0 0
    %956 = vmatpush1.bf16.msra.mxu0 0
    %957 = vmatprep.subr.bf16.mxu0 0
    %958 = vmatpush1.bf16.msra.mxu0 0
    %959 = vmatprep.subr.bf16.mxu0 0
    %960 = vmatpush1.bf16.msra.mxu0 0
    %961 = vmatprep.subr.bf16.mxu0 0
    %962 = vmatpush1.bf16.msra.mxu0 0
    %963 = vmatprep.subr.bf16.mxu0 0
    %964 = vmatpush1.bf16.msra.mxu0 0
    %965 = vmatprep.subr.bf16.mxu0 0
    %966 = vmatpush1.bf16.msra.mxu0 0
    %967 = vmatprep.subr.bf16.mxu0 0
    %968 = vmatpush1.bf16.msra.mxu0 %v513
    %969 = vmatprep.subr.bf16.mxu0 0
    %970 = vmatpush1.bf16.msra.mxu0 %v512
    %971 = vmatprep.subr.bf16.mxu0 0
    %972 = vmatpush2.bf16.msra.mxu0 0
    %973 = vmatprep.subr.bf16.mxu0 0
    %974 = vmatpush2.bf16.msra.mxu0 0
    %975 = vmatprep.subr.bf16.mxu0 0
    %976 = vmatpush2.bf16.msra.mxu0 0
    %977 = vmatprep.subr.bf16.mxu0 0
    %978 = vmatpush2.bf16.msra.mxu0 0
    %979 = vmatprep.subr.bf16.mxu0 0
    %980 = vmatpush2.bf16.msra.mxu0 0
    %981 = vmatprep.subr.bf16.mxu0 0
    %982 = vmatpush2.bf16.msra.mxu0 0
    %983 = vmatprep.subr.bf16.mxu0 0
    %984 = vmatpush2.bf16.msra.mxu0 0
    %985 = vmatprep.subr.bf16.mxu0 0
    %986 = vmatpush2.bf16.msra.mxu0 0
    %987 = vmatprep.mubr.bf16.mxu0 0
    %988 = vmatmul.mubr.bf16.gmra.mxu0 %v953
    %v989 = vpop.f32.mrf.mxu0
    %v990 = vadd.f32 0.0, %v989
    %v991 = vpop.f32.mrf.mxu0
    %v992 = vpop.f32.mrf.mxu0
    %v993 = vpop.f32.mrf.mxu0
    %994 = vdwg.mxu0
    %v995 = vadd.f32 %v951, %v990
    %s996 = scalar_lea.vmem [#allocation3], 16
    %v997 = vld [vmem:[%s996] sm:$0xff]
    %998 = vmatprep.subr.bf16.mxu0 0
    %999 = vmatpush1.bf16.msra.mxu0 0
    %1000 = vmatprep.subr.bf16.mxu0 0
    %1001 = vmatpush1.bf16.msra.mxu0 0
    %1002 = vmatprep.subr.bf16.mxu0 0
    %1003 = vmatpush1.bf16.msra.mxu0 0
    %1004 = vmatprep.subr.bf16.mxu0 0
    %1005 = vmatpush1.bf16.msra.mxu0 0
    %1006 = vmatprep.subr.bf16.mxu0 0
    %1007 = vmatpush1.bf16.msra.mxu0 0
    %1008 = vmatprep.subr.bf16.mxu0 0
    %1009 = vmatpush1.bf16.msra.mxu0 0
    %1010 = vmatprep.subr.bf16.mxu0 0
    %1011 = vmatpush1.bf16.msra.mxu0 %v570
    %1012 = vmatprep.subr.bf16.mxu0 0
    %1013 = vmatpush1.bf16.msra.mxu0 %v569
    %1014 = vmatprep.subr.bf16.mxu0 0
    %1015 = vmatpush2.bf16.msra.mxu0 0
    %1016 = vmatprep.subr.bf16.mxu0 0
    %1017 = vmatpush2.bf16.msra.mxu0 0
    %1018 = vmatprep.subr.bf16.mxu0 0
    %1019 = vmatpush2.bf16.msra.mxu0 0
    %1020 = vmatprep.subr.bf16.mxu0 0
    %1021 = vmatpush2.bf16.msra.mxu0 0
    %1022 = vmatprep.subr.bf16.mxu0 0
    %1023 = vmatpush2.bf16.msra.mxu0 0
    %1024 = vmatprep.subr.bf16.mxu0 0
    %1025 = vmatpush2.bf16.msra.mxu0 0
    %1026 = vmatprep.subr.bf16.mxu0 0
    %1027 = vmatpush2.bf16.msra.mxu0 0
    %1028 = vmatprep.subr.bf16.mxu0 0
    %1029 = vmatpush2.bf16.msra.mxu0 0
    %1030 = vmatprep.mubr.bf16.mxu0 0
    %1031 = vmatmul.mubr.bf16.gmra.mxu0 %v953
    %v1032 = vpop.f32.mrf.mxu0
    %v1033 = vadd.f32 0.0, %v1032
    %v1034 = vpop.f32.mrf.mxu0
    %v1035 = vpop.f32.mrf.mxu0
    %v1036 = vpop.f32.mrf.mxu0
    %1037 = vdwg.mxu0
    %v1038 = vadd.f32 %v997, %v1033
    %s1039 = scalar_lea.vmem [#allocation4], 16
    %v1040 = vld [vmem:[%s1039] sm:$0xff]
    %1041 = vmatprep.subr.bf16.mxu0 0
    %1042 = vmatpush1.bf16.msra.mxu0 0
    %1043 = vmatprep.subr.bf16.mxu0 0
    %1044 = vmatpush1.bf16.msra.mxu0 0
    %1045 = vmatprep.subr.bf16.mxu0 0
    %1046 = vmatpush1.bf16.msra.mxu0 0
    %1047 = vmatprep.subr.bf16.mxu0 0
    %1048 = vmatpush1.bf16.msra.mxu0 0
    %1049 = vmatprep.subr.bf16.mxu0 0
    %1050 = vmatpush1.bf16.msra.mxu0 0
    %1051 = vmatprep.subr.bf16.mxu0 0
    %1052 = vmatpush1.bf16.msra.mxu0 0
    %1053 = vmatprep.subr.bf16.mxu0 0
    %1054 = vmatpush1.bf16.msra.mxu0 %v624
    %1055 = vmatprep.subr.bf16.mxu0 0
    %1056 = vmatpush1.bf16.msra.mxu0 %v623
    %1057 = vmatprep.subr.bf16.mxu0 0
    %1058 = vmatpush2.bf16.msra.mxu0 0
    %1059 = vmatprep.subr.bf16.mxu0 0
    %1060 = vmatpush2.bf16.msra.mxu0 0
    %1061 = vmatprep.subr.bf16.mxu0 0
    %1062 = vmatpush2.bf16.msra.mxu0 0
    %1063 = vmatprep.subr.bf16.mxu0 0
    %1064 = vmatpush2.bf16.msra.mxu0 0
    %1065 = vmatprep.subr.bf16.mxu0 0
    %1066 = vmatpush2.bf16.msra.mxu0 0
    %1067 = vmatprep.subr.bf16.mxu0 0
    %1068 = vmatpush2.bf16.msra.mxu0 0
    %1069 = vmatprep.subr.bf16.mxu0 0
    %1070 = vmatpush2.bf16.msra.mxu0 0
    %1071 = vmatprep.subr.bf16.mxu0 0
    %1072 = vmatpush2.bf16.msra.mxu0 0
    %1073 = vmatprep.mubr.bf16.mxu0 0
    %1074 = vmatmul.mubr.bf16.gmra.mxu0 %v953
    %v1075 = vpop.f32.mrf.mxu0
    %v1076 = vadd.f32 0.0, %v1075
    %v1077 = vpop.f32.mrf.mxu0
    %v1078 = vpop.f32.mrf.mxu0
    %v1079 = vpop.f32.mrf.mxu0
    %1080 = vdwg.mxu0
    %v1081 = vadd.f32 %v1040, %v1076
    %s1082 = scalar_lea.vmem [#allocation5], 16
    %v1083 = vld [vmem:[%s1082] sm:$0xff]
    %1084 = vmatprep.subr.bf16.mxu0 0
    %1085 = vmatpush1.bf16.msra.mxu0 0
    %1086 = vmatprep.subr.bf16.mxu0 0
    %1087 = vmatpush1.bf16.msra.mxu0 0
    %1088 = vmatprep.subr.bf16.mxu0 0
    %1089 = vmatpush1.bf16.msra.mxu0 0
    %1090 = vmatprep.subr.bf16.mxu0 0
    %1091 = vmatpush1.bf16.msra.mxu0 0
    %1092 = vmatprep.subr.bf16.mxu0 0
    %1093 = vmatpush1.bf16.msra.mxu0 0
    %1094 = vmatprep.subr.bf16.mxu0 0
    %1095 = vmatpush1.bf16.msra.mxu0 0
    %1096 = vmatprep.subr.bf16.mxu0 0
    %1097 = vmatpush1.bf16.msra.mxu0 %v678
    %1098 = vmatprep.subr.bf16.mxu0 0
    %1099 = vmatpush1.bf16.msra.mxu0 %v677
    %1100 = vmatprep.subr.bf16.mxu0 0
    %1101 = vmatpush2.bf16.msra.mxu0 0
    %1102 = vmatprep.subr.bf16.mxu0 0
    %1103 = vmatpush2.bf16.msra.mxu0 0
    %1104 = vmatprep.subr.bf16.mxu0 0
    %1105 = vmatpush2.bf16.msra.mxu0 0
    %1106 = vmatprep.subr.bf16.mxu0 0
    %1107 = vmatpush2.bf16.msra.mxu0 0
    %1108 = vmatprep.subr.bf16.mxu0 0
    %1109 = vmatpush2.bf16.msra.mxu0 0
    %1110 = vmatprep.subr.bf16.mxu0 0
    %1111 = vmatpush2.bf16.msra.mxu0 0
    %1112 = vmatprep.subr.bf16.mxu0 0
    %1113 = vmatpush2.bf16.msra.mxu0 0
    %1114 = vmatprep.subr.bf16.mxu0 0
    %1115 = vmatpush2.bf16.msra.mxu0 0
    %1116 = vmatprep.mubr.bf16.mxu0 0
    %1117 = vmatmul.mubr.bf16.gmra.mxu0 %v953
    %v1118 = vpop.f32.mrf.mxu0
    %v1119 = vadd.f32 0.0, %v1118
    %v1120 = vpop.f32.mrf.mxu0
    %v1121 = vpop.f32.mrf.mxu0
    %v1122 = vpop.f32.mrf.mxu0
    %1123 = vdwg.mxu0
    %v1124 = vadd.f32 %v1083, %v1119
    %v1125 = vxor.u32 %v995, 2147483648
    %v1126 = vmul.f32 %v1125, 1.442695
    %v1127 = vpow.pop %v1126
    %v1128 = vadd.f32 %v1127, 1.0
    %v1129 = vrcp.pop %v1128
    %v1130 = vmul.f32 1.0, %v1129
    %v1131 = vxor.u32 %v1038, 2147483648
    %v1132 = vmul.f32 %v1131, 1.442695
    %v1133 = vpow.pop %v1132
    %v1134 = vadd.f32 %v1133, 1.0
    %v1135 = vrcp.pop %v1134
    %v1136 = vmul.f32 1.0, %v1135
    %v1137 = vtanh.pop %v1081
    %v1138 = vxor.u32 %v1124, 2147483648
    %v1139 = vmul.f32 %v1138, 1.442695
    %v1140 = vpow.pop %v1139
    %v1141 = vadd.f32 %v1140, 1.0
    %v1142 = vrcp.pop %v1141
    %v1143 = vmul.f32 1.0, %v1142
    %v1144 = vmul.f32 %v1136, %v944
    %v1145 = vmul.f32 %v1130, %v1137
    %v1146 = vadd.f32 %v1144, %v1145
    %v1147 = vtanh.pop %v1146
    %v1148 = vmul.f32 %v1143, %v1147
    %s1149 = scalar_lea.vmem %s9, 16
    %1150 = vst.msk [vmem:[%s1149] sm:$0xff] %vm101, %v1148
    %v1151 = vpack.c.bf16 %v1148, %v1148
    %s1152 = scalar_lea.vmem [#allocation2], 24
    %v1153 = vld [vmem:[%s1152] sm:$0xff]
    %v1155 = vsel %vm101, %v1151, 0
    %1157 = vmatprep.subr.bf16.mxu0 0
    %1158 = vmatpush1.bf16.msra.mxu0 0
    %1159 = vmatprep.subr.bf16.mxu0 0
    %1160 = vmatpush1.bf16.msra.mxu0 0
    %1161 = vmatprep.subr.bf16.mxu0 0
    %1162 = vmatpush1.bf16.msra.mxu0 0
    %1163 = vmatprep.subr.bf16.mxu0 0
    %1164 = vmatpush1.bf16.msra.mxu0 0
    %1165 = vmatprep.subr.bf16.mxu0 0
    %1166 = vmatpush1.bf16.msra.mxu0 0
    %1167 = vmatprep.subr.bf16.mxu0 0
    %1168 = vmatpush1.bf16.msra.mxu0 0
    %1169 = vmatprep.subr.bf16.mxu0 0
    %1170 = vmatpush1.bf16.msra.mxu0 %v513
    %1171 = vmatprep.subr.bf16.mxu0 0
    %1172 = vmatpush1.bf16.msra.mxu0 %v512
    %1173 = vmatprep.subr.bf16.mxu0 0
    %1174 = vmatpush2.bf16.msra.mxu0 0
    %1175 = vmatprep.subr.bf16.mxu0 0
    %1176 = vmatpush2.bf16.msra.mxu0 0
    %1177 = vmatprep.subr.bf16.mxu0 0
    %1178 = vmatpush2.bf16.msra.mxu0 0
    %1179 = vmatprep.subr.bf16.mxu0 0
    %1180 = vmatpush2.bf16.msra.mxu0 0
    %1181 = vmatprep.subr.bf16.mxu0 0
    %1182 = vmatpush2.bf16.msra.mxu0 0
    %1183 = vmatprep.subr.bf16.mxu0 0
    %1184 = vmatpush2.bf16.msra.mxu0 0
    %1185 = vmatprep.subr.bf16.mxu0 0
    %1186 = vmatpush2.bf16.msra.mxu0 0
    %1187 = vmatprep.subr.bf16.mxu0 0
    %1188 = vmatpush2.bf16.msra.mxu0 0
    %1189 = vmatprep.mubr.bf16.mxu0 0
    %1190 = vmatmul.mubr.bf16.gmra.mxu0 %v1155
    %v1191 = vpop.f32.mrf.mxu0
    %v1192 = vadd.f32 0.0, %v1191
    %v1193 = vpop.f32.mrf.mxu0
    %v1194 = vpop.f32.mrf.mxu0
    %v1195 = vpop.f32.mrf.mxu0
    %1196 = vdwg.mxu0
    %v1197 = vadd.f32 %v1153, %v1192
    %s1198 = scalar_lea.vmem [#allocation3], 24
    %v1199 = vld [vmem:[%s1198] sm:$0xff]
    %1200 = vmatprep.subr.bf16.mxu0 0
    %1201 = vmatpush1.bf16.msra.mxu0 0
    %1202 = vmatprep.subr.bf16.mxu0 0
    %1203 = vmatpush1.bf16.msra.mxu0 0
    %1204 = vmatprep.subr.bf16.mxu0 0
    %1205 = vmatpush1.bf16.msra.mxu0 0
    %1206 = vmatprep.subr.bf16.mxu0 0
    %1207 = vmatpush1.bf16.msra.mxu0 0
    %1208 = vmatprep.subr.bf16.mxu0 0
    %1209 = vmatpush1.bf16.msra.mxu0 0
    %1210 = vmatprep.subr.bf16.mxu0 0
    %1211 = vmatpush1.bf16.msra.mxu0 0
    %1212 = vmatprep.subr.bf16.mxu0 0
    %1213 = vmatpush1.bf16.msra.mxu0 %v570
    %1214 = vmatprep.subr.bf16.mxu0 0
    %1215 = vmatpush1.bf16.msra.mxu0 %v569
    %1216 = vmatprep.subr.bf16.mxu0 0
    %1217 = vmatpush2.bf16.msra.mxu0 0
    %1218 = vmatprep.subr.bf16.mxu0 0
    %1219 = vmatpush2.bf16.msra.mxu0 0
    %1220 = vmatprep.subr.bf16.mxu0 0
    %1221 = vmatpush2.bf16.msra.mxu0 0
    %1222 = vmatprep.subr.bf16.mxu0 0
    %1223 = vmatpush2.bf16.msra.mxu0 0
    %1224 = vmatprep.subr.bf16.mxu0 0
    %1225 = vmatpush2.bf16.msra.mxu0 0
    %1226 = vmatprep.subr.bf16.mxu0 0
    %1227 = vmatpush2.bf16.msra.mxu0 0
    %1228 = vmatprep.subr.bf16.mxu0 0
    %1229 = vmatpush2.bf16.msra.mxu0 0
    %1230 = vmatprep.subr.bf16.mxu0 0
    %1231 = vmatpush2.bf16.msra.mxu0 0
    %1232 = vmatprep.mubr.bf16.mxu0 0
    %1233 = vmatmul.mubr.bf16.gmra.mxu0 %v1155
    %v1234 = vpop.f32.mrf.mxu0
    %v1235 = vadd.f32 0.0, %v1234
    %v1236 = vpop.f32.mrf.mxu0
    %v1237 = vpop.f32.mrf.mxu0
    %v1238 = vpop.f32.mrf.mxu0
    %1239 = vdwg.mxu0
    %v1240 = vadd.f32 %v1199, %v1235
    %s1241 = scalar_lea.vmem [#allocation4], 24
    %v1242 = vld [vmem:[%s1241] sm:$0xff]
    %1243 = vmatprep.subr.bf16.mxu0 0
    %1244 = vmatpush1.bf16.msra.mxu0 0
    %1245 = vmatprep.subr.bf16.mxu0 0
    %1246 = vmatpush1.bf16.msra.mxu0 0
    %1247 = vmatprep.subr.bf16.mxu0 0
    %1248 = vmatpush1.bf16.msra.mxu0 0
    %1249 = vmatprep.subr.bf16.mxu0 0
    %1250 = vmatpush1.bf16.msra.mxu0 0
    %1251 = vmatprep.subr.bf16.mxu0 0
    %1252 = vmatpush1.bf16.msra.mxu0 0
    %1253 = vmatprep.subr.bf16.mxu0 0
    %1254 = vmatpush1.bf16.msra.mxu0 0
    %1255 = vmatprep.subr.bf16.mxu0 0
    %1256 = vmatpush1.bf16.msra.mxu0 %v624
    %1257 = vmatprep.subr.bf16.mxu0 0
    %1258 = vmatpush1.bf16.msra.mxu0 %v623
    %1259 = vmatprep.subr.bf16.mxu0 0
    %1260 = vmatpush2.bf16.msra.mxu0 0
    %1261 = vmatprep.subr.bf16.mxu0 0
    %1262 = vmatpush2.bf16.msra.mxu0 0
    %1263 = vmatprep.subr.bf16.mxu0 0
    %1264 = vmatpush2.bf16.msra.mxu0 0
    %1265 = vmatprep.subr.bf16.mxu0 0
    %1266 = vmatpush2.bf16.msra.mxu0 0
    %1267 = vmatprep.subr.bf16.mxu0 0
    %1268 = vmatpush2.bf16.msra.mxu0 0
    %1269 = vmatprep.subr.bf16.mxu0 0
    %1270 = vmatpush2.bf16.msra.mxu0 0
    %1271 = vmatprep.subr.bf16.mxu0 0
    %1272 = vmatpush2.bf16.msra.mxu0 0
    %1273 = vmatprep.subr.bf16.mxu0 0
    %1274 = vmatpush2.bf16.msra.mxu0 0
    %1275 = vmatprep.mubr.bf16.mxu0 0
    %1276 = vmatmul.mubr.bf16.gmra.mxu0 %v1155
    %v1277 = vpop.f32.mrf.mxu0
    %v1278 = vadd.f32 0.0, %v1277
    %v1279 = vpop.f32.mrf.mxu0
    %v1280 = vpop.f32.mrf.mxu0
    %v1281 = vpop.f32.mrf.mxu0
    %1282 = vdwg.mxu0
    %v1283 = vadd.f32 %v1242, %v1278
    %s1284 = scalar_lea.vmem [#allocation5], 24
    %v1285 = vld [vmem:[%s1284] sm:$0xff]
    %1286 = vmatprep.subr.bf16.mxu0 0
    %1287 = vmatpush1.bf16.msra.mxu0 0
    %1288 = vmatprep.subr.bf16.mxu0 0
    %1289 = vmatpush1.bf16.msra.mxu0 0
    %1290 = vmatprep.subr.bf16.mxu0 0
    %1291 = vmatpush1.bf16.msra.mxu0 0
    %1292 = vmatprep.subr.bf16.mxu0 0
    %1293 = vmatpush1.bf16.msra.mxu0 0
    %1294 = vmatprep.subr.bf16.mxu0 0
    %1295 = vmatpush1.bf16.msra.mxu0 0
    %1296 = vmatprep.subr.bf16.mxu0 0
    %1297 = vmatpush1.bf16.msra.mxu0 0
    %1298 = vmatprep.subr.bf16.mxu0 0
    %1299 = vmatpush1.bf16.msra.mxu0 %v678
    %1300 = vmatprep.subr.bf16.mxu0 0
    %1301 = vmatpush1.bf16.msra.mxu0 %v677
    %1302 = vmatprep.subr.bf16.mxu0 0
    %1303 = vmatpush2.bf16.msra.mxu0 0
    %1304 = vmatprep.subr.bf16.mxu0 0
    %1305 = vmatpush2.bf16.msra.mxu0 0
    %1306 = vmatprep.subr.bf16.mxu0 0
    %1307 = vmatpush2.bf16.msra.mxu0 0
    %1308 = vmatprep.subr.bf16.mxu0 0
    %1309 = vmatpush2.bf16.msra.mxu0 0
    %1310 = vmatprep.subr.bf16.mxu0 0
    %1311 = vmatpush2.bf16.msra.mxu0 0
    %1312 = vmatprep.subr.bf16.mxu0 0
    %1313 = vmatpush2.bf16.msra.mxu0 0
    %1314 = vmatprep.subr.bf16.mxu0 0
    %1315 = vmatpush2.bf16.msra.mxu0 0
    %1316 = vmatprep.subr.bf16.mxu0 0
    %1317 = vmatpush2.bf16.msra.mxu0 0
    %1318 = vmatprep.mubr.bf16.mxu0 0
    %1319 = vmatmul.mubr.bf16.gmra.mxu0 %v1155
    %v1320 = vpop.f32.mrf.mxu0
    %v1321 = vadd.f32 0.0, %v1320
    %v1322 = vpop.f32.mrf.mxu0
    %v1323 = vpop.f32.mrf.mxu0
    %v1324 = vpop.f32.mrf.mxu0
    %1325 = vdwg.mxu0
    %v1326 = vadd.f32 %v1285, %v1321
    %v1327 = vxor.u32 %v1197, 2147483648
    %v1328 = vmul.f32 %v1327, 1.442695
    %v1329 = vpow.pop %v1328
    %v1330 = vadd.f32 %v1329, 1.0
    %v1331 = vrcp.pop %v1330
    %v1332 = vmul.f32 1.0, %v1331
    %v1333 = vxor.u32 %v1240, 2147483648
    %v1334 = vmul.f32 %v1333, 1.442695
    %v1335 = vpow.pop %v1334
    %v1336 = vadd.f32 %v1335, 1.0
    %v1337 = vrcp.pop %v1336
    %v1338 = vmul.f32 1.0, %v1337
    %v1339 = vtanh.pop %v1283
    %v1340 = vxor.u32 %v1326, 2147483648
    %v1341 = vmul.f32 %v1340, 1.442695
    %v1342 = vpow.pop %v1341
    %v1343 = vadd.f32 %v1342, 1.0
    %v1344 = vrcp.pop %v1343
    %v1345 = vmul.f32 1.0, %v1344
    %v1346 = vmul.f32 %v1338, %v1146
    %v1347 = vmul.f32 %v1332, %v1339
    %v1348 = vadd.f32 %v1346, %v1347
    %v1349 = vtanh.pop %v1348
    %v1350 = vmul.f32 %v1345, %v1349
    %s1351 = scalar_lea.vmem %s9, 24
    %1352 = vst.msk [vmem:[%s1351] sm:$0xff] %vm101, %v1350
    %v1353 = vpack.c.bf16 %v1350, %v1350
    %s1354 = scalar_lea.vmem [#allocation2], 32
    %v1355 = vld [vmem:[%s1354] sm:$0xff]
    %v1357 = vsel %vm101, %v1353, 0
    %1359 = vmatprep.subr.bf16.mxu0 0
    %1360 = vmatpush1.bf16.msra.mxu0 0
    %1361 = vmatprep.subr.bf16.mxu0 0
    %1362 = vmatpush1.bf16.msra.mxu0 0
    %1363 = vmatprep.subr.bf16.mxu0 0
    %1364 = vmatpush1.bf16.msra.mxu0 0
    %1365 = vmatprep.subr.bf16.mxu0 0
    %1366 = vmatpush1.bf16.msra.mxu0 0
    %1367 = vmatprep.subr.bf16.mxu0 0
    %1368 = vmatpush1.bf16.msra.mxu0 0
    %1369 = vmatprep.subr.bf16.mxu0 0
    %1370 = vmatpush1.bf16.msra.mxu0 0
    %1371 = vmatprep.subr.bf16.mxu0 0
    %1372 = vmatpush1.bf16.msra.mxu0 %v513
    %1373 = vmatprep.subr.bf16.mxu0 0
    %1374 = vmatpush1.bf16.msra.mxu0 %v512
    %1375 = vmatprep.subr.bf16.mxu0 0
    %1376 = vmatpush2.bf16.msra.mxu0 0
    %1377 = vmatprep.subr.bf16.mxu0 0
    %1378 = vmatpush2.bf16.msra.mxu0 0
    %1379 = vmatprep.subr.bf16.mxu0 0
    %1380 = vmatpush2.bf16.msra.mxu0 0
    %1381 = vmatprep.subr.bf16.mxu0 0
    %1382 = vmatpush2.bf16.msra.mxu0 0
    %1383 = vmatprep.subr.bf16.mxu0 0
    %1384 = vmatpush2.bf16.msra.mxu0 0
    %1385 = vmatprep.subr.bf16.mxu0 0
    %1386 = vmatpush2.bf16.msra.mxu0 0
    %1387 = vmatprep.subr.bf16.mxu0 0
    %1388 = vmatpush2.bf16.msra.mxu0 0
    %1389 = vmatprep.subr.bf16.mxu0 0
    %1390 = vmatpush2.bf16.msra.mxu0 0
    %1391 = vmatprep.mubr.bf16.mxu0 0
    %1392 = vmatmul.mubr.bf16.gmra.mxu0 %v1357
    %v1393 = vpop.f32.mrf.mxu0
    %v1394 = vadd.f32 0.0, %v1393
    %v1395 = vpop.f32.mrf.mxu0
    %v1396 = vpop.f32.mrf.mxu0
    %v1397 = vpop.f32.mrf.mxu0
    %1398 = vdwg.mxu0
    %v1399 = vadd.f32 %v1355, %v1394
    %s1400 = scalar_lea.vmem [#allocation3], 32
    %v1401 = vld [vmem:[%s1400] sm:$0xff]
    %1402 = vmatprep.subr.bf16.mxu0 0
    %1403 = vmatpush1.bf16.msra.mxu0 0
    %1404 = vmatprep.subr.bf16.mxu0 0
    %1405 = vmatpush1.bf16.msra.mxu0 0
    %1406 = vmatprep.subr.bf16.mxu0 0
    %1407 = vmatpush1.bf16.msra.mxu0 0
    %1408 = vmatprep.subr.bf16.mxu0 0
    %1409 = vmatpush1.bf16.msra.mxu0 0
    %1410 = vmatprep.subr.bf16.mxu0 0
    %1411 = vmatpush1.bf16.msra.mxu0 0
    %1412 = vmatprep.subr.bf16.mxu0 0
    %1413 = vmatpush1.bf16.msra.mxu0 0
    %1414 = vmatprep.subr.bf16.mxu0 0
    %1415 = vmatpush1.bf16.msra.mxu0 %v570
    %1416 = vmatprep.subr.bf16.mxu0 0
    %1417 = vmatpush1.bf16.msra.mxu0 %v569
    %1418 = vmatprep.subr.bf16.mxu0 0
    %1419 = vmatpush2.bf16.msra.mxu0 0
    %1420 = vmatprep.subr.bf16.mxu0 0
    %1421 = vmatpush2.bf16.msra.mxu0 0
    %1422 = vmatprep.subr.bf16.mxu0 0
    %1423 = vmatpush2.bf16.msra.mxu0 0
    %1424 = vmatprep.subr.bf16.mxu0 0
    %1425 = vmatpush2.bf16.msra.mxu0 0
    %1426 = vmatprep.subr.bf16.mxu0 0
    %1427 = vmatpush2.bf16.msra.mxu0 0
    %1428 = vmatprep.subr.bf16.mxu0 0
    %1429 = vmatpush2.bf16.msra.mxu0 0
    %1430 = vmatprep.subr.bf16.mxu0 0
    %1431 = vmatpush2.bf16.msra.mxu0 0
    %1432 = vmatprep.subr.bf16.mxu0 0
    %1433 = vmatpush2.bf16.msra.mxu0 0
    %1434 = vmatprep.mubr.bf16.mxu0 0
    %1435 = vmatmul.mubr.bf16.gmra.mxu0 %v1357
    %v1436 = vpop.f32.mrf.mxu0
    %v1437 = vadd.f32 0.0, %v1436
    %v1438 = vpop.f32.mrf.mxu0
    %v1439 = vpop.f32.mrf.mxu0
    %v1440 = vpop.f32.mrf.mxu0
    %1441 = vdwg.mxu0
    %v1442 = vadd.f32 %v1401, %v1437
    %s1443 = scalar_lea.vmem [#allocation4], 32
    %v1444 = vld [vmem:[%s1443] sm:$0xff]
    %1445 = vmatprep.subr.bf16.mxu0 0
    %1446 = vmatpush1.bf16.msra.mxu0 0
    %1447 = vmatprep.subr.bf16.mxu0 0
    %1448 = vmatpush1.bf16.msra.mxu0 0
    %1449 = vmatprep.subr.bf16.mxu0 0
    %1450 = vmatpush1.bf16.msra.mxu0 0
    %1451 = vmatprep.subr.bf16.mxu0 0
    %1452 = vmatpush1.bf16.msra.mxu0 0
    %1453 = vmatprep.subr.bf16.mxu0 0
    %1454 = vmatpush1.bf16.msra.mxu0 0
    %1455 = vmatprep.subr.bf16.mxu0 0
    %1456 = vmatpush1.bf16.msra.mxu0 0
    %1457 = vmatprep.subr.bf16.mxu0 0
    %1458 = vmatpush1.bf16.msra.mxu0 %v624
    %1459 = vmatprep.subr.bf16.mxu0 0
    %1460 = vmatpush1.bf16.msra.mxu0 %v623
    %1461 = vmatprep.subr.bf16.mxu0 0
    %1462 = vmatpush2.bf16.msra.mxu0 0
    %1463 = vmatprep.subr.bf16.mxu0 0
    %1464 = vmatpush2.bf16.msra.mxu0 0
    %1465 = vmatprep.subr.bf16.mxu0 0
    %1466 = vmatpush2.bf16.msra.mxu0 0
    %1467 = vmatprep.subr.bf16.mxu0 0
    %1468 = vmatpush2.bf16.msra.mxu0 0
    %1469 = vmatprep.subr.bf16.mxu0 0
    %1470 = vmatpush2.bf16.msra.mxu0 0
    %1471 = vmatprep.subr.bf16.mxu0 0
    %1472 = vmatpush2.bf16.msra.mxu0 0
    %1473 = vmatprep.subr.bf16.mxu0 0
    %1474 = vmatpush2.bf16.msra.mxu0 0
    %1475 = vmatprep.subr.bf16.mxu0 0
    %1476 = vmatpush2.bf16.msra.mxu0 0
    %1477 = vmatprep.mubr.bf16.mxu0 0
    %1478 = vmatmul.mubr.bf16.gmra.mxu0 %v1357
    %v1479 = vpop.f32.mrf.mxu0
    %v1480 = vadd.f32 0.0, %v1479
    %v1481 = vpop.f32.mrf.mxu0
    %v1482 = vpop.f32.mrf.mxu0
    %v1483 = vpop.f32.mrf.mxu0
    %1484 = vdwg.mxu0
    %v1485 = vadd.f32 %v1444, %v1480
    %s1486 = scalar_lea.vmem [#allocation5], 32
    %v1487 = vld [vmem:[%s1486] sm:$0xff]
    %1488 = vmatprep.subr.bf16.mxu0 0
    %1489 = vmatpush1.bf16.msra.mxu0 0
    %1490 = vmatprep.subr.bf16.mxu0 0
    %1491 = vmatpush1.bf16.msra.mxu0 0
    %1492 = vmatprep.subr.bf16.mxu0 0
    %1493 = vmatpush1.bf16.msra.mxu0 0
    %1494 = vmatprep.subr.bf16.mxu0 0
    %1495 = vmatpush1.bf16.msra.mxu0 0
    %1496 = vmatprep.subr.bf16.mxu0 0
    %1497 = vmatpush1.bf16.msra.mxu0 0
    %1498 = vmatprep.subr.bf16.mxu0 0
    %1499 = vmatpush1.bf16.msra.mxu0 0
    %1500 = vmatprep.subr.bf16.mxu0 0
    %1501 = vmatpush1.bf16.msra.mxu0 %v678
    %1502 = vmatprep.subr.bf16.mxu0 0
    %1503 = vmatpush1.bf16.msra.mxu0 %v677
    %1504 = vmatprep.subr.bf16.mxu0 0
    %1505 = vmatpush2.bf16.msra.mxu0 0
    %1506 = vmatprep.subr.bf16.mxu0 0
    %1507 = vmatpush2.bf16.msra.mxu0 0
    %1508 = vmatprep.subr.bf16.mxu0 0
    %1509 = vmatpush2.bf16.msra.mxu0 0
    %1510 = vmatprep.subr.bf16.mxu0 0
    %1511 = vmatpush2.bf16.msra.mxu0 0
    %1512 = vmatprep.subr.bf16.mxu0 0
    %1513 = vmatpush2.bf16.msra.mxu0 0
    %1514 = vmatprep.subr.bf16.mxu0 0
    %1515 = vmatpush2.bf16.msra.mxu0 0
    %1516 = vmatprep.subr.bf16.mxu0 0
    %1517 = vmatpush2.bf16.msra.mxu0 0
    %1518 = vmatprep.subr.bf16.mxu0 0
    %1519 = vmatpush2.bf16.msra.mxu0 0
    %1520 = vmatprep.mubr.bf16.mxu0 0
    %1521 = vmatmul.mubr.bf16.gmra.mxu0 %v1357
    %v1522 = vpop.f32.mrf.mxu0
    %v1523 = vadd.f32 0.0, %v1522
    %v1524 = vpop.f32.mrf.mxu0
    %v1525 = vpop.f32.mrf.mxu0
    %v1526 = vpop.f32.mrf.mxu0
    %1527 = vdwg.mxu0
    %v1528 = vadd.f32 %v1487, %v1523
    %v1529 = vxor.u32 %v1399, 2147483648
    %v1530 = vmul.f32 %v1529, 1.442695
    %v1531 = vpow.pop %v1530
    %v1532 = vadd.f32 %v1531, 1.0
    %v1533 = vrcp.pop %v1532
    %v1534 = vmul.f32 1.0, %v1533
    %v1535 = vxor.u32 %v1442, 2147483648
    %v1536 = vmul.f32 %v1535, 1.442695
    %v1537 = vpow.pop %v1536
    %v1538 = vadd.f32 %v1537, 1.0
    %v1539 = vrcp.pop %v1538
    %v1540 = vmul.f32 1.0, %v1539
    %v1541 = vtanh.pop %v1485
    %v1542 = vxor.u32 %v1528, 2147483648
    %v1543 = vmul.f32 %v1542, 1.442695
    %v1544 = vpow.pop %v1543
    %v1545 = vadd.f32 %v1544, 1.0
    %v1546 = vrcp.pop %v1545
    %v1547 = vmul.f32 1.0, %v1546
    %v1548 = vmul.f32 %v1540, %v1348
    %v1549 = vmul.f32 %v1534, %v1541
    %v1550 = vadd.f32 %v1548, %v1549
    %v1551 = vtanh.pop %v1550
    %v1552 = vmul.f32 %v1547, %v1551
    %s1553 = scalar_lea.vmem %s9, 32
    %1554 = vst.msk [vmem:[%s1553] sm:$0xff] %vm101, %v1552
    %v1555 = vpack.c.bf16 %v1552, %v1552
    %s1556 = scalar_lea.vmem [#allocation2], 40
    %v1557 = vld [vmem:[%s1556] sm:$0xff]
    %v1559 = vsel %vm101, %v1555, 0
    %1561 = vmatprep.subr.bf16.mxu0 0
    %1562 = vmatpush1.bf16.msra.mxu0 0
    %1563 = vmatprep.subr.bf16.mxu0 0
    %1564 = vmatpush1.bf16.msra.mxu0 0
    %1565 = vmatprep.subr.bf16.mxu0 0
    %1566 = vmatpush1.bf16.msra.mxu0 0
    %1567 = vmatprep.subr.bf16.mxu0 0
    %1568 = vmatpush1.bf16.msra.mxu0 0
    %1569 = vmatprep.subr.bf16.mxu0 0
    %1570 = vmatpush1.bf16.msra.mxu0 0
    %1571 = vmatprep.subr.bf16.mxu0 0
    %1572 = vmatpush1.bf16.msra.mxu0 0
    %1573 = vmatprep.subr.bf16.mxu0 0
    %1574 = vmatpush1.bf16.msra.mxu0 %v513
    %1575 = vmatprep.subr.bf16.mxu0 0
    %1576 = vmatpush1.bf16.msra.mxu0 %v512
    %1577 = vmatprep.subr.bf16.mxu0 0
    %1578 = vmatpush2.bf16.msra.mxu0 0
    %1579 = vmatprep.subr.bf16.mxu0 0
    %1580 = vmatpush2.bf16.msra.mxu0 0
    %1581 = vmatprep.subr.bf16.mxu0 0
    %1582 = vmatpush2.bf16.msra.mxu0 0
    %1583 = vmatprep.subr.bf16.mxu0 0
    %1584 = vmatpush2.bf16.msra.mxu0 0
    %1585 = vmatprep.subr.bf16.mxu0 0
    %1586 = vmatpush2.bf16.msra.mxu0 0
    %1587 = vmatprep.subr.bf16.mxu0 0
    %1588 = vmatpush2.bf16.msra.mxu0 0
    %1589 = vmatprep.subr.bf16.mxu0 0
    %1590 = vmatpush2.bf16.msra.mxu0 0
    %1591 = vmatprep.subr.bf16.mxu0 0
    %1592 = vmatpush2.bf16.msra.mxu0 0
    %1593 = vmatprep.mubr.bf16.mxu0 0
    %1594 = vmatmul.mubr.bf16.gmra.mxu0 %v1559
    %v1595 = vpop.f32.mrf.mxu0
    %v1596 = vadd.f32 0.0, %v1595
    %v1597 = vpop.f32.mrf.mxu0
    %v1598 = vpop.f32.mrf.mxu0
    %v1599 = vpop.f32.mrf.mxu0
    %1600 = vdwg.mxu0
    %v1601 = vadd.f32 %v1557, %v1596
    %s1602 = scalar_lea.vmem [#allocation3], 40
    %v1603 = vld [vmem:[%s1602] sm:$0xff]
    %1604 = vmatprep.subr.bf16.mxu0 0
    %1605 = vmatpush1.bf16.msra.mxu0 0
    %1606 = vmatprep.subr.bf16.mxu0 0
    %1607 = vmatpush1.bf16.msra.mxu0 0
    %1608 = vmatprep.subr.bf16.mxu0 0
    %1609 = vmatpush1.bf16.msra.mxu0 0
    %1610 = vmatprep.subr.bf16.mxu0 0
    %1611 = vmatpush1.bf16.msra.mxu0 0
    %1612 = vmatprep.subr.bf16.mxu0 0
    %1613 = vmatpush1.bf16.msra.mxu0 0
    %1614 = vmatprep.subr.bf16.mxu0 0
    %1615 = vmatpush1.bf16.msra.mxu0 0
    %1616 = vmatprep.subr.bf16.mxu0 0
    %1617 = vmatpush1.bf16.msra.mxu0 %v570
    %1618 = vmatprep.subr.bf16.mxu0 0
    %1619 = vmatpush1.bf16.msra.mxu0 %v569
    %1620 = vmatprep.subr.bf16.mxu0 0
    %1621 = vmatpush2.bf16.msra.mxu0 0
    %1622 = vmatprep.subr.bf16.mxu0 0
    %1623 = vmatpush2.bf16.msra.mxu0 0
    %1624 = vmatprep.subr.bf16.mxu0 0
    %1625 = vmatpush2.bf16.msra.mxu0 0
    %1626 = vmatprep.subr.bf16.mxu0 0
    %1627 = vmatpush2.bf16.msra.mxu0 0
    %1628 = vmatprep.subr.bf16.mxu0 0
    %1629 = vmatpush2.bf16.msra.mxu0 0
    %1630 = vmatprep.subr.bf16.mxu0 0
    %1631 = vmatpush2.bf16.msra.mxu0 0
    %1632 = vmatprep.subr.bf16.mxu0 0
    %1633 = vmatpush2.bf16.msra.mxu0 0
    %1634 = vmatprep.subr.bf16.mxu0 0
    %1635 = vmatpush2.bf16.msra.mxu0 0
    %1636 = vmatprep.mubr.bf16.mxu0 0
    %1637 = vmatmul.mubr.bf16.gmra.mxu0 %v1559
    %v1638 = vpop.f32.mrf.mxu0
    %v1639 = vadd.f32 0.0, %v1638
    %v1640 = vpop.f32.mrf.mxu0
    %v1641 = vpop.f32.mrf.mxu0
    %v1642 = vpop.f32.mrf.mxu0
    %1643 = vdwg.mxu0
    %v1644 = vadd.f32 %v1603, %v1639
    %s1645 = scalar_lea.vmem [#allocation4], 40
    %v1646 = vld [vmem:[%s1645] sm:$0xff]
    %1647 = vmatprep.subr.bf16.mxu0 0
    %1648 = vmatpush1.bf16.msra.mxu0 0
    %1649 = vmatprep.subr.bf16.mxu0 0
    %1650 = vmatpush1.bf16.msra.mxu0 0
    %1651 = vmatprep.subr.bf16.mxu0 0
    %1652 = vmatpush1.bf16.msra.mxu0 0
    %1653 = vmatprep.subr.bf16.mxu0 0
    %1654 = vmatpush1.bf16.msra.mxu0 0
    %1655 = vmatprep.subr.bf16.mxu0 0
    %1656 = vmatpush1.bf16.msra.mxu0 0
    %1657 = vmatprep.subr.bf16.mxu0 0
    %1658 = vmatpush1.bf16.msra.mxu0 0
    %1659 = vmatprep.subr.bf16.mxu0 0
    %1660 = vmatpush1.bf16.msra.mxu0 %v624
    %1661 = vmatprep.subr.bf16.mxu0 0
    %1662 = vmatpush1.bf16.msra.mxu0 %v623
    %1663 = vmatprep.subr.bf16.mxu0 0
    %1664 = vmatpush2.bf16.msra.mxu0 0
    %1665 = vmatprep.subr.bf16.mxu0 0
    %1666 = vmatpush2.bf16.msra.mxu0 0
    %1667 = vmatprep.subr.bf16.mxu0 0
    %1668 = vmatpush2.bf16.msra.mxu0 0
    %1669 = vmatprep.subr.bf16.mxu0 0
    %1670 = vmatpush2.bf16.msra.mxu0 0
    %1671 = vmatprep.subr.bf16.mxu0 0
    %1672 = vmatpush2.bf16.msra.mxu0 0
    %1673 = vmatprep.subr.bf16.mxu0 0
    %1674 = vmatpush2.bf16.msra.mxu0 0
    %1675 = vmatprep.subr.bf16.mxu0 0
    %1676 = vmatpush2.bf16.msra.mxu0 0
    %1677 = vmatprep.subr.bf16.mxu0 0
    %1678 = vmatpush2.bf16.msra.mxu0 0
    %1679 = vmatprep.mubr.bf16.mxu0 0
    %1680 = vmatmul.mubr.bf16.gmra.mxu0 %v1559
    %v1681 = vpop.f32.mrf.mxu0
    %v1682 = vadd.f32 0.0, %v1681
    %v1683 = vpop.f32.mrf.mxu0
    %v1684 = vpop.f32.mrf.mxu0
    %v1685 = vpop.f32.mrf.mxu0
    %1686 = vdwg.mxu0
    %v1687 = vadd.f32 %v1646, %v1682
    %s1688 = scalar_lea.vmem [#allocation5], 40
    %v1689 = vld [vmem:[%s1688] sm:$0xff]
    %1690 = vmatprep.subr.bf16.mxu0 0
    %1691 = vmatpush1.bf16.msra.mxu0 0
    %1692 = vmatprep.subr.bf16.mxu0 0
    %1693 = vmatpush1.bf16.msra.mxu0 0
    %1694 = vmatprep.subr.bf16.mxu0 0
    %1695 = vmatpush1.bf16.msra.mxu0 0
    %1696 = vmatprep.subr.bf16.mxu0 0
    %1697 = vmatpush1.bf16.msra.mxu0 0
    %1698 = vmatprep.subr.bf16.mxu0 0
    %1699 = vmatpush1.bf16.msra.mxu0 0
    %1700 = vmatprep.subr.bf16.mxu0 0
    %1701 = vmatpush1.bf16.msra.mxu0 0
    %1702 = vmatprep.subr.bf16.mxu0 0
    %1703 = vmatpush1.bf16.msra.mxu0 %v678
    %1704 = vmatprep.subr.bf16.mxu0 0
    %1705 = vmatpush1.bf16.msra.mxu0 %v677
    %1706 = vmatprep.subr.bf16.mxu0 0
    %1707 = vmatpush2.bf16.msra.mxu0 0
    %1708 = vmatprep.subr.bf16.mxu0 0
    %1709 = vmatpush2.bf16.msra.mxu0 0
    %1710 = vmatprep.subr.bf16.mxu0 0
    %1711 = vmatpush2.bf16.msra.mxu0 0
    %1712 = vmatprep.subr.bf16.mxu0 0
    %1713 = vmatpush2.bf16.msra.mxu0 0
    %1714 = vmatprep.subr.bf16.mxu0 0
    %1715 = vmatpush2.bf16.msra.mxu0 0
    %1716 = vmatprep.subr.bf16.mxu0 0
    %1717 = vmatpush2.bf16.msra.mxu0 0
    %1718 = vmatprep.subr.bf16.mxu0 0
    %1719 = vmatpush2.bf16.msra.mxu0 0
    %1720 = vmatprep.subr.bf16.mxu0 0
    %1721 = vmatpush2.bf16.msra.mxu0 0
    %1722 = vmatprep.mubr.bf16.mxu0 0
    %1723 = vmatmul.mubr.bf16.gmra.mxu0 %v1559
    %v1724 = vpop.f32.mrf.mxu0
    %v1725 = vadd.f32 0.0, %v1724
    %v1726 = vpop.f32.mrf.mxu0
    %v1727 = vpop.f32.mrf.mxu0
    %v1728 = vpop.f32.mrf.mxu0
    %1729 = vdwg.mxu0
    %v1730 = vadd.f32 %v1689, %v1725
    %v1731 = vxor.u32 %v1601, 2147483648
    %v1732 = vmul.f32 %v1731, 1.442695
    %v1733 = vpow.pop %v1732
    %v1734 = vadd.f32 %v1733, 1.0
    %v1735 = vrcp.pop %v1734
    %v1736 = vmul.f32 1.0, %v1735
    %v1737 = vxor.u32 %v1644, 2147483648
    %v1738 = vmul.f32 %v1737, 1.442695
    %v1739 = vpow.pop %v1738
    %v1740 = vadd.f32 %v1739, 1.0
    %v1741 = vrcp.pop %v1740
    %v1742 = vmul.f32 1.0, %v1741
    %v1743 = vtanh.pop %v1687
    %v1744 = vxor.u32 %v1730, 2147483648
    %v1745 = vmul.f32 %v1744, 1.442695
    %v1746 = vpow.pop %v1745
    %v1747 = vadd.f32 %v1746, 1.0
    %v1748 = vrcp.pop %v1747
    %v1749 = vmul.f32 1.0, %v1748
    %v1750 = vmul.f32 %v1742, %v1550
    %v1751 = vmul.f32 %v1736, %v1743
    %v1752 = vadd.f32 %v1750, %v1751
    %v1753 = vtanh.pop %v1752
    %v1754 = vmul.f32 %v1749, %v1753
    %s1755 = scalar_lea.vmem %s9, 40
    %1756 = vst.msk [vmem:[%s1755] sm:$0xff] %vm101, %v1754
    %v1757 = vpack.c.bf16 %v1754, %v1754
    %s1758 = scalar_lea.vmem [#allocation2], 48
    %v1759 = vld [vmem:[%s1758] sm:$0xff]
    %v1761 = vsel %vm101, %v1757, 0
    %1763 = vmatprep.subr.bf16.mxu0 0
    %1764 = vmatpush1.bf16.msra.mxu0 0
    %1765 = vmatprep.subr.bf16.mxu0 0
    %1766 = vmatpush1.bf16.msra.mxu0 0
    %1767 = vmatprep.subr.bf16.mxu0 0
    %1768 = vmatpush1.bf16.msra.mxu0 0
    %1769 = vmatprep.subr.bf16.mxu0 0
    %1770 = vmatpush1.bf16.msra.mxu0 0
    %1771 = vmatprep.subr.bf16.mxu0 0
    %1772 = vmatpush1.bf16.msra.mxu0 0
    %1773 = vmatprep.subr.bf16.mxu0 0
    %1774 = vmatpush1.bf16.msra.mxu0 0
    %1775 = vmatprep.subr.bf16.mxu0 0
    %1776 = vmatpush1.bf16.msra.mxu0 %v513
    %1777 = vmatprep.subr.bf16.mxu0 0
    %1778 = vmatpush1.bf16.msra.mxu0 %v512
    %1779 = vmatprep.subr.bf16.mxu0 0
    %1780 = vmatpush2.bf16.msra.mxu0 0
    %1781 = vmatprep.subr.bf16.mxu0 0
    %1782 = vmatpush2.bf16.msra.mxu0 0
    %1783 = vmatprep.subr.bf16.mxu0 0
    %1784 = vmatpush2.bf16.msra.mxu0 0
    %1785 = vmatprep.subr.bf16.mxu0 0
    %1786 = vmatpush2.bf16.msra.mxu0 0
    %1787 = vmatprep.subr.bf16.mxu0 0
    %1788 = vmatpush2.bf16.msra.mxu0 0
    %1789 = vmatprep.subr.bf16.mxu0 0
    %1790 = vmatpush2.bf16.msra.mxu0 0
    %1791 = vmatprep.subr.bf16.mxu0 0
    %1792 = vmatpush2.bf16.msra.mxu0 0
    %1793 = vmatprep.subr.bf16.mxu0 0
    %1794 = vmatpush2.bf16.msra.mxu0 0
    %1795 = vmatprep.mubr.bf16.mxu0 0
    %1796 = vmatmul.mubr.bf16.gmra.mxu0 %v1761
    %v1797 = vpop.f32.mrf.mxu0
    %v1798 = vadd.f32 0.0, %v1797
    %v1799 = vpop.f32.mrf.mxu0
    %v1800 = vpop.f32.mrf.mxu0
    %v1801 = vpop.f32.mrf.mxu0
    %1802 = vdwg.mxu0
    %v1803 = vadd.f32 %v1759, %v1798
    %s1804 = scalar_lea.vmem [#allocation3], 48
    %v1805 = vld [vmem:[%s1804] sm:$0xff]
    %1806 = vmatprep.subr.bf16.mxu0 0
    %1807 = vmatpush1.bf16.msra.mxu0 0
    %1808 = vmatprep.subr.bf16.mxu0 0
    %1809 = vmatpush1.bf16.msra.mxu0 0
    %1810 = vmatprep.subr.bf16.mxu0 0
    %1811 = vmatpush1.bf16.msra.mxu0 0
    %1812 = vmatprep.subr.bf16.mxu0 0
    %1813 = vmatpush1.bf16.msra.mxu0 0
    %1814 = vmatprep.subr.bf16.mxu0 0
    %1815 = vmatpush1.bf16.msra.mxu0 0
    %1816 = vmatprep.subr.bf16.mxu0 0
    %1817 = vmatpush1.bf16.msra.mxu0 0
    %1818 = vmatprep.subr.bf16.mxu0 0
    %1819 = vmatpush1.bf16.msra.mxu0 %v570
    %1820 = vmatprep.subr.bf16.mxu0 0
    %1821 = vmatpush1.bf16.msra.mxu0 %v569
    %1822 = vmatprep.subr.bf16.mxu0 0
    %1823 = vmatpush2.bf16.msra.mxu0 0
    %1824 = vmatprep.subr.bf16.mxu0 0
    %1825 = vmatpush2.bf16.msra.mxu0 0
    %1826 = vmatprep.subr.bf16.mxu0 0
    %1827 = vmatpush2.bf16.msra.mxu0 0
    %1828 = vmatprep.subr.bf16.mxu0 0
    %1829 = vmatpush2.bf16.msra.mxu0 0
    %1830 = vmatprep.subr.bf16.mxu0 0
    %1831 = vmatpush2.bf16.msra.mxu0 0
    %1832 = vmatprep.subr.bf16.mxu0 0
    %1833 = vmatpush2.bf16.msra.mxu0 0
    %1834 = vmatprep.subr.bf16.mxu0 0
    %1835 = vmatpush2.bf16.msra.mxu0 0
    %1836 = vmatprep.subr.bf16.mxu0 0
    %1837 = vmatpush2.bf16.msra.mxu0 0
    %1838 = vmatprep.mubr.bf16.mxu0 0
    %1839 = vmatmul.mubr.bf16.gmra.mxu0 %v1761
    %v1840 = vpop.f32.mrf.mxu0
    %v1841 = vadd.f32 0.0, %v1840
    %v1842 = vpop.f32.mrf.mxu0
    %v1843 = vpop.f32.mrf.mxu0
    %v1844 = vpop.f32.mrf.mxu0
    %1845 = vdwg.mxu0
    %v1846 = vadd.f32 %v1805, %v1841
    %s1847 = scalar_lea.vmem [#allocation4], 48
    %v1848 = vld [vmem:[%s1847] sm:$0xff]
    %1849 = vmatprep.subr.bf16.mxu0 0
    %1850 = vmatpush1.bf16.msra.mxu0 0
    %1851 = vmatprep.subr.bf16.mxu0 0
    %1852 = vmatpush1.bf16.msra.mxu0 0
    %1853 = vmatprep.subr.bf16.mxu0 0
    %1854 = vmatpush1.bf16.msra.mxu0 0
    %1855 = vmatprep.subr.bf16.mxu0 0
    %1856 = vmatpush1.bf16.msra.mxu0 0
    %1857 = vmatprep.subr.bf16.mxu0 0
    %1858 = vmatpush1.bf16.msra.mxu0 0
    %1859 = vmatprep.subr.bf16.mxu0 0
    %1860 = vmatpush1.bf16.msra.mxu0 0
    %1861 = vmatprep.subr.bf16.mxu0 0
    %1862 = vmatpush1.bf16.msra.mxu0 %v624
    %1863 = vmatprep.subr.bf16.mxu0 0
    %1864 = vmatpush1.bf16.msra.mxu0 %v623
    %1865 = vmatprep.subr.bf16.mxu0 0
    %1866 = vmatpush2.bf16.msra.mxu0 0
    %1867 = vmatprep.subr.bf16.mxu0 0
    %1868 = vmatpush2.bf16.msra.mxu0 0
    %1869 = vmatprep.subr.bf16.mxu0 0
    %1870 = vmatpush2.bf16.msra.mxu0 0
    %1871 = vmatprep.subr.bf16.mxu0 0
    %1872 = vmatpush2.bf16.msra.mxu0 0
    %1873 = vmatprep.subr.bf16.mxu0 0
    %1874 = vmatpush2.bf16.msra.mxu0 0
    %1875 = vmatprep.subr.bf16.mxu0 0
    %1876 = vmatpush2.bf16.msra.mxu0 0
    %1877 = vmatprep.subr.bf16.mxu0 0
    %1878 = vmatpush2.bf16.msra.mxu0 0
    %1879 = vmatprep.subr.bf16.mxu0 0
    %1880 = vmatpush2.bf16.msra.mxu0 0
    %1881 = vmatprep.mubr.bf16.mxu0 0
    %1882 = vmatmul.mubr.bf16.gmra.mxu0 %v1761
    %v1883 = vpop.f32.mrf.mxu0
    %v1884 = vadd.f32 0.0, %v1883
    %v1885 = vpop.f32.mrf.mxu0
    %v1886 = vpop.f32.mrf.mxu0
    %v1887 = vpop.f32.mrf.mxu0
    %1888 = vdwg.mxu0
    %v1889 = vadd.f32 %v1848, %v1884
    %s1890 = scalar_lea.vmem [#allocation5], 48
    %v1891 = vld [vmem:[%s1890] sm:$0xff]
    %1892 = vmatprep.subr.bf16.mxu0 0
    %1893 = vmatpush1.bf16.msra.mxu0 0
    %1894 = vmatprep.subr.bf16.mxu0 0
    %1895 = vmatpush1.bf16.msra.mxu0 0
    %1896 = vmatprep.subr.bf16.mxu0 0
    %1897 = vmatpush1.bf16.msra.mxu0 0
    %1898 = vmatprep.subr.bf16.mxu0 0
    %1899 = vmatpush1.bf16.msra.mxu0 0
    %1900 = vmatprep.subr.bf16.mxu0 0
    %1901 = vmatpush1.bf16.msra.mxu0 0
    %1902 = vmatprep.subr.bf16.mxu0 0
    %1903 = vmatpush1.bf16.msra.mxu0 0
    %1904 = vmatprep.subr.bf16.mxu0 0
    %1905 = vmatpush1.bf16.msra.mxu0 %v678
    %1906 = vmatprep.subr.bf16.mxu0 0
    %1907 = vmatpush1.bf16.msra.mxu0 %v677
    %1908 = vmatprep.subr.bf16.mxu0 0
    %1909 = vmatpush2.bf16.msra.mxu0 0
    %1910 = vmatprep.subr.bf16.mxu0 0
    %1911 = vmatpush2.bf16.msra.mxu0 0
    %1912 = vmatprep.subr.bf16.mxu0 0
    %1913 = vmatpush2.bf16.msra.mxu0 0
    %1914 = vmatprep.subr.bf16.mxu0 0
    %1915 = vmatpush2.bf16.msra.mxu0 0
    %1916 = vmatprep.subr.bf16.mxu0 0
    %1917 = vmatpush2.bf16.msra.mxu0 0
    %1918 = vmatprep.subr.bf16.mxu0 0
    %1919 = vmatpush2.bf16.msra.mxu0 0
    %1920 = vmatprep.subr.bf16.mxu0 0
    %1921 = vmatpush2.bf16.msra.mxu0 0
    %1922 = vmatprep.subr.bf16.mxu0 0
    %1923 = vmatpush2.bf16.msra.mxu0 0
    %1924 = vmatprep.mubr.bf16.mxu0 0
    %1925 = vmatmul.mubr.bf16.gmra.mxu0 %v1761
    %v1926 = vpop.f32.mrf.mxu0
    %v1927 = vadd.f32 0.0, %v1926
    %v1928 = vpop.f32.mrf.mxu0
    %v1929 = vpop.f32.mrf.mxu0
    %v1930 = vpop.f32.mrf.mxu0
    %1931 = vdwg.mxu0
    %v1932 = vadd.f32 %v1891, %v1927
    %v1933 = vxor.u32 %v1803, 2147483648
    %v1934 = vmul.f32 %v1933, 1.442695
    %v1935 = vpow.pop %v1934
    %v1936 = vadd.f32 %v1935, 1.0
    %v1937 = vrcp.pop %v1936
    %v1938 = vmul.f32 1.0, %v1937
    %v1939 = vxor.u32 %v1846, 2147483648
    %v1940 = vmul.f32 %v1939, 1.442695
    %v1941 = vpow.pop %v1940
    %v1942 = vadd.f32 %v1941, 1.0
    %v1943 = vrcp.pop %v1942
    %v1944 = vmul.f32 1.0, %v1943
    %v1945 = vtanh.pop %v1889
    %v1946 = vxor.u32 %v1932, 2147483648
    %v1947 = vmul.f32 %v1946, 1.442695
    %v1948 = vpow.pop %v1947
    %v1949 = vadd.f32 %v1948, 1.0
    %v1950 = vrcp.pop %v1949
    %v1951 = vmul.f32 1.0, %v1950
    %v1952 = vmul.f32 %v1944, %v1752
    %v1953 = vmul.f32 %v1938, %v1945
    %v1954 = vadd.f32 %v1952, %v1953
    %v1955 = vtanh.pop %v1954
    %v1956 = vmul.f32 %v1951, %v1955
    %s1957 = scalar_lea.vmem %s9, 48
    %1958 = vst.msk [vmem:[%s1957] sm:$0xff] %vm101, %v1956
    %v1959 = vpack.c.bf16 %v1956, %v1956
    %s1960 = scalar_lea.vmem [#allocation2], 56
    %v1961 = vld [vmem:[%s1960] sm:$0xff]
    %v1963 = vsel %vm101, %v1959, 0
    %1965 = vmatprep.subr.bf16.mxu0 0
    %1966 = vmatpush1.bf16.msra.mxu0 0
    %1967 = vmatprep.subr.bf16.mxu0 0
    %1968 = vmatpush1.bf16.msra.mxu0 0
    %1969 = vmatprep.subr.bf16.mxu0 0
    %1970 = vmatpush1.bf16.msra.mxu0 0
    %1971 = vmatprep.subr.bf16.mxu0 0
    %1972 = vmatpush1.bf16.msra.mxu0 0
    %1973 = vmatprep.subr.bf16.mxu0 0
    %1974 = vmatpush1.bf16.msra.mxu0 0
    %1975 = vmatprep.subr.bf16.mxu0 0
    %1976 = vmatpush1.bf16.msra.mxu0 0
    %1977 = vmatprep.subr.bf16.mxu0 0
    %1978 = vmatpush1.bf16.msra.mxu0 %v513
    %1979 = vmatprep.subr.bf16.mxu0 0
    %1980 = vmatpush1.bf16.msra.mxu0 %v512
    %1981 = vmatprep.subr.bf16.mxu0 0
    %1982 = vmatpush2.bf16.msra.mxu0 0
    %1983 = vmatprep.subr.bf16.mxu0 0
    %1984 = vmatpush2.bf16.msra.mxu0 0
    %1985 = vmatprep.subr.bf16.mxu0 0
    %1986 = vmatpush2.bf16.msra.mxu0 0
    %1987 = vmatprep.subr.bf16.mxu0 0
    %1988 = vmatpush2.bf16.msra.mxu0 0
    %1989 = vmatprep.subr.bf16.mxu0 0
    %1990 = vmatpush2.bf16.msra.mxu0 0
    %1991 = vmatprep.subr.bf16.mxu0 0
    %1992 = vmatpush2.bf16.msra.mxu0 0
    %1993 = vmatprep.subr.bf16.mxu0 0
    %1994 = vmatpush2.bf16.msra.mxu0 0
    %1995 = vmatprep.subr.bf16.mxu0 0
    %1996 = vmatpush2.bf16.msra.mxu0 0
    %1997 = vmatprep.mubr.bf16.mxu0 0
    %1998 = vmatmul.mubr.bf16.gmra.mxu0 %v1963
    %v1999 = vpop.f32.mrf.mxu0
    %v2000 = vadd.f32 0.0, %v1999
    %v2001 = vpop.f32.mrf.mxu0
    %v2002 = vpop.f32.mrf.mxu0
    %v2003 = vpop.f32.mrf.mxu0
    %2004 = vdwg.mxu0
    %v2005 = vadd.f32 %v1961, %v2000
    %s2006 = scalar_lea.vmem [#allocation3], 56
    %v2007 = vld [vmem:[%s2006] sm:$0xff]
    %2008 = vmatprep.subr.bf16.mxu0 0
    %2009 = vmatpush1.bf16.msra.mxu0 0
    %2010 = vmatprep.subr.bf16.mxu0 0
    %2011 = vmatpush1.bf16.msra.mxu0 0
    %2012 = vmatprep.subr.bf16.mxu0 0
    %2013 = vmatpush1.bf16.msra.mxu0 0
    %2014 = vmatprep.subr.bf16.mxu0 0
    %2015 = vmatpush1.bf16.msra.mxu0 0
    %2016 = vmatprep.subr.bf16.mxu0 0
    %2017 = vmatpush1.bf16.msra.mxu0 0
    %2018 = vmatprep.subr.bf16.mxu0 0
    %2019 = vmatpush1.bf16.msra.mxu0 0
    %2020 = vmatprep.subr.bf16.mxu0 0
    %2021 = vmatpush1.bf16.msra.mxu0 %v570
    %2022 = vmatprep.subr.bf16.mxu0 0
    %2023 = vmatpush1.bf16.msra.mxu0 %v569
    %2024 = vmatprep.subr.bf16.mxu0 0
    %2025 = vmatpush2.bf16.msra.mxu0 0
    %2026 = vmatprep.subr.bf16.mxu0 0
    %2027 = vmatpush2.bf16.msra.mxu0 0
    %2028 = vmatprep.subr.bf16.mxu0 0
    %2029 = vmatpush2.bf16.msra.mxu0 0
    %2030 = vmatprep.subr.bf16.mxu0 0
    %2031 = vmatpush2.bf16.msra.mxu0 0
    %2032 = vmatprep.subr.bf16.mxu0 0
    %2033 = vmatpush2.bf16.msra.mxu0 0
    %2034 = vmatprep.subr.bf16.mxu0 0
    %2035 = vmatpush2.bf16.msra.mxu0 0
    %2036 = vmatprep.subr.bf16.mxu0 0
    %2037 = vmatpush2.bf16.msra.mxu0 0
    %2038 = vmatprep.subr.bf16.mxu0 0
    %2039 = vmatpush2.bf16.msra.mxu0 0
    %2040 = vmatprep.mubr.bf16.mxu0 0
    %2041 = vmatmul.mubr.bf16.gmra.mxu0 %v1963
    %v2042 = vpop.f32.mrf.mxu0
    %v2043 = vadd.f32 0.0, %v2042
    %v2044 = vpop.f32.mrf.mxu0
    %v2045 = vpop.f32.mrf.mxu0
    %v2046 = vpop.f32.mrf.mxu0
    %2047 = vdwg.mxu0
    %v2048 = vadd.f32 %v2007, %v2043
    %s2049 = scalar_lea.vmem [#allocation4], 56
    %v2050 = vld [vmem:[%s2049] sm:$0xff]
    %2051 = vmatprep.subr.bf16.mxu0 0
    %2052 = vmatpush1.bf16.msra.mxu0 0
    %2053 = vmatprep.subr.bf16.mxu0 0
    %2054 = vmatpush1.bf16.msra.mxu0 0
    %2055 = vmatprep.subr.bf16.mxu0 0
    %2056 = vmatpush1.bf16.msra.mxu0 0
    %2057 = vmatprep.subr.bf16.mxu0 0
    %2058 = vmatpush1.bf16.msra.mxu0 0
    %2059 = vmatprep.subr.bf16.mxu0 0
    %2060 = vmatpush1.bf16.msra.mxu0 0
    %2061 = vmatprep.subr.bf16.mxu0 0
    %2062 = vmatpush1.bf16.msra.mxu0 0
    %2063 = vmatprep.subr.bf16.mxu0 0
    %2064 = vmatpush1.bf16.msra.mxu0 %v624
    %2065 = vmatprep.subr.bf16.mxu0 0
    %2066 = vmatpush1.bf16.msra.mxu0 %v623
    %2067 = vmatprep.subr.bf16.mxu0 0
    %2068 = vmatpush2.bf16.msra.mxu0 0
    %2069 = vmatprep.subr.bf16.mxu0 0
    %2070 = vmatpush2.bf16.msra.mxu0 0
    %2071 = vmatprep.subr.bf16.mxu0 0
    %2072 = vmatpush2.bf16.msra.mxu0 0
    %2073 = vmatprep.subr.bf16.mxu0 0
    %2074 = vmatpush2.bf16.msra.mxu0 0
    %2075 = vmatprep.subr.bf16.mxu0 0
    %2076 = vmatpush2.bf16.msra.mxu0 0
    %2077 = vmatprep.subr.bf16.mxu0 0
    %2078 = vmatpush2.bf16.msra.mxu0 0
    %2079 = vmatprep.subr.bf16.mxu0 0
    %2080 = vmatpush2.bf16.msra.mxu0 0
    %2081 = vmatprep.subr.bf16.mxu0 0
    %2082 = vmatpush2.bf16.msra.mxu0 0
    %2083 = vmatprep.mubr.bf16.mxu0 0
    %2084 = vmatmul.mubr.bf16.gmra.mxu0 %v1963
    %v2085 = vpop.f32.mrf.mxu0
    %v2086 = vadd.f32 0.0, %v2085
    %v2087 = vpop.f32.mrf.mxu0
    %v2088 = vpop.f32.mrf.mxu0
    %v2089 = vpop.f32.mrf.mxu0
    %2090 = vdwg.mxu0
    %v2091 = vadd.f32 %v2050, %v2086
    %s2092 = scalar_lea.vmem [#allocation5], 56
    %v2093 = vld [vmem:[%s2092] sm:$0xff]
    %2094 = vmatprep.subr.bf16.mxu0 0
    %2095 = vmatpush1.bf16.msra.mxu0 0
    %2096 = vmatprep.subr.bf16.mxu0 0
    %2097 = vmatpush1.bf16.msra.mxu0 0
    %2098 = vmatprep.subr.bf16.mxu0 0
    %2099 = vmatpush1.bf16.msra.mxu0 0
    %2100 = vmatprep.subr.bf16.mxu0 0
    %2101 = vmatpush1.bf16.msra.mxu0 0
    %2102 = vmatprep.subr.bf16.mxu0 0
    %2103 = vmatpush1.bf16.msra.mxu0 0
    %2104 = vmatprep.subr.bf16.mxu0 0
    %2105 = vmatpush1.bf16.msra.mxu0 0
    %2106 = vmatprep.subr.bf16.mxu0 0
    %2107 = vmatpush1.bf16.msra.mxu0 %v678
    %2108 = vmatprep.subr.bf16.mxu0 0
    %2109 = vmatpush1.bf16.msra.mxu0 %v677
    %2110 = vmatprep.subr.bf16.mxu0 0
    %2111 = vmatpush2.bf16.msra.mxu0 0
    %2112 = vmatprep.subr.bf16.mxu0 0
    %2113 = vmatpush2.bf16.msra.mxu0 0
    %2114 = vmatprep.subr.bf16.mxu0 0
    %2115 = vmatpush2.bf16.msra.mxu0 0
    %2116 = vmatprep.subr.bf16.mxu0 0
    %2117 = vmatpush2.bf16.msra.mxu0 0
    %2118 = vmatprep.subr.bf16.mxu0 0
    %2119 = vmatpush2.bf16.msra.mxu0 0
    %2120 = vmatprep.subr.bf16.mxu0 0
    %2121 = vmatpush2.bf16.msra.mxu0 0
    %2122 = vmatprep.subr.bf16.mxu0 0
    %2123 = vmatpush2.bf16.msra.mxu0 0
    %2124 = vmatprep.subr.bf16.mxu0 0
    %2125 = vmatpush2.bf16.msra.mxu0 0
    %2126 = vmatprep.mubr.bf16.mxu0 0
    %2127 = vmatmul.mubr.bf16.gmra.mxu0 %v1963
    %v2128 = vpop.f32.mrf.mxu0
    %v2129 = vadd.f32 0.0, %v2128
    %v2130 = vpop.f32.mrf.mxu0
    %v2131 = vpop.f32.mrf.mxu0
    %v2132 = vpop.f32.mrf.mxu0
    %2133 = vdwg.mxu0
    %v2134 = vadd.f32 %v2093, %v2129
    %v2135 = vxor.u32 %v2005, 2147483648
    %v2136 = vmul.f32 %v2135, 1.442695
    %v2137 = vpow.pop %v2136
    %v2138 = vadd.f32 %v2137, 1.0
    %v2139 = vrcp.pop %v2138
    %v2140 = vmul.f32 1.0, %v2139
    %v2141 = vxor.u32 %v2048, 2147483648
    %v2142 = vmul.f32 %v2141, 1.442695
    %v2143 = vpow.pop %v2142
    %v2144 = vadd.f32 %v2143, 1.0
    %v2145 = vrcp.pop %v2144
    %v2146 = vmul.f32 1.0, %v2145
    %v2147 = vtanh.pop %v2091
    %v2148 = vxor.u32 %v2134, 2147483648
    %v2149 = vmul.f32 %v2148, 1.442695
    %v2150 = vpow.pop %v2149
    %v2151 = vadd.f32 %v2150, 1.0
    %v2152 = vrcp.pop %v2151
    %v2153 = vmul.f32 1.0, %v2152
    %v2154 = vmul.f32 %v2146, %v1954
    %v2155 = vmul.f32 %v2140, %v2147
    %v2156 = vadd.f32 %v2154, %v2155
    %v2157 = vtanh.pop %v2156
    %v2158 = vmul.f32 %v2153, %v2157
    %s2159 = scalar_lea.vmem %s9, 56
    %2160 = vst.msk [vmem:[%s2159] sm:$0xff] %vm101, %v2158
    %2161 = vst.msk [vmem:[%s10] sm:$0xff] %vm101, %v2158
    %2162 = vst.msk [vmem:[%s11] sm:$0xff] %vm101, %v2156
    %v2163 = vld [vmem:[%s9] sm:$0xff]
    %v2164 = vld [vmem:[%s9 + $0x8] sm:$0xff]
    %v2165 = vld [vmem:[%s9 + $0x10] sm:$0xff]
    %v2166 = vld [vmem:[%s9 + $0x18] sm:$0xff]
    %v2167 = vld [vmem:[%s9 + $0x20] sm:$0xff]
    %v2168 = vld [vmem:[%s9 + $0x28] sm:$0xff]
    %v2169 = vld [vmem:[%s9 + $0x30] sm:$0xff]
    %v2170 = vld [vmem:[%s9 + $0x38] sm:$0xff]
    %v2171 = vpack.c.bf16 %v2163, %v2163
    %v2172 = vpack.c.bf16 %v2164, %v2164
    %v2173 = vpack.c.bf16 %v2165, %v2165
    %v2174 = vpack.c.bf16 %v2166, %v2166
    %v2175 = vpack.c.bf16 %v2167, %v2167
    %v2176 = vpack.c.bf16 %v2168, %v2168
    %v2177 = vpack.c.bf16 %v2169, %v2169
    %v2178 = vpack.c.bf16 %v2170, %v2170
    %v2179 = vld [vmem:[%s6] sm:$0xf]
    %v2180 = vld [vmem:[%s6 + $0x4] sm:$0xf]
    %v2181 = vld [vmem:[%s6 + $0x8] sm:$0xf]
    %v2182 = vld [vmem:[%s6 + $0xc] sm:$0xf]
    %v2183 = vld [vmem:[%s8] sm:$0x1]
    %v2185 = vlaneseq
    %v2186 = vshrl.u32 %v2185, 7
    %v2187 = vsub.s32 0, %v2186
    %v2188 = vrot.slane %v2183, %v2187
    %v2198 = vunpack.c.l.b16 %v2171
    %v2199 = vunpack.c.l.b16 %v2172
    %v2200 = vunpack.c.l.b16 %v2173
    %v2201 = vunpack.c.l.b16 %v2174
    %v2202 = vunpack.c.l.b16 %v2175
    %v2203 = vunpack.c.l.b16 %v2176
    %v2204 = vunpack.c.l.b16 %v2177
    %v2205 = vunpack.c.l.b16 %v2178
    %v2206 = vpack.c.b16 %v2199, %v2198
    %v2207 = vpack.c.b16 %v2201, %v2200
    %v2208 = vpack.c.b16 %v2203, %v2202
    %v2209 = vpack.c.b16 %v2205, %v2204
    %v2214 = vunpack.c.l.b16 %v2179
    %v2215 = vunpack.c.l.b16 %v2180
    %v2216 = vunpack.c.l.b16 %v2181
    %v2217 = vunpack.c.l.b16 %v2182
    %v2218 = vpack.c.b16 %v2215, %v2214
    %v2219 = vpack.c.b16 %v2217, %v2216
    %v2223 = vsel %vm101, %v2206, 0
    %v2226 = vsel %vm101, %v2207, 0
    %v2229 = vsel %vm101, %v2208, 0
    %v2232 = vsel %vm101, %v2209, 0
    %2234 = vmatprep.subr.bf16.mxu0 0
    %2235 = vmatpush1.bf16.msra.mxu0 0
    %2236 = vmatprep.subr.bf16.mxu0 0
    %2237 = vmatpush1.bf16.msra.mxu0 0
    %2238 = vmatprep.subr.bf16.mxu0 0
    %2239 = vmatpush1.bf16.msra.mxu0 0
    %2240 = vmatprep.subr.bf16.mxu0 0
    %2241 = vmatpush1.bf16.msra.mxu0 0
    %2242 = vmatprep.subr.bf16.mxu0 0
    %2243 = vmatpush1.bf16.msra.mxu0 0
    %2244 = vmatprep.subr.bf16.mxu0 0
    %2245 = vmatpush1.bf16.msra.mxu0 0
    %2246 = vmatprep.subr.bf16.mxu0 0
    %2247 = vmatpush1.bf16.msra.mxu0 %v2219
    %2248 = vmatprep.subr.bf16.mxu0 0
    %2249 = vmatpush1.bf16.msra.mxu0 %v2218
    %2250 = vmatprep.subr.bf16.mxu0 0
    %2251 = vmatpush2.bf16.msra.mxu0 0
    %2252 = vmatprep.subr.bf16.mxu0 0
    %2253 = vmatpush2.bf16.msra.mxu0 0
    %2254 = vmatprep.subr.bf16.mxu0 0
    %2255 = vmatpush2.bf16.msra.mxu0 0
    %2256 = vmatprep.subr.bf16.mxu0 0
    %2257 = vmatpush2.bf16.msra.mxu0 0
    %2258 = vmatprep.subr.bf16.mxu0 0
    %2259 = vmatpush2.bf16.msra.mxu0 0
    %2260 = vmatprep.subr.bf16.mxu0 0
    %2261 = vmatpush2.bf16.msra.mxu0 0
    %2262 = vmatprep.subr.bf16.mxu0 0
    %2263 = vmatpush2.bf16.msra.mxu0 0
    %2264 = vmatprep.subr.bf16.mxu0 0
    %2265 = vmatpush2.bf16.msra.mxu0 0
    %2266 = vmatprep.mubr.bf16.mxu0 0
    %2267 = vmatmul.mubr.bf16.gmra.mxu0 %v2223
    %v2268 = vpop.f32.mrf.mxu0
    %v2269 = vadd.f32 %v2188, %v2268
    %v2270 = vpop.f32.mrf.mxu0
    %v2271 = vpop.f32.mrf.mxu0
    %v2272 = vadd.f32 %v2188, %v2271
    %v2273 = vpop.f32.mrf.mxu0
    %2274 = vmatprep.mubr.bf16.mxu0 0
    %2275 = vmatmul.mubr.bf16.gmra.mxu0 %v2226
    %v2276 = vpop.f32.mrf.mxu0
    %v2277 = vadd.f32 %v2188, %v2276
    %v2278 = vpop.f32.mrf.mxu0
    %v2279 = vpop.f32.mrf.mxu0
    %v2280 = vadd.f32 %v2188, %v2279
    %v2281 = vpop.f32.mrf.mxu0
    %2282 = vmatprep.mubr.bf16.mxu0 0
    %2283 = vmatmul.mubr.bf16.gmra.mxu0 %v2229
    %v2284 = vpop.f32.mrf.mxu0
    %v2285 = vadd.f32 %v2188, %v2284
    %v2286 = vpop.f32.mrf.mxu0
    %v2287 = vpop.f32.mrf.mxu0
    %v2288 = vadd.f32 %v2188, %v2287
    %v2289 = vpop.f32.mrf.mxu0
    %2290 = vmatprep.mubr.bf16.mxu0 0
    %2291 = vmatmul.mubr.bf16.gmra.mxu0 %v2232
    %v2292 = vpop.f32.mrf.mxu0
    %v2293 = vadd.f32 %v2188, %v2292
    %v2294 = vpop.f32.mrf.mxu0
    %v2295 = vpop.f32.mrf.mxu0
    %v2296 = vadd.f32 %v2188, %v2295
    %v2297 = vpop.f32.mrf.mxu0
    %2298 = vdwg.mxu0
    %2299 = vst.msk [vmem:[#allocation2] sm:$0xff] %vm101, %v2269
    %2300 = vst.msk [vmem:[#allocation2 + $0x8] sm:$0xff] %vm101, %v2272
    %2301 = vst.msk [vmem:[#allocation2 + $0x10] sm:$0xff] %vm101, %v2277
    %2302 = vst.msk [vmem:[#allocation2 + $0x18] sm:$0xff] %vm101, %v2280
    %2303 = vst.msk [vmem:[#allocation2 + $0x20] sm:$0xff] %vm101, %v2285
    %2304 = vst.msk [vmem:[#allocation2 + $0x28] sm:$0xff] %vm101, %v2288
    %2305 = vst.msk [vmem:[#allocation2 + $0x30] sm:$0xff] %vm101, %v2293
    %2306 = vst.msk [vmem:[#allocation2 + $0x38] sm:$0xff] %vm101, %v2296
    %s2307 = scalar_lea.vmem %s6, 16
    %v2308 = vld [vmem:[%s2307] sm:$0xf]
    %v2309 = vld [vmem:[%s2307 + $0x4] sm:$0xf]
    %v2310 = vld [vmem:[%s2307 + $0x8] sm:$0xf]
    %v2311 = vld [vmem:[%s2307 + $0xc] sm:$0xf]
    %s2312 = scalar_lea.vmem %s8, 1
    %v2313 = vld [vmem:[%s2312] sm:$0x1]
    %v2315 = vlaneseq
    %v2316 = vshrl.u32 %v2315, 7
    %v2317 = vsub.s32 0, %v2316
    %v2318 = vrot.slane %v2313, %v2317
    %v2324 = vunpack.c.l.b16 %v2308
    %v2325 = vunpack.c.l.b16 %v2309
    %v2326 = vunpack.c.l.b16 %v2310
    %v2327 = vunpack.c.l.b16 %v2311
    %v2328 = vpack.c.b16 %v2325, %v2324
    %v2329 = vpack.c.b16 %v2327, %v2326
    %2332 = vmatprep.subr.bf16.mxu0 0
    %2333 = vmatpush1.bf16.msra.mxu0 0
    %2334 = vmatprep.subr.bf16.mxu0 0
    %2335 = vmatpush1.bf16.msra.mxu0 0
    %2336 = vmatprep.subr.bf16.mxu0 0
    %2337 = vmatpush1.bf16.msra.mxu0 0
    %2338 = vmatprep.subr.bf16.mxu0 0
    %2339 = vmatpush1.bf16.msra.mxu0 0
    %2340 = vmatprep.subr.bf16.mxu0 0
    %2341 = vmatpush1.bf16.msra.mxu0 0
    %2342 = vmatprep.subr.bf16.mxu0 0
    %2343 = vmatpush1.bf16.msra.mxu0 0
    %2344 = vmatprep.subr.bf16.mxu0 0
    %2345 = vmatpush1.bf16.msra.mxu0 %v2329
    %2346 = vmatprep.subr.bf16.mxu0 0
    %2347 = vmatpush1.bf16.msra.mxu0 %v2328
    %2348 = vmatprep.subr.bf16.mxu0 0
    %2349 = vmatpush2.bf16.msra.mxu0 0
    %2350 = vmatprep.subr.bf16.mxu0 0
    %2351 = vmatpush2.bf16.msra.mxu0 0
    %2352 = vmatprep.subr.bf16.mxu0 0
    %2353 = vmatpush2.bf16.msra.mxu0 0
    %2354 = vmatprep.subr.bf16.mxu0 0
    %2355 = vmatpush2.bf16.msra.mxu0 0
    %2356 = vmatprep.subr.bf16.mxu0 0
    %2357 = vmatpush2.bf16.msra.mxu0 0
    %2358 = vmatprep.subr.bf16.mxu0 0
    %2359 = vmatpush2.bf16.msra.mxu0 0
    %2360 = vmatprep.subr.bf16.mxu0 0
    %2361 = vmatpush2.bf16.msra.mxu0 0
    %2362 = vmatprep.subr.bf16.mxu0 0
    %2363 = vmatpush2.bf16.msra.mxu0 0
    %2364 = vmatprep.mubr.bf16.mxu0 0
    %2365 = vmatmul.mubr.bf16.gmra.mxu0 %v2223
    %v2366 = vpop.f32.mrf.mxu0
    %v2367 = vadd.f32 %v2318, %v2366
    %v2368 = vpop.f32.mrf.mxu0
    %v2369 = vpop.f32.mrf.mxu0
    %v2370 = vadd.f32 %v2318, %v2369
    %v2371 = vpop.f32.mrf.mxu0
    %2372 = vmatprep.mubr.bf16.mxu0 0
    %2373 = vmatmul.mubr.bf16.gmra.mxu0 %v2226
    %v2374 = vpop.f32.mrf.mxu0
    %v2375 = vadd.f32 %v2318, %v2374
    %v2376 = vpop.f32.mrf.mxu0
    %v2377 = vpop.f32.mrf.mxu0
    %v2378 = vadd.f32 %v2318, %v2377
    %v2379 = vpop.f32.mrf.mxu0
    %2380 = vmatprep.mubr.bf16.mxu0 0
    %2381 = vmatmul.mubr.bf16.gmra.mxu0 %v2229
    %v2382 = vpop.f32.mrf.mxu0
    %v2383 = vadd.f32 %v2318, %v2382
    %v2384 = vpop.f32.mrf.mxu0
    %v2385 = vpop.f32.mrf.mxu0
    %v2386 = vadd.f32 %v2318, %v2385
    %v2387 = vpop.f32.mrf.mxu0
    %2388 = vmatprep.mubr.bf16.mxu0 0
    %2389 = vmatmul.mubr.bf16.gmra.mxu0 %v2232
    %v2390 = vpop.f32.mrf.mxu0
    %v2391 = vadd.f32 %v2318, %v2390
    %v2392 = vpop.f32.mrf.mxu0
    %v2393 = vpop.f32.mrf.mxu0
    %v2394 = vadd.f32 %v2318, %v2393
    %v2395 = vpop.f32.mrf.mxu0
    %2396 = vdwg.mxu0
    %2397 = vst.msk [vmem:[#allocation3] sm:$0xff] %vm101, %v2367
    %2398 = vst.msk [vmem:[#allocation3 + $0x8] sm:$0xff] %vm101, %v2370
    %2399 = vst.msk [vmem:[#allocation3 + $0x10] sm:$0xff] %vm101, %v2375
    %2400 = vst.msk [vmem:[#allocation3 + $0x18] sm:$0xff] %vm101, %v2378
    %2401 = vst.msk [vmem:[#allocation3 + $0x20] sm:$0xff] %vm101, %v2383
    %2402 = vst.msk [vmem:[#allocation3 + $0x28] sm:$0xff] %vm101, %v2386
    %2403 = vst.msk [vmem:[#allocation3 + $0x30] sm:$0xff] %vm101, %v2391
    %2404 = vst.msk [vmem:[#allocation3 + $0x38] sm:$0xff] %vm101, %v2394
    %s2405 = scalar_lea.vmem %s6, 32
    %v2406 = vld [vmem:[%s2405] sm:$0xf]
    %v2407 = vld [vmem:[%s2405 + $0x4] sm:$0xf]
    %v2408 = vld [vmem:[%s2405 + $0x8] sm:$0xf]
    %v2409 = vld [vmem:[%s2405 + $0xc] sm:$0xf]
    %s2410 = scalar_lea.vmem %s8, 2
    %v2411 = vld [vmem:[%s2410] sm:$0x1]
    %v2413 = vlaneseq
    %v2414 = vshrl.u32 %v2413, 7
    %v2415 = vsub.s32 0, %v2414
    %v2416 = vrot.slane %v2411, %v2415
    %v2422 = vunpack.c.l.b16 %v2406
    %v2423 = vunpack.c.l.b16 %v2407
    %v2424 = vunpack.c.l.b16 %v2408
    %v2425 = vunpack.c.l.b16 %v2409
    %v2426 = vpack.c.b16 %v2423, %v2422
    %v2427 = vpack.c.b16 %v2425, %v2424
    %2430 = vmatprep.subr.bf16.mxu0 0
    %2431 = vmatpush1.bf16.msra.mxu0 0
    %2432 = vmatprep.subr.bf16.mxu0 0
    %2433 = vmatpush1.bf16.msra.mxu0 0
    %2434 = vmatprep.subr.bf16.mxu0 0
    %2435 = vmatpush1.bf16.msra.mxu0 0
    %2436 = vmatprep.subr.bf16.mxu0 0
    %2437 = vmatpush1.bf16.msra.mxu0 0
    %2438 = vmatprep.subr.bf16.mxu0 0
    %2439 = vmatpush1.bf16.msra.mxu0 0
    %2440 = vmatprep.subr.bf16.mxu0 0
    %2441 = vmatpush1.bf16.msra.mxu0 0
    %2442 = vmatprep.subr.bf16.mxu0 0
    %2443 = vmatpush1.bf16.msra.mxu0 %v2427
    %2444 = vmatprep.subr.bf16.mxu0 0
    %2445 = vmatpush1.bf16.msra.mxu0 %v2426
    %2446 = vmatprep.subr.bf16.mxu0 0
    %2447 = vmatpush2.bf16.msra.mxu0 0
    %2448 = vmatprep.subr.bf16.mxu0 0
    %2449 = vmatpush2.bf16.msra.mxu0 0
    %2450 = vmatprep.subr.bf16.mxu0 0
    %2451 = vmatpush2.bf16.msra.mxu0 0
    %2452 = vmatprep.subr.bf16.mxu0 0
    %2453 = vmatpush2.bf16.msra.mxu0 0
    %2454 = vmatprep.subr.bf16.mxu0 0
    %2455 = vmatpush2.bf16.msra.mxu0 0
    %2456 = vmatprep.subr.bf16.mxu0 0
    %2457 = vmatpush2.bf16.msra.mxu0 0
    %2458 = vmatprep.subr.bf16.mxu0 0
    %2459 = vmatpush2.bf16.msra.mxu0 0
    %2460 = vmatprep.subr.bf16.mxu0 0
    %2461 = vmatpush2.bf16.msra.mxu0 0
    %2462 = vmatprep.mubr.bf16.mxu0 0
    %2463 = vmatmul.mubr.bf16.gmra.mxu0 %v2223
    %v2464 = vpop.f32.mrf.mxu0
    %v2465 = vadd.f32 %v2416, %v2464
    %v2466 = vpop.f32.mrf.mxu0
    %v2467 = vpop.f32.mrf.mxu0
    %v2468 = vadd.f32 %v2416, %v2467
    %v2469 = vpop.f32.mrf.mxu0
    %2470 = vmatprep.mubr.bf16.mxu0 0
    %2471 = vmatmul.mubr.bf16.gmra.mxu0 %v2226
    %v2472 = vpop.f32.mrf.mxu0
    %v2473 = vadd.f32 %v2416, %v2472
    %v2474 = vpop.f32.mrf.mxu0
    %v2475 = vpop.f32.mrf.mxu0
    %v2476 = vadd.f32 %v2416, %v2475
    %v2477 = vpop.f32.mrf.mxu0
    %2478 = vmatprep.mubr.bf16.mxu0 0
    %2479 = vmatmul.mubr.bf16.gmra.mxu0 %v2229
    %v2480 = vpop.f32.mrf.mxu0
    %v2481 = vadd.f32 %v2416, %v2480
    %v2482 = vpop.f32.mrf.mxu0
    %v2483 = vpop.f32.mrf.mxu0
    %v2484 = vadd.f32 %v2416, %v2483
    %v2485 = vpop.f32.mrf.mxu0
    %2486 = vmatprep.mubr.bf16.mxu0 0
    %2487 = vmatmul.mubr.bf16.gmra.mxu0 %v2232
    %v2488 = vpop.f32.mrf.mxu0
    %v2489 = vadd.f32 %v2416, %v2488
    %v2490 = vpop.f32.mrf.mxu0
    %v2491 = vpop.f32.mrf.mxu0
    %v2492 = vadd.f32 %v2416, %v2491
    %v2493 = vpop.f32.mrf.mxu0
    %2494 = vdwg.mxu0
    %2495 = vst.msk [vmem:[#allocation4] sm:$0xff] %vm101, %v2465
    %2496 = vst.msk [vmem:[#allocation4 + $0x8] sm:$0xff] %vm101, %v2468
    %2497 = vst.msk [vmem:[#allocation4 + $0x10] sm:$0xff] %vm101, %v2473
    %2498 = vst.msk [vmem:[#allocation4 + $0x18] sm:$0xff] %vm101, %v2476
    %2499 = vst.msk [vmem:[#allocation4 + $0x20] sm:$0xff] %vm101, %v2481
    %2500 = vst.msk [vmem:[#allocation4 + $0x28] sm:$0xff] %vm101, %v2484
    %2501 = vst.msk [vmem:[#allocation4 + $0x30] sm:$0xff] %vm101, %v2489
    %2502 = vst.msk [vmem:[#allocation4 + $0x38] sm:$0xff] %vm101, %v2492
    %s2503 = scalar_lea.vmem %s6, 48
    %v2504 = vld [vmem:[%s2503] sm:$0xf]
    %v2505 = vld [vmem:[%s2503 + $0x4] sm:$0xf]
    %v2506 = vld [vmem:[%s2503 + $0x8] sm:$0xf]
    %v2507 = vld [vmem:[%s2503 + $0xc] sm:$0xf]
    %s2508 = scalar_lea.vmem %s8, 3
    %v2509 = vld [vmem:[%s2508] sm:$0x1]
    %v2511 = vlaneseq
    %v2512 = vshrl.u32 %v2511, 7
    %v2513 = vsub.s32 0, %v2512
    %v2514 = vrot.slane %v2509, %v2513
    %v2520 = vunpack.c.l.b16 %v2504
    %v2521 = vunpack.c.l.b16 %v2505
    %v2522 = vunpack.c.l.b16 %v2506
    %v2523 = vunpack.c.l.b16 %v2507
    %v2524 = vpack.c.b16 %v2521, %v2520
    %v2525 = vpack.c.b16 %v2523, %v2522
    %2528 = vmatprep.subr.bf16.mxu0 0
    %2529 = vmatpush1.bf16.msra.mxu0 0
    %2530 = vmatprep.subr.bf16.mxu0 0
    %2531 = vmatpush1.bf16.msra.mxu0 0
    %2532 = vmatprep.subr.bf16.mxu0 0
    %2533 = vmatpush1.bf16.msra.mxu0 0
    %2534 = vmatprep.subr.bf16.mxu0 0
    %2535 = vmatpush1.bf16.msra.mxu0 0
    %2536 = vmatprep.subr.bf16.mxu0 0
    %2537 = vmatpush1.bf16.msra.mxu0 0
    %2538 = vmatprep.subr.bf16.mxu0 0
    %2539 = vmatpush1.bf16.msra.mxu0 0
    %2540 = vmatprep.subr.bf16.mxu0 0
    %2541 = vmatpush1.bf16.msra.mxu0 %v2525
    %2542 = vmatprep.subr.bf16.mxu0 0
    %2543 = vmatpush1.bf16.msra.mxu0 %v2524
    %2544 = vmatprep.subr.bf16.mxu0 0
    %2545 = vmatpush2.bf16.msra.mxu0 0
    %2546 = vmatprep.subr.bf16.mxu0 0
    %2547 = vmatpush2.bf16.msra.mxu0 0
    %2548 = vmatprep.subr.bf16.mxu0 0
    %2549 = vmatpush2.bf16.msra.mxu0 0
    %2550 = vmatprep.subr.bf16.mxu0 0
    %2551 = vmatpush2.bf16.msra.mxu0 0
    %2552 = vmatprep.subr.bf16.mxu0 0
    %2553 = vmatpush2.bf16.msra.mxu0 0
    %2554 = vmatprep.subr.bf16.mxu0 0
    %2555 = vmatpush2.bf16.msra.mxu0 0
    %2556 = vmatprep.subr.bf16.mxu0 0
    %2557 = vmatpush2.bf16.msra.mxu0 0
    %2558 = vmatprep.subr.bf16.mxu0 0
    %2559 = vmatpush2.bf16.msra.mxu0 0
    %2560 = vmatprep.mubr.bf16.mxu0 0
    %2561 = vmatmul.mubr.bf16.gmra.mxu0 %v2223
    %v2562 = vpop.f32.mrf.mxu0
    %v2563 = vadd.f32 %v2514, %v2562
    %v2564 = vpop.f32.mrf.mxu0
    %v2565 = vpop.f32.mrf.mxu0
    %v2566 = vadd.f32 %v2514, %v2565
    %v2567 = vpop.f32.mrf.mxu0
    %2568 = vmatprep.mubr.bf16.mxu0 0
    %2569 = vmatmul.mubr.bf16.gmra.mxu0 %v2226
    %v2570 = vpop.f32.mrf.mxu0
    %v2571 = vadd.f32 %v2514, %v2570
    %v2572 = vpop.f32.mrf.mxu0
    %v2573 = vpop.f32.mrf.mxu0
    %v2574 = vadd.f32 %v2514, %v2573
    %v2575 = vpop.f32.mrf.mxu0
    %2576 = vmatprep.mubr.bf16.mxu0 0
    %2577 = vmatmul.mubr.bf16.gmra.mxu0 %v2229
    %v2578 = vpop.f32.mrf.mxu0
    %v2579 = vadd.f32 %v2514, %v2578
    %v2580 = vpop.f32.mrf.mxu0
    %v2581 = vpop.f32.mrf.mxu0
    %v2582 = vadd.f32 %v2514, %v2581
    %v2583 = vpop.f32.mrf.mxu0
    %2584 = vmatprep.mubr.bf16.mxu0 0
    %2585 = vmatmul.mubr.bf16.gmra.mxu0 %v2232
    %v2586 = vpop.f32.mrf.mxu0
    %v2587 = vadd.f32 %v2514, %v2586
    %v2588 = vpop.f32.mrf.mxu0
    %v2589 = vpop.f32.mrf.mxu0
    %v2590 = vadd.f32 %v2514, %v2589
    %v2591 = vpop.f32.mrf.mxu0
    %2592 = vdwg.mxu0
    %2593 = vst.msk [vmem:[#allocation5] sm:$0xff] %vm101, %v2563
    %2594 = vst.msk [vmem:[#allocation5 + $0x8] sm:$0xff] %vm101, %v2566
    %2595 = vst.msk [vmem:[#allocation5 + $0x10] sm:$0xff] %vm101, %v2571
    %2596 = vst.msk [vmem:[#allocation5 + $0x18] sm:$0xff] %vm101, %v2574
    %2597 = vst.msk [vmem:[#allocation5 + $0x20] sm:$0xff] %vm101, %v2579
    %2598 = vst.msk [vmem:[#allocation5 + $0x28] sm:$0xff] %vm101, %v2582
    %2599 = vst.msk [vmem:[#allocation5 + $0x30] sm:$0xff] %vm101, %v2587
    %2600 = vst.msk [vmem:[#allocation5 + $0x38] sm:$0xff] %vm101, %v2590
    %v2601 = vld [vmem:[#allocation6] sm:$0xf]
    %v2602 = vld [vmem:[#allocation6 + $0x4] sm:$0xf]
    %v2603 = vld [vmem:[#allocation6 + $0x8] sm:$0xf]
    %v2604 = vld [vmem:[#allocation6 + $0xc] sm:$0xf]
    %s2605 = scalar_lea.vmem [#allocation6], 16
    %v2606 = vld [vmem:[%s2605] sm:$0xf]
    %v2607 = vld [vmem:[%s2605 + $0x4] sm:$0xf]
    %v2608 = vld [vmem:[%s2605 + $0x8] sm:$0xf]
    %v2609 = vld [vmem:[%s2605 + $0xc] sm:$0xf]
    %s2610 = scalar_lea.vmem [#allocation6], 32
    %v2611 = vld [vmem:[%s2610] sm:$0xf]
    %v2612 = vld [vmem:[%s2610 + $0x4] sm:$0xf]
    %v2613 = vld [vmem:[%s2610 + $0x8] sm:$0xf]
    %v2614 = vld [vmem:[%s2610 + $0xc] sm:$0xf]
    %s2615 = scalar_lea.vmem [#allocation6], 48
    %v2616 = vld [vmem:[%s2615] sm:$0xf]
    %v2617 = vld [vmem:[%s2615 + $0x4] sm:$0xf]
    %v2618 = vld [vmem:[%s2615 + $0x8] sm:$0xf]
    %v2619 = vld [vmem:[%s2615 + $0xc] sm:$0xf]
    %s2620 = scalar_lea.vmem %s1, 8
    %v2621 = vld [vmem:[%s2620] sm:$0xff]
    %s2622 = scalar_lea.vmem %s2, 8
    %v2623 = vld [vmem:[%s2622] sm:$0xff]
    %v2624 = vpack.c.bf16 %v2621, %v2621
    %v2625 = vld [vmem:[#allocation2] sm:$0xff]
    %v2630 = vunpack.c.l.b16 %v2601
    %v2631 = vunpack.c.l.b16 %v2602
    %v2632 = vunpack.c.l.b16 %v2603
    %v2633 = vunpack.c.l.b16 %v2604
    %v2634 = vpack.c.b16 %v2631, %v2630
    %v2635 = vpack.c.b16 %v2633, %v2632
    %v2639 = vsel %vm101, %v2624, 0
    %2641 = vmatprep.subr.bf16.mxu0 0
    %2642 = vmatpush1.bf16.msra.mxu0 0
    %2643 = vmatprep.subr.bf16.mxu0 0
    %2644 = vmatpush1.bf16.msra.mxu0 0
    %2645 = vmatprep.subr.bf16.mxu0 0
    %2646 = vmatpush1.bf16.msra.mxu0 0
    %2647 = vmatprep.subr.bf16.mxu0 0
    %2648 = vmatpush1.bf16.msra.mxu0 0
    %2649 = vmatprep.subr.bf16.mxu0 0
    %2650 = vmatpush1.bf16.msra.mxu0 0
    %2651 = vmatprep.subr.bf16.mxu0 0
    %2652 = vmatpush1.bf16.msra.mxu0 0
    %2653 = vmatprep.subr.bf16.mxu0 0
    %2654 = vmatpush1.bf16.msra.mxu0 %v2635
    %2655 = vmatprep.subr.bf16.mxu0 0
    %2656 = vmatpush1.bf16.msra.mxu0 %v2634
    %2657 = vmatprep.subr.bf16.mxu0 0
    %2658 = vmatpush2.bf16.msra.mxu0 0
    %2659 = vmatprep.subr.bf16.mxu0 0
    %2660 = vmatpush2.bf16.msra.mxu0 0
    %2661 = vmatprep.subr.bf16.mxu0 0
    %2662 = vmatpush2.bf16.msra.mxu0 0
    %2663 = vmatprep.subr.bf16.mxu0 0
    %2664 = vmatpush2.bf16.msra.mxu0 0
    %2665 = vmatprep.subr.bf16.mxu0 0
    %2666 = vmatpush2.bf16.msra.mxu0 0
    %2667 = vmatprep.subr.bf16.mxu0 0
    %2668 = vmatpush2.bf16.msra.mxu0 0
    %2669 = vmatprep.subr.bf16.mxu0 0
    %2670 = vmatpush2.bf16.msra.mxu0 0
    %2671 = vmatprep.subr.bf16.mxu0 0
    %2672 = vmatpush2.bf16.msra.mxu0 0
    %2673 = vmatprep.mubr.bf16.mxu0 0
    %2674 = vmatmul.mubr.bf16.gmra.mxu0 %v2639
    %v2675 = vpop.f32.mrf.mxu0
    %v2676 = vadd.f32 0.0, %v2675
    %v2677 = vpop.f32.mrf.mxu0
    %v2678 = vpop.f32.mrf.mxu0
    %v2679 = vpop.f32.mrf.mxu0
    %2680 = vdwg.mxu0
    %v2681 = vadd.f32 %v2625, %v2676
    %v2682 = vld [vmem:[#allocation3] sm:$0xff]
    %v2687 = vunpack.c.l.b16 %v2606
    %v2688 = vunpack.c.l.b16 %v2607
    %v2689 = vunpack.c.l.b16 %v2608
    %v2690 = vunpack.c.l.b16 %v2609
    %v2691 = vpack.c.b16 %v2688, %v2687
    %v2692 = vpack.c.b16 %v2690, %v2689
    %2695 = vmatprep.subr.bf16.mxu0 0
    %2696 = vmatpush1.bf16.msra.mxu0 0
    %2697 = vmatprep.subr.bf16.mxu0 0
    %2698 = vmatpush1.bf16.msra.mxu0 0
    %2699 = vmatprep.subr.bf16.mxu0 0
    %2700 = vmatpush1.bf16.msra.mxu0 0
    %2701 = vmatprep.subr.bf16.mxu0 0
    %2702 = vmatpush1.bf16.msra.mxu0 0
    %2703 = vmatprep.subr.bf16.mxu0 0
    %2704 = vmatpush1.bf16.msra.mxu0 0
    %2705 = vmatprep.subr.bf16.mxu0 0
    %2706 = vmatpush1.bf16.msra.mxu0 0
    %2707 = vmatprep.subr.bf16.mxu0 0
    %2708 = vmatpush1.bf16.msra.mxu0 %v2692
    %2709 = vmatprep.subr.bf16.mxu0 0
    %2710 = vmatpush1.bf16.msra.mxu0 %v2691
    %2711 = vmatprep.subr.bf16.mxu0 0
    %2712 = vmatpush2.bf16.msra.mxu0 0
    %2713 = vmatprep.subr.bf16.mxu0 0
    %2714 = vmatpush2.bf16.msra.mxu0 0
    %2715 = vmatprep.subr.bf16.mxu0 0
    %2716 = vmatpush2.bf16.msra.mxu0 0
    %2717 = vmatprep.subr.bf16.mxu0 0
    %2718 = vmatpush2.bf16.msra.mxu0 0
    %2719 = vmatprep.subr.bf16.mxu0 0
    %2720 = vmatpush2.bf16.msra.mxu0 0
    %2721 = vmatprep.subr.bf16.mxu0 0
    %2722 = vmatpush2.bf16.msra.mxu0 0
    %2723 = vmatprep.subr.bf16.mxu0 0
    %2724 = vmatpush2.bf16.msra.mxu0 0
    %2725 = vmatprep.subr.bf16.mxu0 0
    %2726 = vmatpush2.bf16.msra.mxu0 0
    %2727 = vmatprep.mubr.bf16.mxu0 0
    %2728 = vmatmul.mubr.bf16.gmra.mxu0 %v2639
    %v2729 = vpop.f32.mrf.mxu0
    %v2730 = vadd.f32 0.0, %v2729
    %v2731 = vpop.f32.mrf.mxu0
    %v2732 = vpop.f32.mrf.mxu0
    %v2733 = vpop.f32.mrf.mxu0
    %2734 = vdwg.mxu0
    %v2735 = vadd.f32 %v2682, %v2730
    %v2736 = vld [vmem:[#allocation4] sm:$0xff]
    %v2741 = vunpack.c.l.b16 %v2611
    %v2742 = vunpack.c.l.b16 %v2612
    %v2743 = vunpack.c.l.b16 %v2613
    %v2744 = vunpack.c.l.b16 %v2614
    %v2745 = vpack.c.b16 %v2742, %v2741
    %v2746 = vpack.c.b16 %v2744, %v2743
    %2749 = vmatprep.subr.bf16.mxu0 0
    %2750 = vmatpush1.bf16.msra.mxu0 0
    %2751 = vmatprep.subr.bf16.mxu0 0
    %2752 = vmatpush1.bf16.msra.mxu0 0
    %2753 = vmatprep.subr.bf16.mxu0 0
    %2754 = vmatpush1.bf16.msra.mxu0 0
    %2755 = vmatprep.subr.bf16.mxu0 0
    %2756 = vmatpush1.bf16.msra.mxu0 0
    %2757 = vmatprep.subr.bf16.mxu0 0
    %2758 = vmatpush1.bf16.msra.mxu0 0
    %2759 = vmatprep.subr.bf16.mxu0 0
    %2760 = vmatpush1.bf16.msra.mxu0 0
    %2761 = vmatprep.subr.bf16.mxu0 0
    %2762 = vmatpush1.bf16.msra.mxu0 %v2746
    %2763 = vmatprep.subr.bf16.mxu0 0
    %2764 = vmatpush1.bf16.msra.mxu0 %v2745
    %2765 = vmatprep.subr.bf16.mxu0 0
    %2766 = vmatpush2.bf16.msra.mxu0 0
    %2767 = vmatprep.subr.bf16.mxu0 0
    %2768 = vmatpush2.bf16.msra.mxu0 0
    %2769 = vmatprep.subr.bf16.mxu0 0
    %2770 = vmatpush2.bf16.msra.mxu0 0
    %2771 = vmatprep.subr.bf16.mxu0 0
    %2772 = vmatpush2.bf16.msra.mxu0 0
    %2773 = vmatprep.subr.bf16.mxu0 0
    %2774 = vmatpush2.bf16.msra.mxu0 0
    %2775 = vmatprep.subr.bf16.mxu0 0
    %2776 = vmatpush2.bf16.msra.mxu0 0
    %2777 = vmatprep.subr.bf16.mxu0 0
    %2778 = vmatpush2.bf16.msra.mxu0 0
    %2779 = vmatprep.subr.bf16.mxu0 0
    %2780 = vmatpush2.bf16.msra.mxu0 0
    %2781 = vmatprep.mubr.bf16.mxu0 0
    %2782 = vmatmul.mubr.bf16.gmra.mxu0 %v2639
    %v2783 = vpop.f32.mrf.mxu0
    %v2784 = vadd.f32 0.0, %v2783
    %v2785 = vpop.f32.mrf.mxu0
    %v2786 = vpop.f32.mrf.mxu0
    %v2787 = vpop.f32.mrf.mxu0
    %2788 = vdwg.mxu0
    %v2789 = vadd.f32 %v2736, %v2784
    %v2790 = vld [vmem:[#allocation5] sm:$0xff]
    %v2795 = vunpack.c.l.b16 %v2616
    %v2796 = vunpack.c.l.b16 %v2617
    %v2797 = vunpack.c.l.b16 %v2618
    %v2798 = vunpack.c.l.b16 %v2619
    %v2799 = vpack.c.b16 %v2796, %v2795
    %v2800 = vpack.c.b16 %v2798, %v2797
    %2803 = vmatprep.subr.bf16.mxu0 0
    %2804 = vmatpush1.bf16.msra.mxu0 0
    %2805 = vmatprep.subr.bf16.mxu0 0
    %2806 = vmatpush1.bf16.msra.mxu0 0
    %2807 = vmatprep.subr.bf16.mxu0 0
    %2808 = vmatpush1.bf16.msra.mxu0 0
    %2809 = vmatprep.subr.bf16.mxu0 0
    %2810 = vmatpush1.bf16.msra.mxu0 0
    %2811 = vmatprep.subr.bf16.mxu0 0
    %2812 = vmatpush1.bf16.msra.mxu0 0
    %2813 = vmatprep.subr.bf16.mxu0 0
    %2814 = vmatpush1.bf16.msra.mxu0 0
    %2815 = vmatprep.subr.bf16.mxu0 0
    %2816 = vmatpush1.bf16.msra.mxu0 %v2800
    %2817 = vmatprep.subr.bf16.mxu0 0
    %2818 = vmatpush1.bf16.msra.mxu0 %v2799
    %2819 = vmatprep.subr.bf16.mxu0 0
    %2820 = vmatpush2.bf16.msra.mxu0 0
    %2821 = vmatprep.subr.bf16.mxu0 0
    %2822 = vmatpush2.bf16.msra.mxu0 0
    %2823 = vmatprep.subr.bf16.mxu0 0
    %2824 = vmatpush2.bf16.msra.mxu0 0
    %2825 = vmatprep.subr.bf16.mxu0 0
    %2826 = vmatpush2.bf16.msra.mxu0 0
    %2827 = vmatprep.subr.bf16.mxu0 0
    %2828 = vmatpush2.bf16.msra.mxu0 0
    %2829 = vmatprep.subr.bf16.mxu0 0
    %2830 = vmatpush2.bf16.msra.mxu0 0
    %2831 = vmatprep.subr.bf16.mxu0 0
    %2832 = vmatpush2.bf16.msra.mxu0 0
    %2833 = vmatprep.subr.bf16.mxu0 0
    %2834 = vmatpush2.bf16.msra.mxu0 0
    %2835 = vmatprep.mubr.bf16.mxu0 0
    %2836 = vmatmul.mubr.bf16.gmra.mxu0 %v2639
    %v2837 = vpop.f32.mrf.mxu0
    %v2838 = vadd.f32 0.0, %v2837
    %v2839 = vpop.f32.mrf.mxu0
    %v2840 = vpop.f32.mrf.mxu0
    %v2841 = vpop.f32.mrf.mxu0
    %2842 = vdwg.mxu0
    %v2843 = vadd.f32 %v2790, %v2838
    %v2844 = vxor.u32 %v2681, 2147483648
    %v2845 = vmul.f32 %v2844, 1.442695
    %v2846 = vpow.pop %v2845
    %v2847 = vadd.f32 %v2846, 1.0
    %v2848 = vrcp.pop %v2847
    %v2849 = vmul.f32 1.0, %v2848
    %v2850 = vxor.u32 %v2735, 2147483648
    %v2851 = vmul.f32 %v2850, 1.442695
    %v2852 = vpow.pop %v2851
    %v2853 = vadd.f32 %v2852, 1.0
    %v2854 = vrcp.pop %v2853
    %v2855 = vmul.f32 1.0, %v2854
    %v2856 = vtanh.pop %v2789
    %v2857 = vxor.u32 %v2843, 2147483648
    %v2858 = vmul.f32 %v2857, 1.442695
    %v2859 = vpow.pop %v2858
    %v2860 = vadd.f32 %v2859, 1.0
    %v2861 = vrcp.pop %v2860
    %v2862 = vmul.f32 1.0, %v2861
    %v2863 = vmul.f32 %v2855, %v2623
    %v2864 = vmul.f32 %v2849, %v2856
    %v2865 = vadd.f32 %v2863, %v2864
    %v2866 = vtanh.pop %v2865
    %v2867 = vmul.f32 %v2862, %v2866
    %2868 = vst.msk [vmem:[%s9] sm:$0xff] %vm101, %v2867
    %v2869 = vpack.c.bf16 %v2867, %v2867
    %v2870 = vld [vmem:[%s748] sm:$0xff]
    %v2872 = vsel %vm101, %v2869, 0
    %2874 = vmatprep.subr.bf16.mxu0 0
    %2875 = vmatpush1.bf16.msra.mxu0 0
    %2876 = vmatprep.subr.bf16.mxu0 0
    %2877 = vmatpush1.bf16.msra.mxu0 0
    %2878 = vmatprep.subr.bf16.mxu0 0
    %2879 = vmatpush1.bf16.msra.mxu0 0
    %2880 = vmatprep.subr.bf16.mxu0 0
    %2881 = vmatpush1.bf16.msra.mxu0 0
    %2882 = vmatprep.subr.bf16.mxu0 0
    %2883 = vmatpush1.bf16.msra.mxu0 0
    %2884 = vmatprep.subr.bf16.mxu0 0
    %2885 = vmatpush1.bf16.msra.mxu0 0
    %2886 = vmatprep.subr.bf16.mxu0 0
    %2887 = vmatpush1.bf16.msra.mxu0 %v2635
    %2888 = vmatprep.subr.bf16.mxu0 0
    %2889 = vmatpush1.bf16.msra.mxu0 %v2634
    %2890 = vmatprep.subr.bf16.mxu0 0
    %2891 = vmatpush2.bf16.msra.mxu0 0
    %2892 = vmatprep.subr.bf16.mxu0 0
    %2893 = vmatpush2.bf16.msra.mxu0 0
    %2894 = vmatprep.subr.bf16.mxu0 0
    %2895 = vmatpush2.bf16.msra.mxu0 0
    %2896 = vmatprep.subr.bf16.mxu0 0
    %2897 = vmatpush2.bf16.msra.mxu0 0
    %2898 = vmatprep.subr.bf16.mxu0 0
    %2899 = vmatpush2.bf16.msra.mxu0 0
    %2900 = vmatprep.subr.bf16.mxu0 0
    %2901 = vmatpush2.bf16.msra.mxu0 0
    %2902 = vmatprep.subr.bf16.mxu0 0
    %2903 = vmatpush2.bf16.msra.mxu0 0
    %2904 = vmatprep.subr.bf16.mxu0 0
    %2905 = vmatpush2.bf16.msra.mxu0 0
    %2906 = vmatprep.mubr.bf16.mxu0 0
    %2907 = vmatmul.mubr.bf16.gmra.mxu0 %v2872
    %v2908 = vpop.f32.mrf.mxu0
    %v2909 = vadd.f32 0.0, %v2908
    %v2910 = vpop.f32.mrf.mxu0
    %v2911 = vpop.f32.mrf.mxu0
    %v2912 = vpop.f32.mrf.mxu0
    %2913 = vdwg.mxu0
    %v2914 = vadd.f32 %v2870, %v2909
    %v2915 = vld [vmem:[%s794] sm:$0xff]
    %2916 = vmatprep.subr.bf16.mxu0 0
    %2917 = vmatpush1.bf16.msra.mxu0 0
    %2918 = vmatprep.subr.bf16.mxu0 0
    %2919 = vmatpush1.bf16.msra.mxu0 0
    %2920 = vmatprep.subr.bf16.mxu0 0
    %2921 = vmatpush1.bf16.msra.mxu0 0
    %2922 = vmatprep.subr.bf16.mxu0 0
    %2923 = vmatpush1.bf16.msra.mxu0 0
    %2924 = vmatprep.subr.bf16.mxu0 0
    %2925 = vmatpush1.bf16.msra.mxu0 0
    %2926 = vmatprep.subr.bf16.mxu0 0
    %2927 = vmatpush1.bf16.msra.mxu0 0
    %2928 = vmatprep.subr.bf16.mxu0 0
    %2929 = vmatpush1.bf16.msra.mxu0 %v2692
    %2930 = vmatprep.subr.bf16.mxu0 0
    %2931 = vmatpush1.bf16.msra.mxu0 %v2691
    %2932 = vmatprep.subr.bf16.mxu0 0
    %2933 = vmatpush2.bf16.msra.mxu0 0
    %2934 = vmatprep.subr.bf16.mxu0 0
    %2935 = vmatpush2.bf16.msra.mxu0 0
    %2936 = vmatprep.subr.bf16.mxu0 0
    %2937 = vmatpush2.bf16.msra.mxu0 0
    %2938 = vmatprep.subr.bf16.mxu0 0
    %2939 = vmatpush2.bf16.msra.mxu0 0
    %2940 = vmatprep.subr.bf16.mxu0 0
    %2941 = vmatpush2.bf16.msra.mxu0 0
    %2942 = vmatprep.subr.bf16.mxu0 0
    %2943 = vmatpush2.bf16.msra.mxu0 0
    %2944 = vmatprep.subr.bf16.mxu0 0
    %2945 = vmatpush2.bf16.msra.mxu0 0
    %2946 = vmatprep.subr.bf16.mxu0 0
    %2947 = vmatpush2.bf16.msra.mxu0 0
    %2948 = vmatprep.mubr.bf16.mxu0 0
    %2949 = vmatmul.mubr.bf16.gmra.mxu0 %v2872
    %v2950 = vpop.f32.mrf.mxu0
    %v2951 = vadd.f32 0.0, %v2950
    %v2952 = vpop.f32.mrf.mxu0
    %v2953 = vpop.f32.mrf.mxu0
    %v2954 = vpop.f32.mrf.mxu0
    %2955 = vdwg.mxu0
    %v2956 = vadd.f32 %v2915, %v2951
    %v2957 = vld [vmem:[%s837] sm:$0xff]
    %2958 = vmatprep.subr.bf16.mxu0 0
    %2959 = vmatpush1.bf16.msra.mxu0 0
    %2960 = vmatprep.subr.bf16.mxu0 0
    %2961 = vmatpush1.bf16.msra.mxu0 0
    %2962 = vmatprep.subr.bf16.mxu0 0
    %2963 = vmatpush1.bf16.msra.mxu0 0
    %2964 = vmatprep.subr.bf16.mxu0 0
    %2965 = vmatpush1.bf16.msra.mxu0 0
    %2966 = vmatprep.subr.bf16.mxu0 0
    %2967 = vmatpush1.bf16.msra.mxu0 0
    %2968 = vmatprep.subr.bf16.mxu0 0
    %2969 = vmatpush1.bf16.msra.mxu0 0
    %2970 = vmatprep.subr.bf16.mxu0 0
    %2971 = vmatpush1.bf16.msra.mxu0 %v2746
    %2972 = vmatprep.subr.bf16.mxu0 0
    %2973 = vmatpush1.bf16.msra.mxu0 %v2745
    %2974 = vmatprep.subr.bf16.mxu0 0
    %2975 = vmatpush2.bf16.msra.mxu0 0
    %2976 = vmatprep.subr.bf16.mxu0 0
    %2977 = vmatpush2.bf16.msra.mxu0 0
    %2978 = vmatprep.subr.bf16.mxu0 0
    %2979 = vmatpush2.bf16.msra.mxu0 0
    %2980 = vmatprep.subr.bf16.mxu0 0
    %2981 = vmatpush2.bf16.msra.mxu0 0
    %2982 = vmatprep.subr.bf16.mxu0 0
    %2983 = vmatpush2.bf16.msra.mxu0 0
    %2984 = vmatprep.subr.bf16.mxu0 0
    %2985 = vmatpush2.bf16.msra.mxu0 0
    %2986 = vmatprep.subr.bf16.mxu0 0
    %2987 = vmatpush2.bf16.msra.mxu0 0
    %2988 = vmatprep.subr.bf16.mxu0 0
    %2989 = vmatpush2.bf16.msra.mxu0 0
    %2990 = vmatprep.mubr.bf16.mxu0 0
    %2991 = vmatmul.mubr.bf16.gmra.mxu0 %v2872
    %v2992 = vpop.f32.mrf.mxu0
    %v2993 = vadd.f32 0.0, %v2992
    %v2994 = vpop.f32.mrf.mxu0
    %v2995 = vpop.f32.mrf.mxu0
    %v2996 = vpop.f32.mrf.mxu0
    %2997 = vdwg.mxu0
    %v2998 = vadd.f32 %v2957, %v2993
    %v2999 = vld [vmem:[%s880] sm:$0xff]
    %3000 = vmatprep.subr.bf16.mxu0 0
    %3001 = vmatpush1.bf16.msra.mxu0 0
    %3002 = vmatprep.subr.bf16.mxu0 0
    %3003 = vmatpush1.bf16.msra.mxu0 0
    %3004 = vmatprep.subr.bf16.mxu0 0
    %3005 = vmatpush1.bf16.msra.mxu0 0
    %3006 = vmatprep.subr.bf16.mxu0 0
    %3007 = vmatpush1.bf16.msra.mxu0 0
    %3008 = vmatprep.subr.bf16.mxu0 0
    %3009 = vmatpush1.bf16.msra.mxu0 0
    %3010 = vmatprep.subr.bf16.mxu0 0
    %3011 = vmatpush1.bf16.msra.mxu0 0
    %3012 = vmatprep.subr.bf16.mxu0 0
    %3013 = vmatpush1.bf16.msra.mxu0 %v2800
    %3014 = vmatprep.subr.bf16.mxu0 0
    %3015 = vmatpush1.bf16.msra.mxu0 %v2799
    %3016 = vmatprep.subr.bf16.mxu0 0
    %3017 = vmatpush2.bf16.msra.mxu0 0
    %3018 = vmatprep.subr.bf16.mxu0 0
    %3019 = vmatpush2.bf16.msra.mxu0 0
    %3020 = vmatprep.subr.bf16.mxu0 0
    %3021 = vmatpush2.bf16.msra.mxu0 0
    %3022 = vmatprep.subr.bf16.mxu0 0
    %3023 = vmatpush2.bf16.msra.mxu0 0
    %3024 = vmatprep.subr.bf16.mxu0 0
    %3025 = vmatpush2.bf16.msra.mxu0 0
    %3026 = vmatprep.subr.bf16.mxu0 0
    %3027 = vmatpush2.bf16.msra.mxu0 0
    %3028 = vmatprep.subr.bf16.mxu0 0
    %3029 = vmatpush2.bf16.msra.mxu0 0
    %3030 = vmatprep.subr.bf16.mxu0 0
    %3031 = vmatpush2.bf16.msra.mxu0 0
    %3032 = vmatprep.mubr.bf16.mxu0 0
    %3033 = vmatmul.mubr.bf16.gmra.mxu0 %v2872
    %v3034 = vpop.f32.mrf.mxu0
    %v3035 = vadd.f32 0.0, %v3034
    %v3036 = vpop.f32.mrf.mxu0
    %v3037 = vpop.f32.mrf.mxu0
    %v3038 = vpop.f32.mrf.mxu0
    %3039 = vdwg.mxu0
    %v3040 = vadd.f32 %v2999, %v3035
    %v3041 = vxor.u32 %v2914, 2147483648
    %v3042 = vmul.f32 %v3041, 1.442695
    %v3043 = vpow.pop %v3042
    %v3044 = vadd.f32 %v3043, 1.0
    %v3045 = vrcp.pop %v3044
    %v3046 = vmul.f32 1.0, %v3045
    %v3047 = vxor.u32 %v2956, 2147483648
    %v3048 = vmul.f32 %v3047, 1.442695
    %v3049 = vpow.pop %v3048
    %v3050 = vadd.f32 %v3049, 1.0
    %v3051 = vrcp.pop %v3050
    %v3052 = vmul.f32 1.0, %v3051
    %v3053 = vtanh.pop %v2998
    %v3054 = vxor.u32 %v3040, 2147483648
    %v3055 = vmul.f32 %v3054, 1.442695
    %v3056 = vpow.pop %v3055
    %v3057 = vadd.f32 %v3056, 1.0
    %v3058 = vrcp.pop %v3057
    %v3059 = vmul.f32 1.0, %v3058
    %v3060 = vmul.f32 %v3052, %v2865
    %v3061 = vmul.f32 %v3046, %v3053
    %v3062 = vadd.f32 %v3060, %v3061
    %v3063 = vtanh.pop %v3062
    %v3064 = vmul.f32 %v3059, %v3063
    %3065 = vst.msk [vmem:[%s947] sm:$0xff] %vm101, %v3064
    %v3066 = vpack.c.bf16 %v3064, %v3064
    %v3067 = vld [vmem:[%s950] sm:$0xff]
    %v3069 = vsel %vm101, %v3066, 0
    %3071 = vmatprep.subr.bf16.mxu0 0
    %3072 = vmatpush1.bf16.msra.mxu0 0
    %3073 = vmatprep.subr.bf16.mxu0 0
    %3074 = vmatpush1.bf16.msra.mxu0 0
    %3075 = vmatprep.subr.bf16.mxu0 0
    %3076 = vmatpush1.bf16.msra.mxu0 0
    %3077 = vmatprep.subr.bf16.mxu0 0
    %3078 = vmatpush1.bf16.msra.mxu0 0
    %3079 = vmatprep.subr.bf16.mxu0 0
    %3080 = vmatpush1.bf16.msra.mxu0 0
    %3081 = vmatprep.subr.bf16.mxu0 0
    %3082 = vmatpush1.bf16.msra.mxu0 0
    %3083 = vmatprep.subr.bf16.mxu0 0
    %3084 = vmatpush1.bf16.msra.mxu0 %v2635
    %3085 = vmatprep.subr.bf16.mxu0 0
    %3086 = vmatpush1.bf16.msra.mxu0 %v2634
    %3087 = vmatprep.subr.bf16.mxu0 0
    %3088 = vmatpush2.bf16.msra.mxu0 0
    %3089 = vmatprep.subr.bf16.mxu0 0
    %3090 = vmatpush2.bf16.msra.mxu0 0
    %3091 = vmatprep.subr.bf16.mxu0 0
    %3092 = vmatpush2.bf16.msra.mxu0 0
    %3093 = vmatprep.subr.bf16.mxu0 0
    %3094 = vmatpush2.bf16.msra.mxu0 0
    %3095 = vmatprep.subr.bf16.mxu0 0
    %3096 = vmatpush2.bf16.msra.mxu0 0
    %3097 = vmatprep.subr.bf16.mxu0 0
    %3098 = vmatpush2.bf16.msra.mxu0 0
    %3099 = vmatprep.subr.bf16.mxu0 0
    %3100 = vmatpush2.bf16.msra.mxu0 0
    %3101 = vmatprep.subr.bf16.mxu0 0
    %3102 = vmatpush2.bf16.msra.mxu0 0
    %3103 = vmatprep.mubr.bf16.mxu0 0
    %3104 = vmatmul.mubr.bf16.gmra.mxu0 %v3069
    %v3105 = vpop.f32.mrf.mxu0
    %v3106 = vadd.f32 0.0, %v3105
    %v3107 = vpop.f32.mrf.mxu0
    %v3108 = vpop.f32.mrf.mxu0
    %v3109 = vpop.f32.mrf.mxu0
    %3110 = vdwg.mxu0
    %v3111 = vadd.f32 %v3067, %v3106
    %v3112 = vld [vmem:[%s996] sm:$0xff]
    %3113 = vmatprep.subr.bf16.mxu0 0
    %3114 = vmatpush1.bf16.msra.mxu0 0
    %3115 = vmatprep.subr.bf16.mxu0 0
    %3116 = vmatpush1.bf16.msra.mxu0 0
    %3117 = vmatprep.subr.bf16.mxu0 0
    %3118 = vmatpush1.bf16.msra.mxu0 0
    %3119 = vmatprep.subr.bf16.mxu0 0
    %3120 = vmatpush1.bf16.msra.mxu0 0
    %3121 = vmatprep.subr.bf16.mxu0 0
    %3122 = vmatpush1.bf16.msra.mxu0 0
    %3123 = vmatprep.subr.bf16.mxu0 0
    %3124 = vmatpush1.bf16.msra.mxu0 0
    %3125 = vmatprep.subr.bf16.mxu0 0
    %3126 = vmatpush1.bf16.msra.mxu0 %v2692
    %3127 = vmatprep.subr.bf16.mxu0 0
    %3128 = vmatpush1.bf16.msra.mxu0 %v2691
    %3129 = vmatprep.subr.bf16.mxu0 0
    %3130 = vmatpush2.bf16.msra.mxu0 0
    %3131 = vmatprep.subr.bf16.mxu0 0
    %3132 = vmatpush2.bf16.msra.mxu0 0
    %3133 = vmatprep.subr.bf16.mxu0 0
    %3134 = vmatpush2.bf16.msra.mxu0 0
    %3135 = vmatprep.subr.bf16.mxu0 0
    %3136 = vmatpush2.bf16.msra.mxu0 0
    %3137 = vmatprep.subr.bf16.mxu0 0
    %3138 = vmatpush2.bf16.msra.mxu0 0
    %3139 = vmatprep.subr.bf16.mxu0 0
    %3140 = vmatpush2.bf16.msra.mxu0 0
    %3141 = vmatprep.subr.bf16.mxu0 0
    %3142 = vmatpush2.bf16.msra.mxu0 0
    %3143 = vmatprep.subr.bf16.mxu0 0
    %3144 = vmatpush2.bf16.msra.mxu0 0
    %3145 = vmatprep.mubr.bf16.mxu0 0
    %3146 = vmatmul.mubr.bf16.gmra.mxu0 %v3069
    %v3147 = vpop.f32.mrf.mxu0
    %v3148 = vadd.f32 0.0, %v3147
    %v3149 = vpop.f32.mrf.mxu0
    %v3150 = vpop.f32.mrf.mxu0
    %v3151 = vpop.f32.mrf.mxu0
    %3152 = vdwg.mxu0
    %v3153 = vadd.f32 %v3112, %v3148
    %v3154 = vld [vmem:[%s1039] sm:$0xff]
    %3155 = vmatprep.subr.bf16.mxu0 0
    %3156 = vmatpush1.bf16.msra.mxu0 0
    %3157 = vmatprep.subr.bf16.mxu0 0
    %3158 = vmatpush1.bf16.msra.mxu0 0
    %3159 = vmatprep.subr.bf16.mxu0 0
    %3160 = vmatpush1.bf16.msra.mxu0 0
    %3161 = vmatprep.subr.bf16.mxu0 0
    %3162 = vmatpush1.bf16.msra.mxu0 0
    %3163 = vmatprep.subr.bf16.mxu0 0
    %3164 = vmatpush1.bf16.msra.mxu0 0
    %3165 = vmatprep.subr.bf16.mxu0 0
    %3166 = vmatpush1.bf16.msra.mxu0 0
    %3167 = vmatprep.subr.bf16.mxu0 0
    %3168 = vmatpush1.bf16.msra.mxu0 %v2746
    %3169 = vmatprep.subr.bf16.mxu0 0
    %3170 = vmatpush1.bf16.msra.mxu0 %v2745
    %3171 = vmatprep.subr.bf16.mxu0 0
    %3172 = vmatpush2.bf16.msra.mxu0 0
    %3173 = vmatprep.subr.bf16.mxu0 0
    %3174 = vmatpush2.bf16.msra.mxu0 0
    %3175 = vmatprep.subr.bf16.mxu0 0
    %3176 = vmatpush2.bf16.msra.mxu0 0
    %3177 = vmatprep.subr.bf16.mxu0 0
    %3178 = vmatpush2.bf16.msra.mxu0 0
    %3179 = vmatprep.subr.bf16.mxu0 0
    %3180 = vmatpush2.bf16.msra.mxu0 0
    %3181 = vmatprep.subr.bf16.mxu0 0
    %3182 = vmatpush2.bf16.msra.mxu0 0
    %3183 = vmatprep.subr.bf16.mxu0 0
    %3184 = vmatpush2.bf16.msra.mxu0 0
    %3185 = vmatprep.subr.bf16.mxu0 0
    %3186 = vmatpush2.bf16.msra.mxu0 0
    %3187 = vmatprep.mubr.bf16.mxu0 0
    %3188 = vmatmul.mubr.bf16.gmra.mxu0 %v3069
    %v3189 = vpop.f32.mrf.mxu0
    %v3190 = vadd.f32 0.0, %v3189
    %v3191 = vpop.f32.mrf.mxu0
    %v3192 = vpop.f32.mrf.mxu0
    %v3193 = vpop.f32.mrf.mxu0
    %3194 = vdwg.mxu0
    %v3195 = vadd.f32 %v3154, %v3190
    %v3196 = vld [vmem:[%s1082] sm:$0xff]
    %3197 = vmatprep.subr.bf16.mxu0 0
    %3198 = vmatpush1.bf16.msra.mxu0 0
    %3199 = vmatprep.subr.bf16.mxu0 0
    %3200 = vmatpush1.bf16.msra.mxu0 0
    %3201 = vmatprep.subr.bf16.mxu0 0
    %3202 = vmatpush1.bf16.msra.mxu0 0
    %3203 = vmatprep.subr.bf16.mxu0 0
    %3204 = vmatpush1.bf16.msra.mxu0 0
    %3205 = vmatprep.subr.bf16.mxu0 0
    %3206 = vmatpush1.bf16.msra.mxu0 0
    %3207 = vmatprep.subr.bf16.mxu0 0
    %3208 = vmatpush1.bf16.msra.mxu0 0
    %3209 = vmatprep.subr.bf16.mxu0 0
    %3210 = vmatpush1.bf16.msra.mxu0 %v2800
    %3211 = vmatprep.subr.bf16.mxu0 0
    %3212 = vmatpush1.bf16.msra.mxu0 %v2799
    %3213 = vmatprep.subr.bf16.mxu0 0
    %3214 = vmatpush2.bf16.msra.mxu0 0
    %3215 = vmatprep.subr.bf16.mxu0 0
    %3216 = vmatpush2.bf16.msra.mxu0 0
    %3217 = vmatprep.subr.bf16.mxu0 0
    %3218 = vmatpush2.bf16.msra.mxu0 0
    %3219 = vmatprep.subr.bf16.mxu0 0
    %3220 = vmatpush2.bf16.msra.mxu0 0
    %3221 = vmatprep.subr.bf16.mxu0 0
    %3222 = vmatpush2.bf16.msra.mxu0 0
    %3223 = vmatprep.subr.bf16.mxu0 0
    %3224 = vmatpush2.bf16.msra.mxu0 0
    %3225 = vmatprep.subr.bf16.mxu0 0
    %3226 = vmatpush2.bf16.msra.mxu0 0
    %3227 = vmatprep.subr.bf16.mxu0 0
    %3228 = vmatpush2.bf16.msra.mxu0 0
    %3229 = vmatprep.mubr.bf16.mxu0 0
    %3230 = vmatmul.mubr.bf16.gmra.mxu0 %v3069
    %v3231 = vpop.f32.mrf.mxu0
    %v3232 = vadd.f32 0.0, %v3231
    %v3233 = vpop.f32.mrf.mxu0
    %v3234 = vpop.f32.mrf.mxu0
    %v3235 = vpop.f32.mrf.mxu0
    %3236 = vdwg.mxu0
    %v3237 = vadd.f32 %v3196, %v3232
    %v3238 = vxor.u32 %v3111, 2147483648
    %v3239 = vmul.f32 %v3238, 1.442695
    %v3240 = vpow.pop %v3239
    %v3241 = vadd.f32 %v3240, 1.0
    %v3242 = vrcp.pop %v3241
    %v3243 = vmul.f32 1.0, %v3242
    %v3244 = vxor.u32 %v3153, 2147483648
    %v3245 = vmul.f32 %v3244, 1.442695
    %v3246 = vpow.pop %v3245
    %v3247 = vadd.f32 %v3246, 1.0
    %v3248 = vrcp.pop %v3247
    %v3249 = vmul.f32 1.0, %v3248
    %v3250 = vtanh.pop %v3195
    %v3251 = vxor.u32 %v3237, 2147483648
    %v3252 = vmul.f32 %v3251, 1.442695
    %v3253 = vpow.pop %v3252
    %v3254 = vadd.f32 %v3253, 1.0
    %v3255 = vrcp.pop %v3254
    %v3256 = vmul.f32 1.0, %v3255
    %v3257 = vmul.f32 %v3249, %v3062
    %v3258 = vmul.f32 %v3243, %v3250
    %v3259 = vadd.f32 %v3257, %v3258
    %v3260 = vtanh.pop %v3259
    %v3261 = vmul.f32 %v3256, %v3260
    %3262 = vst.msk [vmem:[%s1149] sm:$0xff] %vm101, %v3261
    %v3263 = vpack.c.bf16 %v3261, %v3261
    %v3264 = vld [vmem:[%s1152] sm:$0xff]
    %v3266 = vsel %vm101, %v3263, 0
    %3268 = vmatprep.subr.bf16.mxu0 0
    %3269 = vmatpush1.bf16.msra.mxu0 0
    %3270 = vmatprep.subr.bf16.mxu0 0
    %3271 = vmatpush1.bf16.msra.mxu0 0
    %3272 = vmatprep.subr.bf16.mxu0 0
    %3273 = vmatpush1.bf16.msra.mxu0 0
    %3274 = vmatprep.subr.bf16.mxu0 0
    %3275 = vmatpush1.bf16.msra.mxu0 0
    %3276 = vmatprep.subr.bf16.mxu0 0
    %3277 = vmatpush1.bf16.msra.mxu0 0
    %3278 = vmatprep.subr.bf16.mxu0 0
    %3279 = vmatpush1.bf16.msra.mxu0 0
    %3280 = vmatprep.subr.bf16.mxu0 0
    %3281 = vmatpush1.bf16.msra.mxu0 %v2635
    %3282 = vmatprep.subr.bf16.mxu0 0
    %3283 = vmatpush1.bf16.msra.mxu0 %v2634
    %3284 = vmatprep.subr.bf16.mxu0 0
    %3285 = vmatpush2.bf16.msra.mxu0 0
    %3286 = vmatprep.subr.bf16.mxu0 0
    %3287 = vmatpush2.bf16.msra.mxu0 0
    %3288 = vmatprep.subr.bf16.mxu0 0
    %3289 = vmatpush2.bf16.msra.mxu0 0
    %3290 = vmatprep.subr.bf16.mxu0 0
    %3291 = vmatpush2.bf16.msra.mxu0 0
    %3292 = vmatprep.subr.bf16.mxu0 0
    %3293 = vmatpush2.bf16.msra.mxu0 0
    %3294 = vmatprep.subr.bf16.mxu0 0
    %3295 = vmatpush2.bf16.msra.mxu0 0
    %3296 = vmatprep.subr.bf16.mxu0 0
    %3297 = vmatpush2.bf16.msra.mxu0 0
    %3298 = vmatprep.subr.bf16.mxu0 0
    %3299 = vmatpush2.bf16.msra.mxu0 0
    %3300 = vmatprep.mubr.bf16.mxu0 0
    %3301 = vmatmul.mubr.bf16.gmra.mxu0 %v3266
    %v3302 = vpop.f32.mrf.mxu0
    %v3303 = vadd.f32 0.0, %v3302
    %v3304 = vpop.f32.mrf.mxu0
    %v3305 = vpop.f32.mrf.mxu0
    %v3306 = vpop.f32.mrf.mxu0
    %3307 = vdwg.mxu0
    %v3308 = vadd.f32 %v3264, %v3303
    %v3309 = vld [vmem:[%s1198] sm:$0xff]
    %3310 = vmatprep.subr.bf16.mxu0 0
    %3311 = vmatpush1.bf16.msra.mxu0 0
    %3312 = vmatprep.subr.bf16.mxu0 0
    %3313 = vmatpush1.bf16.msra.mxu0 0
    %3314 = vmatprep.subr.bf16.mxu0 0
    %3315 = vmatpush1.bf16.msra.mxu0 0
    %3316 = vmatprep.subr.bf16.mxu0 0
    %3317 = vmatpush1.bf16.msra.mxu0 0
    %3318 = vmatprep.subr.bf16.mxu0 0
    %3319 = vmatpush1.bf16.msra.mxu0 0
    %3320 = vmatprep.subr.bf16.mxu0 0
    %3321 = vmatpush1.bf16.msra.mxu0 0
    %3322 = vmatprep.subr.bf16.mxu0 0
    %3323 = vmatpush1.bf16.msra.mxu0 %v2692
    %3324 = vmatprep.subr.bf16.mxu0 0
    %3325 = vmatpush1.bf16.msra.mxu0 %v2691
    %3326 = vmatprep.subr.bf16.mxu0 0
    %3327 = vmatpush2.bf16.msra.mxu0 0
    %3328 = vmatprep.subr.bf16.mxu0 0
    %3329 = vmatpush2.bf16.msra.mxu0 0
    %3330 = vmatprep.subr.bf16.mxu0 0
    %3331 = vmatpush2.bf16.msra.mxu0 0
    %3332 = vmatprep.subr.bf16.mxu0 0
    %3333 = vmatpush2.bf16.msra.mxu0 0
    %3334 = vmatprep.subr.bf16.mxu0 0
    %3335 = vmatpush2.bf16.msra.mxu0 0
    %3336 = vmatprep.subr.bf16.mxu0 0
    %3337 = vmatpush2.bf16.msra.mxu0 0
    %3338 = vmatprep.subr.bf16.mxu0 0
    %3339 = vmatpush2.bf16.msra.mxu0 0
    %3340 = vmatprep.subr.bf16.mxu0 0
    %3341 = vmatpush2.bf16.msra.mxu0 0
    %3342 = vmatprep.mubr.bf16.mxu0 0
    %3343 = vmatmul.mubr.bf16.gmra.mxu0 %v3266
    %v3344 = vpop.f32.mrf.mxu0
    %v3345 = vadd.f32 0.0, %v3344
    %v3346 = vpop.f32.mrf.mxu0
    %v3347 = vpop.f32.mrf.mxu0
    %v3348 = vpop.f32.mrf.mxu0
    %3349 = vdwg.mxu0
    %v3350 = vadd.f32 %v3309, %v3345
    %v3351 = vld [vmem:[%s1241] sm:$0xff]
    %3352 = vmatprep.subr.bf16.mxu0 0
    %3353 = vmatpush1.bf16.msra.mxu0 0
    %3354 = vmatprep.subr.bf16.mxu0 0
    %3355 = vmatpush1.bf16.msra.mxu0 0
    %3356 = vmatprep.subr.bf16.mxu0 0
    %3357 = vmatpush1.bf16.msra.mxu0 0
    %3358 = vmatprep.subr.bf16.mxu0 0
    %3359 = vmatpush1.bf16.msra.mxu0 0
    %3360 = vmatprep.subr.bf16.mxu0 0
    %3361 = vmatpush1.bf16.msra.mxu0 0
    %3362 = vmatprep.subr.bf16.mxu0 0
    %3363 = vmatpush1.bf16.msra.mxu0 0
    %3364 = vmatprep.subr.bf16.mxu0 0
    %3365 = vmatpush1.bf16.msra.mxu0 %v2746
    %3366 = vmatprep.subr.bf16.mxu0 0
    %3367 = vmatpush1.bf16.msra.mxu0 %v2745
    %3368 = vmatprep.subr.bf16.mxu0 0
    %3369 = vmatpush2.bf16.msra.mxu0 0
    %3370 = vmatprep.subr.bf16.mxu0 0
    %3371 = vmatpush2.bf16.msra.mxu0 0
    %3372 = vmatprep.subr.bf16.mxu0 0
    %3373 = vmatpush2.bf16.msra.mxu0 0
    %3374 = vmatprep.subr.bf16.mxu0 0
    %3375 = vmatpush2.bf16.msra.mxu0 0
    %3376 = vmatprep.subr.bf16.mxu0 0
    %3377 = vmatpush2.bf16.msra.mxu0 0
    %3378 = vmatprep.subr.bf16.mxu0 0
    %3379 = vmatpush2.bf16.msra.mxu0 0
    %3380 = vmatprep.subr.bf16.mxu0 0
    %3381 = vmatpush2.bf16.msra.mxu0 0
    %3382 = vmatprep.subr.bf16.mxu0 0
    %3383 = vmatpush2.bf16.msra.mxu0 0
    %3384 = vmatprep.mubr.bf16.mxu0 0
    %3385 = vmatmul.mubr.bf16.gmra.mxu0 %v3266
    %v3386 = vpop.f32.mrf.mxu0
    %v3387 = vadd.f32 0.0, %v3386
    %v3388 = vpop.f32.mrf.mxu0
    %v3389 = vpop.f32.mrf.mxu0
    %v3390 = vpop.f32.mrf.mxu0
    %3391 = vdwg.mxu0
    %v3392 = vadd.f32 %v3351, %v3387
    %v3393 = vld [vmem:[%s1284] sm:$0xff]
    %3394 = vmatprep.subr.bf16.mxu0 0
    %3395 = vmatpush1.bf16.msra.mxu0 0
    %3396 = vmatprep.subr.bf16.mxu0 0
    %3397 = vmatpush1.bf16.msra.mxu0 0
    %3398 = vmatprep.subr.bf16.mxu0 0
    %3399 = vmatpush1.bf16.msra.mxu0 0
    %3400 = vmatprep.subr.bf16.mxu0 0
    %3401 = vmatpush1.bf16.msra.mxu0 0
    %3402 = vmatprep.subr.bf16.mxu0 0
    %3403 = vmatpush1.bf16.msra.mxu0 0
    %3404 = vmatprep.subr.bf16.mxu0 0
    %3405 = vmatpush1.bf16.msra.mxu0 0
    %3406 = vmatprep.subr.bf16.mxu0 0
    %3407 = vmatpush1.bf16.msra.mxu0 %v2800
    %3408 = vmatprep.subr.bf16.mxu0 0
    %3409 = vmatpush1.bf16.msra.mxu0 %v2799
    %3410 = vmatprep.subr.bf16.mxu0 0
    %3411 = vmatpush2.bf16.msra.mxu0 0
    %3412 = vmatprep.subr.bf16.mxu0 0
    %3413 = vmatpush2.bf16.msra.mxu0 0
    %3414 = vmatprep.subr.bf16.mxu0 0
    %3415 = vmatpush2.bf16.msra.mxu0 0
    %3416 = vmatprep.subr.bf16.mxu0 0
    %3417 = vmatpush2.bf16.msra.mxu0 0
    %3418 = vmatprep.subr.bf16.mxu0 0
    %3419 = vmatpush2.bf16.msra.mxu0 0
    %3420 = vmatprep.subr.bf16.mxu0 0
    %3421 = vmatpush2.bf16.msra.mxu0 0
    %3422 = vmatprep.subr.bf16.mxu0 0
    %3423 = vmatpush2.bf16.msra.mxu0 0
    %3424 = vmatprep.subr.bf16.mxu0 0
    %3425 = vmatpush2.bf16.msra.mxu0 0
    %3426 = vmatprep.mubr.bf16.mxu0 0
    %3427 = vmatmul.mubr.bf16.gmra.mxu0 %v3266
    %v3428 = vpop.f32.mrf.mxu0
    %v3429 = vadd.f32 0.0, %v3428
    %v3430 = vpop.f32.mrf.mxu0
    %v3431 = vpop.f32.mrf.mxu0
    %v3432 = vpop.f32.mrf.mxu0
    %3433 = vdwg.mxu0
    %v3434 = vadd.f32 %v3393, %v3429
    %v3435 = vxor.u32 %v3308, 2147483648
    %v3436 = vmul.f32 %v3435, 1.442695
    %v3437 = vpow.pop %v3436
    %v3438 = vadd.f32 %v3437, 1.0
    %v3439 = vrcp.pop %v3438
    %v3440 = vmul.f32 1.0, %v3439
    %v3441 = vxor.u32 %v3350, 2147483648
    %v3442 = vmul.f32 %v3441, 1.442695
    %v3443 = vpow.pop %v3442
    %v3444 = vadd.f32 %v3443, 1.0
    %v3445 = vrcp.pop %v3444
    %v3446 = vmul.f32 1.0, %v3445
    %v3447 = vtanh.pop %v3392
    %v3448 = vxor.u32 %v3434, 2147483648
    %v3449 = vmul.f32 %v3448, 1.442695
    %v3450 = vpow.pop %v3449
    %v3451 = vadd.f32 %v3450, 1.0
    %v3452 = vrcp.pop %v3451
    %v3453 = vmul.f32 1.0, %v3452
    %v3454 = vmul.f32 %v3446, %v3259
    %v3455 = vmul.f32 %v3440, %v3447
    %v3456 = vadd.f32 %v3454, %v3455
    %v3457 = vtanh.pop %v3456
    %v3458 = vmul.f32 %v3453, %v3457
    %3459 = vst.msk [vmem:[%s1351] sm:$0xff] %vm101, %v3458
    %v3460 = vpack.c.bf16 %v3458, %v3458
    %v3461 = vld [vmem:[%s1354] sm:$0xff]
    %v3463 = vsel %vm101, %v3460, 0
    %3465 = vmatprep.subr.bf16.mxu0 0
    %3466 = vmatpush1.bf16.msra.mxu0 0
    %3467 = vmatprep.subr.bf16.mxu0 0
    %3468 = vmatpush1.bf16.msra.mxu0 0
    %3469 = vmatprep.subr.bf16.mxu0 0
    %3470 = vmatpush1.bf16.msra.mxu0 0
    %3471 = vmatprep.subr.bf16.mxu0 0
    %3472 = vmatpush1.bf16.msra.mxu0 0
    %3473 = vmatprep.subr.bf16.mxu0 0
    %3474 = vmatpush1.bf16.msra.mxu0 0
    %3475 = vmatprep.subr.bf16.mxu0 0
    %3476 = vmatpush1.bf16.msra.mxu0 0
    %3477 = vmatprep.subr.bf16.mxu0 0
    %3478 = vmatpush1.bf16.msra.mxu0 %v2635
    %3479 = vmatprep.subr.bf16.mxu0 0
    %3480 = vmatpush1.bf16.msra.mxu0 %v2634
    %3481 = vmatprep.subr.bf16.mxu0 0
    %3482 = vmatpush2.bf16.msra.mxu0 0
    %3483 = vmatprep.subr.bf16.mxu0 0
    %3484 = vmatpush2.bf16.msra.mxu0 0
    %3485 = vmatprep.subr.bf16.mxu0 0
    %3486 = vmatpush2.bf16.msra.mxu0 0
    %3487 = vmatprep.subr.bf16.mxu0 0
    %3488 = vmatpush2.bf16.msra.mxu0 0
    %3489 = vmatprep.subr.bf16.mxu0 0
    %3490 = vmatpush2.bf16.msra.mxu0 0
    %3491 = vmatprep.subr.bf16.mxu0 0
    %3492 = vmatpush2.bf16.msra.mxu0 0
    %3493 = vmatprep.subr.bf16.mxu0 0
    %3494 = vmatpush2.bf16.msra.mxu0 0
    %3495 = vmatprep.subr.bf16.mxu0 0
    %3496 = vmatpush2.bf16.msra.mxu0 0
    %3497 = vmatprep.mubr.bf16.mxu0 0
    %3498 = vmatmul.mubr.bf16.gmra.mxu0 %v3463
    %v3499 = vpop.f32.mrf.mxu0
    %v3500 = vadd.f32 0.0, %v3499
    %v3501 = vpop.f32.mrf.mxu0
    %v3502 = vpop.f32.mrf.mxu0
    %v3503 = vpop.f32.mrf.mxu0
    %3504 = vdwg.mxu0
    %v3505 = vadd.f32 %v3461, %v3500
    %v3506 = vld [vmem:[%s1400] sm:$0xff]
    %3507 = vmatprep.subr.bf16.mxu0 0
    %3508 = vmatpush1.bf16.msra.mxu0 0
    %3509 = vmatprep.subr.bf16.mxu0 0
    %3510 = vmatpush1.bf16.msra.mxu0 0
    %3511 = vmatprep.subr.bf16.mxu0 0
    %3512 = vmatpush1.bf16.msra.mxu0 0
    %3513 = vmatprep.subr.bf16.mxu0 0
    %3514 = vmatpush1.bf16.msra.mxu0 0
    %3515 = vmatprep.subr.bf16.mxu0 0
    %3516 = vmatpush1.bf16.msra.mxu0 0
    %3517 = vmatprep.subr.bf16.mxu0 0
    %3518 = vmatpush1.bf16.msra.mxu0 0
    %3519 = vmatprep.subr.bf16.mxu0 0
    %3520 = vmatpush1.bf16.msra.mxu0 %v2692
    %3521 = vmatprep.subr.bf16.mxu0 0
    %3522 = vmatpush1.bf16.msra.mxu0 %v2691
    %3523 = vmatprep.subr.bf16.mxu0 0
    %3524 = vmatpush2.bf16.msra.mxu0 0
    %3525 = vmatprep.subr.bf16.mxu0 0
    %3526 = vmatpush2.bf16.msra.mxu0 0
    %3527 = vmatprep.subr.bf16.mxu0 0
    %3528 = vmatpush2.bf16.msra.mxu0 0
    %3529 = vmatprep.subr.bf16.mxu0 0
    %3530 = vmatpush2.bf16.msra.mxu0 0
    %3531 = vmatprep.subr.bf16.mxu0 0
    %3532 = vmatpush2.bf16.msra.mxu0 0
    %3533 = vmatprep.subr.bf16.mxu0 0
    %3534 = vmatpush2.bf16.msra.mxu0 0
    %3535 = vmatprep.subr.bf16.mxu0 0
    %3536 = vmatpush2.bf16.msra.mxu0 0
    %3537 = vmatprep.subr.bf16.mxu0 0
    %3538 = vmatpush2.bf16.msra.mxu0 0
    %3539 = vmatprep.mubr.bf16.mxu0 0
    %3540 = vmatmul.mubr.bf16.gmra.mxu0 %v3463
    %v3541 = vpop.f32.mrf.mxu0
    %v3542 = vadd.f32 0.0, %v3541
    %v3543 = vpop.f32.mrf.mxu0
    %v3544 = vpop.f32.mrf.mxu0
    %v3545 = vpop.f32.mrf.mxu0
    %3546 = vdwg.mxu0
    %v3547 = vadd.f32 %v3506, %v3542
    %v3548 = vld [vmem:[%s1443] sm:$0xff]
    %3549 = vmatprep.subr.bf16.mxu0 0
    %3550 = vmatpush1.bf16.msra.mxu0 0
    %3551 = vmatprep.subr.bf16.mxu0 0
    %3552 = vmatpush1.bf16.msra.mxu0 0
    %3553 = vmatprep.subr.bf16.mxu0 0
    %3554 = vmatpush1.bf16.msra.mxu0 0
    %3555 = vmatprep.subr.bf16.mxu0 0
    %3556 = vmatpush1.bf16.msra.mxu0 0
    %3557 = vmatprep.subr.bf16.mxu0 0
    %3558 = vmatpush1.bf16.msra.mxu0 0
    %3559 = vmatprep.subr.bf16.mxu0 0
    %3560 = vmatpush1.bf16.msra.mxu0 0
    %3561 = vmatprep.subr.bf16.mxu0 0
    %3562 = vmatpush1.bf16.msra.mxu0 %v2746
    %3563 = vmatprep.subr.bf16.mxu0 0
    %3564 = vmatpush1.bf16.msra.mxu0 %v2745
    %3565 = vmatprep.subr.bf16.mxu0 0
    %3566 = vmatpush2.bf16.msra.mxu0 0
    %3567 = vmatprep.subr.bf16.mxu0 0
    %3568 = vmatpush2.bf16.msra.mxu0 0
    %3569 = vmatprep.subr.bf16.mxu0 0
    %3570 = vmatpush2.bf16.msra.mxu0 0
    %3571 = vmatprep.subr.bf16.mxu0 0
    %3572 = vmatpush2.bf16.msra.mxu0 0
    %3573 = vmatprep.subr.bf16.mxu0 0
    %3574 = vmatpush2.bf16.msra.mxu0 0
    %3575 = vmatprep.subr.bf16.mxu0 0
    %3576 = vmatpush2.bf16.msra.mxu0 0
    %3577 = vmatprep.subr.bf16.mxu0 0
    %3578 = vmatpush2.bf16.msra.mxu0 0
    %3579 = vmatprep.subr.bf16.mxu0 0
    %3580 = vmatpush2.bf16.msra.mxu0 0
    %3581 = vmatprep.mubr.bf16.mxu0 0
    %3582 = vmatmul.mubr.bf16.gmra.mxu0 %v3463
    %v3583 = vpop.f32.mrf.mxu0
    %v3584 = vadd.f32 0.0, %v3583
    %v3585 = vpop.f32.mrf.mxu0
    %v3586 = vpop.f32.mrf.mxu0
    %v3587 = vpop.f32.mrf.mxu0
    %3588 = vdwg.mxu0
    %v3589 = vadd.f32 %v3548, %v3584
    %v3590 = vld [vmem:[%s1486] sm:$0xff]
    %3591 = vmatprep.subr.bf16.mxu0 0
    %3592 = vmatpush1.bf16.msra.mxu0 0
    %3593 = vmatprep.subr.bf16.mxu0 0
    %3594 = vmatpush1.bf16.msra.mxu0 0
    %3595 = vmatprep.subr.bf16.mxu0 0
    %3596 = vmatpush1.bf16.msra.mxu0 0
    %3597 = vmatprep.subr.bf16.mxu0 0
    %3598 = vmatpush1.bf16.msra.mxu0 0
    %3599 = vmatprep.subr.bf16.mxu0 0
    %3600 = vmatpush1.bf16.msra.mxu0 0
    %3601 = vmatprep.subr.bf16.mxu0 0
    %3602 = vmatpush1.bf16.msra.mxu0 0
    %3603 = vmatprep.subr.bf16.mxu0 0
    %3604 = vmatpush1.bf16.msra.mxu0 %v2800
    %3605 = vmatprep.subr.bf16.mxu0 0
    %3606 = vmatpush1.bf16.msra.mxu0 %v2799
    %3607 = vmatprep.subr.bf16.mxu0 0
    %3608 = vmatpush2.bf16.msra.mxu0 0
    %3609 = vmatprep.subr.bf16.mxu0 0
    %3610 = vmatpush2.bf16.msra.mxu0 0
    %3611 = vmatprep.subr.bf16.mxu0 0
    %3612 = vmatpush2.bf16.msra.mxu0 0
    %3613 = vmatprep.subr.bf16.mxu0 0
    %3614 = vmatpush2.bf16.msra.mxu0 0
    %3615 = vmatprep.subr.bf16.mxu0 0
    %3616 = vmatpush2.bf16.msra.mxu0 0
    %3617 = vmatprep.subr.bf16.mxu0 0
    %3618 = vmatpush2.bf16.msra.mxu0 0
    %3619 = vmatprep.subr.bf16.mxu0 0
    %3620 = vmatpush2.bf16.msra.mxu0 0
    %3621 = vmatprep.subr.bf16.mxu0 0
    %3622 = vmatpush2.bf16.msra.mxu0 0
    %3623 = vmatprep.mubr.bf16.mxu0 0
    %3624 = vmatmul.mubr.bf16.gmra.mxu0 %v3463
    %v3625 = vpop.f32.mrf.mxu0
    %v3626 = vadd.f32 0.0, %v3625
    %v3627 = vpop.f32.mrf.mxu0
    %v3628 = vpop.f32.mrf.mxu0
    %v3629 = vpop.f32.mrf.mxu0
    %3630 = vdwg.mxu0
    %v3631 = vadd.f32 %v3590, %v3626
    %v3632 = vxor.u32 %v3505, 2147483648
    %v3633 = vmul.f32 %v3632, 1.442695
    %v3634 = vpow.pop %v3633
    %v3635 = vadd.f32 %v3634, 1.0
    %v3636 = vrcp.pop %v3635
    %v3637 = vmul.f32 1.0, %v3636
    %v3638 = vxor.u32 %v3547, 2147483648
    %v3639 = vmul.f32 %v3638, 1.442695
    %v3640 = vpow.pop %v3639
    %v3641 = vadd.f32 %v3640, 1.0
    %v3642 = vrcp.pop %v3641
    %v3643 = vmul.f32 1.0, %v3642
    %v3644 = vtanh.pop %v3589
    %v3645 = vxor.u32 %v3631, 2147483648
    %v3646 = vmul.f32 %v3645, 1.442695
    %v3647 = vpow.pop %v3646
    %v3648 = vadd.f32 %v3647, 1.0
    %v3649 = vrcp.pop %v3648
    %v3650 = vmul.f32 1.0, %v3649
    %v3651 = vmul.f32 %v3643, %v3456
    %v3652 = vmul.f32 %v3637, %v3644
    %v3653 = vadd.f32 %v3651, %v3652
    %v3654 = vtanh.pop %v3653
    %v3655 = vmul.f32 %v3650, %v3654
    %3656 = vst.msk [vmem:[%s1553] sm:$0xff] %vm101, %v3655
    %v3657 = vpack.c.bf16 %v3655, %v3655
    %v3658 = vld [vmem:[%s1556] sm:$0xff]
    %v3660 = vsel %vm101, %v3657, 0
    %3662 = vmatprep.subr.bf16.mxu0 0
    %3663 = vmatpush1.bf16.msra.mxu0 0
    %3664 = vmatprep.subr.bf16.mxu0 0
    %3665 = vmatpush1.bf16.msra.mxu0 0
    %3666 = vmatprep.subr.bf16.mxu0 0
    %3667 = vmatpush1.bf16.msra.mxu0 0
    %3668 = vmatprep.subr.bf16.mxu0 0
    %3669 = vmatpush1.bf16.msra.mxu0 0
    %3670 = vmatprep.subr.bf16.mxu0 0
    %3671 = vmatpush1.bf16.msra.mxu0 0
    %3672 = vmatprep.subr.bf16.mxu0 0
    %3673 = vmatpush1.bf16.msra.mxu0 0
    %3674 = vmatprep.subr.bf16.mxu0 0
    %3675 = vmatpush1.bf16.msra.mxu0 %v2635
    %3676 = vmatprep.subr.bf16.mxu0 0
    %3677 = vmatpush1.bf16.msra.mxu0 %v2634
    %3678 = vmatprep.subr.bf16.mxu0 0
    %3679 = vmatpush2.bf16.msra.mxu0 0
    %3680 = vmatprep.subr.bf16.mxu0 0
    %3681 = vmatpush2.bf16.msra.mxu0 0
    %3682 = vmatprep.subr.bf16.mxu0 0
    %3683 = vmatpush2.bf16.msra.mxu0 0
    %3684 = vmatprep.subr.bf16.mxu0 0
    %3685 = vmatpush2.bf16.msra.mxu0 0
    %3686 = vmatprep.subr.bf16.mxu0 0
    %3687 = vmatpush2.bf16.msra.mxu0 0
    %3688 = vmatprep.subr.bf16.mxu0 0
    %3689 = vmatpush2.bf16.msra.mxu0 0
    %3690 = vmatprep.subr.bf16.mxu0 0
    %3691 = vmatpush2.bf16.msra.mxu0 0
    %3692 = vmatprep.subr.bf16.mxu0 0
    %3693 = vmatpush2.bf16.msra.mxu0 0
    %3694 = vmatprep.mubr.bf16.mxu0 0
    %3695 = vmatmul.mubr.bf16.gmra.mxu0 %v3660
    %v3696 = vpop.f32.mrf.mxu0
    %v3697 = vadd.f32 0.0, %v3696
    %v3698 = vpop.f32.mrf.mxu0
    %v3699 = vpop.f32.mrf.mxu0
    %v3700 = vpop.f32.mrf.mxu0
    %3701 = vdwg.mxu0
    %v3702 = vadd.f32 %v3658, %v3697
    %v3703 = vld [vmem:[%s1602] sm:$0xff]
    %3704 = vmatprep.subr.bf16.mxu0 0
    %3705 = vmatpush1.bf16.msra.mxu0 0
    %3706 = vmatprep.subr.bf16.mxu0 0
    %3707 = vmatpush1.bf16.msra.mxu0 0
    %3708 = vmatprep.subr.bf16.mxu0 0
    %3709 = vmatpush1.bf16.msra.mxu0 0
    %3710 = vmatprep.subr.bf16.mxu0 0
    %3711 = vmatpush1.bf16.msra.mxu0 0
    %3712 = vmatprep.subr.bf16.mxu0 0
    %3713 = vmatpush1.bf16.msra.mxu0 0
    %3714 = vmatprep.subr.bf16.mxu0 0
    %3715 = vmatpush1.bf16.msra.mxu0 0
    %3716 = vmatprep.subr.bf16.mxu0 0
    %3717 = vmatpush1.bf16.msra.mxu0 %v2692
    %3718 = vmatprep.subr.bf16.mxu0 0
    %3719 = vmatpush1.bf16.msra.mxu0 %v2691
    %3720 = vmatprep.subr.bf16.mxu0 0
    %3721 = vmatpush2.bf16.msra.mxu0 0
    %3722 = vmatprep.subr.bf16.mxu0 0
    %3723 = vmatpush2.bf16.msra.mxu0 0
    %3724 = vmatprep.subr.bf16.mxu0 0
    %3725 = vmatpush2.bf16.msra.mxu0 0
    %3726 = vmatprep.subr.bf16.mxu0 0
    %3727 = vmatpush2.bf16.msra.mxu0 0
    %3728 = vmatprep.subr.bf16.mxu0 0
    %3729 = vmatpush2.bf16.msra.mxu0 0
    %3730 = vmatprep.subr.bf16.mxu0 0
    %3731 = vmatpush2.bf16.msra.mxu0 0
    %3732 = vmatprep.subr.bf16.mxu0 0
    %3733 = vmatpush2.bf16.msra.mxu0 0
    %3734 = vmatprep.subr.bf16.mxu0 0
    %3735 = vmatpush2.bf16.msra.mxu0 0
    %3736 = vmatprep.mubr.bf16.mxu0 0
    %3737 = vmatmul.mubr.bf16.gmra.mxu0 %v3660
    %v3738 = vpop.f32.mrf.mxu0
    %v3739 = vadd.f32 0.0, %v3738
    %v3740 = vpop.f32.mrf.mxu0
    %v3741 = vpop.f32.mrf.mxu0
    %v3742 = vpop.f32.mrf.mxu0
    %3743 = vdwg.mxu0
    %v3744 = vadd.f32 %v3703, %v3739
    %v3745 = vld [vmem:[%s1645] sm:$0xff]
    %3746 = vmatprep.subr.bf16.mxu0 0
    %3747 = vmatpush1.bf16.msra.mxu0 0
    %3748 = vmatprep.subr.bf16.mxu0 0
    %3749 = vmatpush1.bf16.msra.mxu0 0
    %3750 = vmatprep.subr.bf16.mxu0 0
    %3751 = vmatpush1.bf16.msra.mxu0 0
    %3752 = vmatprep.subr.bf16.mxu0 0
    %3753 = vmatpush1.bf16.msra.mxu0 0
    %3754 = vmatprep.subr.bf16.mxu0 0
    %3755 = vmatpush1.bf16.msra.mxu0 0
    %3756 = vmatprep.subr.bf16.mxu0 0
    %3757 = vmatpush1.bf16.msra.mxu0 0
    %3758 = vmatprep.subr.bf16.mxu0 0
    %3759 = vmatpush1.bf16.msra.mxu0 %v2746
    %3760 = vmatprep.subr.bf16.mxu0 0
    %3761 = vmatpush1.bf16.msra.mxu0 %v2745
    %3762 = vmatprep.subr.bf16.mxu0 0
    %3763 = vmatpush2.bf16.msra.mxu0 0
    %3764 = vmatprep.subr.bf16.mxu0 0
    %3765 = vmatpush2.bf16.msra.mxu0 0
    %3766 = vmatprep.subr.bf16.mxu0 0
    %3767 = vmatpush2.bf16.msra.mxu0 0
    %3768 = vmatprep.subr.bf16.mxu0 0
    %3769 = vmatpush2.bf16.msra.mxu0 0
    %3770 = vmatprep.subr.bf16.mxu0 0
    %3771 = vmatpush2.bf16.msra.mxu0 0
    %3772 = vmatprep.subr.bf16.mxu0 0
    %3773 = vmatpush2.bf16.msra.mxu0 0
    %3774 = vmatprep.subr.bf16.mxu0 0
    %3775 = vmatpush2.bf16.msra.mxu0 0
    %3776 = vmatprep.subr.bf16.mxu0 0
    %3777 = vmatpush2.bf16.msra.mxu0 0
    %3778 = vmatprep.mubr.bf16.mxu0 0
    %3779 = vmatmul.mubr.bf16.gmra.mxu0 %v3660
    %v3780 = vpop.f32.mrf.mxu0
    %v3781 = vadd.f32 0.0, %v3780
    %v3782 = vpop.f32.mrf.mxu0
    %v3783 = vpop.f32.mrf.mxu0
    %v3784 = vpop.f32.mrf.mxu0
    %3785 = vdwg.mxu0
    %v3786 = vadd.f32 %v3745, %v3781
    %v3787 = vld [vmem:[%s1688] sm:$0xff]
    %3788 = vmatprep.subr.bf16.mxu0 0
    %3789 = vmatpush1.bf16.msra.mxu0 0
    %3790 = vmatprep.subr.bf16.mxu0 0
    %3791 = vmatpush1.bf16.msra.mxu0 0
    %3792 = vmatprep.subr.bf16.mxu0 0
    %3793 = vmatpush1.bf16.msra.mxu0 0
    %3794 = vmatprep.subr.bf16.mxu0 0
    %3795 = vmatpush1.bf16.msra.mxu0 0
    %3796 = vmatprep.subr.bf16.mxu0 0
    %3797 = vmatpush1.bf16.msra.mxu0 0
    %3798 = vmatprep.subr.bf16.mxu0 0
    %3799 = vmatpush1.bf16.msra.mxu0 0
    %3800 = vmatprep.subr.bf16.mxu0 0
    %3801 = vmatpush1.bf16.msra.mxu0 %v2800
    %3802 = vmatprep.subr.bf16.mxu0 0
    %3803 = vmatpush1.bf16.msra.mxu0 %v2799
    %3804 = vmatprep.subr.bf16.mxu0 0
    %3805 = vmatpush2.bf16.msra.mxu0 0
    %3806 = vmatprep.subr.bf16.mxu0 0
    %3807 = vmatpush2.bf16.msra.mxu0 0
    %3808 = vmatprep.subr.bf16.mxu0 0
    %3809 = vmatpush2.bf16.msra.mxu0 0
    %3810 = vmatprep.subr.bf16.mxu0 0
    %3811 = vmatpush2.bf16.msra.mxu0 0
    %3812 = vmatprep.subr.bf16.mxu0 0
    %3813 = vmatpush2.bf16.msra.mxu0 0
    %3814 = vmatprep.subr.bf16.mxu0 0
    %3815 = vmatpush2.bf16.msra.mxu0 0
    %3816 = vmatprep.subr.bf16.mxu0 0
    %3817 = vmatpush2.bf16.msra.mxu0 0
    %3818 = vmatprep.subr.bf16.mxu0 0
    %3819 = vmatpush2.bf16.msra.mxu0 0
    %3820 = vmatprep.mubr.bf16.mxu0 0
    %3821 = vmatmul.mubr.bf16.gmra.mxu0 %v3660
    %v3822 = vpop.f32.mrf.mxu0
    %v3823 = vadd.f32 0.0, %v3822
    %v3824 = vpop.f32.mrf.mxu0
    %v3825 = vpop.f32.mrf.mxu0
    %v3826 = vpop.f32.mrf.mxu0
    %3827 = vdwg.mxu0
    %v3828 = vadd.f32 %v3787, %v3823
    %v3829 = vxor.u32 %v3702, 2147483648
    %v3830 = vmul.f32 %v3829, 1.442695
    %v3831 = vpow.pop %v3830
    %v3832 = vadd.f32 %v3831, 1.0
    %v3833 = vrcp.pop %v3832
    %v3834 = vmul.f32 1.0, %v3833
    %v3835 = vxor.u32 %v3744, 2147483648
    %v3836 = vmul.f32 %v3835, 1.442695
    %v3837 = vpow.pop %v3836
    %v3838 = vadd.f32 %v3837, 1.0
    %v3839 = vrcp.pop %v3838
    %v3840 = vmul.f32 1.0, %v3839
    %v3841 = vtanh.pop %v3786
    %v3842 = vxor.u32 %v3828, 2147483648
    %v3843 = vmul.f32 %v3842, 1.442695
    %v3844 = vpow.pop %v3843
    %v3845 = vadd.f32 %v3844, 1.0
    %v3846 = vrcp.pop %v3845
    %v3847 = vmul.f32 1.0, %v3846
    %v3848 = vmul.f32 %v3840, %v3653
    %v3849 = vmul.f32 %v3834, %v3841
    %v3850 = vadd.f32 %v3848, %v3849
    %v3851 = vtanh.pop %v3850
    %v3852 = vmul.f32 %v3847, %v3851
    %3853 = vst.msk [vmem:[%s1755] sm:$0xff] %vm101, %v3852
    %v3854 = vpack.c.bf16 %v3852, %v3852
    %v3855 = vld [vmem:[%s1758] sm:$0xff]
    %v3857 = vsel %vm101, %v3854, 0
    %3859 = vmatprep.subr.bf16.mxu0 0
    %3860 = vmatpush1.bf16.msra.mxu0 0
    %3861 = vmatprep.subr.bf16.mxu0 0
    %3862 = vmatpush1.bf16.msra.mxu0 0
    %3863 = vmatprep.subr.bf16.mxu0 0
    %3864 = vmatpush1.bf16.msra.mxu0 0
    %3865 = vmatprep.subr.bf16.mxu0 0
    %3866 = vmatpush1.bf16.msra.mxu0 0
    %3867 = vmatprep.subr.bf16.mxu0 0
    %3868 = vmatpush1.bf16.msra.mxu0 0
    %3869 = vmatprep.subr.bf16.mxu0 0
    %3870 = vmatpush1.bf16.msra.mxu0 0
    %3871 = vmatprep.subr.bf16.mxu0 0
    %3872 = vmatpush1.bf16.msra.mxu0 %v2635
    %3873 = vmatprep.subr.bf16.mxu0 0
    %3874 = vmatpush1.bf16.msra.mxu0 %v2634
    %3875 = vmatprep.subr.bf16.mxu0 0
    %3876 = vmatpush2.bf16.msra.mxu0 0
    %3877 = vmatprep.subr.bf16.mxu0 0
    %3878 = vmatpush2.bf16.msra.mxu0 0
    %3879 = vmatprep.subr.bf16.mxu0 0
    %3880 = vmatpush2.bf16.msra.mxu0 0
    %3881 = vmatprep.subr.bf16.mxu0 0
    %3882 = vmatpush2.bf16.msra.mxu0 0
    %3883 = vmatprep.subr.bf16.mxu0 0
    %3884 = vmatpush2.bf16.msra.mxu0 0
    %3885 = vmatprep.subr.bf16.mxu0 0
    %3886 = vmatpush2.bf16.msra.mxu0 0
    %3887 = vmatprep.subr.bf16.mxu0 0
    %3888 = vmatpush2.bf16.msra.mxu0 0
    %3889 = vmatprep.subr.bf16.mxu0 0
    %3890 = vmatpush2.bf16.msra.mxu0 0
    %3891 = vmatprep.mubr.bf16.mxu0 0
    %3892 = vmatmul.mubr.bf16.gmra.mxu0 %v3857
    %v3893 = vpop.f32.mrf.mxu0
    %v3894 = vadd.f32 0.0, %v3893
    %v3895 = vpop.f32.mrf.mxu0
    %v3896 = vpop.f32.mrf.mxu0
    %v3897 = vpop.f32.mrf.mxu0
    %3898 = vdwg.mxu0
    %v3899 = vadd.f32 %v3855, %v3894
    %v3900 = vld [vmem:[%s1804] sm:$0xff]
    %3901 = vmatprep.subr.bf16.mxu0 0
    %3902 = vmatpush1.bf16.msra.mxu0 0
    %3903 = vmatprep.subr.bf16.mxu0 0
    %3904 = vmatpush1.bf16.msra.mxu0 0
    %3905 = vmatprep.subr.bf16.mxu0 0
    %3906 = vmatpush1.bf16.msra.mxu0 0
    %3907 = vmatprep.subr.bf16.mxu0 0
    %3908 = vmatpush1.bf16.msra.mxu0 0
    %3909 = vmatprep.subr.bf16.mxu0 0
    %3910 = vmatpush1.bf16.msra.mxu0 0
    %3911 = vmatprep.subr.bf16.mxu0 0
    %3912 = vmatpush1.bf16.msra.mxu0 0
    %3913 = vmatprep.subr.bf16.mxu0 0
    %3914 = vmatpush1.bf16.msra.mxu0 %v2692
    %3915 = vmatprep.subr.bf16.mxu0 0
    %3916 = vmatpush1.bf16.msra.mxu0 %v2691
    %3917 = vmatprep.subr.bf16.mxu0 0
    %3918 = vmatpush2.bf16.msra.mxu0 0
    %3919 = vmatprep.subr.bf16.mxu0 0
    %3920 = vmatpush2.bf16.msra.mxu0 0
    %3921 = vmatprep.subr.bf16.mxu0 0
    %3922 = vmatpush2.bf16.msra.mxu0 0
    %3923 = vmatprep.subr.bf16.mxu0 0
    %3924 = vmatpush2.bf16.msra.mxu0 0
    %3925 = vmatprep.subr.bf16.mxu0 0
    %3926 = vmatpush2.bf16.msra.mxu0 0
    %3927 = vmatprep.subr.bf16.mxu0 0
    %3928 = vmatpush2.bf16.msra.mxu0 0
    %3929 = vmatprep.subr.bf16.mxu0 0
    %3930 = vmatpush2.bf16.msra.mxu0 0
    %3931 = vmatprep.subr.bf16.mxu0 0
    %3932 = vmatpush2.bf16.msra.mxu0 0
    %3933 = vmatprep.mubr.bf16.mxu0 0
    %3934 = vmatmul.mubr.bf16.gmra.mxu0 %v3857
    %v3935 = vpop.f32.mrf.mxu0
    %v3936 = vadd.f32 0.0, %v3935
    %v3937 = vpop.f32.mrf.mxu0
    %v3938 = vpop.f32.mrf.mxu0
    %v3939 = vpop.f32.mrf.mxu0
    %3940 = vdwg.mxu0
    %v3941 = vadd.f32 %v3900, %v3936
    %v3942 = vld [vmem:[%s1847] sm:$0xff]
    %3943 = vmatprep.subr.bf16.mxu0 0
    %3944 = vmatpush1.bf16.msra.mxu0 0
    %3945 = vmatprep.subr.bf16.mxu0 0
    %3946 = vmatpush1.bf16.msra.mxu0 0
    %3947 = vmatprep.subr.bf16.mxu0 0
    %3948 = vmatpush1.bf16.msra.mxu0 0
    %3949 = vmatprep.subr.bf16.mxu0 0
    %3950 = vmatpush1.bf16.msra.mxu0 0
    %3951 = vmatprep.subr.bf16.mxu0 0
    %3952 = vmatpush1.bf16.msra.mxu0 0
    %3953 = vmatprep.subr.bf16.mxu0 0
    %3954 = vmatpush1.bf16.msra.mxu0 0
    %3955 = vmatprep.subr.bf16.mxu0 0
    %3956 = vmatpush1.bf16.msra.mxu0 %v2746
    %3957 = vmatprep.subr.bf16.mxu0 0
    %3958 = vmatpush1.bf16.msra.mxu0 %v2745
    %3959 = vmatprep.subr.bf16.mxu0 0
    %3960 = vmatpush2.bf16.msra.mxu0 0
    %3961 = vmatprep.subr.bf16.mxu0 0
    %3962 = vmatpush2.bf16.msra.mxu0 0
    %3963 = vmatprep.subr.bf16.mxu0 0
    %3964 = vmatpush2.bf16.msra.mxu0 0
    %3965 = vmatprep.subr.bf16.mxu0 0
    %3966 = vmatpush2.bf16.msra.mxu0 0
    %3967 = vmatprep.subr.bf16.mxu0 0
    %3968 = vmatpush2.bf16.msra.mxu0 0
    %3969 = vmatprep.subr.bf16.mxu0 0
    %3970 = vmatpush2.bf16.msra.mxu0 0
    %3971 = vmatprep.subr.bf16.mxu0 0
    %3972 = vmatpush2.bf16.msra.mxu0 0
    %3973 = vmatprep.subr.bf16.mxu0 0
    %3974 = vmatpush2.bf16.msra.mxu0 0
    %3975 = vmatprep.mubr.bf16.mxu0 0
    %3976 = vmatmul.mubr.bf16.gmra.mxu0 %v3857
    %v3977 = vpop.f32.mrf.mxu0
    %v3978 = vadd.f32 0.0, %v3977
    %v3979 = vpop.f32.mrf.mxu0
    %v3980 = vpop.f32.mrf.mxu0
    %v3981 = vpop.f32.mrf.mxu0
    %3982 = vdwg.mxu0
    %v3983 = vadd.f32 %v3942, %v3978
    %v3984 = vld [vmem:[%s1890] sm:$0xff]
    %3985 = vmatprep.subr.bf16.mxu0 0
    %3986 = vmatpush1.bf16.msra.mxu0 0
    %3987 = vmatprep.subr.bf16.mxu0 0
    %3988 = vmatpush1.bf16.msra.mxu0 0
    %3989 = vmatprep.subr.bf16.mxu0 0
    %3990 = vmatpush1.bf16.msra.mxu0 0
    %3991 = vmatprep.subr.bf16.mxu0 0
    %3992 = vmatpush1.bf16.msra.mxu0 0
    %3993 = vmatprep.subr.bf16.mxu0 0
    %3994 = vmatpush1.bf16.msra.mxu0 0
    %3995 = vmatprep.subr.bf16.mxu0 0
    %3996 = vmatpush1.bf16.msra.mxu0 0
    %3997 = vmatprep.subr.bf16.mxu0 0
    %3998 = vmatpush1.bf16.msra.mxu0 %v2800
    %3999 = vmatprep.subr.bf16.mxu0 0
    %4000 = vmatpush1.bf16.msra.mxu0 %v2799
    %4001 = vmatprep.subr.bf16.mxu0 0
    %4002 = vmatpush2.bf16.msra.mxu0 0
    %4003 = vmatprep.subr.bf16.mxu0 0
    %4004 = vmatpush2.bf16.msra.mxu0 0
    %4005 = vmatprep.subr.bf16.mxu0 0
    %4006 = vmatpush2.bf16.msra.mxu0 0
    %4007 = vmatprep.subr.bf16.mxu0 0
    %4008 = vmatpush2.bf16.msra.mxu0 0
    %4009 = vmatprep.subr.bf16.mxu0 0
    %4010 = vmatpush2.bf16.msra.mxu0 0
    %4011 = vmatprep.subr.bf16.mxu0 0
    %4012 = vmatpush2.bf16.msra.mxu0 0
    %4013 = vmatprep.subr.bf16.mxu0 0
    %4014 = vmatpush2.bf16.msra.mxu0 0
    %4015 = vmatprep.subr.bf16.mxu0 0
    %4016 = vmatpush2.bf16.msra.mxu0 0
    %4017 = vmatprep.mubr.bf16.mxu0 0
    %4018 = vmatmul.mubr.bf16.gmra.mxu0 %v3857
    %v4019 = vpop.f32.mrf.mxu0
    %v4020 = vadd.f32 0.0, %v4019
    %v4021 = vpop.f32.mrf.mxu0
    %v4022 = vpop.f32.mrf.mxu0
    %v4023 = vpop.f32.mrf.mxu0
    %4024 = vdwg.mxu0
    %v4025 = vadd.f32 %v3984, %v4020
    %v4026 = vxor.u32 %v3899, 2147483648
    %v4027 = vmul.f32 %v4026, 1.442695
    %v4028 = vpow.pop %v4027
    %v4029 = vadd.f32 %v4028, 1.0
    %v4030 = vrcp.pop %v4029
    %v4031 = vmul.f32 1.0, %v4030
    %v4032 = vxor.u32 %v3941, 2147483648
    %v4033 = vmul.f32 %v4032, 1.442695
    %v4034 = vpow.pop %v4033
    %v4035 = vadd.f32 %v4034, 1.0
    %v4036 = vrcp.pop %v4035
    %v4037 = vmul.f32 1.0, %v4036
    %v4038 = vtanh.pop %v3983
    %v4039 = vxor.u32 %v4025, 2147483648
    %v4040 = vmul.f32 %v4039, 1.442695
    %v4041 = vpow.pop %v4040
    %v4042 = vadd.f32 %v4041, 1.0
    %v4043 = vrcp.pop %v4042
    %v4044 = vmul.f32 1.0, %v4043
    %v4045 = vmul.f32 %v4037, %v3850
    %v4046 = vmul.f32 %v4031, %v4038
    %v4047 = vadd.f32 %v4045, %v4046
    %v4048 = vtanh.pop %v4047
    %v4049 = vmul.f32 %v4044, %v4048
    %4050 = vst.msk [vmem:[%s1957] sm:$0xff] %vm101, %v4049
    %v4051 = vpack.c.bf16 %v4049, %v4049
    %v4052 = vld [vmem:[%s1960] sm:$0xff]
    %v4054 = vsel %vm101, %v4051, 0
    %4056 = vmatprep.subr.bf16.mxu0 0
    %4057 = vmatpush1.bf16.msra.mxu0 0
    %4058 = vmatprep.subr.bf16.mxu0 0
    %4059 = vmatpush1.bf16.msra.mxu0 0
    %4060 = vmatprep.subr.bf16.mxu0 0
    %4061 = vmatpush1.bf16.msra.mxu0 0
    %4062 = vmatprep.subr.bf16.mxu0 0
    %4063 = vmatpush1.bf16.msra.mxu0 0
    %4064 = vmatprep.subr.bf16.mxu0 0
    %4065 = vmatpush1.bf16.msra.mxu0 0
    %4066 = vmatprep.subr.bf16.mxu0 0
    %4067 = vmatpush1.bf16.msra.mxu0 0
    %4068 = vmatprep.subr.bf16.mxu0 0
    %4069 = vmatpush1.bf16.msra.mxu0 %v2635
    %4070 = vmatprep.subr.bf16.mxu0 0
    %4071 = vmatpush1.bf16.msra.mxu0 %v2634
    %4072 = vmatprep.subr.bf16.mxu0 0
    %4073 = vmatpush2.bf16.msra.mxu0 0
    %4074 = vmatprep.subr.bf16.mxu0 0
    %4075 = vmatpush2.bf16.msra.mxu0 0
    %4076 = vmatprep.subr.bf16.mxu0 0
    %4077 = vmatpush2.bf16.msra.mxu0 0
    %4078 = vmatprep.subr.bf16.mxu0 0
    %4079 = vmatpush2.bf16.msra.mxu0 0
    %4080 = vmatprep.subr.bf16.mxu0 0
    %4081 = vmatpush2.bf16.msra.mxu0 0
    %4082 = vmatprep.subr.bf16.mxu0 0
    %4083 = vmatpush2.bf16.msra.mxu0 0
    %4084 = vmatprep.subr.bf16.mxu0 0
    %4085 = vmatpush2.bf16.msra.mxu0 0
    %4086 = vmatprep.subr.bf16.mxu0 0
    %4087 = vmatpush2.bf16.msra.mxu0 0
    %4088 = vmatprep.mubr.bf16.mxu0 0
    %4089 = vmatmul.mubr.bf16.gmra.mxu0 %v4054
    %v4090 = vpop.f32.mrf.mxu0
    %v4091 = vadd.f32 0.0, %v4090
    %v4092 = vpop.f32.mrf.mxu0
    %v4093 = vpop.f32.mrf.mxu0
    %v4094 = vpop.f32.mrf.mxu0
    %4095 = vdwg.mxu0
    %v4096 = vadd.f32 %v4052, %v4091
    %v4097 = vld [vmem:[%s2006] sm:$0xff]
    %4098 = vmatprep.subr.bf16.mxu0 0
    %4099 = vmatpush1.bf16.msra.mxu0 0
    %4100 = vmatprep.subr.bf16.mxu0 0
    %4101 = vmatpush1.bf16.msra.mxu0 0
    %4102 = vmatprep.subr.bf16.mxu0 0
    %4103 = vmatpush1.bf16.msra.mxu0 0
    %4104 = vmatprep.subr.bf16.mxu0 0
    %4105 = vmatpush1.bf16.msra.mxu0 0
    %4106 = vmatprep.subr.bf16.mxu0 0
    %4107 = vmatpush1.bf16.msra.mxu0 0
    %4108 = vmatprep.subr.bf16.mxu0 0
    %4109 = vmatpush1.bf16.msra.mxu0 0
    %4110 = vmatprep.subr.bf16.mxu0 0
    %4111 = vmatpush1.bf16.msra.mxu0 %v2692
    %4112 = vmatprep.subr.bf16.mxu0 0
    %4113 = vmatpush1.bf16.msra.mxu0 %v2691
    %4114 = vmatprep.subr.bf16.mxu0 0
    %4115 = vmatpush2.bf16.msra.mxu0 0
    %4116 = vmatprep.subr.bf16.mxu0 0
    %4117 = vmatpush2.bf16.msra.mxu0 0
    %4118 = vmatprep.subr.bf16.mxu0 0
    %4119 = vmatpush2.bf16.msra.mxu0 0
    %4120 = vmatprep.subr.bf16.mxu0 0
    %4121 = vmatpush2.bf16.msra.mxu0 0
    %4122 = vmatprep.subr.bf16.mxu0 0
    %4123 = vmatpush2.bf16.msra.mxu0 0
    %4124 = vmatprep.subr.bf16.mxu0 0
    %4125 = vmatpush2.bf16.msra.mxu0 0
    %4126 = vmatprep.subr.bf16.mxu0 0
    %4127 = vmatpush2.bf16.msra.mxu0 0
    %4128 = vmatprep.subr.bf16.mxu0 0
    %4129 = vmatpush2.bf16.msra.mxu0 0
    %4130 = vmatprep.mubr.bf16.mxu0 0
    %4131 = vmatmul.mubr.bf16.gmra.mxu0 %v4054
    %v4132 = vpop.f32.mrf.mxu0
    %v4133 = vadd.f32 0.0, %v4132
    %v4134 = vpop.f32.mrf.mxu0
    %v4135 = vpop.f32.mrf.mxu0
    %v4136 = vpop.f32.mrf.mxu0
    %4137 = vdwg.mxu0
    %v4138 = vadd.f32 %v4097, %v4133
    %v4139 = vld [vmem:[%s2049] sm:$0xff]
    %4140 = vmatprep.subr.bf16.mxu0 0
    %4141 = vmatpush1.bf16.msra.mxu0 0
    %4142 = vmatprep.subr.bf16.mxu0 0
    %4143 = vmatpush1.bf16.msra.mxu0 0
    %4144 = vmatprep.subr.bf16.mxu0 0
    %4145 = vmatpush1.bf16.msra.mxu0 0
    %4146 = vmatprep.subr.bf16.mxu0 0
    %4147 = vmatpush1.bf16.msra.mxu0 0
    %4148 = vmatprep.subr.bf16.mxu0 0
    %4149 = vmatpush1.bf16.msra.mxu0 0
    %4150 = vmatprep.subr.bf16.mxu0 0
    %4151 = vmatpush1.bf16.msra.mxu0 0
    %4152 = vmatprep.subr.bf16.mxu0 0
    %4153 = vmatpush1.bf16.msra.mxu0 %v2746
    %4154 = vmatprep.subr.bf16.mxu0 0
    %4155 = vmatpush1.bf16.msra.mxu0 %v2745
    %4156 = vmatprep.subr.bf16.mxu0 0
    %4157 = vmatpush2.bf16.msra.mxu0 0
    %4158 = vmatprep.subr.bf16.mxu0 0
    %4159 = vmatpush2.bf16.msra.mxu0 0
    %4160 = vmatprep.subr.bf16.mxu0 0
    %4161 = vmatpush2.bf16.msra.mxu0 0
    %4162 = vmatprep.subr.bf16.mxu0 0
    %4163 = vmatpush2.bf16.msra.mxu0 0
    %4164 = vmatprep.subr.bf16.mxu0 0
    %4165 = vmatpush2.bf16.msra.mxu0 0
    %4166 = vmatprep.subr.bf16.mxu0 0
    %4167 = vmatpush2.bf16.msra.mxu0 0
    %4168 = vmatprep.subr.bf16.mxu0 0
    %4169 = vmatpush2.bf16.msra.mxu0 0
    %4170 = vmatprep.subr.bf16.mxu0 0
    %4171 = vmatpush2.bf16.msra.mxu0 0
    %4172 = vmatprep.mubr.bf16.mxu0 0
    %4173 = vmatmul.mubr.bf16.gmra.mxu0 %v4054
    %v4174 = vpop.f32.mrf.mxu0
    %v4175 = vadd.f32 0.0, %v4174
    %v4176 = vpop.f32.mrf.mxu0
    %v4177 = vpop.f32.mrf.mxu0
    %v4178 = vpop.f32.mrf.mxu0
    %4179 = vdwg.mxu0
    %v4180 = vadd.f32 %v4139, %v4175
    %v4181 = vld [vmem:[%s2092] sm:$0xff]
    %4182 = vmatprep.subr.bf16.mxu0 0
    %4183 = vmatpush1.bf16.msra.mxu0 0
    %4184 = vmatprep.subr.bf16.mxu0 0
    %4185 = vmatpush1.bf16.msra.mxu0 0
    %4186 = vmatprep.subr.bf16.mxu0 0
    %4187 = vmatpush1.bf16.msra.mxu0 0
    %4188 = vmatprep.subr.bf16.mxu0 0
    %4189 = vmatpush1.bf16.msra.mxu0 0
    %4190 = vmatprep.subr.bf16.mxu0 0
    %4191 = vmatpush1.bf16.msra.mxu0 0
    %4192 = vmatprep.subr.bf16.mxu0 0
    %4193 = vmatpush1.bf16.msra.mxu0 0
    %4194 = vmatprep.subr.bf16.mxu0 0
    %4195 = vmatpush1.bf16.msra.mxu0 %v2800
    %4196 = vmatprep.subr.bf16.mxu0 0
    %4197 = vmatpush1.bf16.msra.mxu0 %v2799
    %4198 = vmatprep.subr.bf16.mxu0 0
    %4199 = vmatpush2.bf16.msra.mxu0 0
    %4200 = vmatprep.subr.bf16.mxu0 0
    %4201 = vmatpush2.bf16.msra.mxu0 0
    %4202 = vmatprep.subr.bf16.mxu0 0
    %4203 = vmatpush2.bf16.msra.mxu0 0
    %4204 = vmatprep.subr.bf16.mxu0 0
    %4205 = vmatpush2.bf16.msra.mxu0 0
    %4206 = vmatprep.subr.bf16.mxu0 0
    %4207 = vmatpush2.bf16.msra.mxu0 0
    %4208 = vmatprep.subr.bf16.mxu0 0
    %4209 = vmatpush2.bf16.msra.mxu0 0
    %4210 = vmatprep.subr.bf16.mxu0 0
    %4211 = vmatpush2.bf16.msra.mxu0 0
    %4212 = vmatprep.subr.bf16.mxu0 0
    %4213 = vmatpush2.bf16.msra.mxu0 0
    %4214 = vmatprep.mubr.bf16.mxu0 0
    %4215 = vmatmul.mubr.bf16.gmra.mxu0 %v4054
    %v4216 = vpop.f32.mrf.mxu0
    %v4217 = vadd.f32 0.0, %v4216
    %v4218 = vpop.f32.mrf.mxu0
    %v4219 = vpop.f32.mrf.mxu0
    %v4220 = vpop.f32.mrf.mxu0
    %4221 = vdwg.mxu0
    %v4222 = vadd.f32 %v4181, %v4217
    %v4223 = vxor.u32 %v4096, 2147483648
    %v4224 = vmul.f32 %v4223, 1.442695
    %v4225 = vpow.pop %v4224
    %v4226 = vadd.f32 %v4225, 1.0
    %v4227 = vrcp.pop %v4226
    %v4228 = vmul.f32 1.0, %v4227
    %v4229 = vxor.u32 %v4138, 2147483648
    %v4230 = vmul.f32 %v4229, 1.442695
    %v4231 = vpow.pop %v4230
    %v4232 = vadd.f32 %v4231, 1.0
    %v4233 = vrcp.pop %v4232
    %v4234 = vmul.f32 1.0, %v4233
    %v4235 = vtanh.pop %v4180
    %v4236 = vxor.u32 %v4222, 2147483648
    %v4237 = vmul.f32 %v4236, 1.442695
    %v4238 = vpow.pop %v4237
    %v4239 = vadd.f32 %v4238, 1.0
    %v4240 = vrcp.pop %v4239
    %v4241 = vmul.f32 1.0, %v4240
    %v4242 = vmul.f32 %v4234, %v4047
    %v4243 = vmul.f32 %v4228, %v4235
    %v4244 = vadd.f32 %v4242, %v4243
    %v4245 = vtanh.pop %v4244
    %v4246 = vmul.f32 %v4241, %v4245
    %4247 = vst.msk [vmem:[%s2159] sm:$0xff] %vm101, %v4246
    %s4248 = scalar_lea.vmem %s10, 8
    %4249 = vst.msk [vmem:[%s4248] sm:$0xff] %vm101, %v4246
    %s4250 = scalar_lea.vmem %s11, 8
    %4251 = vst.msk [vmem:[%s4250] sm:$0xff] %vm101, %v4244
    // Predicated region
    $region42: #{_lambda_.2} parent=1 // pred_check
      _
    $region43: #{_lambda_.2} parent=1 // pred_check_branch
      %4253 = sbr.rel (0) target = $region45
    $region44: #{_lambda_.2} parent=1 // pred_region
      _
    $region45: #{_lambda_.2} parent=1 // pred_fallthru
      _
    // Predicated region
    $region46: #{_lambda_.2} parent=1 // pred_check
      _
    $region47: #{_lambda_.2} parent=1 // pred_check_branch
      %4255 = sbr.rel (0) target = $region49
    $region48: #{_lambda_.2} parent=1 // pred_region
      _
    $region49: #{_lambda_.2} parent=1 // pred_fallthru
      _
    // Predicated region
    $region50: #{_lambda_.2} parent=1 // pred_check
      _
    $region51: #{_lambda_.2} parent=1 // pred_check_branch
      %4257 = sbr.rel (0) target = $region53
    $region52: #{_lambda_.2} parent=1 // pred_region
      _
    $region53: #{_lambda_.2} parent=1 // pred_fallthru
      _
    // Predicated region
    $region54: #{_lambda_.2} parent=1 // pred_check
      _
    $region55: #{_lambda_.2} parent=1 // pred_check_branch
      %4259 = sbr.rel (0) target = $region57
    $region56: #{_lambda_.2} parent=1 // pred_region
      _
    $region57: #{_lambda_.2} parent=1 // pred_fallthru
      _
    // Predicated region
    $region58: #{_lambda_.2} parent=1 // pred_check
      _
    $region59: #{_lambda_.2} parent=1 // pred_check_branch
      %4261 = sbr.rel (0) target = $region61
    $region60: #{_lambda_.2} parent=1 // pred_region
      _
    $region61: #{_lambda_.2} parent=1 // pred_fallthru
      _
    // Predicated region
    $region62: #{_lambda_.2} parent=1 // pred_check
      _
    $region63: #{_lambda_.2} parent=1 // pred_check_branch
      %4263 = sbr.rel (0) target = $region65
    $region64: #{_lambda_.2} parent=1 // pred_region
      _
    $region65: #{_lambda_.2} parent=1 // pred_fallthru
      _
    %4264 = vsyncpa [#allocation7], 1

</llo_original>
